<compile_context>
chip_gen: v7x
topology: tpu7x:2x2x1
jax: 0.10.0
libtpu: 0.0.40
codegen_flags: <defaults>
</compile_context>

<pallas_src>
import functools
import math

import jax
import jax.numpy as jnp
from jax import lax
from jax.experimental import pallas as pl
from jax.experimental.pallas import tpu as pltpu

FEAT_DIM = 32
IN_CHANNELS = (16, 24, 40, 96, 320)
LANE = 128


def _round_up(x, m):
    return ((x + m - 1) // m) * m


def _idiv(x, d):
    """Integer divide of an int32 array by a static positive int."""
    if d & (d - 1) == 0:
        return x >> (d.bit_length() - 1)
    # TODO(synk): non-power-of-two spatial dims need general int division on the
    # VPU; the demo (and typical /2-pyramids) only hits the shift path.
    return x // d


def _imod(x, d):
    if d & (d - 1) == 0:
        return x & (d - 1)
    return x % d


# ----------------------------- Pallas kernel --------------------------------

def _fused_level_kernel(*refs, H, W, F, has_td):
    """One FPN level, channel-major (C on sublanes, flattened spatial on lanes).

    inner = W1x1 @ x + b1 (+ coarse @ U)   ;   out = W3x3 @ im2col(inner) + b3
    """
    if has_td:
        (x_ref, coarse_ref, u_ref, wi_ref, bi_ref, wo_ref, bo_ref,
         inner_ref, out_ref, col_scr) = refs
    else:
        (x_ref, wi_ref, bi_ref, wo_ref, bo_ref,
         inner_ref, out_ref, col_scr) = refs
        coarse_ref = None
        u_ref = None
    S_pad = inner_ref.shape[1]

    # ---- lateral 1x1 conv: (F, Cin) @ (Cin, S_pad) on the MXU, f32 acc ----
    inner = jnp.dot(wi_ref[...].astype(jnp.bfloat16),
                    x_ref[...].astype(jnp.bfloat16),
                    preferred_element_type=jnp.float32) + bi_ref[...]

    if coarse_ref is not None:
        # fused nearest-neighbour upsample + add: 0/1 selection matmul.
        inner = inner + jnp.dot(coarse_ref[...].astype(jnp.bfloat16),
                                u_ref[...],
                                preferred_element_type=jnp.float32)
    inner_ref[...] = inner

    # ---- 3x3 SAME conv: roll-based im2col + single K=9F matmul ----
    # Tap (dh, dw) of output position m lives at flattened index
    # m + (dh-1)*W + (dw-1); an XLU lane roll brings it to lane m and hoisted
    # f32 0/1 masks emulate the zero padding at the image borders (wrapped /
    # out-of-row lanes are always masked off, so the roll wraparound and the
    # lane padding beyond S are harmless).
    lane = lax.broadcasted_iota(jnp.int32, (1, S_pad), 1)
    h = _idiv(lane, W)
    w = _imod(lane, W)
    hv = [jnp.where((h + (dh - 1) >= 0) & (h + (dh - 1) < H), 1.0, 0.0)
          for dh in range(3)]
    wv = [jnp.where((w + (dw - 1) >= 0) & (w + (dw - 1) < W), 1.0, 0.0)
          for dw in range(3)]

    for dh in range(3):
        for dw in range(3):
            k = dh * 3 + dw
            d = (dh - 1) * W + (dw - 1)
            tap = pltpu.roll(inner, (-d) % S_pad, 1) if d != 0 else inner
            mask = hv[dh] * wv[dw]                       # (1, S_pad) f32
            col_scr[pl.ds(k * F, F), :] = (tap * mask).astype(jnp.bfloat16)

    out_ref[...] = (jnp.dot(wo_ref[...].astype(jnp.bfloat16), col_scr[...],
                            preferred_element_type=jnp.float32) + bo_ref[...])


# ------------------------------ wrapper --------------------------------------

def _build_upsample_matrix(Hc, Wc, Sc_pad, H, W, S_pad):
    """U[c, m] = 1 iff coarse flat index c is the nearest source of fine m.

    Matches F.interpolate(mode='nearest', size=(H, W)). Compile-time constant."""
    m = jnp.arange(S_pad, dtype=jnp.int32)
    h = m // W
    w = m % W
    src = (h * Hc) // H * Wc + (w * Wc) // W
    c = jnp.arange(Sc_pad, dtype=jnp.int32)[:, None]
    real = (m < H * W)[None, :]
    return ((c == src[None, :]) & real).astype(jnp.bfloat16)


def fused_level(x_nchw, wi_t, bi, wo_t, bo, coarse=None, coarse_hw=None):
    """One FPN level.

    x_nchw: (N, Cin, H, W) f32
    wi_t:   (F, Cin)  f32   lateral 1x1 weight (transposed OIHW)
    bi,bo:  (F,)      f32
    wo_t:   (F, 9F)   f32   3x3 weight, column index = (dh*3+dw)*F + cin
    coarse: (N, F, Sc_pad) f32 channel-major inner of the coarser level
    Returns (inner (N, F, S_pad) f32, out NCHW (N, F, H, W) f32).
    """
    N, Cin, H, W = x_nchw.shape
    F = wi_t.shape[0]
    S = H * W
    S_pad = _round_up(S, LANE)

    x = x_nchw.reshape(N, Cin, S)
    if S_pad != S:
        x = jnp.pad(x, ((0, 0), (0, 0), (0, S_pad - S)))

    has_td = coarse is not None
    kernel = functools.partial(_fused_level_kernel, H=H, W=W, F=F,
                               has_td=has_td)

    args = [x]
    in_specs = [pl.BlockSpec((None, Cin, S_pad), lambda n: (n, 0, 0))]
    if has_td:
        Hc, Wc = coarse_hw
        Sc_pad = coarse.shape[2]
        u_mat = _build_upsample_matrix(Hc, Wc, Sc_pad, H, W, S_pad)
        args += [coarse, u_mat]
        in_specs += [pl.BlockSpec((None, F, Sc_pad), lambda n: (n, 0, 0)),
                     pl.BlockSpec((Sc_pad, S_pad), lambda n: (0, 0))]
    args += [wi_t, bi.reshape(F, 1), wo_t, bo.reshape(F, 1)]
    in_specs += [
        pl.BlockSpec((F, Cin), lambda n: (0, 0)),
        pl.BlockSpec((F, 1), lambda n: (0, 0)),
        pl.BlockSpec((F, 9 * F), lambda n: (0, 0)),
        pl.BlockSpec((F, 1), lambda n: (0, 0)),
    ]

    inner, out = pl.pallas_call(
        kernel,
        out_shape=(jax.ShapeDtypeStruct((N, F, S_pad), jnp.float32),
                   jax.ShapeDtypeStruct((N, F, S_pad), jnp.float32)),
        grid=(N,),
        in_specs=in_specs,
        out_specs=(pl.BlockSpec((None, F, S_pad), lambda n: (n, 0, 0)),
                   pl.BlockSpec((None, F, S_pad), lambda n: (n, 0, 0))),
        scratch_shapes=[pltpu.VMEM((9 * F, S_pad), jnp.bfloat16)],
        compiler_params=pltpu.CompilerParams(
            dimension_semantics=("parallel",)),
    )(*args)

    out_nchw = out[:, :, :S].reshape(N, F, H, W)
    return inner, out_nchw


# ------------------------------ FPN forward ---------------------------------

def init_params(key, feat_dim=FEAT_DIM):
    """Parameters in PyTorch Conv2d (OIHW) layout."""
    params = {"inner_w": [], "inner_b": [], "layer_w": [], "layer_b": []}
    for cin in IN_CHANNELS:
        key, k1, k2 = jax.random.split(key, 3)
        params["inner_w"].append(
            0.05 * jax.random.normal(k1, (feat_dim, cin, 1, 1), jnp.float32))
        params["inner_b"].append(jnp.zeros((feat_dim,), jnp.float32))
        params["layer_w"].append(
            0.05 * jax.random.normal(k2, (feat_dim, feat_dim, 3, 3),
                                     jnp.float32))
        params["layer_b"].append(jnp.zeros((feat_dim,), jnp.float32))
    return params


def feature_shrinker_forward(params, layer1, layer2, layer3, layer4, layer5):
    """Inputs and outputs are NCHW (PyTorch convention). No layout transposes."""
    layers = [layer1, layer2, layer3, layer4, layer5]
    F = params["inner_b"][0].shape[0]

    def prep(idx):
        wi_t = params["inner_w"][idx][:, :, 0, 0]                       # (F, Cin)
        wo_t = params["layer_w"][idx].transpose(0, 2, 3, 1).reshape(F, 9 * F)
        return wi_t, params["inner_b"][idx], wo_t, params["layer_b"][idx]

    outs = [None] * 5
    # top of the pyramid (coarsest level)
    wi_t, bi, wo_t, bo = prep(4)
    inner, outs[4] = fused_level(layers[4], wi_t, bi, wo_t, bo)
    coarse_hw = layers[4].shape[2:]
    # top-down pathway
    for idx in range(3, -1, -1):
        wi_t, bi, wo_t, bo = prep(idx)
        inner, outs[idx] = fused_level(layers[idx], wi_t, bi, wo_t, bo,
                                       coarse=inner, coarse_hw=coarse_hw)
        coarse_hw = layers[idx].shape[2:]
    return tuple(outs)


# ------------------------ pure-JAX references (check) ------------------------

def upsample_nearest_nchw(x, out_h, out_w):
    _, _, H, W = x.shape
    idx_h = (jnp.arange(out_h) * H) // out_h
    idx_w = (jnp.arange(out_w) * W) // out_w
    return x[:, :, idx_h][:, :, :, idx_w]


def _ref_conv(x, w_oihw, b, *, bf16):
    if bf16:
        lhs, rhs, prec = x.astype(jnp.bfloat16), w_oihw.astype(jnp.bfloat16), None
    else:
        lhs, rhs, prec = x, w_oihw, lax.Precision.HIGHEST
    y = lax.conv_general_dilated(lhs, rhs, (1, 1), "SAME",
                                 dimension_numbers=("NCHW", "OIHW", "NCHW"),
                                 precision=prec,
                                 preferred_element_type=jnp.float32)
    return y + b.reshape(1, -1, 1, 1)


def reference_forward(params, *layers, bf16=False):
    def maybe_round(x):
        return x.astype(jnp.bfloat16).astype(jnp.float32) if bf16 else x

    outs = [None] * 5
    last = _ref_conv(layers[4], params["inner_w"][4], params["inner_b"][4],
                     bf16=bf16)
    outs[4] = _ref_conv(last, params["layer_w"][4], params["layer_b"][4],
                        bf16=bf16)
    for idx in range(3, -1, -1):
        H, W = layers[idx].shape[2:]
        lateral = _ref_conv(layers[idx], params["inner_w"][idx],
                            params["inner_b"][idx], bf16=bf16)
        last = lateral + maybe_round(upsample_nearest_nchw(last, H, W))
        outs[idx] = _ref_conv(last, params["layer_w"][idx],
                              params["layer_b"][idx], bf16=bf16)
    return tuple(outs)


# --------------------------------- main --------------------------------------

if __name__ == "__main__":
    key = jax.random.PRNGKey(0)
    pkey, dkey = jax.random.split(key)
    params = init_params(pkey)

    N = 2
    shapes = [(N, 16, 32, 32), (N, 24, 16, 16), (N, 40, 8, 8),
              (N, 96, 4, 4), (N, 320, 2, 2)]
    dkeys = jax.random.split(dkey, 5)
    layers = [jax.random.normal(k, s, jnp.float32)
              for k, s in zip(dkeys, shapes)]

    fwd = jax.jit(feature_shrinker_forward)
    outs = jax.block_until_ready(fwd(params, *layers))

    # tight check: reference with matching bf16 operand rounding (f32 acc)
    refs_bf16 = reference_forward(params, *layers, bf16=True)
    # loose sanity check: full-f32 reference (covers bf16 operand rounding)
    refs_f32 = reference_forward(params, *layers, bf16=False)

    for o, rb, rf in zip(outs, refs_bf16, refs_f32):
        assert o.shape == rb.shape, (o.shape, rb.shape)
        d_bf = float(jnp.max(jnp.abs(o - rb)))
        d_f32 = float(jnp.max(jnp.abs(o - rf)))
        assert d_bf < 2e-2, f"mismatch vs bf16-matched reference: {d_bf}"
        assert d_f32 < 2e-1, f"mismatch vs f32 reference: {d_f32}"

    print("KERNEL_OK")
</pallas_src>

<mosaic_0001>
module attributes {stable_mosaic.version = 11 : i64} {
  func.func @_fused_level_kernel(%arg0: i32, %arg1: memref<1x320x128xf32, #tpu.memory_space<vmem>>, %arg2: memref<32x320xf32, #tpu.memory_space<vmem>>, %arg3: memref<32x1xf32, #tpu.memory_space<vmem>>, %arg4: memref<32x288xf32, #tpu.memory_space<vmem>>, %arg5: memref<32x1xf32, #tpu.memory_space<vmem>>, %arg6: memref<1x32x128xf32, #tpu.memory_space<vmem>>, %arg7: memref<1x32x128xf32, #tpu.memory_space<vmem>>, %arg8: memref<288x128xbf16, #tpu.memory_space<vmem>>) attributes {dimension_semantics = [#tpu.dimension_semantics<parallel>], iteration_bounds = array<i64: 2>, scalar_prefetch = 0 : i64, scratch_operands = 1 : i64, tpu.core_type = #tpu.core_type<tc>, window_params = [{transform_indices = @transform_0, window_bounds = array<i64: 1, 320, 128>}, {pipeline_mode = #tpu.pipeline_mode<synchronous>, transform_indices = @transform_1, window_bounds = array<i64: 32, 320>}, {pipeline_mode = #tpu.pipeline_mode<synchronous>, transform_indices = @transform_2, window_bounds = array<i64: 32, 1>}, {pipeline_mode = #tpu.pipeline_mode<synchronous>, transform_indices = @transform_3, window_bounds = array<i64: 32, 288>}, {pipeline_mode = #tpu.pipeline_mode<synchronous>, transform_indices = @transform_4, window_bounds = array<i64: 32, 1>}, {transform_indices = @transform_5, window_bounds = array<i64: 1, 32, 128>}, {transform_indices = @transform_6, window_bounds = array<i64: 1, 32, 128>}]} {
    %c0 = arith.constant 0 : index
    %c0_0 = arith.constant 0 : index
    %0 = vector.load %arg2[%c0, %c0_0] : memref<32x320xf32, #tpu.memory_space<vmem>>, vector<32x320xf32>
    %1 = arith.truncf %0 : vector<32x320xf32> to vector<32x320xbf16>
    %c0_1 = arith.constant 0 : index
    %c0_2 = arith.constant 0 : index
    %c0_3 = arith.constant 0 : index
    %2 = vector.load %arg1[%c0_1, %c0_2, %c0_3] : memref<1x320x128xf32, #tpu.memory_space<vmem>>, vector<1x320x128xf32>
    %3 = vector.shape_cast %2 : vector<1x320x128xf32> to vector<320x128xf32>
    %4 = arith.truncf %3 : vector<320x128xf32> to vector<320x128xbf16>
    %cst = arith.constant dense<0.000000e+00> : vector<32x128xf32>
    %5 = tpu.matmul %1, %4, %cst {dimension_numbers = #tpu.dot_dimension_numbers<[1], [0], [0], [1], [0, 0, 1, 1], [], []>} : vector<32x320xbf16>, vector<320x128xbf16>, vector<32x128xf32> -> vector<32x128xf32>
    %c0_4 = arith.constant 0 : index
    %c0_5 = arith.constant 0 : index
    %6 = vector.load %arg3[%c0_4, %c0_5] : memref<32x1xf32, #tpu.memory_space<vmem>>, vector<32x1xf32>
    %7 = vector.broadcast %6 : vector<32x1xf32> to vector<32x128xf32>
    %8 = arith.addf %5, %7 : vector<32x128xf32>
    %c0_6 = arith.constant 0 : index
    %c0_7 = arith.constant 0 : index
    %c0_8 = arith.constant 0 : index
    %9 = vector.load %arg6[%c0_6, %c0_7, %c0_8] : memref<1x32x128xf32, #tpu.memory_space<vmem>>, vector<1x32x128xf32>
    %10 = vector.shape_cast %9 : vector<1x32x128xf32> to vector<32x128xf32>
    %11 = vector.shape_cast %8 : vector<32x128xf32> to vector<1x32x128xf32>
    tpu.vector_store %arg6[%c0_6, %c0_7, %c0_8], %11 {strides = array<i32>} : memref<1x32x128xf32, #tpu.memory_space<vmem>>, vector<1x32x128xf32>,
    %12 = tpu.iota {dimensions = array<i32: 1>} : vector<1x128xi32>
    %c1_i32 = arith.constant 1 : i32
    %13 = vector.broadcast %c1_i32 : i32 to vector<1x128xi32>
    %14 = arith.shrsi %12, %13 : vector<1x128xi32>
    %c1_i32_9 = arith.constant 1 : i32
    %15 = vector.broadcast %c1_i32_9 : i32 to vector<1x128xi32>
    %16 = arith.andi %12, %15 : vector<1x128xi32>
    %c-1_i32 = arith.constant -1 : i32
    %17 = vector.broadcast %c-1_i32 : i32 to vector<1x128xi32>
    %18 = arith.addi %14, %17 : vector<1x128xi32>
    %c0_i32 = arith.constant 0 : i32
    %19 = vector.broadcast %c0_i32 : i32 to vector<1x128xi32>
    %20 = arith.cmpi sge, %18, %19 : vector<1x128xi32>
    %c-1_i32_10 = arith.constant -1 : i32
    %21 = vector.broadcast %c-1_i32_10 : i32 to vector<1x128xi32>
    %22 = arith.addi %14, %21 : vector<1x128xi32>
    %c2_i32 = arith.constant 2 : i32
    %23 = vector.broadcast %c2_i32 : i32 to vector<1x128xi32>
    %24 = arith.cmpi slt, %22, %23 : vector<1x128xi32>
    %25 = arith.andi %20, %24 : vector<1x128xi1>
    %cst_11 = arith.constant 1.000000e+00 : f32
    %cst_12 = arith.constant 0.000000e+00 : f32
    %26 = vector.broadcast %cst_11 : f32 to vector<1x128xf32>
    %27 = vector.broadcast %cst_12 : f32 to vector<1x128xf32>
    %28 = arith.select %25, %26, %27 : vector<1x128xi1>, vector<1x128xf32>
    %c0_i32_13 = arith.constant 0 : i32
    %29 = vector.broadcast %c0_i32_13 : i32 to vector<1x128xi32>
    %30 = arith.addi %14, %29 : vector<1x128xi32>
    %c0_i32_14 = arith.constant 0 : i32
    %31 = vector.broadcast %c0_i32_14 : i32 to vector<1x128xi32>
    %32 = arith.cmpi sge, %30, %31 : vector<1x128xi32>
    %c0_i32_15 = arith.constant 0 : i32
    %33 = vector.broadcast %c0_i32_15 : i32 to vector<1x128xi32>
    %34 = arith.addi %14, %33 : vector<1x128xi32>
    %c2_i32_16 = arith.constant 2 : i32
    %35 = vector.broadcast %c2_i32_16 : i32 to vector<1x128xi32>
    %36 = arith.cmpi slt, %34, %35 : vector<1x128xi32>
    %37 = arith.andi %32, %36 : vector<1x128xi1>
    %cst_17 = arith.constant 1.000000e+00 : f32
    %cst_18 = arith.constant 0.000000e+00 : f32
    %38 = vector.broadcast %cst_17 : f32 to vector<1x128xf32>
    %39 = vector.broadcast %cst_18 : f32 to vector<1x128xf32>
    %40 = arith.select %37, %38, %39 : vector<1x128xi1>, vector<1x128xf32>
    %c1_i32_19 = arith.constant 1 : i32
    %41 = vector.broadcast %c1_i32_19 : i32 to vector<1x128xi32>
    %42 = arith.addi %14, %41 : vector<1x128xi32>
    %c0_i32_20 = arith.constant 0 : i32
    %43 = vector.broadcast %c0_i32_20 : i32 to vector<1x128xi32>
    %44 = arith.cmpi sge, %42, %43 : vector<1x128xi32>
    %c1_i32_21 = arith.constant 1 : i32
    %45 = vector.broadcast %c1_i32_21 : i32 to vector<1x128xi32>
    %46 = arith.addi %14, %45 : vector<1x128xi32>
    %c2_i32_22 = arith.constant 2 : i32
    %47 = vector.broadcast %c2_i32_22 : i32 to vector<1x128xi32>
    %48 = arith.cmpi slt, %46, %47 : vector<1x128xi32>
    %49 = arith.andi %44, %48 : vector<1x128xi1>
    %cst_23 = arith.constant 1.000000e+00 : f32
    %cst_24 = arith.constant 0.000000e+00 : f32
    %50 = vector.broadcast %cst_23 : f32 to vector<1x128xf32>
    %51 = vector.broadcast %cst_24 : f32 to vector<1x128xf32>
    %52 = arith.select %49, %50, %51 : vector<1x128xi1>, vector<1x128xf32>
    %c-1_i32_25 = arith.constant -1 : i32
    %53 = vector.broadcast %c-1_i32_25 : i32 to vector<1x128xi32>
    %54 = arith.addi %16, %53 : vector<1x128xi32>
    %c0_i32_26 = arith.constant 0 : i32
    %55 = vector.broadcast %c0_i32_26 : i32 to vector<1x128xi32>
    %56 = arith.cmpi sge, %54, %55 : vector<1x128xi32>
    %c-1_i32_27 = arith.constant -1 : i32
    %57 = vector.broadcast %c-1_i32_27 : i32 to vector<1x128xi32>
    %58 = arith.addi %16, %57 : vector<1x128xi32>
    %c2_i32_28 = arith.constant 2 : i32
    %59 = vector.broadcast %c2_i32_28 : i32 to vector<1x128xi32>
    %60 = arith.cmpi slt, %58, %59 : vector<1x128xi32>
    %61 = arith.andi %56, %60 : vector<1x128xi1>
    %cst_29 = arith.constant 1.000000e+00 : f32
    %cst_30 = arith.constant 0.000000e+00 : f32
    %62 = vector.broadcast %cst_29 : f32 to vector<1x128xf32>
    %63 = vector.broadcast %cst_30 : f32 to vector<1x128xf32>
    %64 = arith.select %61, %62, %63 : vector<1x128xi1>, vector<1x128xf32>
    %c0_i32_31 = arith.constant 0 : i32
    %65 = vector.broadcast %c0_i32_31 : i32 to vector<1x128xi32>
    %66 = arith.addi %16, %65 : vector<1x128xi32>
    %c0_i32_32 = arith.constant 0 : i32
    %67 = vector.broadcast %c0_i32_32 : i32 to vector<1x128xi32>
    %68 = arith.cmpi sge, %66, %67 : vector<1x128xi32>
    %c0_i32_33 = arith.constant 0 : i32
    %69 = vector.broadcast %c0_i32_33 : i32 to vector<1x128xi32>
    %70 = arith.addi %16, %69 : vector<1x128xi32>
    %c2_i32_34 = arith.constant 2 : i32
    %71 = vector.broadcast %c2_i32_34 : i32 to vector<1x128xi32>
    %72 = arith.cmpi slt, %70, %71 : vector<1x128xi32>
    %73 = arith.andi %68, %72 : vector<1x128xi1>
    %cst_35 = arith.constant 1.000000e+00 : f32
    %cst_36 = arith.constant 0.000000e+00 : f32
    %74 = vector.broadcast %cst_35 : f32 to vector<1x128xf32>
    %75 = vector.broadcast %cst_36 : f32 to vector<1x128xf32>
    %76 = arith.select %73, %74, %75 : vector<1x128xi1>, vector<1x128xf32>
    %c1_i32_37 = arith.constant 1 : i32
    %77 = vector.broadcast %c1_i32_37 : i32 to vector<1x128xi32>
    %78 = arith.addi %16, %77 : vector<1x128xi32>
    %c0_i32_38 = arith.constant 0 : i32
    %79 = vector.broadcast %c0_i32_38 : i32 to vector<1x128xi32>
    %80 = arith.cmpi sge, %78, %79 : vector<1x128xi32>
    %c1_i32_39 = arith.constant 1 : i32
    %81 = vector.broadcast %c1_i32_39 : i32 to vector<1x128xi32>
    %82 = arith.addi %16, %81 : vector<1x128xi32>
    %c2_i32_40 = arith.constant 2 : i32
    %83 = vector.broadcast %c2_i32_40 : i32 to vector<1x128xi32>
    %84 = arith.cmpi slt, %82, %83 : vector<1x128xi32>
    %85 = arith.andi %80, %84 : vector<1x128xi1>
    %cst_41 = arith.constant 1.000000e+00 : f32
    %cst_42 = arith.constant 0.000000e+00 : f32
    %86 = vector.broadcast %cst_41 : f32 to vector<1x128xf32>
    %87 = vector.broadcast %cst_42 : f32 to vector<1x128xf32>
    %88 = arith.select %85, %86, %87 : vector<1x128xi1>, vector<1x128xf32>
    %c3_i32 = arith.constant 3 : i32
    %89 = tpu.dynamic_rotate %8 by %c3_i32 dim 1 : vector<32x128xf32>, i32 -> vector<32x128xf32>
    %90 = arith.mulf %28, %64 : vector<1x128xf32>
    %91 = vector.broadcast %90 : vector<1x128xf32> to vector<32x128xf32>
    %92 = arith.mulf %89, %91 : vector<32x128xf32>
    %93 = arith.truncf %92 : vector<32x128xf32> to vector<32x128xbf16>
    %c0_43 = arith.constant 0 : index
    %c0_44 = arith.constant 0 : index
    %94 = vector.load %arg8[%c0_43, %c0_44] : memref<288x128xbf16, #tpu.memory_space<vmem>>, vector<32x128xbf16>
    tpu.vector_store %arg8[%c0_43, %c0_44], %93 {strides = array<i32>} : memref<288x128xbf16, #tpu.memory_space<vmem>>, vector<32x128xbf16>,
    %c2_i32_45 = arith.constant 2 : i32
    %95 = tpu.dynamic_rotate %8 by %c2_i32_45 dim 1 : vector<32x128xf32>, i32 -> vector<32x128xf32>
    %96 = arith.mulf %28, %76 : vector<1x128xf32>
    %97 = vector.broadcast %96 : vector<1x128xf32> to vector<32x128xf32>
    %98 = arith.mulf %95, %97 : vector<32x128xf32>
    %99 = arith.truncf %98 : vector<32x128xf32> to vector<32x128xbf16>
    %c32 = arith.constant 32 : index
    %c0_46 = arith.constant 0 : index
    %100 = vector.load %arg8[%c32, %c0_46] : memref<288x128xbf16, #tpu.memory_space<vmem>>, vector<32x128xbf16>
    tpu.vector_store %arg8[%c32, %c0_46], %99 {strides = array<i32>} : memref<288x128xbf16, #tpu.memory_space<vmem>>, vector<32x128xbf16>,
    %c1_i32_47 = arith.constant 1 : i32
    %101 = tpu.dynamic_rotate %8 by %c1_i32_47 dim 1 : vector<32x128xf32>, i32 -> vector<32x128xf32>
    %102 = arith.mulf %28, %88 : vector<1x128xf32>
    %103 = vector.broadcast %102 : vector<1x128xf32> to vector<32x128xf32>
    %104 = arith.mulf %101, %103 : vector<32x128xf32>
    %105 = arith.truncf %104 : vector<32x128xf32> to vector<32x128xbf16>
    %c64 = arith.constant 64 : index
    %c0_48 = arith.constant 0 : index
    %106 = vector.load %arg8[%c64, %c0_48] : memref<288x128xbf16, #tpu.memory_space<vmem>>, vector<32x128xbf16>
    tpu.vector_store %arg8[%c64, %c0_48], %105 {strides = array<i32>} : memref<288x128xbf16, #tpu.memory_space<vmem>>, vector<32x128xbf16>,
    %c1_i32_49 = arith.constant 1 : i32
    %107 = tpu.dynamic_rotate %8 by %c1_i32_49 dim 1 : vector<32x128xf32>, i32 -> vector<32x128xf32>
    %108 = arith.mulf %40, %64 : vector<1x128xf32>
    %109 = vector.broadcast %108 : vector<1x128xf32> to vector<32x128xf32>
    %110 = arith.mulf %107, %109 : vector<32x128xf32>
    %111 = arith.truncf %110 : vector<32x128xf32> to vector<32x128xbf16>
    %c96 = arith.constant 96 : index
    %c0_50 = arith.constant 0 : index
    %112 = vector.load %arg8[%c96, %c0_50] : memref<288x128xbf16, #tpu.memory_space<vmem>>, vector<32x128xbf16>
    tpu.vector_store %arg8[%c96, %c0_50], %111 {strides = array<i32>} : memref<288x128xbf16, #tpu.memory_space<vmem>>, vector<32x128xbf16>,
    %113 = arith.mulf %40, %76 : vector<1x128xf32>
    %114 = vector.broadcast %113 : vector<1x128xf32> to vector<32x128xf32>
    %115 = arith.mulf %8, %114 : vector<32x128xf32>
    %116 = arith.truncf %115 : vector<32x128xf32> to vector<32x128xbf16>
    %c128 = arith.constant 128 : index
    %c0_51 = arith.constant 0 : index
    %117 = vector.load %arg8[%c128, %c0_51] : memref<288x128xbf16, #tpu.memory_space<vmem>>, vector<32x128xbf16>
    tpu.vector_store %arg8[%c128, %c0_51], %116 {strides = array<i32>} : memref<288x128xbf16, #tpu.memory_space<vmem>>, vector<32x128xbf16>,
    %c127_i32 = arith.constant 127 : i32
    %118 = tpu.dynamic_rotate %8 by %c127_i32 dim 1 : vector<32x128xf32>, i32 -> vector<32x128xf32>
    %119 = arith.mulf %40, %88 : vector<1x128xf32>
    %120 = vector.broadcast %119 : vector<1x128xf32> to vector<32x128xf32>
    %121 = arith.mulf %118, %120 : vector<32x128xf32>
    %122 = arith.truncf %121 : vector<32x128xf32> to vector<32x128xbf16>
    %c160 = arith.constant 160 : index
    %c0_52 = arith.constant 0 : index
    %123 = vector.load %arg8[%c160, %c0_52] : memref<288x128xbf16, #tpu.memory_space<vmem>>, vector<32x128xbf16>
    tpu.vector_store %arg8[%c160, %c0_52], %122 {strides = array<i32>} : memref<288x128xbf16, #tpu.memory_space<vmem>>, vector<32x128xbf16>,
    %c127_i32_53 = arith.constant 127 : i32
    %124 = tpu.dynamic_rotate %8 by %c127_i32_53 dim 1 : vector<32x128xf32>, i32 -> vector<32x128xf32>
    %125 = arith.mulf %52, %64 : vector<1x128xf32>
    %126 = vector.broadcast %125 : vector<1x128xf32> to vector<32x128xf32>
    %127 = arith.mulf %124, %126 : vector<32x128xf32>
    %128 = arith.truncf %127 : vector<32x128xf32> to vector<32x128xbf16>
    %c192 = arith.constant 192 : index
    %c0_54 = arith.constant 0 : index
    %129 = vector.load %arg8[%c192, %c0_54] : memref<288x128xbf16, #tpu.memory_space<vmem>>, vector<32x128xbf16>
    tpu.vector_store %arg8[%c192, %c0_54], %128 {strides = array<i32>} : memref<288x128xbf16, #tpu.memory_space<vmem>>, vector<32x128xbf16>,
    %c126_i32 = arith.constant 126 : i32
    %130 = tpu.dynamic_rotate %8 by %c126_i32 dim 1 : vector<32x128xf32>, i32 -> vector<32x128xf32>
    %131 = arith.mulf %52, %76 : vector<1x128xf32>
    %132 = vector.broadcast %131 : vector<1x128xf32> to vector<32x128xf32>
    %133 = arith.mulf %130, %132 : vector<32x128xf32>
    %134 = arith.truncf %133 : vector<32x128xf32> to vector<32x128xbf16>
    %c224 = arith.constant 224 : index
    %c0_55 = arith.constant 0 : index
    %135 = vector.load %arg8[%c224, %c0_55] : memref<288x128xbf16, #tpu.memory_space<vmem>>, vector<32x128xbf16>
    tpu.vector_store %arg8[%c224, %c0_55], %134 {strides = array<i32>} : memref<288x128xbf16, #tpu.memory_space<vmem>>, vector<32x128xbf16>,
    %c125_i32 = arith.constant 125 : i32
    %136 = tpu.dynamic_rotate %8 by %c125_i32 dim 1 : vector<32x128xf32>, i32 -> vector<32x128xf32>
    %137 = arith.mulf %52, %88 : vector<1x128xf32>
    %138 = vector.broadcast %137 : vector<1x128xf32> to vector<32x128xf32>
    %139 = arith.mulf %136, %138 : vector<32x128xf32>
    %140 = arith.truncf %139 : vector<32x128xf32> to vector<32x128xbf16>
    %c256 = arith.constant 256 : index
    %c0_56 = arith.constant 0 : index
    %141 = vector.load %arg8[%c256, %c0_56] : memref<288x128xbf16, #tpu.memory_space<vmem>>, vector<32x128xbf16>
    tpu.vector_store %arg8[%c256, %c0_56], %140 {strides = array<i32>} : memref<288x128xbf16, #tpu.memory_space<vmem>>, vector<32x128xbf16>,
    %c0_57 = arith.constant 0 : index
    %c0_58 = arith.constant 0 : index
    %142 = vector.load %arg4[%c0_57, %c0_58] : memref<32x288xf32, #tpu.memory_space<vmem>>, vector<32x288xf32>
    %143 = arith.truncf %142 : vector<32x288xf32> to vector<32x288xbf16>
    %c0_59 = arith.constant 0 : index
    %c0_60 = arith.constant 0 : index
    %144 = vector.load %arg8[%c0_59, %c0_60] : memref<288x128xbf16, #tpu.memory_space<vmem>>, vector<288x128xbf16>
    %cst_61 = arith.constant dense<0.000000e+00> : vector<32x128xf32>
    %145 = tpu.matmul %143, %144, %cst_61 {dimension_numbers = #tpu.dot_dimension_numbers<[1], [0], [0], [1], [0, 0, 1, 1], [], []>} : vector<32x288xbf16>, vector<288x128xbf16>, vector<32x128xf32> -> vector<32x128xf32>
    %c0_62 = arith.constant 0 : index
    %c0_63 = arith.constant 0 : index
    %146 = vector.load %arg5[%c0_62, %c0_63] : memref<32x1xf32, #tpu.memory_space<vmem>>, vector<32x1xf32>
    %147 = vector.broadcast %146 : vector<32x1xf32> to vector<32x128xf32>
    %148 = arith.addf %145, %147 : vector<32x128xf32>
    %c0_64 = arith.constant 0 : index
    %c0_65 = arith.constant 0 : index
    %c0_66 = arith.constant 0 : index
    %149 = vector.load %arg7[%c0_64, %c0_65, %c0_66] : memref<1x32x128xf32, #tpu.memory_space<vmem>>, vector<1x32x128xf32>
    %150 = vector.shape_cast %149 : vector<1x32x128xf32> to vector<32x128xf32>
    %151 = vector.shape_cast %148 : vector<32x128xf32> to vector<1x32x128xf32>
    tpu.vector_store %arg7[%c0_64, %c0_65, %c0_66], %151 {strides = array<i32>} : memref<1x32x128xf32, #tpu.memory_space<vmem>>, vector<1x32x128xf32>,
    return
  }
  func.func @transform_0(%arg0: i32) -> (i32, i32, i32) {
    %c0_i32 = arith.constant 0 : i32
    %c0_i32_0 = arith.constant 0 : i32
    %c0_i32_1 = arith.constant 0 : i32
    return %arg0, %c0_i32, %c0_i32_0 : i32, i32, i32
  }
  func.func @transform_1(%arg0: i32) -> (i32, i32) {
    %c0_i32 = arith.constant 0 : i32
    %c0_i32_0 = arith.constant 0 : i32
    %c0_i32_1 = arith.constant 0 : i32
    return %c0_i32, %c0_i32_0 : i32, i32
  }
  func.func @transform_2(%arg0: i32) -> (i32, i32) {
    %c0_i32 = arith.constant 0 : i32
    %c0_i32_0 = arith.constant 0 : i32
    %c0_i32_1 = arith.constant 0 : i32
    return %c0_i32, %c0_i32_0 : i32, i32
  }
  func.func @transform_3(%arg0: i32) -> (i32, i32) {
    %c0_i32 = arith.constant 0 : i32
    %c0_i32_0 = arith.constant 0 : i32
    %c0_i32_1 = arith.constant 0 : i32
    return %c0_i32, %c0_i32_0 : i32, i32
  }
  func.func @transform_4(%arg0: i32) -> (i32, i32) {
    %c0_i32 = arith.constant 0 : i32
    %c0_i32_0 = arith.constant 0 : i32
    %c0_i32_1 = arith.constant 0 : i32
    return %c0_i32, %c0_i32_0 : i32, i32
  }
  func.func @transform_5(%arg0: i32) -> (i32, i32, i32) {
    %c0_i32 = arith.constant 0 : i32
    %c0_i32_0 = arith.constant 0 : i32
    %c0_i32_1 = arith.constant 0 : i32
    return %arg0, %c0_i32, %c0_i32_0 : i32, i32, i32
  }
  func.func @transform_6(%arg0: i32) -> (i32, i32, i32) {
    %c0_i32 = arith.constant 0 : i32
    %c0_i32_0 = arith.constant 0 : i32
    %c0_i32_1 = arith.constant 0 : i32
    return %arg0, %c0_i32, %c0_i32_0 : i32, i32, i32
  }
}

module attributes {stable_mosaic.version = 11 : i64} {
  func.func @_fused_level_kernel(%arg0: i32, %arg1: memref<1x96x128xf32, #tpu.memory_space<vmem>>, %arg2: memref<1x32x128xf32, #tpu.memory_space<vmem>>, %arg3: memref<128x128xbf16, #tpu.memory_space<vmem>>, %arg4: memref<32x96xf32, #tpu.memory_space<vmem>>, %arg5: memref<32x1xf32, #tpu.memory_space<vmem>>, %arg6: memref<32x288xf32, #tpu.memory_space<vmem>>, %arg7: memref<32x1xf32, #tpu.memory_space<vmem>>, %arg8: memref<1x32x128xf32, #tpu.memory_space<vmem>>, %arg9: memref<1x32x128xf32, #tpu.memory_space<vmem>>, %arg10: memref<288x128xbf16, #tpu.memory_space<vmem>>) attributes {dimension_semantics = [#tpu.dimension_semantics<parallel>], iteration_bounds = array<i64: 2>, scalar_prefetch = 0 : i64, scratch_operands = 1 : i64, tpu.core_type = #tpu.core_type<tc>, window_params = [{transform_indices = @transform_0, window_bounds = array<i64: 1, 96, 128>}, {transform_indices = @transform_1, window_bounds = array<i64: 1, 32, 128>}, {pipeline_mode = #tpu.pipeline_mode<synchronous>, transform_indices = @transform_2, window_bounds = array<i64: 128, 128>}, {pipeline_mode = #tpu.pipeline_mode<synchronous>, transform_indices = @transform_3, window_bounds = array<i64: 32, 96>}, {pipeline_mode = #tpu.pipeline_mode<synchronous>, transform_indices = @transform_4, window_bounds = array<i64: 32, 1>}, {pipeline_mode = #tpu.pipeline_mode<synchronous>, transform_indices = @transform_5, window_bounds = array<i64: 32, 288>}, {pipeline_mode = #tpu.pipeline_mode<synchronous>, transform_indices = @transform_6, window_bounds = array<i64: 32, 1>}, {transform_indices = @transform_7, window_bounds = array<i64: 1, 32, 128>}, {transform_indices = @transform_8, window_bounds = array<i64: 1, 32, 128>}]} {
    %c0 = arith.constant 0 : index
    %c0_0 = arith.constant 0 : index
    %0 = vector.load %arg4[%c0, %c0_0] : memref<32x96xf32, #tpu.memory_space<vmem>>, vector<32x96xf32>
    %1 = arith.truncf %0 : vector<32x96xf32> to vector<32x96xbf16>
    %c0_1 = arith.constant 0 : index
    %c0_2 = arith.constant 0 : index
    %c0_3 = arith.constant 0 : index
    %2 = vector.load %arg1[%c0_1, %c0_2, %c0_3] : memref<1x96x128xf32, #tpu.memory_space<vmem>>, vector<1x96x128xf32>
    %3 = vector.shape_cast %2 : vector<1x96x128xf32> to vector<96x128xf32>
    %4 = arith.truncf %3 : vector<96x128xf32> to vector<96x128xbf16>
    %cst = arith.constant dense<0.000000e+00> : vector<32x128xf32>
    %5 = tpu.matmul %1, %4, %cst {dimension_numbers = #tpu.dot_dimension_numbers<[1], [0], [0], [1], [0, 0, 1, 1], [], []>} : vector<32x96xbf16>, vector<96x128xbf16>, vector<32x128xf32> -> vector<32x128xf32>
    %c0_4 = arith.constant 0 : index
    %c0_5 = arith.constant 0 : index
    %6 = vector.load %arg5[%c0_4, %c0_5] : memref<32x1xf32, #tpu.memory_space<vmem>>, vector<32x1xf32>
    %7 = vector.broadcast %6 : vector<32x1xf32> to vector<32x128xf32>
    %8 = arith.addf %5, %7 : vector<32x128xf32>
    %c0_6 = arith.constant 0 : index
    %c0_7 = arith.constant 0 : index
    %c0_8 = arith.constant 0 : index
    %9 = vector.load %arg2[%c0_6, %c0_7, %c0_8] : memref<1x32x128xf32, #tpu.memory_space<vmem>>, vector<1x32x128xf32>
    %10 = vector.shape_cast %9 : vector<1x32x128xf32> to vector<32x128xf32>
    %11 = arith.truncf %10 : vector<32x128xf32> to vector<32x128xbf16>
    %c0_9 = arith.constant 0 : index
    %c0_10 = arith.constant 0 : index
    %12 = vector.load %arg3[%c0_9, %c0_10] : memref<128x128xbf16, #tpu.memory_space<vmem>>, vector<128x128xbf16>
    %cst_11 = arith.constant dense<0.000000e+00> : vector<32x128xf32>
    %13 = tpu.matmul %11, %12, %cst_11 {dimension_numbers = #tpu.dot_dimension_numbers<[1], [0], [0], [1], [0, 0, 1, 1], [], []>} : vector<32x128xbf16>, vector<128x128xbf16>, vector<32x128xf32> -> vector<32x128xf32>
    %14 = arith.addf %8, %13 : vector<32x128xf32>
    %c0_12 = arith.constant 0 : index
    %c0_13 = arith.constant 0 : index
    %c0_14 = arith.constant 0 : index
    %15 = vector.load %arg8[%c0_12, %c0_13, %c0_14] : memref<1x32x128xf32, #tpu.memory_space<vmem>>, vector<1x32x128xf32>
    %16 = vector.shape_cast %15 : vector<1x32x128xf32> to vector<32x128xf32>
    %17 = vector.shape_cast %14 : vector<32x128xf32> to vector<1x32x128xf32>
    tpu.vector_store %arg8[%c0_12, %c0_13, %c0_14], %17 {strides = array<i32>} : memref<1x32x128xf32, #tpu.memory_space<vmem>>, vector<1x32x128xf32>,
    %18 = tpu.iota {dimensions = array<i32: 1>} : vector<1x128xi32>
    %c2_i32 = arith.constant 2 : i32
    %19 = vector.broadcast %c2_i32 : i32 to vector<1x128xi32>
    %20 = arith.shrsi %18, %19 : vector<1x128xi32>
    %c3_i32 = arith.constant 3 : i32
    %21 = vector.broadcast %c3_i32 : i32 to vector<1x128xi32>
    %22 = arith.andi %18, %21 : vector<1x128xi32>
    %c-1_i32 = arith.constant -1 : i32
    %23 = vector.broadcast %c-1_i32 : i32 to vector<1x128xi32>
    %24 = arith.addi %20, %23 : vector<1x128xi32>
    %c0_i32 = arith.constant 0 : i32
    %25 = vector.broadcast %c0_i32 : i32 to vector<1x128xi32>
    %26 = arith.cmpi sge, %24, %25 : vector<1x128xi32>
    %c-1_i32_15 = arith.constant -1 : i32
    %27 = vector.broadcast %c-1_i32_15 : i32 to vector<1x128xi32>
    %28 = arith.addi %20, %27 : vector<1x128xi32>
    %c4_i32 = arith.constant 4 : i32
    %29 = vector.broadcast %c4_i32 : i32 to vector<1x128xi32>
    %30 = arith.cmpi slt, %28, %29 : vector<1x128xi32>
    %31 = arith.andi %26, %30 : vector<1x128xi1>
    %cst_16 = arith.constant 1.000000e+00 : f32
    %cst_17 = arith.constant 0.000000e+00 : f32
    %32 = vector.broadcast %cst_16 : f32 to vector<1x128xf32>
    %33 = vector.broadcast %cst_17 : f32 to vector<1x128xf32>
    %34 = arith.select %31, %32, %33 : vector<1x128xi1>, vector<1x128xf32>
    %c0_i32_18 = arith.constant 0 : i32
    %35 = vector.broadcast %c0_i32_18 : i32 to vector<1x128xi32>
    %36 = arith.addi %20, %35 : vector<1x128xi32>
    %c0_i32_19 = arith.constant 0 : i32
    %37 = vector.broadcast %c0_i32_19 : i32 to vector<1x128xi32>
    %38 = arith.cmpi sge, %36, %37 : vector<1x128xi32>
    %c0_i32_20 = arith.constant 0 : i32
    %39 = vector.broadcast %c0_i32_20 : i32 to vector<1x128xi32>
    %40 = arith.addi %20, %39 : vector<1x128xi32>
    %c4_i32_21 = arith.constant 4 : i32
    %41 = vector.broadcast %c4_i32_21 : i32 to vector<1x128xi32>
    %42 = arith.cmpi slt, %40, %41 : vector<1x128xi32>
    %43 = arith.andi %38, %42 : vector<1x128xi1>
    %cst_22 = arith.constant 1.000000e+00 : f32
    %cst_23 = arith.constant 0.000000e+00 : f32
    %44 = vector.broadcast %cst_22 : f32 to vector<1x128xf32>
    %45 = vector.broadcast %cst_23 : f32 to vector<1x128xf32>
    %46 = arith.select %43, %44, %45 : vector<1x128xi1>, vector<1x128xf32>
    %c1_i32 = arith.constant 1 : i32
    %47 = vector.broadcast %c1_i32 : i32 to vector<1x128xi32>
    %48 = arith.addi %20, %47 : vector<1x128xi32>
    %c0_i32_24 = arith.constant 0 : i32
    %49 = vector.broadcast %c0_i32_24 : i32 to vector<1x128xi32>
    %50 = arith.cmpi sge, %48, %49 : vector<1x128xi32>
    %c1_i32_25 = arith.constant 1 : i32
    %51 = vector.broadcast %c1_i32_25 : i32 to vector<1x128xi32>
    %52 = arith.addi %20, %51 : vector<1x128xi32>
    %c4_i32_26 = arith.constant 4 : i32
    %53 = vector.broadcast %c4_i32_26 : i32 to vector<1x128xi32>
    %54 = arith.cmpi slt, %52, %53 : vector<1x128xi32>
    %55 = arith.andi %50, %54 : vector<1x128xi1>
    %cst_27 = arith.constant 1.000000e+00 : f32
    %cst_28 = arith.constant 0.000000e+00 : f32
    %56 = vector.broadcast %cst_27 : f32 to vector<1x128xf32>
    %57 = vector.broadcast %cst_28 : f32 to vector<1x128xf32>
    %58 = arith.select %55, %56, %57 : vector<1x128xi1>, vector<1x128xf32>
    %c-1_i32_29 = arith.constant -1 : i32
    %59 = vector.broadcast %c-1_i32_29 : i32 to vector<1x128xi32>
    %60 = arith.addi %22, %59 : vector<1x128xi32>
    %c0_i32_30 = arith.constant 0 : i32
    %61 = vector.broadcast %c0_i32_30 : i32 to vector<1x128xi32>
    %62 = arith.cmpi sge, %60, %61 : vector<1x128xi32>
    %c-1_i32_31 = arith.constant -1 : i32
    %63 = vector.broadcast %c-1_i32_31 : i32 to vector<1x128xi32>
    %64 = arith.addi %22, %63 : vector<1x128xi32>
    %c4_i32_32 = arith.constant 4 : i32
    %65 = vector.broadcast %c4_i32_32 : i32 to vector<1x128xi32>
    %66 = arith.cmpi slt, %64, %65 : vector<1x128xi32>
    %67 = arith.andi %62, %66 : vector<1x128xi1>
    %cst_33 = arith.constant 1.000000e+00 : f32
    %cst_34 = arith.constant 0.000000e+00 : f32
    %68 = vector.broadcast %cst_33 : f32 to vector<1x128xf32>
    %69 = vector.broadcast %cst_34 : f32 to vector<1x128xf32>
    %70 = arith.select %67, %68, %69 : vector<1x128xi1>, vector<1x128xf32>
    %c0_i32_35 = arith.constant 0 : i32
    %71 = vector.broadcast %c0_i32_35 : i32 to vector<1x128xi32>
    %72 = arith.addi %22, %71 : vector<1x128xi32>
    %c0_i32_36 = arith.constant 0 : i32
    %73 = vector.broadcast %c0_i32_36 : i32 to vector<1x128xi32>
    %74 = arith.cmpi sge, %72, %73 : vector<1x128xi32>
    %c0_i32_37 = arith.constant 0 : i32
    %75 = vector.broadcast %c0_i32_37 : i32 to vector<1x128xi32>
    %76 = arith.addi %22, %75 : vector<1x128xi32>
    %c4_i32_38 = arith.constant 4 : i32
    %77 = vector.broadcast %c4_i32_38 : i32 to vector<1x128xi32>
    %78 = arith.cmpi slt, %76, %77 : vector<1x128xi32>
    %79 = arith.andi %74, %78 : vector<1x128xi1>
    %cst_39 = arith.constant 1.000000e+00 : f32
    %cst_40 = arith.constant 0.000000e+00 : f32
    %80 = vector.broadcast %cst_39 : f32 to vector<1x128xf32>
    %81 = vector.broadcast %cst_40 : f32 to vector<1x128xf32>
    %82 = arith.select %79, %80, %81 : vector<1x128xi1>, vector<1x128xf32>
    %c1_i32_41 = arith.constant 1 : i32
    %83 = vector.broadcast %c1_i32_41 : i32 to vector<1x128xi32>
    %84 = arith.addi %22, %83 : vector<1x128xi32>
    %c0_i32_42 = arith.constant 0 : i32
    %85 = vector.broadcast %c0_i32_42 : i32 to vector<1x128xi32>
    %86 = arith.cmpi sge, %84, %85 : vector<1x128xi32>
    %c1_i32_43 = arith.constant 1 : i32
    %87 = vector.broadcast %c1_i32_43 : i32 to vector<1x128xi32>
    %88 = arith.addi %22, %87 : vector<1x128xi32>
    %c4_i32_44 = arith.constant 4 : i32
    %89 = vector.broadcast %c4_i32_44 : i32 to vector<1x128xi32>
    %90 = arith.cmpi slt, %88, %89 : vector<1x128xi32>
    %91 = arith.andi %86, %90 : vector<1x128xi1>
    %cst_45 = arith.constant 1.000000e+00 : f32
    %cst_46 = arith.constant 0.000000e+00 : f32
    %92 = vector.broadcast %cst_45 : f32 to vector<1x128xf32>
    %93 = vector.broadcast %cst_46 : f32 to vector<1x128xf32>
    %94 = arith.select %91, %92, %93 : vector<1x128xi1>, vector<1x128xf32>
    %c5_i32 = arith.constant 5 : i32
    %95 = tpu.dynamic_rotate %14 by %c5_i32 dim 1 : vector<32x128xf32>, i32 -> vector<32x128xf32>
    %96 = arith.mulf %34, %70 : vector<1x128xf32>
    %97 = vector.broadcast %96 : vector<1x128xf32> to vector<32x128xf32>
    %98 = arith.mulf %95, %97 : vector<32x128xf32>
    %99 = arith.truncf %98 : vector<32x128xf32> to vector<32x128xbf16>
    %c0_47 = arith.constant 0 : index
    %c0_48 = arith.constant 0 : index
    %100 = vector.load %arg10[%c0_47, %c0_48] : memref<288x128xbf16, #tpu.memory_space<vmem>>, vector<32x128xbf16>
    tpu.vector_store %arg10[%c0_47, %c0_48], %99 {strides = array<i32>} : memref<288x128xbf16, #tpu.memory_space<vmem>>, vector<32x128xbf16>,
    %c4_i32_49 = arith.constant 4 : i32
    %101 = tpu.dynamic_rotate %14 by %c4_i32_49 dim 1 : vector<32x128xf32>, i32 -> vector<32x128xf32>
    %102 = arith.mulf %34, %82 : vector<1x128xf32>
    %103 = vector.broadcast %102 : vector<1x128xf32> to vector<32x128xf32>
    %104 = arith.mulf %101, %103 : vector<32x128xf32>
    %105 = arith.truncf %104 : vector<32x128xf32> to vector<32x128xbf16>
    %c32 = arith.constant 32 : index
    %c0_50 = arith.constant 0 : index
    %106 = vector.load %arg10[%c32, %c0_50] : memref<288x128xbf16, #tpu.memory_space<vmem>>, vector<32x128xbf16>
    tpu.vector_store %arg10[%c32, %c0_50], %105 {strides = array<i32>} : memref<288x128xbf16, #tpu.memory_space<vmem>>, vector<32x128xbf16>,
    %c3_i32_51 = arith.constant 3 : i32
    %107 = tpu.dynamic_rotate %14 by %c3_i32_51 dim 1 : vector<32x128xf32>, i32 -> vector<32x128xf32>
    %108 = arith.mulf %34, %94 : vector<1x128xf32>
    %109 = vector.broadcast %108 : vector<1x128xf32> to vector<32x128xf32>
    %110 = arith.mulf %107, %109 : vector<32x128xf32>
    %111 = arith.truncf %110 : vector<32x128xf32> to vector<32x128xbf16>
    %c64 = arith.constant 64 : index
    %c0_52 = arith.constant 0 : index
    %112 = vector.load %arg10[%c64, %c0_52] : memref<288x128xbf16, #tpu.memory_space<vmem>>, vector<32x128xbf16>
    tpu.vector_store %arg10[%c64, %c0_52], %111 {strides = array<i32>} : memref<288x128xbf16, #tpu.memory_space<vmem>>, vector<32x128xbf16>,
    %c1_i32_53 = arith.constant 1 : i32
    %113 = tpu.dynamic_rotate %14 by %c1_i32_53 dim 1 : vector<32x128xf32>, i32 -> vector<32x128xf32>
    %114 = arith.mulf %46, %70 : vector<1x128xf32>
    %115 = vector.broadcast %114 : vector<1x128xf32> to vector<32x128xf32>
    %116 = arith.mulf %113, %115 : vector<32x128xf32>
    %117 = arith.truncf %116 : vector<32x128xf32> to vector<32x128xbf16>
    %c96 = arith.constant 96 : index
    %c0_54 = arith.constant 0 : index
    %118 = vector.load %arg10[%c96, %c0_54] : memref<288x128xbf16, #tpu.memory_space<vmem>>, vector<32x128xbf16>
    tpu.vector_store %arg10[%c96, %c0_54], %117 {strides = array<i32>} : memref<288x128xbf16, #tpu.memory_space<vmem>>, vector<32x128xbf16>,
    %119 = arith.mulf %46, %82 : vector<1x128xf32>
    %120 = vector.broadcast %119 : vector<1x128xf32> to vector<32x128xf32>
    %121 = arith.mulf %14, %120 : vector<32x128xf32>
    %122 = arith.truncf %121 : vector<32x128xf32> to vector<32x128xbf16>
    %c128 = arith.constant 128 : index
    %c0_55 = arith.constant 0 : index
    %123 = vector.load %arg10[%c128, %c0_55] : memref<288x128xbf16, #tpu.memory_space<vmem>>, vector<32x128xbf16>
    tpu.vector_store %arg10[%c128, %c0_55], %122 {strides = array<i32>} : memref<288x128xbf16, #tpu.memory_space<vmem>>, vector<32x128xbf16>,
    %c127_i32 = arith.constant 127 : i32
    %124 = tpu.dynamic_rotate %14 by %c127_i32 dim 1 : vector<32x128xf32>, i32 -> vector<32x128xf32>
    %125 = arith.mulf %46, %94 : vector<1x128xf32>
    %126 = vector.broadcast %125 : vector<1x128xf32> to vector<32x128xf32>
    %127 = arith.mulf %124, %126 : vector<32x128xf32>
    %128 = arith.truncf %127 : vector<32x128xf32> to vector<32x128xbf16>
    %c160 = arith.constant 160 : index
    %c0_56 = arith.constant 0 : index
    %129 = vector.load %arg10[%c160, %c0_56] : memref<288x128xbf16, #tpu.memory_space<vmem>>, vector<32x128xbf16>
    tpu.vector_store %arg10[%c160, %c0_56], %128 {strides = array<i32>} : memref<288x128xbf16, #tpu.memory_space<vmem>>, vector<32x128xbf16>,
    %c125_i32 = arith.constant 125 : i32
    %130 = tpu.dynamic_rotate %14 by %c125_i32 dim 1 : vector<32x128xf32>, i32 -> vector<32x128xf32>
    %131 = arith.mulf %58, %70 : vector<1x128xf32>
    %132 = vector.broadcast %131 : vector<1x128xf32> to vector<32x128xf32>
    %133 = arith.mulf %130, %132 : vector<32x128xf32>
    %134 = arith.truncf %133 : vector<32x128xf32> to vector<32x128xbf16>
    %c192 = arith.constant 192 : index
    %c0_57 = arith.constant 0 : index
    %135 = vector.load %arg10[%c192, %c0_57] : memref<288x128xbf16, #tpu.memory_space<vmem>>, vector<32x128xbf16>
    tpu.vector_store %arg10[%c192, %c0_57], %134 {strides = array<i32>} : memref<288x128xbf16, #tpu.memory_space<vmem>>, vector<32x128xbf16>,
    %c124_i32 = arith.constant 124 : i32
    %136 = tpu.dynamic_rotate %14 by %c124_i32 dim 1 : vector<32x128xf32>, i32 -> vector<32x128xf32>
    %137 = arith.mulf %58, %82 : vector<1x128xf32>
    %138 = vector.broadcast %137 : vector<1x128xf32> to vector<32x128xf32>
    %139 = arith.mulf %136, %138 : vector<32x128xf32>
    %140 = arith.truncf %139 : vector<32x128xf32> to vector<32x128xbf16>
    %c224 = arith.constant 224 : index
    %c0_58 = arith.constant 0 : index
    %141 = vector.load %arg10[%c224, %c0_58] : memref<288x128xbf16, #tpu.memory_space<vmem>>, vector<32x128xbf16>
    tpu.vector_store %arg10[%c224, %c0_58], %140 {strides = array<i32>} : memref<288x128xbf16, #tpu.memory_space<vmem>>, vector<32x128xbf16>,
    %c123_i32 = arith.constant 123 : i32
    %142 = tpu.dynamic_rotate %14 by %c123_i32 dim 1 : vector<32x128xf32>, i32 -> vector<32x128xf32>
    %143 = arith.mulf %58, %94 : vector<1x128xf32>
    %144 = vector.broadcast %143 : vector<1x128xf32> to vector<32x128xf32>
    %145 = arith.mulf %142, %144 : vector<32x128xf32>
    %146 = arith.truncf %145 : vector<32x128xf32> to vector<32x128xbf16>
    %c256 = arith.constant 256 : index
    %c0_59 = arith.constant 0 : index
    %147 = vector.load %arg10[%c256, %c0_59] : memref<288x128xbf16, #tpu.memory_space<vmem>>, vector<32x128xbf16>
    tpu.vector_store %arg10[%c256, %c0_59], %146 {strides = array<i32>} : memref<288x128xbf16, #tpu.memory_space<vmem>>, vector<32x128xbf16>,
    %c0_60 = arith.constant 0 : index
    %c0_61 = arith.constant 0 : index
    %148 = vector.load %arg6[%c0_60, %c0_61] : memref<32x288xf32, #tpu.memory_space<vmem>>, vector<32x288xf32>
    %149 = arith.truncf %148 : vector<32x288xf32> to vector<32x288xbf16>
    %c0_62 = arith.constant 0 : index
    %c0_63 = arith.constant 0 : index
    %150 = vector.load %arg10[%c0_62, %c0_63] : memref<288x128xbf16, #tpu.memory_space<vmem>>, vector<288x128xbf16>
    %cst_64 = arith.constant dense<0.000000e+00> : vector<32x128xf32>
    %151 = tpu.matmul %149, %150, %cst_64 {dimension_numbers = #tpu.dot_dimension_numbers<[1], [0], [0], [1], [0, 0, 1, 1], [], []>} : vector<32x288xbf16>, vector<288x128xbf16>, vector<32x128xf32> -> vector<32x128xf32>
    %c0_65 = arith.constant 0 : index
    %c0_66 = arith.constant 0 : index
    %152 = vector.load %arg7[%c0_65, %c0_66] : memref<32x1xf32, #tpu.memory_space<vmem>>, vector<32x1xf32>
    %153 = vector.broadcast %152 : vector<32x1xf32> to vector<32x128xf32>
    %154 = arith.addf %151, %153 : vector<32x128xf32>
    %c0_67 = arith.constant 0 : index
    %c0_68 = arith.constant 0 : index
    %c0_69 = arith.constant 0 : index
    %155 = vector.load %arg9[%c0_67, %c0_68, %c0_69] : memref<1x32x128xf32, #tpu.memory_space<vmem>>, vector<1x32x128xf32>
    %156 = vector.shape_cast %155 : vector<1x32x128xf32> to vector<32x128xf32>
    %157 = vector.shape_cast %154 : vector<32x128xf32> to vector<1x32x128xf32>
    tpu.vector_store %arg9[%c0_67, %c0_68, %c0_69], %157 {strides = array<i32>} : memref<1x32x128xf32, #tpu.memory_space<vmem>>, vector<1x32x128xf32>,
    return
  }
  func.func @transform_0(%arg0: i32) -> (i32, i32, i32) {
    %c0_i32 = arith.constant 0 : i32
    %c0_i32_0 = arith.constant 0 : i32
    %c0_i32_1 = arith.constant 0 : i32
    return %arg0, %c0_i32, %c0_i32_0 : i32, i32, i32
  }
  func.func @transform_1(%arg0: i32) -> (i32, i32, i32) {
    %c0_i32 = arith.constant 0 : i32
    %c0_i32_0 = arith.constant 0 : i32
    %c0_i32_1 = arith.constant 0 : i32
    return %arg0, %c0_i32, %c0_i32_0 : i32, i32, i32
  }
  func.func @transform_2(%arg0: i32) -> (i32, i32) {
    %c0_i32 = arith.constant 0 : i32
    %c0_i32_0 = arith.constant 0 : i32
    %c0_i32_1 = arith.constant 0 : i32
    return %c0_i32, %c0_i32_0 : i32, i32
  }
  func.func @transform_3(%arg0: i32) -> (i32, i32) {
    %c0_i32 = arith.constant 0 : i32
    %c0_i32_0 = arith.constant 0 : i32
    %c0_i32_1 = arith.constant 0 : i32
    return %c0_i32, %c0_i32_0 : i32, i32
  }
  func.func @transform_4(%arg0: i32) -> (i32, i32) {
    %c0_i32 = arith.constant 0 : i32
    %c0_i32_0 = arith.constant 0 : i32
    %c0_i32_1 = arith.constant 0 : i32
    return %c0_i32, %c0_i32_0 : i32, i32
  }
  func.func @transform_5(%arg0: i32) -> (i32, i32) {
    %c0_i32 = arith.constant 0 : i32
    %c0_i32_0 = arith.constant 0 : i32
    %c0_i32_1 = arith.constant 0 : i32
    return %c0_i32, %c0_i32_0 : i32, i32
  }
  func.func @transform_6(%arg0: i32) -> (i32, i32) {
    %c0_i32 = arith.constant 0 : i32
    %c0_i32_0 = arith.constant 0 : i32
    %c0_i32_1 = arith.constant 0 : i32
    return %c0_i32, %c0_i32_0 : i32, i32
  }
  func.func @transform_7(%arg0: i32) -> (i32, i32, i32) {
    %c0_i32 = arith.constant 0 : i32
    %c0_i32_0 = arith.constant 0 : i32
    %c0_i32_1 = arith.constant 0 : i32
    return %arg0, %c0_i32, %c0_i32_0 : i32, i32, i32
  }
  func.func @transform_8(%arg0: i32) -> (i32, i32, i32) {
    %c0_i32 = arith.constant 0 : i32
    %c0_i32_0 = arith.constant 0 : i32
    %c0_i32_1 = arith.constant 0 : i32
    return %arg0, %c0_i32, %c0_i32_0 : i32, i32, i32
  }
}

module attributes {stable_mosaic.version = 11 : i64} {
  func.func @_fused_level_kernel(%arg0: i32, %arg1: memref<1x40x128xf32, #tpu.memory_space<vmem>>, %arg2: memref<1x32x128xf32, #tpu.memory_space<vmem>>, %arg3: memref<128x128xbf16, #tpu.memory_space<vmem>>, %arg4: memref<32x40xf32, #tpu.memory_space<vmem>>, %arg5: memref<32x1xf32, #tpu.memory_space<vmem>>, %arg6: memref<32x288xf32, #tpu.memory_space<vmem>>, %arg7: memref<32x1xf32, #tpu.memory_space<vmem>>, %arg8: memref<1x32x128xf32, #tpu.memory_space<vmem>>, %arg9: memref<1x32x128xf32, #tpu.memory_space<vmem>>, %arg10: memref<288x128xbf16, #tpu.memory_space<vmem>>) attributes {dimension_semantics = [#tpu.dimension_semantics<parallel>], iteration_bounds = array<i64: 2>, scalar_prefetch = 0 : i64, scratch_operands = 1 : i64, tpu.core_type = #tpu.core_type<tc>, window_params = [{transform_indices = @transform_0, window_bounds = array<i64: 1, 40, 128>}, {transform_indices = @transform_1, window_bounds = array<i64: 1, 32, 128>}, {pipeline_mode = #tpu.pipeline_mode<synchronous>, transform_indices = @transform_2, window_bounds = array<i64: 128, 128>}, {pipeline_mode = #tpu.pipeline_mode<synchronous>, transform_indices = @transform_3, window_bounds = array<i64: 32, 40>}, {pipeline_mode = #tpu.pipeline_mode<synchronous>, transform_indices = @transform_4, window_bounds = array<i64: 32, 1>}, {pipeline_mode = #tpu.pipeline_mode<synchronous>, transform_indices = @transform_5, window_bounds = array<i64: 32, 288>}, {pipeline_mode = #tpu.pipeline_mode<synchronous>, transform_indices = @transform_6, window_bounds = array<i64: 32, 1>}, {transform_indices = @transform_7, window_bounds = array<i64: 1, 32, 128>}, {transform_indices = @transform_8, window_bounds = array<i64: 1, 32, 128>}]} {
    %c0 = arith.constant 0 : index
    %c0_0 = arith.constant 0 : index
    %0 = vector.load %arg4[%c0, %c0_0] : memref<32x40xf32, #tpu.memory_space<vmem>>, vector<32x40xf32>
    %1 = arith.truncf %0 : vector<32x40xf32> to vector<32x40xbf16>
    %c0_1 = arith.constant 0 : index
    %c0_2 = arith.constant 0 : index
    %c0_3 = arith.constant 0 : index
    %2 = vector.load %arg1[%c0_1, %c0_2, %c0_3] : memref<1x40x128xf32, #tpu.memory_space<vmem>>, vector<1x40x128xf32>
    %3 = vector.shape_cast %2 : vector<1x40x128xf32> to vector<40x128xf32>
    %4 = arith.truncf %3 : vector<40x128xf32> to vector<40x128xbf16>
    %cst = arith.constant dense<0.000000e+00> : vector<32x128xf32>
    %5 = tpu.matmul %1, %4, %cst {dimension_numbers = #tpu.dot_dimension_numbers<[1], [0], [0], [1], [0, 0, 1, 1], [], []>} : vector<32x40xbf16>, vector<40x128xbf16>, vector<32x128xf32> -> vector<32x128xf32>
    %c0_4 = arith.constant 0 : index
    %c0_5 = arith.constant 0 : index
    %6 = vector.load %arg5[%c0_4, %c0_5] : memref<32x1xf32, #tpu.memory_space<vmem>>, vector<32x1xf32>
    %7 = vector.broadcast %6 : vector<32x1xf32> to vector<32x128xf32>
    %8 = arith.addf %5, %7 : vector<32x128xf32>
    %c0_6 = arith.constant 0 : index
    %c0_7 = arith.constant 0 : index
    %c0_8 = arith.constant 0 : index
    %9 = vector.load %arg2[%c0_6, %c0_7, %c0_8] : memref<1x32x128xf32, #tpu.memory_space<vmem>>, vector<1x32x128xf32>
    %10 = vector.shape_cast %9 : vector<1x32x128xf32> to vector<32x128xf32>
    %11 = arith.truncf %10 : vector<32x128xf32> to vector<32x128xbf16>
    %c0_9 = arith.constant 0 : index
    %c0_10 = arith.constant 0 : index
    %12 = vector.load %arg3[%c0_9, %c0_10] : memref<128x128xbf16, #tpu.memory_space<vmem>>, vector<128x128xbf16>
    %cst_11 = arith.constant dense<0.000000e+00> : vector<32x128xf32>
    %13 = tpu.matmul %11, %12, %cst_11 {dimension_numbers = #tpu.dot_dimension_numbers<[1], [0], [0], [1], [0, 0, 1, 1], [], []>} : vector<32x128xbf16>, vector<128x128xbf16>, vector<32x128xf32> -> vector<32x128xf32>
    %14 = arith.addf %8, %13 : vector<32x128xf32>
    %c0_12 = arith.constant 0 : index
    %c0_13 = arith.constant 0 : index
    %c0_14 = arith.constant 0 : index
    %15 = vector.load %arg8[%c0_12, %c0_13, %c0_14] : memref<1x32x128xf32, #tpu.memory_space<vmem>>, vector<1x32x128xf32>
    %16 = vector.shape_cast %15 : vector<1x32x128xf32> to vector<32x128xf32>
    %17 = vector.shape_cast %14 : vector<32x128xf32> to vector<1x32x128xf32>
    tpu.vector_store %arg8[%c0_12, %c0_13, %c0_14], %17 {strides = array<i32>} : memref<1x32x128xf32, #tpu.memory_space<vmem>>, vector<1x32x128xf32>,
    %18 = tpu.iota {dimensions = array<i32: 1>} : vector<1x128xi32>
    %c3_i32 = arith.constant 3 : i32
    %19 = vector.broadcast %c3_i32 : i32 to vector<1x128xi32>
    %20 = arith.shrsi %18, %19 : vector<1x128xi32>
    %c7_i32 = arith.constant 7 : i32
    %21 = vector.broadcast %c7_i32 : i32 to vector<1x128xi32>
    %22 = arith.andi %18, %21 : vector<1x128xi32>
    %c-1_i32 = arith.constant -1 : i32
    %23 = vector.broadcast %c-1_i32 : i32 to vector<1x128xi32>
    %24 = arith.addi %20, %23 : vector<1x128xi32>
    %c0_i32 = arith.constant 0 : i32
    %25 = vector.broadcast %c0_i32 : i32 to vector<1x128xi32>
    %26 = arith.cmpi sge, %24, %25 : vector<1x128xi32>
    %c-1_i32_15 = arith.constant -1 : i32
    %27 = vector.broadcast %c-1_i32_15 : i32 to vector<1x128xi32>
    %28 = arith.addi %20, %27 : vector<1x128xi32>
    %c8_i32 = arith.constant 8 : i32
    %29 = vector.broadcast %c8_i32 : i32 to vector<1x128xi32>
    %30 = arith.cmpi slt, %28, %29 : vector<1x128xi32>
    %31 = arith.andi %26, %30 : vector<1x128xi1>
    %cst_16 = arith.constant 1.000000e+00 : f32
    %cst_17 = arith.constant 0.000000e+00 : f32
    %32 = vector.broadcast %cst_16 : f32 to vector<1x128xf32>
    %33 = vector.broadcast %cst_17 : f32 to vector<1x128xf32>
    %34 = arith.select %31, %32, %33 : vector<1x128xi1>, vector<1x128xf32>
    %c0_i32_18 = arith.constant 0 : i32
    %35 = vector.broadcast %c0_i32_18 : i32 to vector<1x128xi32>
    %36 = arith.addi %20, %35 : vector<1x128xi32>
    %c0_i32_19 = arith.constant 0 : i32
    %37 = vector.broadcast %c0_i32_19 : i32 to vector<1x128xi32>
    %38 = arith.cmpi sge, %36, %37 : vector<1x128xi32>
    %c0_i32_20 = arith.constant 0 : i32
    %39 = vector.broadcast %c0_i32_20 : i32 to vector<1x128xi32>
    %40 = arith.addi %20, %39 : vector<1x128xi32>
    %c8_i32_21 = arith.constant 8 : i32
    %41 = vector.broadcast %c8_i32_21 : i32 to vector<1x128xi32>
    %42 = arith.cmpi slt, %40, %41 : vector<1x128xi32>
    %43 = arith.andi %38, %42 : vector<1x128xi1>
    %cst_22 = arith.constant 1.000000e+00 : f32
    %cst_23 = arith.constant 0.000000e+00 : f32
    %44 = vector.broadcast %cst_22 : f32 to vector<1x128xf32>
    %45 = vector.broadcast %cst_23 : f32 to vector<1x128xf32>
    %46 = arith.select %43, %44, %45 : vector<1x128xi1>, vector<1x128xf32>
    %c1_i32 = arith.constant 1 : i32
    %47 = vector.broadcast %c1_i32 : i32 to vector<1x128xi32>
    %48 = arith.addi %20, %47 : vector<1x128xi32>
    %c0_i32_24 = arith.constant 0 : i32
    %49 = vector.broadcast %c0_i32_24 : i32 to vector<1x128xi32>
    %50 = arith.cmpi sge, %48, %49 : vector<1x128xi32>
    %c1_i32_25 = arith.constant 1 : i32
    %51 = vector.broadcast %c1_i32_25 : i32 to vector<1x128xi32>
    %52 = arith.addi %20, %51 : vector<1x128xi32>
    %c8_i32_26 = arith.constant 8 : i32
    %53 = vector.broadcast %c8_i32_26 : i32 to vector<1x128xi32>
    %54 = arith.cmpi slt, %52, %53 : vector<1x128xi32>
    %55 = arith.andi %50, %54 : vector<1x128xi1>
    %cst_27 = arith.constant 1.000000e+00 : f32
    %cst_28 = arith.constant 0.000000e+00 : f32
    %56 = vector.broadcast %cst_27 : f32 to vector<1x128xf32>
    %57 = vector.broadcast %cst_28 : f32 to vector<1x128xf32>
    %58 = arith.select %55, %56, %57 : vector<1x128xi1>, vector<1x128xf32>
    %c-1_i32_29 = arith.constant -1 : i32
    %59 = vector.broadcast %c-1_i32_29 : i32 to vector<1x128xi32>
    %60 = arith.addi %22, %59 : vector<1x128xi32>
    %c0_i32_30 = arith.constant 0 : i32
    %61 = vector.broadcast %c0_i32_30 : i32 to vector<1x128xi32>
    %62 = arith.cmpi sge, %60, %61 : vector<1x128xi32>
    %c-1_i32_31 = arith.constant -1 : i32
    %63 = vector.broadcast %c-1_i32_31 : i32 to vector<1x128xi32>
    %64 = arith.addi %22, %63 : vector<1x128xi32>
    %c8_i32_32 = arith.constant 8 : i32
    %65 = vector.broadcast %c8_i32_32 : i32 to vector<1x128xi32>
    %66 = arith.cmpi slt, %64, %65 : vector<1x128xi32>
    %67 = arith.andi %62, %66 : vector<1x128xi1>
    %cst_33 = arith.constant 1.000000e+00 : f32
    %cst_34 = arith.constant 0.000000e+00 : f32
    %68 = vector.broadcast %cst_33 : f32 to vector<1x128xf32>
    %69 = vector.broadcast %cst_34 : f32 to vector<1x128xf32>
    %70 = arith.select %67, %68, %69 : vector<1x128xi1>, vector<1x128xf32>
    %c0_i32_35 = arith.constant 0 : i32
    %71 = vector.broadcast %c0_i32_35 : i32 to vector<1x128xi32>
    %72 = arith.addi %22, %71 : vector<1x128xi32>
    %c0_i32_36 = arith.constant 0 : i32
    %73 = vector.broadcast %c0_i32_36 : i32 to vector<1x128xi32>
    %74 = arith.cmpi sge, %72, %73 : vector<1x128xi32>
    %c0_i32_37 = arith.constant 0 : i32
    %75 = vector.broadcast %c0_i32_37 : i32 to vector<1x128xi32>
    %76 = arith.addi %22, %75 : vector<1x128xi32>
    %c8_i32_38 = arith.constant 8 : i32
    %77 = vector.broadcast %c8_i32_38 : i32 to vector<1x128xi32>
    %78 = arith.cmpi slt, %76, %77 : vector<1x128xi32>
    %79 = arith.andi %74, %78 : vector<1x128xi1>
    %cst_39 = arith.constant 1.000000e+00 : f32
    %cst_40 = arith.constant 0.000000e+00 : f32
    %80 = vector.broadcast %cst_39 : f32 to vector<1x128xf32>
    %81 = vector.broadcast %cst_40 : f32 to vector<1x128xf32>
    %82 = arith.select %79, %80, %81 : vector<1x128xi1>, vector<1x128xf32>
    %c1_i32_41 = arith.constant 1 : i32
    %83 = vector.broadcast %c1_i32_41 : i32 to vector<1x128xi32>
    %84 = arith.addi %22, %83 : vector<1x128xi32>
    %c0_i32_42 = arith.constant 0 : i32
    %85 = vector.broadcast %c0_i32_42 : i32 to vector<1x128xi32>
    %86 = arith.cmpi sge, %84, %85 : vector<1x128xi32>
    %c1_i32_43 = arith.constant 1 : i32
    %87 = vector.broadcast %c1_i32_43 : i32 to vector<1x128xi32>
    %88 = arith.addi %22, %87 : vector<1x128xi32>
    %c8_i32_44 = arith.constant 8 : i32
    %89 = vector.broadcast %c8_i32_44 : i32 to vector<1x128xi32>
    %90 = arith.cmpi slt, %88, %89 : vector<1x128xi32>
    %91 = arith.andi %86, %90 : vector<1x128xi1>
    %cst_45 = arith.constant 1.000000e+00 : f32
    %cst_46 = arith.constant 0.000000e+00 : f32
    %92 = vector.broadcast %cst_45 : f32 to vector<1x128xf32>
    %93 = vector.broadcast %cst_46 : f32 to vector<1x128xf32>
    %94 = arith.select %91, %92, %93 : vector<1x128xi1>, vector<1x128xf32>
    %c9_i32 = arith.constant 9 : i32
    %95 = tpu.dynamic_rotate %14 by %c9_i32 dim 1 : vector<32x128xf32>, i32 -> vector<32x128xf32>
    %96 = arith.mulf %34, %70 : vector<1x128xf32>
    %97 = vector.broadcast %96 : vector<1x128xf32> to vector<32x128xf32>
    %98 = arith.mulf %95, %97 : vector<32x128xf32>
    %99 = arith.truncf %98 : vector<32x128xf32> to vector<32x128xbf16>
    %c0_47 = arith.constant 0 : index
    %c0_48 = arith.constant 0 : index
    %100 = vector.load %arg10[%c0_47, %c0_48] : memref<288x128xbf16, #tpu.memory_space<vmem>>, vector<32x128xbf16>
    tpu.vector_store %arg10[%c0_47, %c0_48], %99 {strides = array<i32>} : memref<288x128xbf16, #tpu.memory_space<vmem>>, vector<32x128xbf16>,
    %c8_i32_49 = arith.constant 8 : i32
    %101 = tpu.dynamic_rotate %14 by %c8_i32_49 dim 1 : vector<32x128xf32>, i32 -> vector<32x128xf32>
    %102 = arith.mulf %34, %82 : vector<1x128xf32>
    %103 = vector.broadcast %102 : vector<1x128xf32> to vector<32x128xf32>
    %104 = arith.mulf %101, %103 : vector<32x128xf32>
    %105 = arith.truncf %104 : vector<32x128xf32> to vector<32x128xbf16>
    %c32 = arith.constant 32 : index
    %c0_50 = arith.constant 0 : index
    %106 = vector.load %arg10[%c32, %c0_50] : memref<288x128xbf16, #tpu.memory_space<vmem>>, vector<32x128xbf16>
    tpu.vector_store %arg10[%c32, %c0_50], %105 {strides = array<i32>} : memref<288x128xbf16, #tpu.memory_space<vmem>>, vector<32x128xbf16>,
    %c7_i32_51 = arith.constant 7 : i32
    %107 = tpu.dynamic_rotate %14 by %c7_i32_51 dim 1 : vector<32x128xf32>, i32 -> vector<32x128xf32>
    %108 = arith.mulf %34, %94 : vector<1x128xf32>
    %109 = vector.broadcast %108 : vector<1x128xf32> to vector<32x128xf32>
    %110 = arith.mulf %107, %109 : vector<32x128xf32>
    %111 = arith.truncf %110 : vector<32x128xf32> to vector<32x128xbf16>
    %c64 = arith.constant 64 : index
    %c0_52 = arith.constant 0 : index
    %112 = vector.load %arg10[%c64, %c0_52] : memref<288x128xbf16, #tpu.memory_space<vmem>>, vector<32x128xbf16>
    tpu.vector_store %arg10[%c64, %c0_52], %111 {strides = array<i32>} : memref<288x128xbf16, #tpu.memory_space<vmem>>, vector<32x128xbf16>,
    %c1_i32_53 = arith.constant 1 : i32
    %113 = tpu.dynamic_rotate %14 by %c1_i32_53 dim 1 : vector<32x128xf32>, i32 -> vector<32x128xf32>
    %114 = arith.mulf %46, %70 : vector<1x128xf32>
    %115 = vector.broadcast %114 : vector<1x128xf32> to vector<32x128xf32>
    %116 = arith.mulf %113, %115 : vector<32x128xf32>
    %117 = arith.truncf %116 : vector<32x128xf32> to vector<32x128xbf16>
    %c96 = arith.constant 96 : index
    %c0_54 = arith.constant 0 : index
    %118 = vector.load %arg10[%c96, %c0_54] : memref<288x128xbf16, #tpu.memory_space<vmem>>, vector<32x128xbf16>
    tpu.vector_store %arg10[%c96, %c0_54], %117 {strides = array<i32>} : memref<288x128xbf16, #tpu.memory_space<vmem>>, vector<32x128xbf16>,
    %119 = arith.mulf %46, %82 : vector<1x128xf32>
    %120 = vector.broadcast %119 : vector<1x128xf32> to vector<32x128xf32>
    %121 = arith.mulf %14, %120 : vector<32x128xf32>
    %122 = arith.truncf %121 : vector<32x128xf32> to vector<32x128xbf16>
    %c128 = arith.constant 128 : index
    %c0_55 = arith.constant 0 : index
    %123 = vector.load %arg10[%c128, %c0_55] : memref<288x128xbf16, #tpu.memory_space<vmem>>, vector<32x128xbf16>
    tpu.vector_store %arg10[%c128, %c0_55], %122 {strides = array<i32>} : memref<288x128xbf16, #tpu.memory_space<vmem>>, vector<32x128xbf16>,
    %c127_i32 = arith.constant 127 : i32
    %124 = tpu.dynamic_rotate %14 by %c127_i32 dim 1 : vector<32x128xf32>, i32 -> vector<32x128xf32>
    %125 = arith.mulf %46, %94 : vector<1x128xf32>
    %126 = vector.broadcast %125 : vector<1x128xf32> to vector<32x128xf32>
    %127 = arith.mulf %124, %126 : vector<32x128xf32>
    %128 = arith.truncf %127 : vector<32x128xf32> to vector<32x128xbf16>
    %c160 = arith.constant 160 : index
    %c0_56 = arith.constant 0 : index
    %129 = vector.load %arg10[%c160, %c0_56] : memref<288x128xbf16, #tpu.memory_space<vmem>>, vector<32x128xbf16>
    tpu.vector_store %arg10[%c160, %c0_56], %128 {strides = array<i32>} : memref<288x128xbf16, #tpu.memory_space<vmem>>, vector<32x128xbf16>,
    %c121_i32 = arith.constant 121 : i32
    %130 = tpu.dynamic_rotate %14 by %c121_i32 dim 1 : vector<32x128xf32>, i32 -> vector<32x128xf32>
    %131 = arith.mulf %58, %70 : vector<1x128xf32>
    %132 = vector.broadcast %131 : vector<1x128xf32> to vector<32x128xf32>
    %133 = arith.mulf %130, %132 : vector<32x128xf32>
    %134 = arith.truncf %133 : vector<32x128xf32> to vector<32x128xbf16>
    %c192 = arith.constant 192 : index
    %c0_57 = arith.constant 0 : index
    %135 = vector.load %arg10[%c192, %c0_57] : memref<288x128xbf16, #tpu.memory_space<vmem>>, vector<32x128xbf16>
    tpu.vector_store %arg10[%c192, %c0_57], %134 {strides = array<i32>} : memref<288x128xbf16, #tpu.memory_space<vmem>>, vector<32x128xbf16>,
    %c120_i32 = arith.constant 120 : i32
    %136 = tpu.dynamic_rotate %14 by %c120_i32 dim 1 : vector<32x128xf32>, i32 -> vector<32x128xf32>
    %137 = arith.mulf %58, %82 : vector<1x128xf32>
    %138 = vector.broadcast %137 : vector<1x128xf32> to vector<32x128xf32>
    %139 = arith.mulf %136, %138 : vector<32x128xf32>
    %140 = arith.truncf %139 : vector<32x128xf32> to vector<32x128xbf16>
    %c224 = arith.constant 224 : index
    %c0_58 = arith.constant 0 : index
    %141 = vector.load %arg10[%c224, %c0_58] : memref<288x128xbf16, #tpu.memory_space<vmem>>, vector<32x128xbf16>
    tpu.vector_store %arg10[%c224, %c0_58], %140 {strides = array<i32>} : memref<288x128xbf16, #tpu.memory_space<vmem>>, vector<32x128xbf16>,
    %c119_i32 = arith.constant 119 : i32
    %142 = tpu.dynamic_rotate %14 by %c119_i32 dim 1 : vector<32x128xf32>, i32 -> vector<32x128xf32>
    %143 = arith.mulf %58, %94 : vector<1x128xf32>
    %144 = vector.broadcast %143 : vector<1x128xf32> to vector<32x128xf32>
    %145 = arith.mulf %142, %144 : vector<32x128xf32>
    %146 = arith.truncf %145 : vector<32x128xf32> to vector<32x128xbf16>
    %c256 = arith.constant 256 : index
    %c0_59 = arith.constant 0 : index
    %147 = vector.load %arg10[%c256, %c0_59] : memref<288x128xbf16, #tpu.memory_space<vmem>>, vector<32x128xbf16>
    tpu.vector_store %arg10[%c256, %c0_59], %146 {strides = array<i32>} : memref<288x128xbf16, #tpu.memory_space<vmem>>, vector<32x128xbf16>,
    %c0_60 = arith.constant 0 : index
    %c0_61 = arith.constant 0 : index
    %148 = vector.load %arg6[%c0_60, %c0_61] : memref<32x288xf32, #tpu.memory_space<vmem>>, vector<32x288xf32>
    %149 = arith.truncf %148 : vector<32x288xf32> to vector<32x288xbf16>
    %c0_62 = arith.constant 0 : index
    %c0_63 = arith.constant 0 : index
    %150 = vector.load %arg10[%c0_62, %c0_63] : memref<288x128xbf16, #tpu.memory_space<vmem>>, vector<288x128xbf16>
    %cst_64 = arith.constant dense<0.000000e+00> : vector<32x128xf32>
    %151 = tpu.matmul %149, %150, %cst_64 {dimension_numbers = #tpu.dot_dimension_numbers<[1], [0], [0], [1], [0, 0, 1, 1], [], []>} : vector<32x288xbf16>, vector<288x128xbf16>, vector<32x128xf32> -> vector<32x128xf32>
    %c0_65 = arith.constant 0 : index
    %c0_66 = arith.constant 0 : index
    %152 = vector.load %arg7[%c0_65, %c0_66] : memref<32x1xf32, #tpu.memory_space<vmem>>, vector<32x1xf32>
    %153 = vector.broadcast %152 : vector<32x1xf32> to vector<32x128xf32>
    %154 = arith.addf %151, %153 : vector<32x128xf32>
    %c0_67 = arith.constant 0 : index
    %c0_68 = arith.constant 0 : index
    %c0_69 = arith.constant 0 : index
    %155 = vector.load %arg9[%c0_67, %c0_68, %c0_69] : memref<1x32x128xf32, #tpu.memory_space<vmem>>, vector<1x32x128xf32>
    %156 = vector.shape_cast %155 : vector<1x32x128xf32> to vector<32x128xf32>
    %157 = vector.shape_cast %154 : vector<32x128xf32> to vector<1x32x128xf32>
    tpu.vector_store %arg9[%c0_67, %c0_68, %c0_69], %157 {strides = array<i32>} : memref<1x32x128xf32, #tpu.memory_space<vmem>>, vector<1x32x128xf32>,
    return
  }
  func.func @transform_0(%arg0: i32) -> (i32, i32, i32) {
    %c0_i32 = arith.constant 0 : i32
    %c0_i32_0 = arith.constant 0 : i32
    %c0_i32_1 = arith.constant 0 : i32
    return %arg0, %c0_i32, %c0_i32_0 : i32, i32, i32
  }
  func.func @transform_1(%arg0: i32) -> (i32, i32, i32) {
    %c0_i32 = arith.constant 0 : i32
    %c0_i32_0 = arith.constant 0 : i32
    %c0_i32_1 = arith.constant 0 : i32
    return %arg0, %c0_i32, %c0_i32_0 : i32, i32, i32
  }
  func.func @transform_2(%arg0: i32) -> (i32, i32) {
    %c0_i32 = arith.constant 0 : i32
    %c0_i32_0 = arith.constant 0 : i32
    %c0_i32_1 = arith.constant 0 : i32
    return %c0_i32, %c0_i32_0 : i32, i32
  }
  func.func @transform_3(%arg0: i32) -> (i32, i32) {
    %c0_i32 = arith.constant 0 : i32
    %c0_i32_0 = arith.constant 0 : i32
    %c0_i32_1 = arith.constant 0 : i32
    return %c0_i32, %c0_i32_0 : i32, i32
  }
  func.func @transform_4(%arg0: i32) -> (i32, i32) {
    %c0_i32 = arith.constant 0 : i32
    %c0_i32_0 = arith.constant 0 : i32
    %c0_i32_1 = arith.constant 0 : i32
    return %c0_i32, %c0_i32_0 : i32, i32
  }
  func.func @transform_5(%arg0: i32) -> (i32, i32) {
    %c0_i32 = arith.constant 0 : i32
    %c0_i32_0 = arith.constant 0 : i32
    %c0_i32_1 = arith.constant 0 : i32
    return %c0_i32, %c0_i32_0 : i32, i32
  }
  func.func @transform_6(%arg0: i32) -> (i32, i32) {
    %c0_i32 = arith.constant 0 : i32
    %c0_i32_0 = arith.constant 0 : i32
    %c0_i32_1 = arith.constant 0 : i32
    return %c0_i32, %c0_i32_0 : i32, i32
  }
  func.func @transform_7(%arg0: i32) -> (i32, i32, i32) {
    %c0_i32 = arith.constant 0 : i32
    %c0_i32_0 = arith.constant 0 : i32
    %c0_i32_1 = arith.constant 0 : i32
    return %arg0, %c0_i32, %c0_i32_0 : i32, i32, i32
  }
  func.func @transform_8(%arg0: i32) -> (i32, i32, i32) {
    %c0_i32 = arith.constant 0 : i32
    %c0_i32_0 = arith.constant 0 : i32
    %c0_i32_1 = arith.constant 0 : i32
    return %arg0, %c0_i32, %c0_i32_0 : i32, i32, i32
  }
}

module attributes {stable_mosaic.version = 11 : i64} {
  func.func @_fused_level_kernel(%arg0: i32, %arg1: memref<1x24x256xf32, #tpu.memory_space<vmem>>, %arg2: memref<1x32x128xf32, #tpu.memory_space<vmem>>, %arg3: memref<128x256xbf16, #tpu.memory_space<vmem>>, %arg4: memref<32x24xf32, #tpu.memory_space<vmem>>, %arg5: memref<32x1xf32, #tpu.memory_space<vmem>>, %arg6: memref<32x288xf32, #tpu.memory_space<vmem>>, %arg7: memref<32x1xf32, #tpu.memory_space<vmem>>, %arg8: memref<1x32x256xf32, #tpu.memory_space<vmem>>, %arg9: memref<1x32x256xf32, #tpu.memory_space<vmem>>, %arg10: memref<288x256xbf16, #tpu.memory_space<vmem>>) attributes {dimension_semantics = [#tpu.dimension_semantics<parallel>], iteration_bounds = array<i64: 2>, scalar_prefetch = 0 : i64, scratch_operands = 1 : i64, tpu.core_type = #tpu.core_type<tc>, window_params = [{transform_indices = @transform_0, window_bounds = array<i64: 1, 24, 256>}, {transform_indices = @transform_1, window_bounds = array<i64: 1, 32, 128>}, {pipeline_mode = #tpu.pipeline_mode<synchronous>, transform_indices = @transform_2, window_bounds = array<i64: 128, 256>}, {pipeline_mode = #tpu.pipeline_mode<synchronous>, transform_indices = @transform_3, window_bounds = array<i64: 32, 24>}, {pipeline_mode = #tpu.pipeline_mode<synchronous>, transform_indices = @transform_4, window_bounds = array<i64: 32, 1>}, {pipeline_mode = #tpu.pipeline_mode<synchronous>, transform_indices = @transform_5, window_bounds = array<i64: 32, 288>}, {pipeline_mode = #tpu.pipeline_mode<synchronous>, transform_indices = @transform_6, window_bounds = array<i64: 32, 1>}, {transform_indices = @transform_7, window_bounds = array<i64: 1, 32, 256>}, {transform_indices = @transform_8, window_bounds = array<i64: 1, 32, 256>}]} {
    %c0 = arith.constant 0 : index
    %c0_0 = arith.constant 0 : index
    %0 = vector.load %arg4[%c0, %c0_0] : memref<32x24xf32, #tpu.memory_space<vmem>>, vector<32x24xf32>
    %1 = arith.truncf %0 : vector<32x24xf32> to vector<32x24xbf16>
    %c0_1 = arith.constant 0 : index
    %c0_2 = arith.constant 0 : index
    %c0_3 = arith.constant 0 : index
    %2 = vector.load %arg1[%c0_1, %c0_2, %c0_3] : memref<1x24x256xf32, #tpu.memory_space<vmem>>, vector<1x24x256xf32>
    %3 = vector.shape_cast %2 : vector<1x24x256xf32> to vector<24x256xf32>
    %4 = arith.truncf %3 : vector<24x256xf32> to vector<24x256xbf16>
    %cst = arith.constant dense<0.000000e+00> : vector<32x256xf32>
    %5 = tpu.matmul %1, %4, %cst {dimension_numbers = #tpu.dot_dimension_numbers<[1], [0], [0], [1], [0, 0, 1, 1], [], []>} : vector<32x24xbf16>, vector<24x256xbf16>, vector<32x256xf32> -> vector<32x256xf32>
    %c0_4 = arith.constant 0 : index
    %c0_5 = arith.constant 0 : index
    %6 = vector.load %arg5[%c0_4, %c0_5] : memref<32x1xf32, #tpu.memory_space<vmem>>, vector<32x1xf32>
    %7 = vector.broadcast %6 : vector<32x1xf32> to vector<32x256xf32>
    %8 = arith.addf %5, %7 : vector<32x256xf32>
    %c0_6 = arith.constant 0 : index
    %c0_7 = arith.constant 0 : index
    %c0_8 = arith.constant 0 : index
    %9 = vector.load %arg2[%c0_6, %c0_7, %c0_8] : memref<1x32x128xf32, #tpu.memory_space<vmem>>, vector<1x32x128xf32>
    %10 = vector.shape_cast %9 : vector<1x32x128xf32> to vector<32x128xf32>
    %11 = arith.truncf %10 : vector<32x128xf32> to vector<32x128xbf16>
    %c0_9 = arith.constant 0 : index
    %c0_10 = arith.constant 0 : index
    %12 = vector.load %arg3[%c0_9, %c0_10] : memref<128x256xbf16, #tpu.memory_space<vmem>>, vector<128x256xbf16>
    %cst_11 = arith.constant dense<0.000000e+00> : vector<32x256xf32>
    %13 = tpu.matmul %11, %12, %cst_11 {dimension_numbers = #tpu.dot_dimension_numbers<[1], [0], [0], [1], [0, 0, 1, 1], [], []>} : vector<32x128xbf16>, vector<128x256xbf16>, vector<32x256xf32> -> vector<32x256xf32>
    %14 = arith.addf %8, %13 : vector<32x256xf32>
    %c0_12 = arith.constant 0 : index
    %c0_13 = arith.constant 0 : index
    %c0_14 = arith.constant 0 : index
    %15 = vector.load %arg8[%c0_12, %c0_13, %c0_14] : memref<1x32x256xf32, #tpu.memory_space<vmem>>, vector<1x32x256xf32>
    %16 = vector.shape_cast %15 : vector<1x32x256xf32> to vector<32x256xf32>
    %17 = vector.shape_cast %14 : vector<32x256xf32> to vector<1x32x256xf32>
    tpu.vector_store %arg8[%c0_12, %c0_13, %c0_14], %17 {strides = array<i32>} : memref<1x32x256xf32, #tpu.memory_space<vmem>>, vector<1x32x256xf32>,
    %18 = tpu.iota {dimensions = array<i32: 1>} : vector<1x256xi32>
    %c4_i32 = arith.constant 4 : i32
    %19 = vector.broadcast %c4_i32 : i32 to vector<1x256xi32>
    %20 = arith.shrsi %18, %19 : vector<1x256xi32>
    %c15_i32 = arith.constant 15 : i32
    %21 = vector.broadcast %c15_i32 : i32 to vector<1x256xi32>
    %22 = arith.andi %18, %21 : vector<1x256xi32>
    %c-1_i32 = arith.constant -1 : i32
    %23 = vector.broadcast %c-1_i32 : i32 to vector<1x256xi32>
    %24 = arith.addi %20, %23 : vector<1x256xi32>
    %c0_i32 = arith.constant 0 : i32
    %25 = vector.broadcast %c0_i32 : i32 to vector<1x256xi32>
    %26 = arith.cmpi sge, %24, %25 : vector<1x256xi32>
    %c-1_i32_15 = arith.constant -1 : i32
    %27 = vector.broadcast %c-1_i32_15 : i32 to vector<1x256xi32>
    %28 = arith.addi %20, %27 : vector<1x256xi32>
    %c16_i32 = arith.constant 16 : i32
    %29 = vector.broadcast %c16_i32 : i32 to vector<1x256xi32>
    %30 = arith.cmpi slt, %28, %29 : vector<1x256xi32>
    %31 = arith.andi %26, %30 : vector<1x256xi1>
    %cst_16 = arith.constant 1.000000e+00 : f32
    %cst_17 = arith.constant 0.000000e+00 : f32
    %32 = vector.broadcast %cst_16 : f32 to vector<1x256xf32>
    %33 = vector.broadcast %cst_17 : f32 to vector<1x256xf32>
    %34 = arith.select %31, %32, %33 : vector<1x256xi1>, vector<1x256xf32>
    %c0_i32_18 = arith.constant 0 : i32
    %35 = vector.broadcast %c0_i32_18 : i32 to vector<1x256xi32>
    %36 = arith.addi %20, %35 : vector<1x256xi32>
    %c0_i32_19 = arith.constant 0 : i32
    %37 = vector.broadcast %c0_i32_19 : i32 to vector<1x256xi32>
    %38 = arith.cmpi sge, %36, %37 : vector<1x256xi32>
    %c0_i32_20 = arith.constant 0 : i32
    %39 = vector.broadcast %c0_i32_20 : i32 to vector<1x256xi32>
    %40 = arith.addi %20, %39 : vector<1x256xi32>
    %c16_i32_21 = arith.constant 16 : i32
    %41 = vector.broadcast %c16_i32_21 : i32 to vector<1x256xi32>
    %42 = arith.cmpi slt, %40, %41 : vector<1x256xi32>
    %43 = arith.andi %38, %42 : vector<1x256xi1>
    %cst_22 = arith.constant 1.000000e+00 : f32
    %cst_23 = arith.constant 0.000000e+00 : f32
    %44 = vector.broadcast %cst_22 : f32 to vector<1x256xf32>
    %45 = vector.broadcast %cst_23 : f32 to vector<1x256xf32>
    %46 = arith.select %43, %44, %45 : vector<1x256xi1>, vector<1x256xf32>
    %c1_i32 = arith.constant 1 : i32
    %47 = vector.broadcast %c1_i32 : i32 to vector<1x256xi32>
    %48 = arith.addi %20, %47 : vector<1x256xi32>
    %c0_i32_24 = arith.constant 0 : i32
    %49 = vector.broadcast %c0_i32_24 : i32 to vector<1x256xi32>
    %50 = arith.cmpi sge, %48, %49 : vector<1x256xi32>
    %c1_i32_25 = arith.constant 1 : i32
    %51 = vector.broadcast %c1_i32_25 : i32 to vector<1x256xi32>
    %52 = arith.addi %20, %51 : vector<1x256xi32>
    %c16_i32_26 = arith.constant 16 : i32
    %53 = vector.broadcast %c16_i32_26 : i32 to vector<1x256xi32>
    %54 = arith.cmpi slt, %52, %53 : vector<1x256xi32>
    %55 = arith.andi %50, %54 : vector<1x256xi1>
    %cst_27 = arith.constant 1.000000e+00 : f32
    %cst_28 = arith.constant 0.000000e+00 : f32
    %56 = vector.broadcast %cst_27 : f32 to vector<1x256xf32>
    %57 = vector.broadcast %cst_28 : f32 to vector<1x256xf32>
    %58 = arith.select %55, %56, %57 : vector<1x256xi1>, vector<1x256xf32>
    %c-1_i32_29 = arith.constant -1 : i32
    %59 = vector.broadcast %c-1_i32_29 : i32 to vector<1x256xi32>
    %60 = arith.addi %22, %59 : vector<1x256xi32>
    %c0_i32_30 = arith.constant 0 : i32
    %61 = vector.broadcast %c0_i32_30 : i32 to vector<1x256xi32>
    %62 = arith.cmpi sge, %60, %61 : vector<1x256xi32>
    %c-1_i32_31 = arith.constant -1 : i32
    %63 = vector.broadcast %c-1_i32_31 : i32 to vector<1x256xi32>
    %64 = arith.addi %22, %63 : vector<1x256xi32>
    %c16_i32_32 = arith.constant 16 : i32
    %65 = vector.broadcast %c16_i32_32 : i32 to vector<1x256xi32>
    %66 = arith.cmpi slt, %64, %65 : vector<1x256xi32>
    %67 = arith.andi %62, %66 : vector<1x256xi1>
    %cst_33 = arith.constant 1.000000e+00 : f32
    %cst_34 = arith.constant 0.000000e+00 : f32
    %68 = vector.broadcast %cst_33 : f32 to vector<1x256xf32>
    %69 = vector.broadcast %cst_34 : f32 to vector<1x256xf32>
    %70 = arith.select %67, %68, %69 : vector<1x256xi1>, vector<1x256xf32>
    %c0_i32_35 = arith.constant 0 : i32
    %71 = vector.broadcast %c0_i32_35 : i32 to vector<1x256xi32>
    %72 = arith.addi %22, %71 : vector<1x256xi32>
    %c0_i32_36 = arith.constant 0 : i32
    %73 = vector.broadcast %c0_i32_36 : i32 to vector<1x256xi32>
    %74 = arith.cmpi sge, %72, %73 : vector<1x256xi32>
    %c0_i32_37 = arith.constant 0 : i32
    %75 = vector.broadcast %c0_i32_37 : i32 to vector<1x256xi32>
    %76 = arith.addi %22, %75 : vector<1x256xi32>
    %c16_i32_38 = arith.constant 16 : i32
    %77 = vector.broadcast %c16_i32_38 : i32 to vector<1x256xi32>
    %78 = arith.cmpi slt, %76, %77 : vector<1x256xi32>
    %79 = arith.andi %74, %78 : vector<1x256xi1>
    %cst_39 = arith.constant 1.000000e+00 : f32
    %cst_40 = arith.constant 0.000000e+00 : f32
    %80 = vector.broadcast %cst_39 : f32 to vector<1x256xf32>
    %81 = vector.broadcast %cst_40 : f32 to vector<1x256xf32>
    %82 = arith.select %79, %80, %81 : vector<1x256xi1>, vector<1x256xf32>
    %c1_i32_41 = arith.constant 1 : i32
    %83 = vector.broadcast %c1_i32_41 : i32 to vector<1x256xi32>
    %84 = arith.addi %22, %83 : vector<1x256xi32>
    %c0_i32_42 = arith.constant 0 : i32
    %85 = vector.broadcast %c0_i32_42 : i32 to vector<1x256xi32>
    %86 = arith.cmpi sge, %84, %85 : vector<1x256xi32>
    %c1_i32_43 = arith.constant 1 : i32
    %87 = vector.broadcast %c1_i32_43 : i32 to vector<1x256xi32>
    %88 = arith.addi %22, %87 : vector<1x256xi32>
    %c16_i32_44 = arith.constant 16 : i32
    %89 = vector.broadcast %c16_i32_44 : i32 to vector<1x256xi32>
    %90 = arith.cmpi slt, %88, %89 : vector<1x256xi32>
    %91 = arith.andi %86, %90 : vector<1x256xi1>
    %cst_45 = arith.constant 1.000000e+00 : f32
    %cst_46 = arith.constant 0.000000e+00 : f32
    %92 = vector.broadcast %cst_45 : f32 to vector<1x256xf32>
    %93 = vector.broadcast %cst_46 : f32 to vector<1x256xf32>
    %94 = arith.select %91, %92, %93 : vector<1x256xi1>, vector<1x256xf32>
    %c17_i32 = arith.constant 17 : i32
    %95 = tpu.dynamic_rotate %14 by %c17_i32 dim 1 : vector<32x256xf32>, i32 -> vector<32x256xf32>
    %96 = arith.mulf %34, %70 : vector<1x256xf32>
    %97 = vector.broadcast %96 : vector<1x256xf32> to vector<32x256xf32>
    %98 = arith.mulf %95, %97 : vector<32x256xf32>
    %99 = arith.truncf %98 : vector<32x256xf32> to vector<32x256xbf16>
    %c0_47 = arith.constant 0 : index
    %c0_48 = arith.constant 0 : index
    %100 = vector.load %arg10[%c0_47, %c0_48] : memref<288x256xbf16, #tpu.memory_space<vmem>>, vector<32x256xbf16>
    tpu.vector_store %arg10[%c0_47, %c0_48], %99 {strides = array<i32>} : memref<288x256xbf16, #tpu.memory_space<vmem>>, vector<32x256xbf16>,
    %c16_i32_49 = arith.constant 16 : i32
    %101 = tpu.dynamic_rotate %14 by %c16_i32_49 dim 1 : vector<32x256xf32>, i32 -> vector<32x256xf32>
    %102 = arith.mulf %34, %82 : vector<1x256xf32>
    %103 = vector.broadcast %102 : vector<1x256xf32> to vector<32x256xf32>
    %104 = arith.mulf %101, %103 : vector<32x256xf32>
    %105 = arith.truncf %104 : vector<32x256xf32> to vector<32x256xbf16>
    %c32 = arith.constant 32 : index
    %c0_50 = arith.constant 0 : index
    %106 = vector.load %arg10[%c32, %c0_50] : memref<288x256xbf16, #tpu.memory_space<vmem>>, vector<32x256xbf16>
    tpu.vector_store %arg10[%c32, %c0_50], %105 {strides = array<i32>} : memref<288x256xbf16, #tpu.memory_space<vmem>>, vector<32x256xbf16>,
    %c15_i32_51 = arith.constant 15 : i32
    %107 = tpu.dynamic_rotate %14 by %c15_i32_51 dim 1 : vector<32x256xf32>, i32 -> vector<32x256xf32>
    %108 = arith.mulf %34, %94 : vector<1x256xf32>
    %109 = vector.broadcast %108 : vector<1x256xf32> to vector<32x256xf32>
    %110 = arith.mulf %107, %109 : vector<32x256xf32>
    %111 = arith.truncf %110 : vector<32x256xf32> to vector<32x256xbf16>
    %c64 = arith.constant 64 : index
    %c0_52 = arith.constant 0 : index
    %112 = vector.load %arg10[%c64, %c0_52] : memref<288x256xbf16, #tpu.memory_space<vmem>>, vector<32x256xbf16>
    tpu.vector_store %arg10[%c64, %c0_52], %111 {strides = array<i32>} : memref<288x256xbf16, #tpu.memory_space<vmem>>, vector<32x256xbf16>,
    %c1_i32_53 = arith.constant 1 : i32
    %113 = tpu.dynamic_rotate %14 by %c1_i32_53 dim 1 : vector<32x256xf32>, i32 -> vector<32x256xf32>
    %114 = arith.mulf %46, %70 : vector<1x256xf32>
    %115 = vector.broadcast %114 : vector<1x256xf32> to vector<32x256xf32>
    %116 = arith.mulf %113, %115 : vector<32x256xf32>
    %117 = arith.truncf %116 : vector<32x256xf32> to vector<32x256xbf16>
    %c96 = arith.constant 96 : index
    %c0_54 = arith.constant 0 : index
    %118 = vector.load %arg10[%c96, %c0_54] : memref<288x256xbf16, #tpu.memory_space<vmem>>, vector<32x256xbf16>
    tpu.vector_store %arg10[%c96, %c0_54], %117 {strides = array<i32>} : memref<288x256xbf16, #tpu.memory_space<vmem>>, vector<32x256xbf16>,
    %119 = arith.mulf %46, %82 : vector<1x256xf32>
    %120 = vector.broadcast %119 : vector<1x256xf32> to vector<32x256xf32>
    %121 = arith.mulf %14, %120 : vector<32x256xf32>
    %122 = arith.truncf %121 : vector<32x256xf32> to vector<32x256xbf16>
    %c128 = arith.constant 128 : index
    %c0_55 = arith.constant 0 : index
    %123 = vector.load %arg10[%c128, %c0_55] : memref<288x256xbf16, #tpu.memory_space<vmem>>, vector<32x256xbf16>
    tpu.vector_store %arg10[%c128, %c0_55], %122 {strides = array<i32>} : memref<288x256xbf16, #tpu.memory_space<vmem>>, vector<32x256xbf16>,
    %c255_i32 = arith.constant 255 : i32
    %124 = tpu.dynamic_rotate %14 by %c255_i32 dim 1 : vector<32x256xf32>, i32 -> vector<32x256xf32>
    %125 = arith.mulf %46, %94 : vector<1x256xf32>
    %126 = vector.broadcast %125 : vector<1x256xf32> to vector<32x256xf32>
    %127 = arith.mulf %124, %126 : vector<32x256xf32>
    %128 = arith.truncf %127 : vector<32x256xf32> to vector<32x256xbf16>
    %c160 = arith.constant 160 : index
    %c0_56 = arith.constant 0 : index
    %129 = vector.load %arg10[%c160, %c0_56] : memref<288x256xbf16, #tpu.memory_space<vmem>>, vector<32x256xbf16>
    tpu.vector_store %arg10[%c160, %c0_56], %128 {strides = array<i32>} : memref<288x256xbf16, #tpu.memory_space<vmem>>, vector<32x256xbf16>,
    %c241_i32 = arith.constant 241 : i32
    %130 = tpu.dynamic_rotate %14 by %c241_i32 dim 1 : vector<32x256xf32>, i32 -> vector<32x256xf32>
    %131 = arith.mulf %58, %70 : vector<1x256xf32>
    %132 = vector.broadcast %131 : vector<1x256xf32> to vector<32x256xf32>
    %133 = arith.mulf %130, %132 : vector<32x256xf32>
    %134 = arith.truncf %133 : vector<32x256xf32> to vector<32x256xbf16>
    %c192 = arith.constant 192 : index
    %c0_57 = arith.constant 0 : index
    %135 = vector.load %arg10[%c192, %c0_57] : memref<288x256xbf16, #tpu.memory_space<vmem>>, vector<32x256xbf16>
    tpu.vector_store %arg10[%c192, %c0_57], %134 {strides = array<i32>} : memref<288x256xbf16, #tpu.memory_space<vmem>>, vector<32x256xbf16>,
    %c240_i32 = arith.constant 240 : i32
    %136 = tpu.dynamic_rotate %14 by %c240_i32 dim 1 : vector<32x256xf32>, i32 -> vector<32x256xf32>
    %137 = arith.mulf %58, %82 : vector<1x256xf32>
    %138 = vector.broadcast %137 : vector<1x256xf32> to vector<32x256xf32>
    %139 = arith.mulf %136, %138 : vector<32x256xf32>
    %140 = arith.truncf %139 : vector<32x256xf32> to vector<32x256xbf16>
    %c224 = arith.constant 224 : index
    %c0_58 = arith.constant 0 : index
    %141 = vector.load %arg10[%c224, %c0_58] : memref<288x256xbf16, #tpu.memory_space<vmem>>, vector<32x256xbf16>
    tpu.vector_store %arg10[%c224, %c0_58], %140 {strides = array<i32>} : memref<288x256xbf16, #tpu.memory_space<vmem>>, vector<32x256xbf16>,
    %c239_i32 = arith.constant 239 : i32
    %142 = tpu.dynamic_rotate %14 by %c239_i32 dim 1 : vector<32x256xf32>, i32 -> vector<32x256xf32>
    %143 = arith.mulf %58, %94 : vector<1x256xf32>
    %144 = vector.broadcast %143 : vector<1x256xf32> to vector<32x256xf32>
    %145 = arith.mulf %142, %144 : vector<32x256xf32>
    %146 = arith.truncf %145 : vector<32x256xf32> to vector<32x256xbf16>
    %c256 = arith.constant 256 : index
    %c0_59 = arith.constant 0 : index
    %147 = vector.load %arg10[%c256, %c0_59] : memref<288x256xbf16, #tpu.memory_space<vmem>>, vector<32x256xbf16>
    tpu.vector_store %arg10[%c256, %c0_59], %146 {strides = array<i32>} : memref<288x256xbf16, #tpu.memory_space<vmem>>, vector<32x256xbf16>,
    %c0_60 = arith.constant 0 : index
    %c0_61 = arith.constant 0 : index
    %148 = vector.load %arg6[%c0_60, %c0_61] : memref<32x288xf32, #tpu.memory_space<vmem>>, vector<32x288xf32>
    %149 = arith.truncf %148 : vector<32x288xf32> to vector<32x288xbf16>
    %c0_62 = arith.constant 0 : index
    %c0_63 = arith.constant 0 : index
    %150 = vector.load %arg10[%c0_62, %c0_63] : memref<288x256xbf16, #tpu.memory_space<vmem>>, vector<288x256xbf16>
    %cst_64 = arith.constant dense<0.000000e+00> : vector<32x256xf32>
    %151 = tpu.matmul %149, %150, %cst_64 {dimension_numbers = #tpu.dot_dimension_numbers<[1], [0], [0], [1], [0, 0, 1, 1], [], []>} : vector<32x288xbf16>, vector<288x256xbf16>, vector<32x256xf32> -> vector<32x256xf32>
    %c0_65 = arith.constant 0 : index
    %c0_66 = arith.constant 0 : index
    %152 = vector.load %arg7[%c0_65, %c0_66] : memref<32x1xf32, #tpu.memory_space<vmem>>, vector<32x1xf32>
    %153 = vector.broadcast %152 : vector<32x1xf32> to vector<32x256xf32>
    %154 = arith.addf %151, %153 : vector<32x256xf32>
    %c0_67 = arith.constant 0 : index
    %c0_68 = arith.constant 0 : index
    %c0_69 = arith.constant 0 : index
    %155 = vector.load %arg9[%c0_67, %c0_68, %c0_69] : memref<1x32x256xf32, #tpu.memory_space<vmem>>, vector<1x32x256xf32>
    %156 = vector.shape_cast %155 : vector<1x32x256xf32> to vector<32x256xf32>
    %157 = vector.shape_cast %154 : vector<32x256xf32> to vector<1x32x256xf32>
    tpu.vector_store %arg9[%c0_67, %c0_68, %c0_69], %157 {strides = array<i32>} : memref<1x32x256xf32, #tpu.memory_space<vmem>>, vector<1x32x256xf32>,
    return
  }
  func.func @transform_0(%arg0: i32) -> (i32, i32, i32) {
    %c0_i32 = arith.constant 0 : i32
    %c0_i32_0 = arith.constant 0 : i32
    %c0_i32_1 = arith.constant 0 : i32
    return %arg0, %c0_i32, %c0_i32_0 : i32, i32, i32
  }
  func.func @transform_1(%arg0: i32) -> (i32, i32, i32) {
    %c0_i32 = arith.constant 0 : i32
    %c0_i32_0 = arith.constant 0 : i32
    %c0_i32_1 = arith.constant 0 : i32
    return %arg0, %c0_i32, %c0_i32_0 : i32, i32, i32
  }
  func.func @transform_2(%arg0: i32) -> (i32, i32) {
    %c0_i32 = arith.constant 0 : i32
    %c0_i32_0 = arith.constant 0 : i32
    %c0_i32_1 = arith.constant 0 : i32
    return %c0_i32, %c0_i32_0 : i32, i32
  }
  func.func @transform_3(%arg0: i32) -> (i32, i32) {
    %c0_i32 = arith.constant 0 : i32
    %c0_i32_0 = arith.constant 0 : i32
    %c0_i32_1 = arith.constant 0 : i32
    return %c0_i32, %c0_i32_0 : i32, i32
  }
  func.func @transform_4(%arg0: i32) -> (i32, i32) {
    %c0_i32 = arith.constant 0 : i32
    %c0_i32_0 = arith.constant 0 : i32
    %c0_i32_1 = arith.constant 0 : i32
    return %c0_i32, %c0_i32_0 : i32, i32
  }
  func.func @transform_5(%arg0: i32) -> (i32, i32) {
    %c0_i32 = arith.constant 0 : i32
    %c0_i32_0 = arith.constant 0 : i32
    %c0_i32_1 = arith.constant 0 : i32
    return %c0_i32, %c0_i32_0 : i32, i32
  }
  func.func @transform_6(%arg0: i32) -> (i32, i32) {
    %c0_i32 = arith.constant 0 : i32
    %c0_i32_0 = arith.constant 0 : i32
    %c0_i32_1 = arith.constant 0 : i32
    return %c0_i32, %c0_i32_0 : i32, i32
  }
  func.func @transform_7(%arg0: i32) -> (i32, i32, i32) {
    %c0_i32 = arith.constant 0 : i32
    %c0_i32_0 = arith.constant 0 : i32
    %c0_i32_1 = arith.constant 0 : i32
    return %arg0, %c0_i32, %c0_i32_0 : i32, i32, i32
  }
  func.func @transform_8(%arg0: i32) -> (i32, i32, i32) {
    %c0_i32 = arith.constant 0 : i32
    %c0_i32_0 = arith.constant 0 : i32
    %c0_i32_1 = arith.constant 0 : i32
    return %arg0, %c0_i32, %c0_i32_0 : i32, i32, i32
  }
}

module attributes {stable_mosaic.version = 11 : i64} {
  func.func @_fused_level_kernel(%arg0: i32, %arg1: memref<1x16x1024xf32, #tpu.memory_space<vmem>>, %arg2: memref<1x32x256xf32, #tpu.memory_space<vmem>>, %arg3: memref<256x1024xbf16, #tpu.memory_space<vmem>>, %arg4: memref<32x16xf32, #tpu.memory_space<vmem>>, %arg5: memref<32x1xf32, #tpu.memory_space<vmem>>, %arg6: memref<32x288xf32, #tpu.memory_space<vmem>>, %arg7: memref<32x1xf32, #tpu.memory_space<vmem>>, %arg8: memref<1x32x1024xf32, #tpu.memory_space<vmem>>, %arg9: memref<1x32x1024xf32, #tpu.memory_space<vmem>>, %arg10: memref<288x1024xbf16, #tpu.memory_space<vmem>>) attributes {dimension_semantics = [#tpu.dimension_semantics<parallel>], iteration_bounds = array<i64: 2>, scalar_prefetch = 0 : i64, scratch_operands = 1 : i64, tpu.core_type = #tpu.core_type<tc>, window_params = [{transform_indices = @transform_0, window_bounds = array<i64: 1, 16, 1024>}, {transform_indices = @transform_1, window_bounds = array<i64: 1, 32, 256>}, {pipeline_mode = #tpu.pipeline_mode<synchronous>, transform_indices = @transform_2, window_bounds = array<i64: 256, 1024>}, {pipeline_mode = #tpu.pipeline_mode<synchronous>, transform_indices = @transform_3, window_bounds = array<i64: 32, 16>}, {pipeline_mode = #tpu.pipeline_mode<synchronous>, transform_indices = @transform_4, window_bounds = array<i64: 32, 1>}, {pipeline_mode = #tpu.pipeline_mode<synchronous>, transform_indices = @transform_5, window_bounds = array<i64: 32, 288>}, {pipeline_mode = #tpu.pipeline_mode<synchronous>, transform_indices = @transform_6, window_bounds = array<i64: 32, 1>}, {transform_indices = @transform_7, window_bounds = array<i64: 1, 32, 1024>}, {transform_indices = @transform_8, window_bounds = array<i64: 1, 32, 1024>}]} {
    %c0 = arith.constant 0 : index
    %c0_0 = arith.constant 0 : index
    %0 = vector.load %arg4[%c0, %c0_0] : memref<32x16xf32, #tpu.memory_space<vmem>>, vector<32x16xf32>
    %1 = arith.truncf %0 : vector<32x16xf32> to vector<32x16xbf16>
    %c0_1 = arith.constant 0 : index
    %c0_2 = arith.constant 0 : index
    %c0_3 = arith.constant 0 : index
    %2 = vector.load %arg1[%c0_1, %c0_2, %c0_3] : memref<1x16x1024xf32, #tpu.memory_space<vmem>>, vector<1x16x1024xf32>
    %3 = vector.shape_cast %2 : vector<1x16x1024xf32> to vector<16x1024xf32>
    %4 = arith.truncf %3 : vector<16x1024xf32> to vector<16x1024xbf16>
    %cst = arith.constant dense<0.000000e+00> : vector<32x1024xf32>
    %5 = tpu.matmul %1, %4, %cst {dimension_numbers = #tpu.dot_dimension_numbers<[1], [0], [0], [1], [0, 0, 1, 1], [], []>} : vector<32x16xbf16>, vector<16x1024xbf16>, vector<32x1024xf32> -> vector<32x1024xf32>
    %c0_4 = arith.constant 0 : index
    %c0_5 = arith.constant 0 : index
    %6 = vector.load %arg5[%c0_4, %c0_5] : memref<32x1xf32, #tpu.memory_space<vmem>>, vector<32x1xf32>
    %7 = vector.broadcast %6 : vector<32x1xf32> to vector<32x1024xf32>
    %8 = arith.addf %5, %7 : vector<32x1024xf32>
    %c0_6 = arith.constant 0 : index
    %c0_7 = arith.constant 0 : index
    %c0_8 = arith.constant 0 : index
    %9 = vector.load %arg2[%c0_6, %c0_7, %c0_8] : memref<1x32x256xf32, #tpu.memory_space<vmem>>, vector<1x32x256xf32>
    %10 = vector.shape_cast %9 : vector<1x32x256xf32> to vector<32x256xf32>
    %11 = arith.truncf %10 : vector<32x256xf32> to vector<32x256xbf16>
    %c0_9 = arith.constant 0 : index
    %c0_10 = arith.constant 0 : index
    %12 = vector.load %arg3[%c0_9, %c0_10] : memref<256x1024xbf16, #tpu.memory_space<vmem>>, vector<256x1024xbf16>
    %cst_11 = arith.constant dense<0.000000e+00> : vector<32x1024xf32>
    %13 = tpu.matmul %11, %12, %cst_11 {dimension_numbers = #tpu.dot_dimension_numbers<[1], [0], [0], [1], [0, 0, 1, 1], [], []>} : vector<32x256xbf16>, vector<256x1024xbf16>, vector<32x1024xf32> -> vector<32x1024xf32>
    %14 = arith.addf %8, %13 : vector<32x1024xf32>
    %c0_12 = arith.constant 0 : index
    %c0_13 = arith.constant 0 : index
    %c0_14 = arith.constant 0 : index
    %15 = vector.load %arg8[%c0_12, %c0_13, %c0_14] : memref<1x32x1024xf32, #tpu.memory_space<vmem>>, vector<1x32x1024xf32>
    %16 = vector.shape_cast %15 : vector<1x32x1024xf32> to vector<32x1024xf32>
    %17 = vector.shape_cast %14 : vector<32x1024xf32> to vector<1x32x1024xf32>
    tpu.vector_store %arg8[%c0_12, %c0_13, %c0_14], %17 {strides = array<i32>} : memref<1x32x1024xf32, #tpu.memory_space<vmem>>, vector<1x32x1024xf32>,
    %18 = tpu.iota {dimensions = array<i32: 1>} : vector<1x1024xi32>
    %c5_i32 = arith.constant 5 : i32
    %19 = vector.broadcast %c5_i32 : i32 to vector<1x1024xi32>
    %20 = arith.shrsi %18, %19 : vector<1x1024xi32>
    %c31_i32 = arith.constant 31 : i32
    %21 = vector.broadcast %c31_i32 : i32 to vector<1x1024xi32>
    %22 = arith.andi %18, %21 : vector<1x1024xi32>
    %c-1_i32 = arith.constant -1 : i32
    %23 = vector.broadcast %c-1_i32 : i32 to vector<1x1024xi32>
    %24 = arith.addi %20, %23 : vector<1x1024xi32>
    %c0_i32 = arith.constant 0 : i32
    %25 = vector.broadcast %c0_i32 : i32 to vector<1x1024xi32>
    %26 = arith.cmpi sge, %24, %25 : vector<1x1024xi32>
    %c-1_i32_15 = arith.constant -1 : i32
    %27 = vector.broadcast %c-1_i32_15 : i32 to vector<1x1024xi32>
    %28 = arith.addi %20, %27 : vector<1x1024xi32>
    %c32_i32 = arith.constant 32 : i32
    %29 = vector.broadcast %c32_i32 : i32 to vector<1x1024xi32>
    %30 = arith.cmpi slt, %28, %29 : vector<1x1024xi32>
    %31 = arith.andi %26, %30 : vector<1x1024xi1>
    %cst_16 = arith.constant 1.000000e+00 : f32
    %cst_17 = arith.constant 0.000000e+00 : f32
    %32 = vector.broadcast %cst_16 : f32 to vector<1x1024xf32>
    %33 = vector.broadcast %cst_17 : f32 to vector<1x1024xf32>
    %34 = arith.select %31, %32, %33 : vector<1x1024xi1>, vector<1x1024xf32>
    %c0_i32_18 = arith.constant 0 : i32
    %35 = vector.broadcast %c0_i32_18 : i32 to vector<1x1024xi32>
    %36 = arith.addi %20, %35 : vector<1x1024xi32>
    %c0_i32_19 = arith.constant 0 : i32
    %37 = vector.broadcast %c0_i32_19 : i32 to vector<1x1024xi32>
    %38 = arith.cmpi sge, %36, %37 : vector<1x1024xi32>
    %c0_i32_20 = arith.constant 0 : i32
    %39 = vector.broadcast %c0_i32_20 : i32 to vector<1x1024xi32>
    %40 = arith.addi %20, %39 : vector<1x1024xi32>
    %c32_i32_21 = arith.constant 32 : i32
    %41 = vector.broadcast %c32_i32_21 : i32 to vector<1x1024xi32>
    %42 = arith.cmpi slt, %40, %41 : vector<1x1024xi32>
    %43 = arith.andi %38, %42 : vector<1x1024xi1>
    %cst_22 = arith.constant 1.000000e+00 : f32
    %cst_23 = arith.constant 0.000000e+00 : f32
    %44 = vector.broadcast %cst_22 : f32 to vector<1x1024xf32>
    %45 = vector.broadcast %cst_23 : f32 to vector<1x1024xf32>
    %46 = arith.select %43, %44, %45 : vector<1x1024xi1>, vector<1x1024xf32>
    %c1_i32 = arith.constant 1 : i32
    %47 = vector.broadcast %c1_i32 : i32 to vector<1x1024xi32>
    %48 = arith.addi %20, %47 : vector<1x1024xi32>
    %c0_i32_24 = arith.constant 0 : i32
    %49 = vector.broadcast %c0_i32_24 : i32 to vector<1x1024xi32>
    %50 = arith.cmpi sge, %48, %49 : vector<1x1024xi32>
    %c1_i32_25 = arith.constant 1 : i32
    %51 = vector.broadcast %c1_i32_25 : i32 to vector<1x1024xi32>
    %52 = arith.addi %20, %51 : vector<1x1024xi32>
    %c32_i32_26 = arith.constant 32 : i32
    %53 = vector.broadcast %c32_i32_26 : i32 to vector<1x1024xi32>
    %54 = arith.cmpi slt, %52, %53 : vector<1x1024xi32>
    %55 = arith.andi %50, %54 : vector<1x1024xi1>
    %cst_27 = arith.constant 1.000000e+00 : f32
    %cst_28 = arith.constant 0.000000e+00 : f32
    %56 = vector.broadcast %cst_27 : f32 to vector<1x1024xf32>
    %57 = vector.broadcast %cst_28 : f32 to vector<1x1024xf32>
    %58 = arith.select %55, %56, %57 : vector<1x1024xi1>, vector<1x1024xf32>
    %c-1_i32_29 = arith.constant -1 : i32
    %59 = vector.broadcast %c-1_i32_29 : i32 to vector<1x1024xi32>
    %60 = arith.addi %22, %59 : vector<1x1024xi32>
    %c0_i32_30 = arith.constant 0 : i32
    %61 = vector.broadcast %c0_i32_30 : i32 to vector<1x1024xi32>
    %62 = arith.cmpi sge, %60, %61 : vector<1x1024xi32>
    %c-1_i32_31 = arith.constant -1 : i32
    %63 = vector.broadcast %c-1_i32_31 : i32 to vector<1x1024xi32>
    %64 = arith.addi %22, %63 : vector<1x1024xi32>
    %c32_i32_32 = arith.constant 32 : i32
    %65 = vector.broadcast %c32_i32_32 : i32 to vector<1x1024xi32>
    %66 = arith.cmpi slt, %64, %65 : vector<1x1024xi32>
    %67 = arith.andi %62, %66 : vector<1x1024xi1>
    %cst_33 = arith.constant 1.000000e+00 : f32
    %cst_34 = arith.constant 0.000000e+00 : f32
    %68 = vector.broadcast %cst_33 : f32 to vector<1x1024xf32>
    %69 = vector.broadcast %cst_34 : f32 to vector<1x1024xf32>
    %70 = arith.select %67, %68, %69 : vector<1x1024xi1>, vector<1x1024xf32>
    %c0_i32_35 = arith.constant 0 : i32
    %71 = vector.broadcast %c0_i32_35 : i32 to vector<1x1024xi32>
    %72 = arith.addi %22, %71 : vector<1x1024xi32>
    %c0_i32_36 = arith.constant 0 : i32
    %73 = vector.broadcast %c0_i32_36 : i32 to vector<1x1024xi32>
    %74 = arith.cmpi sge, %72, %73 : vector<1x1024xi32>
    %c0_i32_37 = arith.constant 0 : i32
    %75 = vector.broadcast %c0_i32_37 : i32 to vector<1x1024xi32>
    %76 = arith.addi %22, %75 : vector<1x1024xi32>
    %c32_i32_38 = arith.constant 32 : i32
    %77 = vector.broadcast %c32_i32_38 : i32 to vector<1x1024xi32>
    %78 = arith.cmpi slt, %76, %77 : vector<1x1024xi32>
    %79 = arith.andi %74, %78 : vector<1x1024xi1>
    %cst_39 = arith.constant 1.000000e+00 : f32
    %cst_40 = arith.constant 0.000000e+00 : f32
    %80 = vector.broadcast %cst_39 : f32 to vector<1x1024xf32>
    %81 = vector.broadcast %cst_40 : f32 to vector<1x1024xf32>
    %82 = arith.select %79, %80, %81 : vector<1x1024xi1>, vector<1x1024xf32>
    %c1_i32_41 = arith.constant 1 : i32
    %83 = vector.broadcast %c1_i32_41 : i32 to vector<1x1024xi32>
    %84 = arith.addi %22, %83 : vector<1x1024xi32>
    %c0_i32_42 = arith.constant 0 : i32
    %85 = vector.broadcast %c0_i32_42 : i32 to vector<1x1024xi32>
    %86 = arith.cmpi sge, %84, %85 : vector<1x1024xi32>
    %c1_i32_43 = arith.constant 1 : i32
    %87 = vector.broadcast %c1_i32_43 : i32 to vector<1x1024xi32>
    %88 = arith.addi %22, %87 : vector<1x1024xi32>
    %c32_i32_44 = arith.constant 32 : i32
    %89 = vector.broadcast %c32_i32_44 : i32 to vector<1x1024xi32>
    %90 = arith.cmpi slt, %88, %89 : vector<1x1024xi32>
    %91 = arith.andi %86, %90 : vector<1x1024xi1>
    %cst_45 = arith.constant 1.000000e+00 : f32
    %cst_46 = arith.constant 0.000000e+00 : f32
    %92 = vector.broadcast %cst_45 : f32 to vector<1x1024xf32>
    %93 = vector.broadcast %cst_46 : f32 to vector<1x1024xf32>
    %94 = arith.select %91, %92, %93 : vector<1x1024xi1>, vector<1x1024xf32>
    %c33_i32 = arith.constant 33 : i32
    %95 = tpu.dynamic_rotate %14 by %c33_i32 dim 1 : vector<32x1024xf32>, i32 -> vector<32x1024xf32>
    %96 = arith.mulf %34, %70 : vector<1x1024xf32>
    %97 = vector.broadcast %96 : vector<1x1024xf32> to vector<32x1024xf32>
    %98 = arith.mulf %95, %97 : vector<32x1024xf32>
    %99 = arith.truncf %98 : vector<32x1024xf32> to vector<32x1024xbf16>
    %c0_47 = arith.constant 0 : index
    %c0_48 = arith.constant 0 : index
    %100 = vector.load %arg10[%c0_47, %c0_48] : memref<288x1024xbf16, #tpu.memory_space<vmem>>, vector<32x1024xbf16>
    tpu.vector_store %arg10[%c0_47, %c0_48], %99 {strides = array<i32>} : memref<288x1024xbf16, #tpu.memory_space<vmem>>, vector<32x1024xbf16>,
    %c32_i32_49 = arith.constant 32 : i32
    %101 = tpu.dynamic_rotate %14 by %c32_i32_49 dim 1 : vector<32x1024xf32>, i32 -> vector<32x1024xf32>
    %102 = arith.mulf %34, %82 : vector<1x1024xf32>
    %103 = vector.broadcast %102 : vector<1x1024xf32> to vector<32x1024xf32>
    %104 = arith.mulf %101, %103 : vector<32x1024xf32>
    %105 = arith.truncf %104 : vector<32x1024xf32> to vector<32x1024xbf16>
    %c32 = arith.constant 32 : index
    %c0_50 = arith.constant 0 : index
    %106 = vector.load %arg10[%c32, %c0_50] : memref<288x1024xbf16, #tpu.memory_space<vmem>>, vector<32x1024xbf16>
    tpu.vector_store %arg10[%c32, %c0_50], %105 {strides = array<i32>} : memref<288x1024xbf16, #tpu.memory_space<vmem>>, vector<32x1024xbf16>,
    %c31_i32_51 = arith.constant 31 : i32
    %107 = tpu.dynamic_rotate %14 by %c31_i32_51 dim 1 : vector<32x1024xf32>, i32 -> vector<32x1024xf32>
    %108 = arith.mulf %34, %94 : vector<1x1024xf32>
    %109 = vector.broadcast %108 : vector<1x1024xf32> to vector<32x1024xf32>
    %110 = arith.mulf %107, %109 : vector<32x1024xf32>
    %111 = arith.truncf %110 : vector<32x1024xf32> to vector<32x1024xbf16>
    %c64 = arith.constant 64 : index
    %c0_52 = arith.constant 0 : index
    %112 = vector.load %arg10[%c64, %c0_52] : memref<288x1024xbf16, #tpu.memory_space<vmem>>, vector<32x1024xbf16>
    tpu.vector_store %arg10[%c64, %c0_52], %111 {strides = array<i32>} : memref<288x1024xbf16, #tpu.memory_space<vmem>>, vector<32x1024xbf16>,
    %c1_i32_53 = arith.constant 1 : i32
    %113 = tpu.dynamic_rotate %14 by %c1_i32_53 dim 1 : vector<32x1024xf32>, i32 -> vector<32x1024xf32>
    %114 = arith.mulf %46, %70 : vector<1x1024xf32>
    %115 = vector.broadcast %114 : vector<1x1024xf32> to vector<32x1024xf32>
    %116 = arith.mulf %113, %115 : vector<32x1024xf32>
    %117 = arith.truncf %116 : vector<32x1024xf32> to vector<32x1024xbf16>
    %c96 = arith.constant 96 : index
    %c0_54 = arith.constant 0 : index
    %118 = vector.load %arg10[%c96, %c0_54] : memref<288x1024xbf16, #tpu.memory_space<vmem>>, vector<32x1024xbf16>
    tpu.vector_store %arg10[%c96, %c0_54], %117 {strides = array<i32>} : memref<288x1024xbf16, #tpu.memory_space<vmem>>, vector<32x1024xbf16>,
    %119 = arith.mulf %46, %82 : vector<1x1024xf32>
    %120 = vector.broadcast %119 : vector<1x1024xf32> to vector<32x1024xf32>
    %121 = arith.mulf %14, %120 : vector<32x1024xf32>
    %122 = arith.truncf %121 : vector<32x1024xf32> to vector<32x1024xbf16>
    %c128 = arith.constant 128 : index
    %c0_55 = arith.constant 0 : index
    %123 = vector.load %arg10[%c128, %c0_55] : memref<288x1024xbf16, #tpu.memory_space<vmem>>, vector<32x1024xbf16>
    tpu.vector_store %arg10[%c128, %c0_55], %122 {strides = array<i32>} : memref<288x1024xbf16, #tpu.memory_space<vmem>>, vector<32x1024xbf16>,
    %c1023_i32 = arith.constant 1023 : i32
    %124 = tpu.dynamic_rotate %14 by %c1023_i32 dim 1 : vector<32x1024xf32>, i32 -> vector<32x1024xf32>
    %125 = arith.mulf %46, %94 : vector<1x1024xf32>
    %126 = vector.broadcast %125 : vector<1x1024xf32> to vector<32x1024xf32>
    %127 = arith.mulf %124, %126 : vector<32x1024xf32>
    %128 = arith.truncf %127 : vector<32x1024xf32> to vector<32x1024xbf16>
    %c160 = arith.constant 160 : index
    %c0_56 = arith.constant 0 : index
    %129 = vector.load %arg10[%c160, %c0_56] : memref<288x1024xbf16, #tpu.memory_space<vmem>>, vector<32x1024xbf16>
    tpu.vector_store %arg10[%c160, %c0_56], %128 {strides = array<i32>} : memref<288x1024xbf16, #tpu.memory_space<vmem>>, vector<32x1024xbf16>,
    %c993_i32 = arith.constant 993 : i32
    %130 = tpu.dynamic_rotate %14 by %c993_i32 dim 1 : vector<32x1024xf32>, i32 -> vector<32x1024xf32>
    %131 = arith.mulf %58, %70 : vector<1x1024xf32>
    %132 = vector.broadcast %131 : vector<1x1024xf32> to vector<32x1024xf32>
    %133 = arith.mulf %130, %132 : vector<32x1024xf32>
    %134 = arith.truncf %133 : vector<32x1024xf32> to vector<32x1024xbf16>
    %c192 = arith.constant 192 : index
    %c0_57 = arith.constant 0 : index
    %135 = vector.load %arg10[%c192, %c0_57] : memref<288x1024xbf16, #tpu.memory_space<vmem>>, vector<32x1024xbf16>
    tpu.vector_store %arg10[%c192, %c0_57], %134 {strides = array<i32>} : memref<288x1024xbf16, #tpu.memory_space<vmem>>, vector<32x1024xbf16>,
    %c992_i32 = arith.constant 992 : i32
    %136 = tpu.dynamic_rotate %14 by %c992_i32 dim 1 : vector<32x1024xf32>, i32 -> vector<32x1024xf32>
    %137 = arith.mulf %58, %82 : vector<1x1024xf32>
    %138 = vector.broadcast %137 : vector<1x1024xf32> to vector<32x1024xf32>
    %139 = arith.mulf %136, %138 : vector<32x1024xf32>
    %140 = arith.truncf %139 : vector<32x1024xf32> to vector<32x1024xbf16>
    %c224 = arith.constant 224 : index
    %c0_58 = arith.constant 0 : index
    %141 = vector.load %arg10[%c224, %c0_58] : memref<288x1024xbf16, #tpu.memory_space<vmem>>, vector<32x1024xbf16>
    tpu.vector_store %arg10[%c224, %c0_58], %140 {strides = array<i32>} : memref<288x1024xbf16, #tpu.memory_space<vmem>>, vector<32x1024xbf16>,
    %c991_i32 = arith.constant 991 : i32
    %142 = tpu.dynamic_rotate %14 by %c991_i32 dim 1 : vector<32x1024xf32>, i32 -> vector<32x1024xf32>
    %143 = arith.mulf %58, %94 : vector<1x1024xf32>
    %144 = vector.broadcast %143 : vector<1x1024xf32> to vector<32x1024xf32>
    %145 = arith.mulf %142, %144 : vector<32x1024xf32>
    %146 = arith.truncf %145 : vector<32x1024xf32> to vector<32x1024xbf16>
    %c256 = arith.constant 256 : index
    %c0_59 = arith.constant 0 : index
    %147 = vector.load %arg10[%c256, %c0_59] : memref<288x1024xbf16, #tpu.memory_space<vmem>>, vector<32x1024xbf16>
    tpu.vector_store %arg10[%c256, %c0_59], %146 {strides = array<i32>} : memref<288x1024xbf16, #tpu.memory_space<vmem>>, vector<32x1024xbf16>,
    %c0_60 = arith.constant 0 : index
    %c0_61 = arith.constant 0 : index
    %148 = vector.load %arg6[%c0_60, %c0_61] : memref<32x288xf32, #tpu.memory_space<vmem>>, vector<32x288xf32>
    %149 = arith.truncf %148 : vector<32x288xf32> to vector<32x288xbf16>
    %c0_62 = arith.constant 0 : index
    %c0_63 = arith.constant 0 : index
    %150 = vector.load %arg10[%c0_62, %c0_63] : memref<288x1024xbf16, #tpu.memory_space<vmem>>, vector<288x1024xbf16>
    %cst_64 = arith.constant dense<0.000000e+00> : vector<32x1024xf32>
    %151 = tpu.matmul %149, %150, %cst_64 {dimension_numbers = #tpu.dot_dimension_numbers<[1], [0], [0], [1], [0, 0, 1, 1], [], []>} : vector<32x288xbf16>, vector<288x1024xbf16>, vector<32x1024xf32> -> vector<32x1024xf32>
    %c0_65 = arith.constant 0 : index
    %c0_66 = arith.constant 0 : index
    %152 = vector.load %arg7[%c0_65, %c0_66] : memref<32x1xf32, #tpu.memory_space<vmem>>, vector<32x1xf32>
    %153 = vector.broadcast %152 : vector<32x1xf32> to vector<32x1024xf32>
    %154 = arith.addf %151, %153 : vector<32x1024xf32>
    %c0_67 = arith.constant 0 : index
    %c0_68 = arith.constant 0 : index
    %c0_69 = arith.constant 0 : index
    %155 = vector.load %arg9[%c0_67, %c0_68, %c0_69] : memref<1x32x1024xf32, #tpu.memory_space<vmem>>, vector<1x32x1024xf32>
    %156 = vector.shape_cast %155 : vector<1x32x1024xf32> to vector<32x1024xf32>
    %157 = vector.shape_cast %154 : vector<32x1024xf32> to vector<1x32x1024xf32>
    tpu.vector_store %arg9[%c0_67, %c0_68, %c0_69], %157 {strides = array<i32>} : memref<1x32x1024xf32, #tpu.memory_space<vmem>>, vector<1x32x1024xf32>,
    return
  }
  func.func @transform_0(%arg0: i32) -> (i32, i32, i32) {
    %c0_i32 = arith.constant 0 : i32
    %c0_i32_0 = arith.constant 0 : i32
    %c0_i32_1 = arith.constant 0 : i32
    return %arg0, %c0_i32, %c0_i32_0 : i32, i32, i32
  }
  func.func @transform_1(%arg0: i32) -> (i32, i32, i32) {
    %c0_i32 = arith.constant 0 : i32
    %c0_i32_0 = arith.constant 0 : i32
    %c0_i32_1 = arith.constant 0 : i32
    return %arg0, %c0_i32, %c0_i32_0 : i32, i32, i32
  }
  func.func @transform_2(%arg0: i32) -> (i32, i32) {
    %c0_i32 = arith.constant 0 : i32
    %c0_i32_0 = arith.constant 0 : i32
    %c0_i32_1 = arith.constant 0 : i32
    return %c0_i32, %c0_i32_0 : i32, i32
  }
  func.func @transform_3(%arg0: i32) -> (i32, i32) {
    %c0_i32 = arith.constant 0 : i32
    %c0_i32_0 = arith.constant 0 : i32
    %c0_i32_1 = arith.constant 0 : i32
    return %c0_i32, %c0_i32_0 : i32, i32
  }
  func.func @transform_4(%arg0: i32) -> (i32, i32) {
    %c0_i32 = arith.constant 0 : i32
    %c0_i32_0 = arith.constant 0 : i32
    %c0_i32_1 = arith.constant 0 : i32
    return %c0_i32, %c0_i32_0 : i32, i32
  }
  func.func @transform_5(%arg0: i32) -> (i32, i32) {
    %c0_i32 = arith.constant 0 : i32
    %c0_i32_0 = arith.constant 0 : i32
    %c0_i32_1 = arith.constant 0 : i32
    return %c0_i32, %c0_i32_0 : i32, i32
  }
  func.func @transform_6(%arg0: i32) -> (i32, i32) {
    %c0_i32 = arith.constant 0 : i32
    %c0_i32_0 = arith.constant 0 : i32
    %c0_i32_1 = arith.constant 0 : i32
    return %c0_i32, %c0_i32_0 : i32, i32
  }
  func.func @transform_7(%arg0: i32) -> (i32, i32, i32) {
    %c0_i32 = arith.constant 0 : i32
    %c0_i32_0 = arith.constant 0 : i32
    %c0_i32_1 = arith.constant 0 : i32
    return %arg0, %c0_i32, %c0_i32_0 : i32, i32, i32
  }
  func.func @transform_8(%arg0: i32) -> (i32, i32, i32) {
    %c0_i32 = arith.constant 0 : i32
    %c0_i32_0 = arith.constant 0 : i32
    %c0_i32_1 = arith.constant 0 : i32
    return %arg0, %c0_i32, %c0_i32_0 : i32, i32, i32
  }
}

</mosaic_0001>

<llo_original>
// kernel: feature_shrinker_forward.5
$region0: #{feature_shrinker_forward.5}
  #allocation0 [shape = 'u32[]', space=smem, size = 0x4, offset = 0x4, fixed_abs, tag = 'smem constant byte address 0x4 - core index']
  #allocation1 [shape = 'u32[144,128]{1,0:T(1,128)}', space=vmem, size = 0x12000, scoped, tag = 'internal scratch']
  #allocation2 [shape = 'bf16[288,128]{1,0:T(16,128)(2,1)}', space=vmem, size = 0x12000, scoped, tag = 'scratch operand']
  %s0 = inlined_call_operand.vmem [shape: f32[2,320,128], index: 0, kind: input, shape index: {}]
  %s1 = inlined_call_operand.vmem [shape: f32[32,320], index: 1, kind: input, shape index: {}]
  %s2 = inlined_call_operand.vmem [shape: f32[32,1], index: 2, kind: input, shape index: {}]
  %s3 = inlined_call_operand.vmem [shape: f32[32,288], index: 3, kind: input, shape index: {}]
  %s4 = inlined_call_operand.vmem [shape: f32[32,1], index: 4, kind: input, shape index: {}]
  %s5 = inlined_call_operand.vmem [shape: f32[2,32,128], index: 5, kind: output, shape index: {0}]
  %s6 = inlined_call_operand.vmem [shape: f32[2,32,128], index: 6, kind: output, shape index: {1}]
  %7 = xla_tuple %s5, %s6
  %s8 = sld [smem:[#allocation0]]
  $region61: #{feature_shrinker_forward.5} parent=0
    _
  %s10 = ssub.s32 1, %s8
  %s11 = scalar_select 0, %s10, %s8
  loop: start=0, step=1, limit=4
  $region2: #{feature_shrinker_forward.5} parent=0 // loop_pre_header
    _
  $region3: #{feature_shrinker_forward.5} parent=0 // loop_header
    %s13 = sphi 0, %s17
    %p14 = scmp.ge.s32.totalorder %s13, 4
    %s23 = sphi 0, %s25
    %s26 = sphi 0, %s23
    %s27 = sphi 0, %s26
    %s43 = sphi 0, %s27
    %s47 = sphi 0, %s47
    %s49 = sphi 0, %s47
    %s50 = sphi 0, %s49
    %s64 = sphi 0, %s50
    %s68 = sphi 0, %s68
    %s70 = sphi 0, %s68
    %s71 = sphi 0, %s70
    %s85 = sphi 0, %s71
    %s89 = sphi 0, %s89
    %s91 = sphi 0, %s89
    %s92 = sphi 0, %s91
    %s106 = sphi 0, %s92
    %s110 = sphi 0, %s110
    %s112 = sphi 0, %s110
    %s113 = sphi 0, %s112
    %s127 = sphi 0, %s113
    %s133 = sphi 0, %s135
    %s136 = sphi 0, %s133
    %s137 = sphi 0, %s136
    %s153 = sphi 0, %s137
    %s159 = sphi 0, %s161
    %s162 = sphi 0, %s159
    %s163 = sphi 0, %s162
    %s179 = sphi 0, %s163
  $region4: #{feature_shrinker_forward.5} parent=0 // loop_header_branch
    %16 = sbr.rel (%p14) target = $region8
  $region5: #{feature_shrinker_forward.5} parent=0 // loop_body
    %s18 = ssub.s32 %s13, 1
    %s19 = ssub.s32 %s13, 2
    %s20 = sadd.s32 %s13, 1
    %s21 = ssub.s32 %s13, %s20
    %p22 = scmp.eq.s32.totalorder %s21, 0
    %s24 = sadd.s32 %s23, 1
    %s25 = scalar_select %p22, %s23, %s24
    %p28 = pneg %p22
    %p29 = scmp.eq.s32.totalorder %s13, 1
    %p30 = por %p28, %p29
    %p31 = scmp.ne.s32.totalorder %s23, %s26
    %p32 = scmp.eq.s32.totalorder %s13, 0
    %p33 = por %p31, %p32
    %p34 = scmp.ne.s32.totalorder %s23, %s26
    %p35 = scmp.eq.s32.totalorder %s18, 1
    %p36 = por %p34, %p35
    %p37 = scmp.ne.s32.totalorder %s26, %s27
    %p38 = scmp.eq.s32.totalorder %s18, 0
    %p39 = por %p37, %p38
    %p40 = scmp.ne.s32.totalorder %s26, %s27
    %p41 = scmp.eq.s32.totalorder %s19, 1
    %p42 = por %p40, %p41
    %p44 = scmp.ne.s32.totalorder %s27, %s43
    %p45 = scmp.eq.s32.totalorder %s19, 0
    %p46 = por %p44, %p45
    %s48 = sadd.s32 %s47, 1
    %p51 = scmp.eq.s32.totalorder %s13, 1
    %p52 = scmp.ne.s32.totalorder %s47, %s49
    %p53 = scmp.eq.s32.totalorder %s13, 0
    %p54 = por %p52, %p53
    %p55 = scmp.ne.s32.totalorder %s47, %s49
    %p56 = scmp.eq.s32.totalorder %s18, 1
    %p57 = por %p55, %p56
    %p58 = scmp.ne.s32.totalorder %s49, %s50
    %p59 = scmp.eq.s32.totalorder %s18, 0
    %p60 = por %p58, %p59
    %p61 = scmp.ne.s32.totalorder %s49, %s50
    %p62 = scmp.eq.s32.totalorder %s19, 1
    %p63 = por %p61, %p62
    %p65 = scmp.ne.s32.totalorder %s50, %s64
    %p66 = scmp.eq.s32.totalorder %s19, 0
    %p67 = por %p65, %p66
    %s69 = sadd.s32 %s68, 1
    %p72 = scmp.eq.s32.totalorder %s13, 1
    %p73 = scmp.ne.s32.totalorder %s68, %s70
    %p74 = scmp.eq.s32.totalorder %s13, 0
    %p75 = por %p73, %p74
    %p76 = scmp.ne.s32.totalorder %s68, %s70
    %p77 = scmp.eq.s32.totalorder %s18, 1
    %p78 = por %p76, %p77
    %p79 = scmp.ne.s32.totalorder %s70, %s71
    %p80 = scmp.eq.s32.totalorder %s18, 0
    %p81 = por %p79, %p80
    %p82 = scmp.ne.s32.totalorder %s70, %s71
    %p83 = scmp.eq.s32.totalorder %s19, 1
    %p84 = por %p82, %p83
    %p86 = scmp.ne.s32.totalorder %s71, %s85
    %p87 = scmp.eq.s32.totalorder %s19, 0
    %p88 = por %p86, %p87
    %s90 = sadd.s32 %s89, 1
    %p93 = scmp.eq.s32.totalorder %s13, 1
    %p94 = scmp.ne.s32.totalorder %s89, %s91
    %p95 = scmp.eq.s32.totalorder %s13, 0
    %p96 = por %p94, %p95
    %p97 = scmp.ne.s32.totalorder %s89, %s91
    %p98 = scmp.eq.s32.totalorder %s18, 1
    %p99 = por %p97, %p98
    %p100 = scmp.ne.s32.totalorder %s91, %s92
    %p101 = scmp.eq.s32.totalorder %s18, 0
    %p102 = por %p100, %p101
    %p103 = scmp.ne.s32.totalorder %s91, %s92
    %p104 = scmp.eq.s32.totalorder %s19, 1
    %p105 = por %p103, %p104
    %p107 = scmp.ne.s32.totalorder %s92, %s106
    %p108 = scmp.eq.s32.totalorder %s19, 0
    %p109 = por %p107, %p108
    %s111 = sadd.s32 %s110, 1
    %p114 = scmp.eq.s32.totalorder %s13, 1
    %p115 = scmp.ne.s32.totalorder %s110, %s112
    %p116 = scmp.eq.s32.totalorder %s13, 0
    %p117 = por %p115, %p116
    %p118 = scmp.ne.s32.totalorder %s110, %s112
    %p119 = scmp.eq.s32.totalorder %s18, 1
    %p120 = por %p118, %p119
    %p121 = scmp.ne.s32.totalorder %s112, %s113
    %p122 = scmp.eq.s32.totalorder %s18, 0
    %p123 = por %p121, %p122
    %p124 = scmp.ne.s32.totalorder %s112, %s113
    %p125 = scmp.eq.s32.totalorder %s19, 1
    %p126 = por %p124, %p125
    %p128 = scmp.ne.s32.totalorder %s113, %s127
    %p129 = scmp.eq.s32.totalorder %s19, 0
    %p130 = por %p128, %p129
    %s131 = ssub.s32 %s13, %s20
    %p132 = scmp.eq.s32.totalorder %s131, 0
    %s134 = sadd.s32 %s133, 1
    %s135 = scalar_select %p132, %s133, %s134
    %p138 = pneg %p132
    %p139 = scmp.eq.s32.totalorder %s13, 1
    %p140 = por %p138, %p139
    %p141 = scmp.ne.s32.totalorder %s133, %s136
    %p142 = scmp.eq.s32.totalorder %s13, 0
    %p143 = por %p141, %p142
    %p144 = scmp.ne.s32.totalorder %s133, %s136
    %p145 = scmp.eq.s32.totalorder %s18, 1
    %p146 = por %p144, %p145
    %p147 = scmp.ne.s32.totalorder %s136, %s137
    %p148 = scmp.eq.s32.totalorder %s18, 0
    %p149 = por %p147, %p148
    %p150 = scmp.ne.s32.totalorder %s136, %s137
    %p151 = scmp.eq.s32.totalorder %s19, 1
    %p152 = por %p150, %p151
    %p154 = scmp.ne.s32.totalorder %s137, %s153
    %p155 = scmp.eq.s32.totalorder %s19, 0
    %p156 = por %p154, %p155
    %s157 = ssub.s32 %s13, %s20
    %p158 = scmp.eq.s32.totalorder %s157, 0
    %s160 = sadd.s32 %s159, 1
    %s161 = scalar_select %p158, %s159, %s160
    %p164 = pneg %p158
    %p165 = scmp.eq.s32.totalorder %s13, 1
    %p166 = por %p164, %p165
    %p167 = scmp.ne.s32.totalorder %s159, %s162
    %p168 = scmp.eq.s32.totalorder %s13, 0
    %p169 = por %p167, %p168
    %p170 = scmp.ne.s32.totalorder %s159, %s162
    %p171 = scmp.eq.s32.totalorder %s18, 1
    %p172 = por %p170, %p171
    %p173 = scmp.ne.s32.totalorder %s162, %s163
    %p174 = scmp.eq.s32.totalorder %s18, 0
    %p175 = por %p173, %p174
    %p176 = scmp.ne.s32.totalorder %s162, %s163
    %p177 = scmp.eq.s32.totalorder %s19, 1
    %p178 = por %p176, %p177
    %p180 = scmp.ne.s32.totalorder %s163, %s179
    %p181 = scmp.eq.s32.totalorder %s19, 0
    %p182 = por %p180, %p181
    %p183 = scmp.le.s32.totalorder 1, %s13
    %p184 = scmp.lt.s32.totalorder %s13, 3
    %p185 = pnand %p183, %p184
    %p186 = pneg %p185
    // Predicated region
    $region9: #{feature_shrinker_forward.5} parent=5 // pred_check
      _
    $region10: #{feature_shrinker_forward.5} parent=5 // pred_check_branch
      %188 = sbr.rel (%p185) target = $region12
    $region11: #{feature_shrinker_forward.5} parent=5 // pred_region
      %s189 = ssub.s32 %s13, 1
      // Predicated region
      $region13: #{feature_shrinker_forward.5} parent=11 // pred_check
        %p190 = pneg %p60
      $region14: #{feature_shrinker_forward.5} parent=11 // pred_check_branch
        %192 = sbr.rel (%p190) target = $region16
      $region15: #{feature_shrinker_forward.5} parent=11 // pred_region
        _
      $region16: #{feature_shrinker_forward.5} parent=11 // pred_fallthru
        _
      // Predicated region
      $region17: #{feature_shrinker_forward.5} parent=11 // pred_check
        %p193 = pneg %p81
      $region18: #{feature_shrinker_forward.5} parent=11 // pred_check_branch
        %195 = sbr.rel (%p193) target = $region20
      $region19: #{feature_shrinker_forward.5} parent=11 // pred_region
        _
      $region20: #{feature_shrinker_forward.5} parent=11 // pred_fallthru
        _
      // Predicated region
      $region21: #{feature_shrinker_forward.5} parent=11 // pred_check
        %p196 = pneg %p102
      $region22: #{feature_shrinker_forward.5} parent=11 // pred_check_branch
        %198 = sbr.rel (%p196) target = $region24
      $region23: #{feature_shrinker_forward.5} parent=11 // pred_region
        _
      $region24: #{feature_shrinker_forward.5} parent=11 // pred_fallthru
        _
      // Predicated region
      $region25: #{feature_shrinker_forward.5} parent=11 // pred_check
        %p199 = pneg %p123
      $region26: #{feature_shrinker_forward.5} parent=11 // pred_check_branch
        %201 = sbr.rel (%p199) target = $region28
      $region27: #{feature_shrinker_forward.5} parent=11 // pred_region
        _
      $region28: #{feature_shrinker_forward.5} parent=11 // pred_fallthru
        _
    $region12: #{feature_shrinker_forward.5} parent=5 // pred_fallthru
      _
    %p202 = scmp.lt.s32.totalorder %s13, 2
    // Predicated region
    $region29: #{feature_shrinker_forward.5} parent=5 // pred_check
      %p203 = pneg %p202
    $region30: #{feature_shrinker_forward.5} parent=5 // pred_check_branch
      %205 = sbr.rel (%p203) target = $region32
    $region31: #{feature_shrinker_forward.5} parent=5 // pred_region
      // Predicated region
      $region33: #{feature_shrinker_forward.5} parent=31 // pred_check
        %p206 = pneg %p33
      $region34: #{feature_shrinker_forward.5} parent=31 // pred_check_branch
        %208 = sbr.rel (%p206) target = $region36
      $region35: #{feature_shrinker_forward.5} parent=31 // pred_region
        %p209 = scmp.lt.s32.totalorder %s13, 1
        %s210 = scalar_select %p209, %s13, 1
        %s211 = smul.addr %s210, 40
        %s212 = smul.addr %s211, 8
        %s213 = scalar_lea.vmem %s0, %s212
      $region36: #{feature_shrinker_forward.5} parent=31 // pred_fallthru
        _
    $region32: #{feature_shrinker_forward.5} parent=5 // pred_fallthru
      _
    %p214 = scmp.le.s32.totalorder 1, %s13
    %p215 = scmp.lt.s32.totalorder %s13, 3
    %p216 = pnand %p214, %p215
    %p217 = pneg %p216
    // Predicated region
    $region37: #{feature_shrinker_forward.5} parent=5 // pred_check
      _
    $region38: #{feature_shrinker_forward.5} parent=5 // pred_check_branch
      %219 = sbr.rel (%p216) target = $region40
    $region39: #{feature_shrinker_forward.5} parent=5 // pred_region
      %s220 = ssub.s32 %s13, 1
      %p221 = scmp.lt.s32.totalorder %s18, 1
      %s222 = scalar_select %p221, %s18, 1
      %s223 = smul.addr %s222, 40
      %s224 = smul.addr %s223, 8
      %s225 = scalar_lea.vmem %s0, %s224
      %p226 = pneg %p39
      %p227 = pneg %p36
      %p228 = pneg %p60
      %p229 = pneg %p57
      %p230 = pneg %p81
      %p231 = pneg %p78
      %p232 = pneg %p102
      %p233 = pneg %p99
      %p234 = pneg %p123
      %p235 = pneg %p120
      %p236 = pneg %p149
      %p237 = pneg %p146
      %p238 = scmp.lt.s32.totalorder %s18, 1
      %s239 = scalar_select %p238, %s18, 1
      %s240 = smul.addr %s239, 4
      %s241 = smul.addr %s240, 8
      %s242 = scalar_lea.vmem %s5, %s241
      %p243 = pneg %p175
      %p244 = pneg %p172
      %p245 = scmp.lt.s32.totalorder %s18, 1
      %s246 = scalar_select %p245, %s18, 1
      %s247 = smul.addr %s246, 4
      %s248 = smul.addr %s247, 8
      %s249 = scalar_lea.vmem %s6, %s248
      %p250 = scmp.lt.s32.totalorder %s18, 1
      %s251 = scalar_select %p250, %s18, 1
      %s252 = smul.addr %s251, 40
      %s253 = smul.addr %s252, 8
      %s254 = scalar_lea.vmem %s0, %s253
      %p255 = scmp.lt.s32.totalorder %s18, 1
      %s256 = scalar_select %p255, %s18, 1
      %s257 = smul.addr %s256, 4
      %s258 = smul.addr %s257, 8
      %s259 = scalar_lea.vmem %s5, %s258
      %p260 = scmp.lt.s32.totalorder %s18, 1
      %s261 = scalar_select %p260, %s18, 1
      %s262 = smul.addr %s261, 4
      %s263 = smul.addr %s262, 8
      %s264 = scalar_lea.vmem %s6, %s263
      %v266 = vld [vmem:[%s1] sm:$0xff]
      %v267 = vld [vmem:[%s1 + $0x8] sm:$0xff]
      %v268 = vld [vmem:[%s1 + $0x10] sm:$0xff]
      %v269 = vld [vmem:[%s1 + $0x18] sm:$0xff]
      %v270 = vld [vmem:[%s1 + $0x20] sm:$0xff]
      %v271 = vld [vmem:[%s1 + $0x28] sm:$0xff]
      %v272 = vld [vmem:[%s1 + $0x30] sm:$0xff]
      %v273 = vld [vmem:[%s1 + $0x38] sm:$0xff]
      %v274 = vld [vmem:[%s1 + $0x40] sm:$0xff]
      %v275 = vld [vmem:[%s1 + $0x48] sm:$0xff]
      %v276 = vld [vmem:[%s1 + $0x50] sm:$0xff]
      %v277 = vld [vmem:[%s1 + $0x58] sm:$0xff]
      %v278 = vpack.c.bf16 %v269, %v266
      %v279 = vpack.c.bf16 %v270, %v267
      %v280 = vpack.c.bf16 %v271, %v268
      %v281 = vpack.c.bf16 %v275, %v272
      %v282 = vpack.c.bf16 %v276, %v273
      %v283 = vpack.c.bf16 %v277, %v274
      %v284 = vld [vmem:[%s254] sm:$0xff]
      %v285 = vld [vmem:[%s254 + $0x8] sm:$0xff]
      %v286 = vld [vmem:[%s254 + $0x10] sm:$0xff]
      %v287 = vld [vmem:[%s254 + $0x18] sm:$0xff]
      %v288 = vld [vmem:[%s254 + $0x20] sm:$0xff]
      %v289 = vld [vmem:[%s254 + $0x28] sm:$0xff]
      %v290 = vld [vmem:[%s254 + $0x30] sm:$0xff]
      %v291 = vld [vmem:[%s254 + $0x38] sm:$0xff]
      %v292 = vld [vmem:[%s254 + $0x40] sm:$0xff]
      %v293 = vld [vmem:[%s254 + $0x48] sm:$0xff]
      %v294 = vld [vmem:[%s254 + $0x50] sm:$0xff]
      %v295 = vld [vmem:[%s254 + $0x58] sm:$0xff]
      %v296 = vld [vmem:[%s254 + $0x60] sm:$0xff]
      %v297 = vld [vmem:[%s254 + $0x68] sm:$0xff]
      %v298 = vld [vmem:[%s254 + $0x70] sm:$0xff]
      %v299 = vld [vmem:[%s254 + $0x78] sm:$0xff]
      %v300 = vld [vmem:[%s254 + $0x80] sm:$0xff]
      %v301 = vld [vmem:[%s254 + $0x88] sm:$0xff]
      %v302 = vld [vmem:[%s254 + $0x90] sm:$0xff]
      %v303 = vld [vmem:[%s254 + $0x98] sm:$0xff]
      %v304 = vld [vmem:[%s254 + $0xa0] sm:$0xff]
      %v305 = vld [vmem:[%s254 + $0xa8] sm:$0xff]
      %v306 = vld [vmem:[%s254 + $0xb0] sm:$0xff]
      %v307 = vld [vmem:[%s254 + $0xb8] sm:$0xff]
      %v308 = vld [vmem:[%s254 + $0xc0] sm:$0xff]
      %v309 = vld [vmem:[%s254 + $0xc8] sm:$0xff]
      %v310 = vld [vmem:[%s254 + $0xd0] sm:$0xff]
      %v311 = vld [vmem:[%s254 + $0xd8] sm:$0xff]
      %v312 = vld [vmem:[%s254 + $0xe0] sm:$0xff]
      %v313 = vld [vmem:[%s254 + $0xe8] sm:$0xff]
      %v314 = vld [vmem:[%s254 + $0xf0] sm:$0xff]
      %v315 = vld [vmem:[%s254 + $0xf8] sm:$0xff]
      %v316 = vld [vmem:[%s254 + $0x100] sm:$0xff]
      %v317 = vld [vmem:[%s254 + $0x108] sm:$0xff]
      %v318 = vld [vmem:[%s254 + $0x110] sm:$0xff]
      %v319 = vld [vmem:[%s254 + $0x118] sm:$0xff]
      %v320 = vld [vmem:[%s254 + $0x120] sm:$0xff]
      %v321 = vld [vmem:[%s254 + $0x128] sm:$0xff]
      %v322 = vld [vmem:[%s254 + $0x130] sm:$0xff]
      %v323 = vld [vmem:[%s254 + $0x138] sm:$0xff]
      %v324 = vpack.c.bf16 %v285, %v284
      %v325 = vpack.c.bf16 %v287, %v286
      %v326 = vpack.c.bf16 %v289, %v288
      %v327 = vpack.c.bf16 %v291, %v290
      %v328 = vpack.c.bf16 %v293, %v292
      %v329 = vpack.c.bf16 %v295, %v294
      %v330 = vpack.c.bf16 %v297, %v296
      %v331 = vpack.c.bf16 %v299, %v298
      %v332 = vpack.c.bf16 %v301, %v300
      %v333 = vpack.c.bf16 %v303, %v302
      %v334 = vpack.c.bf16 %v305, %v304
      %v335 = vpack.c.bf16 %v307, %v306
      %v336 = vpack.c.bf16 %v309, %v308
      %v337 = vpack.c.bf16 %v311, %v310
      %v338 = vpack.c.bf16 %v313, %v312
      %v339 = vpack.c.bf16 %v315, %v314
      %v340 = vpack.c.bf16 %v317, %v316
      %v341 = vpack.c.bf16 %v319, %v318
      %v342 = vpack.c.bf16 %v321, %v320
      %v343 = vpack.c.bf16 %v323, %v322
      %v344 = vld [vmem:[%s2] sm:$0xff]
      %v345 = vld [vmem:[%s2 + $0x8] sm:$0xff]
      %v346 = vld [vmem:[%s2 + $0x10] sm:$0xff]
      %v347 = vld [vmem:[%s2 + $0x18] sm:$0xff]
      %349 = vset.pattern.permute.xlu0 0
      %350 = vperm.xlu0 %349, %v344
      %v351 = vpop.permute.xlu0 %350
      %354 = vset.pattern.permute.xlu0 0
      %355 = vperm.xlu0 %354, %v345
      %v356 = vpop.permute.xlu0 %355
      %359 = vset.pattern.permute.xlu0 0
      %360 = vperm.xlu0 %359, %v346
      %v361 = vpop.permute.xlu0 %360
      %364 = vset.pattern.permute.xlu0 0
      %365 = vperm.xlu0 %364, %v347
      %v366 = vpop.permute.xlu0 %365
      %vm368 = vcmask 523264
      %v370 = vsel %vm368, %v280, 0
      %v373 = vsel %vm368, %v283, 0
      %375 = vmatprep.subr.bf16.mxu0 0
      %376 = vmatpush1.bf16.msra.mxu0 %v324
      %377 = vmatprep.subr.bf16.mxu0 0
      %378 = vmatpush1.bf16.msra.mxu0 %v325
      %379 = vmatprep.subr.bf16.mxu0 0
      %380 = vmatpush1.bf16.msra.mxu0 %v326
      %381 = vmatprep.subr.bf16.mxu0 0
      %382 = vmatpush1.bf16.msra.mxu0 %v327
      %383 = vmatprep.subr.bf16.mxu0 0
      %384 = vmatpush1.bf16.msra.mxu0 %v328
      %385 = vmatprep.subr.bf16.mxu0 0
      %386 = vmatpush1.bf16.msra.mxu0 %v329
      %387 = vmatprep.subr.bf16.mxu0 0
      %388 = vmatpush1.bf16.msra.mxu0 %v330
      %389 = vmatprep.subr.bf16.mxu0 0
      %390 = vmatpush1.bf16.msra.mxu0 %v331
      %391 = vmatprep.subr.bf16.mxu0 0
      %392 = vmatpush1.bf16.msra.mxu0 %v332
      %393 = vmatprep.subr.bf16.mxu0 0
      %394 = vmatpush1.bf16.msra.mxu0 %v333
      %395 = vmatprep.subr.bf16.mxu0 0
      %396 = vmatpush1.bf16.msra.mxu0 %v334
      %397 = vmatprep.subr.bf16.mxu0 0
      %398 = vmatpush1.bf16.msra.mxu0 %v335
      %399 = vmatprep.subr.bf16.mxu0 0
      %400 = vmatpush1.bf16.msra.mxu0 %v336
      %401 = vmatprep.subr.bf16.mxu0 0
      %402 = vmatpush1.bf16.msra.mxu0 %v337
      %403 = vmatprep.subr.bf16.mxu0 0
      %404 = vmatpush1.bf16.msra.mxu0 %v338
      %405 = vmatprep.subr.bf16.mxu0 0
      %406 = vmatpush1.bf16.msra.mxu0 %v339
      %407 = vmatprep.mubr.bf16.mxu0 %v279
      %408 = vmatmul.mubr.bf16.gmra.mrb[0].mxu0 %v278
      %v409 = vpop.f32.mrb[0].mxu0
      %v410 = vadd.f32 %v351, %v409
      %v411 = vpop.f32.mrb[0].mxu0
      %v412 = vpop.f32.mrb[0].mxu0
      %v413 = vadd.f32 %v356, %v412
      %v414 = vpop.f32.mrb[0].mxu0
      %415 = vmatprep.mubr.bf16.mxu0 %v282
      %416 = vmatmul.mubr.bf16.gmra.mrb[0].mxu0 %v281
      %v417 = vpop.f32.mrb[0].mxu0
      %v418 = vadd.f32 %v361, %v417
      %v419 = vpop.f32.mrb[0].mxu0
      %v420 = vpop.f32.mrb[0].mxu0
      %v421 = vadd.f32 %v366, %v420
      %v422 = vpop.f32.mrb[0].mxu0
      %423 = vdwg.mxu0
      %424 = vmatprep.subr.bf16.mxu0 0
      %425 = vmatpush1.bf16.msra.mxu0 %v340
      %426 = vmatprep.subr.bf16.mxu0 0
      %427 = vmatpush1.bf16.msra.mxu0 %v341
      %428 = vmatprep.subr.bf16.mxu0 0
      %429 = vmatpush1.bf16.msra.mxu0 %v342
      %430 = vmatprep.subr.bf16.mxu0 0
      %431 = vmatpush1.bf16.msra.mxu0 %v343
      %432 = vmatprep.subr.bf16.mxu0 0
      %433 = vmatpush1.bf16.msra.mxu0 0
      %434 = vmatprep.subr.bf16.mxu0 0
      %435 = vmatpush1.bf16.msra.mxu0 0
      %436 = vmatprep.subr.bf16.mxu0 0
      %437 = vmatpush1.bf16.msra.mxu0 0
      %438 = vmatprep.subr.bf16.mxu0 0
      %439 = vmatpush1.bf16.msra.mxu0 0
      %440 = vmatprep.subr.bf16.mxu0 0
      %441 = vmatpush1.bf16.msra.mxu0 0
      %442 = vmatprep.subr.bf16.mxu0 0
      %443 = vmatpush1.bf16.msra.mxu0 0
      %444 = vmatprep.subr.bf16.mxu0 0
      %445 = vmatpush1.bf16.msra.mxu0 0
      %446 = vmatprep.subr.bf16.mxu0 0
      %447 = vmatpush1.bf16.msra.mxu0 0
      %448 = vmatprep.subr.bf16.mxu0 0
      %449 = vmatpush1.bf16.msra.mxu0 0
      %450 = vmatprep.subr.bf16.mxu0 0
      %451 = vmatpush1.bf16.msra.mxu0 0
      %452 = vmatprep.subr.bf16.mxu0 0
      %453 = vmatpush1.bf16.msra.mxu0 0
      %454 = vmatprep.subr.bf16.mxu0 0
      %455 = vmatpush1.bf16.msra.mxu0 0
      %456 = vmatprep.mubr.bf16.mxu0 0
      %457 = vmatmul.mubr.bf16.gmra.mrb[0].mxu0 %v370
      %v458 = vpop.f32.mrb[0].mxu0
      %v459 = vadd.f32 %v410, %v458
      %v460 = vpop.f32.mrb[0].mxu0
      %v461 = vpop.f32.mrb[0].mxu0
      %v462 = vadd.f32 %v413, %v461
      %v463 = vpop.f32.mrb[0].mxu0
      %464 = vmatprep.mubr.bf16.mxu0 0
      %465 = vmatmul.mubr.bf16.gmra.mrb[0].mxu0 %v373
      %v466 = vpop.f32.mrb[0].mxu0
      %v467 = vadd.f32 %v418, %v466
      %v468 = vpop.f32.mrb[0].mxu0
      %v469 = vpop.f32.mrb[0].mxu0
      %v470 = vadd.f32 %v421, %v469
      %v471 = vpop.f32.mrb[0].mxu0
      %472 = vdwg.mxu0
      %473 = vst [vmem:[%s259] sm:$0xff] %v459
      %474 = vst [vmem:[%s259 + $0x8] sm:$0xff] %v462
      %475 = vst [vmem:[%s259 + $0x10] sm:$0xff] %v467
      %476 = vst [vmem:[%s259 + $0x18] sm:$0xff] %v470
      %v477 = vlaneseq
      %v478 = vand.u32 %v477, 127
      %v479 = vshra.s32 %v478, 1
      %v480 = vand.u32 %v478, 1
      %v481 = vadd.s32 %v479, 4294967295
      %vm482 = vcmp.ge.s32.totalorder %v481, 0
      %vm483 = vcmp.lt.s32.totalorder %v481, 2
      %vm484 = vmand %vm482, %vm483
      %v485 = vsel %vm484, 1.0, 0.0
      %vm486 = vcmp.ge.s32.totalorder %v479, 0
      %vm487 = vcmp.lt.s32.totalorder %v479, 2
      %vm488 = vmand %vm486, %vm487
      %v489 = vsel %vm488, 1.0, 0.0
      %v490 = vadd.s32 %v479, 1
      %vm491 = vcmp.ge.s32.totalorder %v490, 0
      %vm492 = vcmp.lt.s32.totalorder %v490, 2
      %vm493 = vmand %vm491, %vm492
      %v494 = vsel %vm493, 1.0, 0.0
      %v495 = vadd.s32 %v480, 4294967295
      %vm496 = vcmp.ge.s32.totalorder %v495, 0
      %vm497 = vcmp.lt.s32.totalorder %v495, 2
      %vm498 = vmand %vm496, %vm497
      %v499 = vsel %vm498, 1.0, 0.0
      %vm500 = vcmp.ge.s32.totalorder %v480, 0
      %vm501 = vcmp.lt.s32.totalorder %v480, 2
      %vm502 = vmand %vm500, %vm501
      %v503 = vsel %vm502, 1.0, 0.0
      %v504 = vadd.s32 %v480, 1
      %vm505 = vcmp.ge.s32.totalorder %v504, 0
      %vm506 = vcmp.lt.s32.totalorder %v504, 2
      %vm507 = vmand %vm505, %vm506
      %v508 = vsel %vm507, 1.0, 0.0
      %509 = vrot.lane.b32.xlu0 %v459, 3
      %v510 = vpop.permute.xlu0 %509
      %511 = vrot.lane.b32.xlu0 %v462, 3
      %v512 = vpop.permute.xlu0 %511
      %513 = vrot.lane.b32.xlu0 %v467, 3
      %v514 = vpop.permute.xlu0 %513
      %515 = vrot.lane.b32.xlu0 %v470, 3
      %v516 = vpop.permute.xlu0 %515
      %v517 = vmul.f32 %v485, %v499
      %v518 = vmul.f32 %v510, %v517
      %v519 = vmul.f32 %v512, %v517
      %v520 = vmul.f32 %v514, %v517
      %v521 = vmul.f32 %v516, %v517
      %v522 = vpack.c.bf16 %v519, %v518
      %v523 = vpack.c.bf16 %v521, %v520
      %524 = vst [vmem:[#allocation2] sm:$0xff] %v522
      %525 = vst [vmem:[#allocation2 + $0x8] sm:$0xff] %v523
      %526 = vrot.lane.b32.xlu0 %v459, 2
      %v527 = vpop.permute.xlu0 %526
      %528 = vrot.lane.b32.xlu0 %v462, 2
      %v529 = vpop.permute.xlu0 %528
      %530 = vrot.lane.b32.xlu0 %v467, 2
      %v531 = vpop.permute.xlu0 %530
      %532 = vrot.lane.b32.xlu0 %v470, 2
      %v533 = vpop.permute.xlu0 %532
      %v534 = vmul.f32 %v485, %v503
      %v535 = vmul.f32 %v527, %v534
      %v536 = vmul.f32 %v529, %v534
      %v537 = vmul.f32 %v531, %v534
      %v538 = vmul.f32 %v533, %v534
      %v539 = vpack.c.bf16 %v536, %v535
      %v540 = vpack.c.bf16 %v538, %v537
      %541 = vst [vmem:[#allocation2 + $0x10] sm:$0xff] %v539
      %542 = vst [vmem:[#allocation2 + $0x18] sm:$0xff] %v540
      %543 = vrot.lane.b32.xlu0 %v459, 1
      %v544 = vpop.permute.xlu0 %543
      %545 = vrot.lane.b32.xlu0 %v462, 1
      %v546 = vpop.permute.xlu0 %545
      %547 = vrot.lane.b32.xlu0 %v467, 1
      %v548 = vpop.permute.xlu0 %547
      %549 = vrot.lane.b32.xlu0 %v470, 1
      %v550 = vpop.permute.xlu0 %549
      %v551 = vmul.f32 %v485, %v508
      %v552 = vmul.f32 %v544, %v551
      %v553 = vmul.f32 %v546, %v551
      %v554 = vmul.f32 %v548, %v551
      %v555 = vmul.f32 %v550, %v551
      %v556 = vpack.c.bf16 %v553, %v552
      %v557 = vpack.c.bf16 %v555, %v554
      %558 = vst [vmem:[#allocation2 + $0x20] sm:$0xff] %v556
      %559 = vst [vmem:[#allocation2 + $0x28] sm:$0xff] %v557
      %v560 = vmul.f32 %v489, %v499
      %v561 = vmul.f32 %v544, %v560
      %v562 = vmul.f32 %v546, %v560
      %v563 = vmul.f32 %v548, %v560
      %v564 = vmul.f32 %v550, %v560
      %v565 = vpack.c.bf16 %v562, %v561
      %v566 = vpack.c.bf16 %v564, %v563
      %567 = vst [vmem:[#allocation2 + $0x30] sm:$0xff] %v565
      %568 = vst [vmem:[#allocation2 + $0x38] sm:$0xff] %v566
      %v569 = vmul.f32 %v489, %v503
      %v570 = vmul.f32 %v459, %v569
      %v571 = vmul.f32 %v462, %v569
      %v572 = vmul.f32 %v467, %v569
      %v573 = vmul.f32 %v470, %v569
      %v574 = vpack.c.bf16 %v571, %v570
      %v575 = vpack.c.bf16 %v573, %v572
      %576 = vst [vmem:[#allocation2 + $0x40] sm:$0xff] %v574
      %577 = vst [vmem:[#allocation2 + $0x48] sm:$0xff] %v575
      %578 = vrot.lane.b32.xlu0 %v459, 127
      %v579 = vpop.permute.xlu0 %578
      %580 = vrot.lane.b32.xlu0 %v462, 127
      %v581 = vpop.permute.xlu0 %580
      %582 = vrot.lane.b32.xlu0 %v467, 127
      %v583 = vpop.permute.xlu0 %582
      %584 = vrot.lane.b32.xlu0 %v470, 127
      %v585 = vpop.permute.xlu0 %584
      %v586 = vmul.f32 %v489, %v508
      %v587 = vmul.f32 %v579, %v586
      %v588 = vmul.f32 %v581, %v586
      %v589 = vmul.f32 %v583, %v586
      %v590 = vmul.f32 %v585, %v586
      %v591 = vpack.c.bf16 %v588, %v587
      %v592 = vpack.c.bf16 %v590, %v589
      %593 = vst [vmem:[#allocation2 + $0x50] sm:$0xff] %v591
      %594 = vst [vmem:[#allocation2 + $0x58] sm:$0xff] %v592
      %v595 = vmul.f32 %v494, %v499
      %v596 = vmul.f32 %v579, %v595
      %v597 = vmul.f32 %v581, %v595
      %v598 = vmul.f32 %v583, %v595
      %v599 = vmul.f32 %v585, %v595
      %v600 = vpack.c.bf16 %v597, %v596
      %v601 = vpack.c.bf16 %v599, %v598
      %602 = vst [vmem:[#allocation2 + $0x60] sm:$0xff] %v600
      %603 = vst [vmem:[#allocation2 + $0x68] sm:$0xff] %v601
      %604 = vrot.lane.b32.xlu0 %v459, 126
      %v605 = vpop.permute.xlu0 %604
      %606 = vrot.lane.b32.xlu0 %v462, 126
      %v607 = vpop.permute.xlu0 %606
      %608 = vrot.lane.b32.xlu0 %v467, 126
      %v609 = vpop.permute.xlu0 %608
      %610 = vrot.lane.b32.xlu0 %v470, 126
      %v611 = vpop.permute.xlu0 %610
      %v612 = vmul.f32 %v494, %v503
      %v613 = vmul.f32 %v605, %v612
      %v614 = vmul.f32 %v607, %v612
      %v615 = vmul.f32 %v609, %v612
      %v616 = vmul.f32 %v611, %v612
      %v617 = vpack.c.bf16 %v614, %v613
      %v618 = vpack.c.bf16 %v616, %v615
      %619 = vst [vmem:[#allocation2 + $0x70] sm:$0xff] %v617
      %620 = vst [vmem:[#allocation2 + $0x78] sm:$0xff] %v618
      %621 = vrot.lane.b32.xlu0 %v459, 125
      %v622 = vpop.permute.xlu0 %621
      %623 = vrot.lane.b32.xlu0 %v462, 125
      %v624 = vpop.permute.xlu0 %623
      %625 = vrot.lane.b32.xlu0 %v467, 125
      %v626 = vpop.permute.xlu0 %625
      %627 = vrot.lane.b32.xlu0 %v470, 125
      %v628 = vpop.permute.xlu0 %627
      %v629 = vmul.f32 %v494, %v508
      %v630 = vmul.f32 %v622, %v629
      %v631 = vmul.f32 %v624, %v629
      %v632 = vmul.f32 %v626, %v629
      %v633 = vmul.f32 %v628, %v629
      %v634 = vpack.c.bf16 %v631, %v630
      %v635 = vpack.c.bf16 %v633, %v632
      %636 = vst [vmem:[#allocation2 + $0x80] sm:$0xff] %v634
      %637 = vst [vmem:[#allocation2 + $0x88] sm:$0xff] %v635
      %v638 = vld [vmem:[%s3] sm:$0xff]
      %v639 = vld [vmem:[%s3 + $0x8] sm:$0xff]
      %v640 = vld [vmem:[%s3 + $0x10] sm:$0xff]
      %v641 = vld [vmem:[%s3 + $0x18] sm:$0xff]
      %v642 = vld [vmem:[%s3 + $0x20] sm:$0xff]
      %v643 = vld [vmem:[%s3 + $0x28] sm:$0xff]
      %v644 = vld [vmem:[%s3 + $0x30] sm:$0xff]
      %v645 = vld [vmem:[%s3 + $0x38] sm:$0xff]
      %v646 = vld [vmem:[%s3 + $0x40] sm:$0xff]
      %v647 = vld [vmem:[%s3 + $0x48] sm:$0xff]
      %v648 = vld [vmem:[%s3 + $0x50] sm:$0xff]
      %v649 = vld [vmem:[%s3 + $0x58] sm:$0xff]
      %v650 = vpack.c.bf16 %v641, %v638
      %v651 = vpack.c.bf16 %v642, %v639
      %v652 = vpack.c.bf16 %v643, %v640
      %v653 = vpack.c.bf16 %v647, %v644
      %v654 = vpack.c.bf16 %v648, %v645
      %v655 = vpack.c.bf16 %v649, %v646
      %v656 = vld [vmem:[#allocation2] sm:$0xff]
      %v657 = vld [vmem:[#allocation2 + $0x8] sm:$0xff]
      %v658 = vld [vmem:[#allocation2 + $0x10] sm:$0xff]
      %v659 = vld [vmem:[#allocation2 + $0x18] sm:$0xff]
      %v660 = vld [vmem:[#allocation2 + $0x20] sm:$0xff]
      %v661 = vld [vmem:[#allocation2 + $0x28] sm:$0xff]
      %v662 = vld [vmem:[#allocation2 + $0x30] sm:$0xff]
      %v663 = vld [vmem:[#allocation2 + $0x38] sm:$0xff]
      %v664 = vld [vmem:[#allocation2 + $0x40] sm:$0xff]
      %v665 = vld [vmem:[#allocation2 + $0x48] sm:$0xff]
      %v666 = vld [vmem:[#allocation2 + $0x50] sm:$0xff]
      %v667 = vld [vmem:[#allocation2 + $0x58] sm:$0xff]
      %v668 = vld [vmem:[#allocation2 + $0x60] sm:$0xff]
      %v669 = vld [vmem:[#allocation2 + $0x68] sm:$0xff]
      %v670 = vld [vmem:[#allocation2 + $0x70] sm:$0xff]
      %v671 = vld [vmem:[#allocation2 + $0x78] sm:$0xff]
      %v672 = vld [vmem:[#allocation2 + $0x80] sm:$0xff]
      %v673 = vld [vmem:[#allocation2 + $0x88] sm:$0xff]
      %v674 = vld [vmem:[%s4] sm:$0xff]
      %v675 = vld [vmem:[%s4 + $0x8] sm:$0xff]
      %v676 = vld [vmem:[%s4 + $0x10] sm:$0xff]
      %v677 = vld [vmem:[%s4 + $0x18] sm:$0xff]
      %679 = vset.pattern.permute.xlu0 0
      %680 = vperm.xlu0 %679, %v674
      %v681 = vpop.permute.xlu0 %680
      %684 = vset.pattern.permute.xlu0 0
      %685 = vperm.xlu0 %684, %v675
      %v686 = vpop.permute.xlu0 %685
      %689 = vset.pattern.permute.xlu0 0
      %690 = vperm.xlu0 %689, %v676
      %v691 = vpop.permute.xlu0 %690
      %694 = vset.pattern.permute.xlu0 0
      %695 = vperm.xlu0 %694, %v677
      %v696 = vpop.permute.xlu0 %695
      %vm698 = vcmask 261120
      %v700 = vsel %vm698, %v652, 0
      %v703 = vsel %vm698, %v655, 0
      %705 = vmatprep.subr.bf16.mxu0 0
      %706 = vmatpush1.bf16.msra.mxu0 %v656
      %707 = vmatprep.subr.bf16.mxu0 0
      %708 = vmatpush1.bf16.msra.mxu0 %v657
      %709 = vmatprep.subr.bf16.mxu0 0
      %710 = vmatpush1.bf16.msra.mxu0 %v658
      %711 = vmatprep.subr.bf16.mxu0 0
      %712 = vmatpush1.bf16.msra.mxu0 %v659
      %713 = vmatprep.subr.bf16.mxu0 0
      %714 = vmatpush1.bf16.msra.mxu0 %v660
      %715 = vmatprep.subr.bf16.mxu0 0
      %716 = vmatpush1.bf16.msra.mxu0 %v661
      %717 = vmatprep.subr.bf16.mxu0 0
      %718 = vmatpush1.bf16.msra.mxu0 %v662
      %719 = vmatprep.subr.bf16.mxu0 0
      %720 = vmatpush1.bf16.msra.mxu0 %v663
      %721 = vmatprep.subr.bf16.mxu0 0
      %722 = vmatpush1.bf16.msra.mxu0 %v664
      %723 = vmatprep.subr.bf16.mxu0 0
      %724 = vmatpush1.bf16.msra.mxu0 %v665
      %725 = vmatprep.subr.bf16.mxu0 0
      %726 = vmatpush1.bf16.msra.mxu0 %v666
      %727 = vmatprep.subr.bf16.mxu0 0
      %728 = vmatpush1.bf16.msra.mxu0 %v667
      %729 = vmatprep.subr.bf16.mxu0 0
      %730 = vmatpush1.bf16.msra.mxu0 %v668
      %731 = vmatprep.subr.bf16.mxu0 0
      %732 = vmatpush1.bf16.msra.mxu0 %v669
      %733 = vmatprep.subr.bf16.mxu0 0
      %734 = vmatpush1.bf16.msra.mxu0 %v670
      %735 = vmatprep.subr.bf16.mxu0 0
      %736 = vmatpush1.bf16.msra.mxu0 %v671
      %737 = vmatprep.mubr.bf16.mxu0 %v651
      %738 = vmatmul.mubr.bf16.gmra.mrb[0].mxu0 %v650
      %v739 = vpop.f32.mrb[0].mxu0
      %v740 = vadd.f32 %v681, %v739
      %v741 = vpop.f32.mrb[0].mxu0
      %v742 = vpop.f32.mrb[0].mxu0
      %v743 = vadd.f32 %v686, %v742
      %v744 = vpop.f32.mrb[0].mxu0
      %745 = vmatprep.mubr.bf16.mxu0 %v654
      %746 = vmatmul.mubr.bf16.gmra.mrb[0].mxu0 %v653
      %v747 = vpop.f32.mrb[0].mxu0
      %v748 = vadd.f32 %v691, %v747
      %v749 = vpop.f32.mrb[0].mxu0
      %v750 = vpop.f32.mrb[0].mxu0
      %v751 = vadd.f32 %v696, %v750
      %v752 = vpop.f32.mrb[0].mxu0
      %753 = vdwg.mxu0
      %754 = vmatprep.subr.bf16.mxu0 0
      %755 = vmatpush1.bf16.msra.mxu0 %v672
      %756 = vmatprep.subr.bf16.mxu0 0
      %757 = vmatpush1.bf16.msra.mxu0 %v673
      %758 = vmatprep.subr.bf16.mxu0 0
      %759 = vmatpush1.bf16.msra.mxu0 0
      %760 = vmatprep.subr.bf16.mxu0 0
      %761 = vmatpush1.bf16.msra.mxu0 0
      %762 = vmatprep.subr.bf16.mxu0 0
      %763 = vmatpush1.bf16.msra.mxu0 0
      %764 = vmatprep.subr.bf16.mxu0 0
      %765 = vmatpush1.bf16.msra.mxu0 0
      %766 = vmatprep.subr.bf16.mxu0 0
      %767 = vmatpush1.bf16.msra.mxu0 0
      %768 = vmatprep.subr.bf16.mxu0 0
      %769 = vmatpush1.bf16.msra.mxu0 0
      %770 = vmatprep.subr.bf16.mxu0 0
      %771 = vmatpush1.bf16.msra.mxu0 0
      %772 = vmatprep.subr.bf16.mxu0 0
      %773 = vmatpush1.bf16.msra.mxu0 0
      %774 = vmatprep.subr.bf16.mxu0 0
      %775 = vmatpush1.bf16.msra.mxu0 0
      %776 = vmatprep.subr.bf16.mxu0 0
      %777 = vmatpush1.bf16.msra.mxu0 0
      %778 = vmatprep.subr.bf16.mxu0 0
      %779 = vmatpush1.bf16.msra.mxu0 0
      %780 = vmatprep.subr.bf16.mxu0 0
      %781 = vmatpush1.bf16.msra.mxu0 0
      %782 = vmatprep.subr.bf16.mxu0 0
      %783 = vmatpush1.bf16.msra.mxu0 0
      %784 = vmatprep.subr.bf16.mxu0 0
      %785 = vmatpush1.bf16.msra.mxu0 0
      %786 = vmatprep.mubr.bf16.mxu0 0
      %787 = vmatmul.mubr.bf16.gmra.mrb[0].mxu0 %v700
      %v788 = vpop.f32.mrb[0].mxu0
      %v789 = vadd.f32 %v740, %v788
      %v790 = vpop.f32.mrb[0].mxu0
      %v791 = vpop.f32.mrb[0].mxu0
      %v792 = vadd.f32 %v743, %v791
      %v793 = vpop.f32.mrb[0].mxu0
      %794 = vmatprep.mubr.bf16.mxu0 0
      %795 = vmatmul.mubr.bf16.gmra.mrb[0].mxu0 %v703
      %v796 = vpop.f32.mrb[0].mxu0
      %v797 = vadd.f32 %v748, %v796
      %v798 = vpop.f32.mrb[0].mxu0
      %v799 = vpop.f32.mrb[0].mxu0
      %v800 = vadd.f32 %v751, %v799
      %v801 = vpop.f32.mrb[0].mxu0
      %802 = vdwg.mxu0
      %803 = vst [vmem:[%s264] sm:$0xff] %v789
      %804 = vst [vmem:[%s264 + $0x8] sm:$0xff] %v792
      %805 = vst [vmem:[%s264 + $0x10] sm:$0xff] %v797
      %806 = vst [vmem:[%s264 + $0x18] sm:$0xff] %v800
      %p807 = scmp.lt.s32.totalorder %s18, 1
      %s808 = scalar_select %p807, %s18, 1
      %s809 = smul.addr %s808, 4
      %s810 = smul.addr %s809, 8
      %s811 = scalar_lea.vmem %s5, %s810
      %p812 = scmp.lt.s32.totalorder %s18, 1
      %s813 = scalar_select %p812, %s18, 1
      %s814 = smul.addr %s813, 4
      %s815 = smul.addr %s814, 8
      %s816 = scalar_lea.vmem %s6, %s815
      // Predicated region
      $region41: #{feature_shrinker_forward.5} parent=39 // pred_check
        %p817 = pneg %p146
      $region42: #{feature_shrinker_forward.5} parent=39 // pred_check_branch
        %819 = sbr.rel (%p817) target = $region44
      $region43: #{feature_shrinker_forward.5} parent=39 // pred_region
        _
      $region44: #{feature_shrinker_forward.5} parent=39 // pred_fallthru
        _
      // Predicated region
      $region45: #{feature_shrinker_forward.5} parent=39 // pred_check
        %p820 = pneg %p172
      $region46: #{feature_shrinker_forward.5} parent=39 // pred_check_branch
        %822 = sbr.rel (%p820) target = $region48
      $region47: #{feature_shrinker_forward.5} parent=39 // pred_region
        _
      $region48: #{feature_shrinker_forward.5} parent=39 // pred_fallthru
        _
    $region40: #{feature_shrinker_forward.5} parent=5 // pred_fallthru
      _
    %p823 = scmp.le.s32.totalorder 2, %s13
    // Predicated region
    $region49: #{feature_shrinker_forward.5} parent=5 // pred_check
      %p824 = pneg %p823
    $region50: #{feature_shrinker_forward.5} parent=5 // pred_check_branch
      %826 = sbr.rel (%p824) target = $region52
    $region51: #{feature_shrinker_forward.5} parent=5 // pred_region
      %s827 = ssub.s32 %s13, 2
      // Predicated region
      $region53: #{feature_shrinker_forward.5} parent=51 // pred_check
        %p828 = pneg %p152
      $region54: #{feature_shrinker_forward.5} parent=51 // pred_check_branch
        %830 = sbr.rel (%p828) target = $region56
      $region55: #{feature_shrinker_forward.5} parent=51 // pred_region
        %p831 = scmp.lt.s32.totalorder %s19, 1
        %s832 = scalar_select %p831, %s19, 1
        %s833 = smul.addr %s832, 4
        %s834 = smul.addr %s833, 8
        %s835 = scalar_lea.vmem %s5, %s834
      $region56: #{feature_shrinker_forward.5} parent=51 // pred_fallthru
        _
      // Predicated region
      $region57: #{feature_shrinker_forward.5} parent=51 // pred_check
        %p836 = pneg %p178
      $region58: #{feature_shrinker_forward.5} parent=51 // pred_check_branch
        %838 = sbr.rel (%p836) target = $region60
      $region59: #{feature_shrinker_forward.5} parent=51 // pred_region
        %p839 = scmp.lt.s32.totalorder %s19, 1
        %s840 = scalar_select %p839, %s19, 1
        %s841 = smul.addr %s840, 4
        %s842 = smul.addr %s841, 8
        %s843 = scalar_lea.vmem %s6, %s842
      $region60: #{feature_shrinker_forward.5} parent=51 // pred_fallthru
        _
    $region52: #{feature_shrinker_forward.5} parent=5 // pred_fallthru
      _
  $region6: #{feature_shrinker_forward.5} parent=0 // loop_footer
    %s17 = sadd.s32 1, %s13
  $region7: #{feature_shrinker_forward.5} parent=0 // loop_footer_branch
    %12 = sbr.rel target = $region3
  $region8: #{feature_shrinker_forward.5} parent=0 // loop_exit
    _

// kernel: feature_shrinker_forward.6
$region0: #{feature_shrinker_forward.6}
  #allocation0 [shape = 'u32[]', space=smem, size = 0x4, offset = 0x4, fixed_abs, tag = 'smem constant byte address 0x4 - core index']
  #allocation1 [shape = 'u32[144,128]{1,0:T(1,128)}', space=vmem, size = 0x12000, scoped, tag = 'internal scratch']
  #allocation2 [shape = 'bf16[288,128]{1,0:T(16,128)(2,1)}', space=vmem, size = 0x12000, scoped, tag = 'scratch operand']
  %s0 = inlined_call_operand.vmem [shape: f32[2,96,128], index: 0, kind: input, shape index: {}]
  %s1 = inlined_call_operand.vmem [shape: f32[2,32,128], index: 1, kind: input, shape index: {}]
  %s2 = inlined_call_operand.vmem [shape: bf16[128,128], index: 2, kind: input, shape index: {}]
  %s3 = inlined_call_operand.vmem [shape: f32[32,96], index: 3, kind: input, shape index: {}]
  %s4 = inlined_call_operand.vmem [shape: f32[32,1], index: 4, kind: input, shape index: {}]
  %s5 = inlined_call_operand.vmem [shape: f32[32,288], index: 5, kind: input, shape index: {}]
  %s6 = inlined_call_operand.vmem [shape: f32[32,1], index: 6, kind: input, shape index: {}]
  %s7 = inlined_call_operand.vmem [shape: f32[2,32,128], index: 7, kind: output, shape index: {0}]
  %s8 = inlined_call_operand.vmem [shape: f32[2,32,128], index: 8, kind: output, shape index: {1}]
  %9 = xla_tuple %s7, %s8
  %s10 = sld [smem:[#allocation0]]
  $region69: #{feature_shrinker_forward.6} parent=0
    _
  %s12 = ssub.s32 1, %s10
  %s13 = scalar_select 0, %s12, %s10
  loop: start=0, step=1, limit=4
  $region2: #{feature_shrinker_forward.6} parent=0 // loop_pre_header
    _
  $region3: #{feature_shrinker_forward.6} parent=0 // loop_header
    %s15 = sphi 0, %s19
    %p16 = scmp.ge.s32.totalorder %s15, 4
    %s25 = sphi 0, %s27
    %s28 = sphi 0, %s25
    %s29 = sphi 0, %s28
    %s45 = sphi 0, %s29
    %s51 = sphi 0, %s53
    %s54 = sphi 0, %s51
    %s55 = sphi 0, %s54
    %s71 = sphi 0, %s55
    %s75 = sphi 0, %s75
    %s77 = sphi 0, %s75
    %s78 = sphi 0, %s77
    %s92 = sphi 0, %s78
    %s96 = sphi 0, %s96
    %s98 = sphi 0, %s96
    %s99 = sphi 0, %s98
    %s113 = sphi 0, %s99
    %s117 = sphi 0, %s117
    %s119 = sphi 0, %s117
    %s120 = sphi 0, %s119
    %s134 = sphi 0, %s120
    %s138 = sphi 0, %s138
    %s140 = sphi 0, %s138
    %s141 = sphi 0, %s140
    %s155 = sphi 0, %s141
    %s159 = sphi 0, %s159
    %s161 = sphi 0, %s159
    %s162 = sphi 0, %s161
    %s176 = sphi 0, %s162
    %s182 = sphi 0, %s184
    %s185 = sphi 0, %s182
    %s186 = sphi 0, %s185
    %s202 = sphi 0, %s186
    %s208 = sphi 0, %s210
    %s211 = sphi 0, %s208
    %s212 = sphi 0, %s211
    %s228 = sphi 0, %s212
  $region4: #{feature_shrinker_forward.6} parent=0 // loop_header_branch
    %18 = sbr.rel (%p16) target = $region8
  $region5: #{feature_shrinker_forward.6} parent=0 // loop_body
    %s20 = ssub.s32 %s15, 1
    %s21 = ssub.s32 %s15, 2
    %s22 = sadd.s32 %s15, 1
    %s23 = ssub.s32 %s15, %s22
    %p24 = scmp.eq.s32.totalorder %s23, 0
    %s26 = sadd.s32 %s25, 1
    %s27 = scalar_select %p24, %s25, %s26
    %p30 = pneg %p24
    %p31 = scmp.eq.s32.totalorder %s15, 1
    %p32 = por %p30, %p31
    %p33 = scmp.ne.s32.totalorder %s25, %s28
    %p34 = scmp.eq.s32.totalorder %s15, 0
    %p35 = por %p33, %p34
    %p36 = scmp.ne.s32.totalorder %s25, %s28
    %p37 = scmp.eq.s32.totalorder %s20, 1
    %p38 = por %p36, %p37
    %p39 = scmp.ne.s32.totalorder %s28, %s29
    %p40 = scmp.eq.s32.totalorder %s20, 0
    %p41 = por %p39, %p40
    %p42 = scmp.ne.s32.totalorder %s28, %s29
    %p43 = scmp.eq.s32.totalorder %s21, 1
    %p44 = por %p42, %p43
    %p46 = scmp.ne.s32.totalorder %s29, %s45
    %p47 = scmp.eq.s32.totalorder %s21, 0
    %p48 = por %p46, %p47
    %s49 = ssub.s32 %s15, %s22
    %p50 = scmp.eq.s32.totalorder %s49, 0
    %s52 = sadd.s32 %s51, 1
    %s53 = scalar_select %p50, %s51, %s52
    %p56 = pneg %p50
    %p57 = scmp.eq.s32.totalorder %s15, 1
    %p58 = por %p56, %p57
    %p59 = scmp.ne.s32.totalorder %s51, %s54
    %p60 = scmp.eq.s32.totalorder %s15, 0
    %p61 = por %p59, %p60
    %p62 = scmp.ne.s32.totalorder %s51, %s54
    %p63 = scmp.eq.s32.totalorder %s20, 1
    %p64 = por %p62, %p63
    %p65 = scmp.ne.s32.totalorder %s54, %s55
    %p66 = scmp.eq.s32.totalorder %s20, 0
    %p67 = por %p65, %p66
    %p68 = scmp.ne.s32.totalorder %s54, %s55
    %p69 = scmp.eq.s32.totalorder %s21, 1
    %p70 = por %p68, %p69
    %p72 = scmp.ne.s32.totalorder %s55, %s71
    %p73 = scmp.eq.s32.totalorder %s21, 0
    %p74 = por %p72, %p73
    %s76 = sadd.s32 %s75, 1
    %p79 = scmp.eq.s32.totalorder %s15, 1
    %p80 = scmp.ne.s32.totalorder %s75, %s77
    %p81 = scmp.eq.s32.totalorder %s15, 0
    %p82 = por %p80, %p81
    %p83 = scmp.ne.s32.totalorder %s75, %s77
    %p84 = scmp.eq.s32.totalorder %s20, 1
    %p85 = por %p83, %p84
    %p86 = scmp.ne.s32.totalorder %s77, %s78
    %p87 = scmp.eq.s32.totalorder %s20, 0
    %p88 = por %p86, %p87
    %p89 = scmp.ne.s32.totalorder %s77, %s78
    %p90 = scmp.eq.s32.totalorder %s21, 1
    %p91 = por %p89, %p90
    %p93 = scmp.ne.s32.totalorder %s78, %s92
    %p94 = scmp.eq.s32.totalorder %s21, 0
    %p95 = por %p93, %p94
    %s97 = sadd.s32 %s96, 1
    %p100 = scmp.eq.s32.totalorder %s15, 1
    %p101 = scmp.ne.s32.totalorder %s96, %s98
    %p102 = scmp.eq.s32.totalorder %s15, 0
    %p103 = por %p101, %p102
    %p104 = scmp.ne.s32.totalorder %s96, %s98
    %p105 = scmp.eq.s32.totalorder %s20, 1
    %p106 = por %p104, %p105
    %p107 = scmp.ne.s32.totalorder %s98, %s99
    %p108 = scmp.eq.s32.totalorder %s20, 0
    %p109 = por %p107, %p108
    %p110 = scmp.ne.s32.totalorder %s98, %s99
    %p111 = scmp.eq.s32.totalorder %s21, 1
    %p112 = por %p110, %p111
    %p114 = scmp.ne.s32.totalorder %s99, %s113
    %p115 = scmp.eq.s32.totalorder %s21, 0
    %p116 = por %p114, %p115
    %s118 = sadd.s32 %s117, 1
    %p121 = scmp.eq.s32.totalorder %s15, 1
    %p122 = scmp.ne.s32.totalorder %s117, %s119
    %p123 = scmp.eq.s32.totalorder %s15, 0
    %p124 = por %p122, %p123
    %p125 = scmp.ne.s32.totalorder %s117, %s119
    %p126 = scmp.eq.s32.totalorder %s20, 1
    %p127 = por %p125, %p126
    %p128 = scmp.ne.s32.totalorder %s119, %s120
    %p129 = scmp.eq.s32.totalorder %s20, 0
    %p130 = por %p128, %p129
    %p131 = scmp.ne.s32.totalorder %s119, %s120
    %p132 = scmp.eq.s32.totalorder %s21, 1
    %p133 = por %p131, %p132
    %p135 = scmp.ne.s32.totalorder %s120, %s134
    %p136 = scmp.eq.s32.totalorder %s21, 0
    %p137 = por %p135, %p136
    %s139 = sadd.s32 %s138, 1
    %p142 = scmp.eq.s32.totalorder %s15, 1
    %p143 = scmp.ne.s32.totalorder %s138, %s140
    %p144 = scmp.eq.s32.totalorder %s15, 0
    %p145 = por %p143, %p144
    %p146 = scmp.ne.s32.totalorder %s138, %s140
    %p147 = scmp.eq.s32.totalorder %s20, 1
    %p148 = por %p146, %p147
    %p149 = scmp.ne.s32.totalorder %s140, %s141
    %p150 = scmp.eq.s32.totalorder %s20, 0
    %p151 = por %p149, %p150
    %p152 = scmp.ne.s32.totalorder %s140, %s141
    %p153 = scmp.eq.s32.totalorder %s21, 1
    %p154 = por %p152, %p153
    %p156 = scmp.ne.s32.totalorder %s141, %s155
    %p157 = scmp.eq.s32.totalorder %s21, 0
    %p158 = por %p156, %p157
    %s160 = sadd.s32 %s159, 1
    %p163 = scmp.eq.s32.totalorder %s15, 1
    %p164 = scmp.ne.s32.totalorder %s159, %s161
    %p165 = scmp.eq.s32.totalorder %s15, 0
    %p166 = por %p164, %p165
    %p167 = scmp.ne.s32.totalorder %s159, %s161
    %p168 = scmp.eq.s32.totalorder %s20, 1
    %p169 = por %p167, %p168
    %p170 = scmp.ne.s32.totalorder %s161, %s162
    %p171 = scmp.eq.s32.totalorder %s20, 0
    %p172 = por %p170, %p171
    %p173 = scmp.ne.s32.totalorder %s161, %s162
    %p174 = scmp.eq.s32.totalorder %s21, 1
    %p175 = por %p173, %p174
    %p177 = scmp.ne.s32.totalorder %s162, %s176
    %p178 = scmp.eq.s32.totalorder %s21, 0
    %p179 = por %p177, %p178
    %s180 = ssub.s32 %s15, %s22
    %p181 = scmp.eq.s32.totalorder %s180, 0
    %s183 = sadd.s32 %s182, 1
    %s184 = scalar_select %p181, %s182, %s183
    %p187 = pneg %p181
    %p188 = scmp.eq.s32.totalorder %s15, 1
    %p189 = por %p187, %p188
    %p190 = scmp.ne.s32.totalorder %s182, %s185
    %p191 = scmp.eq.s32.totalorder %s15, 0
    %p192 = por %p190, %p191
    %p193 = scmp.ne.s32.totalorder %s182, %s185
    %p194 = scmp.eq.s32.totalorder %s20, 1
    %p195 = por %p193, %p194
    %p196 = scmp.ne.s32.totalorder %s185, %s186
    %p197 = scmp.eq.s32.totalorder %s20, 0
    %p198 = por %p196, %p197
    %p199 = scmp.ne.s32.totalorder %s185, %s186
    %p200 = scmp.eq.s32.totalorder %s21, 1
    %p201 = por %p199, %p200
    %p203 = scmp.ne.s32.totalorder %s186, %s202
    %p204 = scmp.eq.s32.totalorder %s21, 0
    %p205 = por %p203, %p204
    %s206 = ssub.s32 %s15, %s22
    %p207 = scmp.eq.s32.totalorder %s206, 0
    %s209 = sadd.s32 %s208, 1
    %s210 = scalar_select %p207, %s208, %s209
    %p213 = pneg %p207
    %p214 = scmp.eq.s32.totalorder %s15, 1
    %p215 = por %p213, %p214
    %p216 = scmp.ne.s32.totalorder %s208, %s211
    %p217 = scmp.eq.s32.totalorder %s15, 0
    %p218 = por %p216, %p217
    %p219 = scmp.ne.s32.totalorder %s208, %s211
    %p220 = scmp.eq.s32.totalorder %s20, 1
    %p221 = por %p219, %p220
    %p222 = scmp.ne.s32.totalorder %s211, %s212
    %p223 = scmp.eq.s32.totalorder %s20, 0
    %p224 = por %p222, %p223
    %p225 = scmp.ne.s32.totalorder %s211, %s212
    %p226 = scmp.eq.s32.totalorder %s21, 1
    %p227 = por %p225, %p226
    %p229 = scmp.ne.s32.totalorder %s212, %s228
    %p230 = scmp.eq.s32.totalorder %s21, 0
    %p231 = por %p229, %p230
    %p232 = scmp.le.s32.totalorder 1, %s15
    %p233 = scmp.lt.s32.totalorder %s15, 3
    %p234 = pnand %p232, %p233
    %p235 = pneg %p234
    // Predicated region
    $region9: #{feature_shrinker_forward.6} parent=5 // pred_check
      _
    $region10: #{feature_shrinker_forward.6} parent=5 // pred_check_branch
      %237 = sbr.rel (%p234) target = $region12
    $region11: #{feature_shrinker_forward.6} parent=5 // pred_region
      %s238 = ssub.s32 %s15, 1
      // Predicated region
      $region13: #{feature_shrinker_forward.6} parent=11 // pred_check
        %p239 = pneg %p88
      $region14: #{feature_shrinker_forward.6} parent=11 // pred_check_branch
        %241 = sbr.rel (%p239) target = $region16
      $region15: #{feature_shrinker_forward.6} parent=11 // pred_region
        _
      $region16: #{feature_shrinker_forward.6} parent=11 // pred_fallthru
        _
      // Predicated region
      $region17: #{feature_shrinker_forward.6} parent=11 // pred_check
        %p242 = pneg %p109
      $region18: #{feature_shrinker_forward.6} parent=11 // pred_check_branch
        %244 = sbr.rel (%p242) target = $region20
      $region19: #{feature_shrinker_forward.6} parent=11 // pred_region
        _
      $region20: #{feature_shrinker_forward.6} parent=11 // pred_fallthru
        _
      // Predicated region
      $region21: #{feature_shrinker_forward.6} parent=11 // pred_check
        %p245 = pneg %p130
      $region22: #{feature_shrinker_forward.6} parent=11 // pred_check_branch
        %247 = sbr.rel (%p245) target = $region24
      $region23: #{feature_shrinker_forward.6} parent=11 // pred_region
        _
      $region24: #{feature_shrinker_forward.6} parent=11 // pred_fallthru
        _
      // Predicated region
      $region25: #{feature_shrinker_forward.6} parent=11 // pred_check
        %p248 = pneg %p151
      $region26: #{feature_shrinker_forward.6} parent=11 // pred_check_branch
        %250 = sbr.rel (%p248) target = $region28
      $region27: #{feature_shrinker_forward.6} parent=11 // pred_region
        _
      $region28: #{feature_shrinker_forward.6} parent=11 // pred_fallthru
        _
      // Predicated region
      $region29: #{feature_shrinker_forward.6} parent=11 // pred_check
        %p251 = pneg %p172
      $region30: #{feature_shrinker_forward.6} parent=11 // pred_check_branch
        %253 = sbr.rel (%p251) target = $region32
      $region31: #{feature_shrinker_forward.6} parent=11 // pred_region
        _
      $region32: #{feature_shrinker_forward.6} parent=11 // pred_fallthru
        _
    $region12: #{feature_shrinker_forward.6} parent=5 // pred_fallthru
      _
    %p254 = scmp.lt.s32.totalorder %s15, 2
    // Predicated region
    $region33: #{feature_shrinker_forward.6} parent=5 // pred_check
      %p255 = pneg %p254
    $region34: #{feature_shrinker_forward.6} parent=5 // pred_check_branch
      %257 = sbr.rel (%p255) target = $region36
    $region35: #{feature_shrinker_forward.6} parent=5 // pred_region
      // Predicated region
      $region37: #{feature_shrinker_forward.6} parent=35 // pred_check
        %p258 = pneg %p35
      $region38: #{feature_shrinker_forward.6} parent=35 // pred_check_branch
        %260 = sbr.rel (%p258) target = $region40
      $region39: #{feature_shrinker_forward.6} parent=35 // pred_region
        %p261 = scmp.lt.s32.totalorder %s15, 1
        %s262 = scalar_select %p261, %s15, 1
        %s263 = smul.addr %s262, 12
        %s264 = smul.addr %s263, 8
        %s265 = scalar_lea.vmem %s0, %s264
      $region40: #{feature_shrinker_forward.6} parent=35 // pred_fallthru
        _
      // Predicated region
      $region41: #{feature_shrinker_forward.6} parent=35 // pred_check
        %p266 = pneg %p61
      $region42: #{feature_shrinker_forward.6} parent=35 // pred_check_branch
        %268 = sbr.rel (%p266) target = $region44
      $region43: #{feature_shrinker_forward.6} parent=35 // pred_region
        %p269 = scmp.lt.s32.totalorder %s15, 1
        %s270 = scalar_select %p269, %s15, 1
        %s271 = smul.addr %s270, 4
        %s272 = smul.addr %s271, 8
        %s273 = scalar_lea.vmem %s1, %s272
      $region44: #{feature_shrinker_forward.6} parent=35 // pred_fallthru
        _
    $region36: #{feature_shrinker_forward.6} parent=5 // pred_fallthru
      _
    %p274 = scmp.le.s32.totalorder 1, %s15
    %p275 = scmp.lt.s32.totalorder %s15, 3
    %p276 = pnand %p274, %p275
    %p277 = pneg %p276
    // Predicated region
    $region45: #{feature_shrinker_forward.6} parent=5 // pred_check
      _
    $region46: #{feature_shrinker_forward.6} parent=5 // pred_check_branch
      %279 = sbr.rel (%p276) target = $region48
    $region47: #{feature_shrinker_forward.6} parent=5 // pred_region
      %s280 = ssub.s32 %s15, 1
      %p281 = scmp.lt.s32.totalorder %s20, 1
      %s282 = scalar_select %p281, %s20, 1
      %s283 = smul.addr %s282, 12
      %s284 = smul.addr %s283, 8
      %s285 = scalar_lea.vmem %s0, %s284
      %p286 = pneg %p41
      %p287 = pneg %p38
      %p288 = scmp.lt.s32.totalorder %s20, 1
      %s289 = scalar_select %p288, %s20, 1
      %s290 = smul.addr %s289, 4
      %s291 = smul.addr %s290, 8
      %s292 = scalar_lea.vmem %s1, %s291
      %p293 = pneg %p67
      %p294 = pneg %p64
      %p295 = pneg %p88
      %p296 = pneg %p85
      %p297 = pneg %p109
      %p298 = pneg %p106
      %p299 = pneg %p130
      %p300 = pneg %p127
      %p301 = pneg %p151
      %p302 = pneg %p148
      %p303 = pneg %p172
      %p304 = pneg %p169
      %p305 = pneg %p198
      %p306 = pneg %p195
      %p307 = scmp.lt.s32.totalorder %s20, 1
      %s308 = scalar_select %p307, %s20, 1
      %s309 = smul.addr %s308, 4
      %s310 = smul.addr %s309, 8
      %s311 = scalar_lea.vmem %s7, %s310
      %p312 = pneg %p224
      %p313 = pneg %p221
      %p314 = scmp.lt.s32.totalorder %s20, 1
      %s315 = scalar_select %p314, %s20, 1
      %s316 = smul.addr %s315, 4
      %s317 = smul.addr %s316, 8
      %s318 = scalar_lea.vmem %s8, %s317
      %p319 = scmp.lt.s32.totalorder %s20, 1
      %s320 = scalar_select %p319, %s20, 1
      %s321 = smul.addr %s320, 12
      %s322 = smul.addr %s321, 8
      %s323 = scalar_lea.vmem %s0, %s322
      %p324 = scmp.lt.s32.totalorder %s20, 1
      %s325 = scalar_select %p324, %s20, 1
      %s326 = smul.addr %s325, 4
      %s327 = smul.addr %s326, 8
      %s328 = scalar_lea.vmem %s1, %s327
      %p329 = scmp.lt.s32.totalorder %s20, 1
      %s330 = scalar_select %p329, %s20, 1
      %s331 = smul.addr %s330, 4
      %s332 = smul.addr %s331, 8
      %s333 = scalar_lea.vmem %s7, %s332
      %p334 = scmp.lt.s32.totalorder %s20, 1
      %s335 = scalar_select %p334, %s20, 1
      %s336 = smul.addr %s335, 4
      %s337 = smul.addr %s336, 8
      %s338 = scalar_lea.vmem %s8, %s337
      %v340 = vld [vmem:[%s3] sm:$0xff]
      %v341 = vld [vmem:[%s3 + $0x8] sm:$0xff]
      %v342 = vld [vmem:[%s3 + $0x10] sm:$0xff]
      %v343 = vld [vmem:[%s3 + $0x18] sm:$0xff]
      %v344 = vpack.c.bf16 %v341, %v340
      %v345 = vpack.c.bf16 %v343, %v342
      %v346 = vld [vmem:[%s323] sm:$0xff]
      %v347 = vld [vmem:[%s323 + $0x8] sm:$0xff]
      %v348 = vld [vmem:[%s323 + $0x10] sm:$0xff]
      %v349 = vld [vmem:[%s323 + $0x18] sm:$0xff]
      %v350 = vld [vmem:[%s323 + $0x20] sm:$0xff]
      %v351 = vld [vmem:[%s323 + $0x28] sm:$0xff]
      %v352 = vld [vmem:[%s323 + $0x30] sm:$0xff]
      %v353 = vld [vmem:[%s323 + $0x38] sm:$0xff]
      %v354 = vld [vmem:[%s323 + $0x40] sm:$0xff]
      %v355 = vld [vmem:[%s323 + $0x48] sm:$0xff]
      %v356 = vld [vmem:[%s323 + $0x50] sm:$0xff]
      %v357 = vld [vmem:[%s323 + $0x58] sm:$0xff]
      %v358 = vpack.c.bf16 %v347, %v346
      %v359 = vpack.c.bf16 %v349, %v348
      %v360 = vpack.c.bf16 %v351, %v350
      %v361 = vpack.c.bf16 %v353, %v352
      %v362 = vpack.c.bf16 %v355, %v354
      %v363 = vpack.c.bf16 %v357, %v356
      %v364 = vld [vmem:[%s4] sm:$0xff]
      %v365 = vld [vmem:[%s4 + $0x8] sm:$0xff]
      %v366 = vld [vmem:[%s4 + $0x10] sm:$0xff]
      %v367 = vld [vmem:[%s4 + $0x18] sm:$0xff]
      %369 = vset.pattern.permute.xlu0 0
      %370 = vperm.xlu0 %369, %v364
      %v371 = vpop.permute.xlu0 %370
      %374 = vset.pattern.permute.xlu0 0
      %375 = vperm.xlu0 %374, %v365
      %v376 = vpop.permute.xlu0 %375
      %379 = vset.pattern.permute.xlu0 0
      %380 = vperm.xlu0 %379, %v366
      %v381 = vpop.permute.xlu0 %380
      %384 = vset.pattern.permute.xlu0 0
      %385 = vperm.xlu0 %384, %v367
      %v386 = vpop.permute.xlu0 %385
      %vm388 = vcmask 785408
      %v390 = vsel %vm388, %v344, 0
      %v393 = vsel %vm388, %v345, 0
      %395 = vmatprep.subr.bf16.mxu0 0
      %396 = vmatpush1.bf16.msra.mxu0 %v358
      %397 = vmatprep.subr.bf16.mxu0 0
      %398 = vmatpush1.bf16.msra.mxu0 %v359
      %399 = vmatprep.subr.bf16.mxu0 0
      %400 = vmatpush1.bf16.msra.mxu0 %v360
      %401 = vmatprep.subr.bf16.mxu0 0
      %402 = vmatpush1.bf16.msra.mxu0 %v361
      %403 = vmatprep.subr.bf16.mxu0 0
      %404 = vmatpush1.bf16.msra.mxu0 %v362
      %405 = vmatprep.subr.bf16.mxu0 0
      %406 = vmatpush1.bf16.msra.mxu0 %v363
      %407 = vmatprep.subr.bf16.mxu0 0
      %408 = vmatpush1.bf16.msra.mxu0 0
      %409 = vmatprep.subr.bf16.mxu0 0
      %410 = vmatpush1.bf16.msra.mxu0 0
      %411 = vmatprep.subr.bf16.mxu0 0
      %412 = vmatpush1.bf16.msra.mxu0 0
      %413 = vmatprep.subr.bf16.mxu0 0
      %414 = vmatpush1.bf16.msra.mxu0 0
      %415 = vmatprep.subr.bf16.mxu0 0
      %416 = vmatpush1.bf16.msra.mxu0 0
      %417 = vmatprep.subr.bf16.mxu0 0
      %418 = vmatpush1.bf16.msra.mxu0 0
      %419 = vmatprep.subr.bf16.mxu0 0
      %420 = vmatpush1.bf16.msra.mxu0 0
      %421 = vmatprep.subr.bf16.mxu0 0
      %422 = vmatpush1.bf16.msra.mxu0 0
      %423 = vmatprep.subr.bf16.mxu0 0
      %424 = vmatpush1.bf16.msra.mxu0 0
      %425 = vmatprep.subr.bf16.mxu0 0
      %426 = vmatpush1.bf16.msra.mxu0 0
      %427 = vmatprep.mubr.bf16.mxu0 0
      %428 = vmatmul.mubr.bf16.gmra.mrb[0].mxu0 %v390
      %v429 = vpop.f32.mrb[0].mxu0
      %v430 = vadd.f32 %v371, %v429
      %v431 = vpop.f32.mrb[0].mxu0
      %v432 = vpop.f32.mrb[0].mxu0
      %v433 = vadd.f32 %v376, %v432
      %v434 = vpop.f32.mrb[0].mxu0
      %435 = vmatprep.mubr.bf16.mxu0 0
      %436 = vmatmul.mubr.bf16.gmra.mrb[0].mxu0 %v393
      %v437 = vpop.f32.mrb[0].mxu0
      %v438 = vadd.f32 %v381, %v437
      %v439 = vpop.f32.mrb[0].mxu0
      %v440 = vpop.f32.mrb[0].mxu0
      %v441 = vadd.f32 %v386, %v440
      %v442 = vpop.f32.mrb[0].mxu0
      %443 = vdwg.mxu0
      %v444 = vld [vmem:[%s328] sm:$0xff]
      %v445 = vld [vmem:[%s328 + $0x8] sm:$0xff]
      %v446 = vld [vmem:[%s328 + $0x10] sm:$0xff]
      %v447 = vld [vmem:[%s328 + $0x18] sm:$0xff]
      %v448 = vpack.c.bf16 %v445, %v444
      %v449 = vpack.c.bf16 %v447, %v446
      %v450 = vld [vmem:[%s2] sm:$0xf]
      %v451 = vld [vmem:[%s2 + $0x4] sm:$0xf]
      %v452 = vld [vmem:[%s2 + $0x8] sm:$0xf]
      %v453 = vld [vmem:[%s2 + $0xc] sm:$0xf]
      %v454 = vld [vmem:[%s2 + $0x10] sm:$0xf]
      %v455 = vld [vmem:[%s2 + $0x14] sm:$0xf]
      %v456 = vld [vmem:[%s2 + $0x18] sm:$0xf]
      %v457 = vld [vmem:[%s2 + $0x1c] sm:$0xf]
      %v458 = vld [vmem:[%s2 + $0x20] sm:$0xf]
      %v459 = vld [vmem:[%s2 + $0x24] sm:$0xf]
      %v460 = vld [vmem:[%s2 + $0x28] sm:$0xf]
      %v461 = vld [vmem:[%s2 + $0x2c] sm:$0xf]
      %v462 = vld [vmem:[%s2 + $0x30] sm:$0xf]
      %v463 = vld [vmem:[%s2 + $0x34] sm:$0xf]
      %v464 = vld [vmem:[%s2 + $0x38] sm:$0xf]
      %v465 = vld [vmem:[%s2 + $0x3c] sm:$0xf]
      %v482 = vunpack.c.l.b16 %v450
      %v483 = vunpack.c.l.b16 %v451
      %v484 = vunpack.c.l.b16 %v452
      %v485 = vunpack.c.l.b16 %v453
      %v486 = vunpack.c.l.b16 %v454
      %v487 = vunpack.c.l.b16 %v455
      %v488 = vunpack.c.l.b16 %v456
      %v489 = vunpack.c.l.b16 %v457
      %v490 = vunpack.c.l.b16 %v458
      %v491 = vunpack.c.l.b16 %v459
      %v492 = vunpack.c.l.b16 %v460
      %v493 = vunpack.c.l.b16 %v461
      %v494 = vunpack.c.l.b16 %v462
      %v495 = vunpack.c.l.b16 %v463
      %v496 = vunpack.c.l.b16 %v464
      %v497 = vunpack.c.l.b16 %v465
      %v498 = vpack.c.b16 %v483, %v482
      %v499 = vpack.c.b16 %v485, %v484
      %v500 = vpack.c.b16 %v487, %v486
      %v501 = vpack.c.b16 %v489, %v488
      %v502 = vpack.c.b16 %v491, %v490
      %v503 = vpack.c.b16 %v493, %v492
      %v504 = vpack.c.b16 %v495, %v494
      %v505 = vpack.c.b16 %v497, %v496
      %514 = vmatprep.subr.bf16.mxu0 0
      %515 = vmatpush1.bf16.msra.mxu0 %v498
      %516 = vmatprep.subr.bf16.mxu0 0
      %517 = vmatpush1.bf16.msra.mxu0 %v499
      %518 = vmatprep.subr.bf16.mxu0 0
      %519 = vmatpush1.bf16.msra.mxu0 %v500
      %520 = vmatprep.subr.bf16.mxu0 0
      %521 = vmatpush1.bf16.msra.mxu0 %v501
      %522 = vmatprep.subr.bf16.mxu0 0
      %523 = vmatpush1.bf16.msra.mxu0 %v502
      %524 = vmatprep.subr.bf16.mxu0 0
      %525 = vmatpush1.bf16.msra.mxu0 %v503
      %526 = vmatprep.subr.bf16.mxu0 0
      %527 = vmatpush1.bf16.msra.mxu0 %v504
      %528 = vmatprep.subr.bf16.mxu0 0
      %529 = vmatpush1.bf16.msra.mxu0 %v505
      %530 = vmatprep.subr.bf16.mxu0 0
      %531 = vmatpush1.bf16.msra.mxu0 0
      %532 = vmatprep.subr.bf16.mxu0 0
      %533 = vmatpush1.bf16.msra.mxu0 0
      %534 = vmatprep.subr.bf16.mxu0 0
      %535 = vmatpush1.bf16.msra.mxu0 0
      %536 = vmatprep.subr.bf16.mxu0 0
      %537 = vmatpush1.bf16.msra.mxu0 0
      %538 = vmatprep.subr.bf16.mxu0 0
      %539 = vmatpush1.bf16.msra.mxu0 0
      %540 = vmatprep.subr.bf16.mxu0 0
      %541 = vmatpush1.bf16.msra.mxu0 0
      %542 = vmatprep.subr.bf16.mxu0 0
      %543 = vmatpush1.bf16.msra.mxu0 0
      %544 = vmatprep.subr.bf16.mxu0 0
      %545 = vmatpush1.bf16.msra.mxu0 0
      %546 = vmatprep.mubr.bf16.mxu0 0
      %547 = vmatmul.mubr.bf16.gmra.mrb[0].mxu0 %v448
      %v548 = vpop.f32.mrb[0].mxu0
      %v549 = vadd.f32 0.0, %v548
      %v550 = vpop.f32.mrb[0].mxu0
      %v551 = vpop.f32.mrb[0].mxu0
      %v552 = vadd.f32 0.0, %v551
      %v553 = vpop.f32.mrb[0].mxu0
      %554 = vmatprep.mubr.bf16.mxu0 0
      %555 = vmatmul.mubr.bf16.gmra.mrb[0].mxu0 %v449
      %v556 = vpop.f32.mrb[0].mxu0
      %v557 = vadd.f32 0.0, %v556
      %v558 = vpop.f32.mrb[0].mxu0
      %v559 = vpop.f32.mrb[0].mxu0
      %v560 = vadd.f32 0.0, %v559
      %v561 = vpop.f32.mrb[0].mxu0
      %562 = vdwg.mxu0
      %v563 = vadd.f32 %v430, %v549
      %v564 = vadd.f32 %v433, %v552
      %v565 = vadd.f32 %v438, %v557
      %v566 = vadd.f32 %v441, %v560
      %567 = vst [vmem:[%s333] sm:$0xff] %v563
      %568 = vst [vmem:[%s333 + $0x8] sm:$0xff] %v564
      %569 = vst [vmem:[%s333 + $0x10] sm:$0xff] %v565
      %570 = vst [vmem:[%s333 + $0x18] sm:$0xff] %v566
      %v571 = vlaneseq
      %v572 = vand.u32 %v571, 127
      %v573 = vshra.s32 %v572, 2
      %v574 = vand.u32 %v572, 3
      %v575 = vadd.s32 %v573, 4294967295
      %vm576 = vcmp.ge.s32.totalorder %v575, 0
      %vm577 = vcmp.lt.s32.totalorder %v575, 4
      %vm578 = vmand %vm576, %vm577
      %v579 = vsel %vm578, 1.0, 0.0
      %vm580 = vcmp.ge.s32.totalorder %v573, 0
      %vm581 = vcmp.lt.s32.totalorder %v573, 4
      %vm582 = vmand %vm580, %vm581
      %v583 = vsel %vm582, 1.0, 0.0
      %v584 = vadd.s32 %v573, 1
      %vm585 = vcmp.ge.s32.totalorder %v584, 0
      %vm586 = vcmp.lt.s32.totalorder %v584, 4
      %vm587 = vmand %vm585, %vm586
      %v588 = vsel %vm587, 1.0, 0.0
      %v589 = vadd.s32 %v574, 4294967295
      %vm590 = vcmp.ge.s32.totalorder %v589, 0
      %vm591 = vcmp.lt.s32.totalorder %v589, 4
      %vm592 = vmand %vm590, %vm591
      %v593 = vsel %vm592, 1.0, 0.0
      %vm594 = vcmp.ge.s32.totalorder %v574, 0
      %vm595 = vcmp.lt.s32.totalorder %v574, 4
      %vm596 = vmand %vm594, %vm595
      %v597 = vsel %vm596, 1.0, 0.0
      %v598 = vadd.s32 %v574, 1
      %vm599 = vcmp.ge.s32.totalorder %v598, 0
      %vm600 = vcmp.lt.s32.totalorder %v598, 4
      %vm601 = vmand %vm599, %vm600
      %v602 = vsel %vm601, 1.0, 0.0
      %603 = vrot.lane.b32.xlu0 %v563, 5
      %v604 = vpop.permute.xlu0 %603
      %605 = vrot.lane.b32.xlu0 %v564, 5
      %v606 = vpop.permute.xlu0 %605
      %607 = vrot.lane.b32.xlu0 %v565, 5
      %v608 = vpop.permute.xlu0 %607
      %609 = vrot.lane.b32.xlu0 %v566, 5
      %v610 = vpop.permute.xlu0 %609
      %v611 = vmul.f32 %v579, %v593
      %v612 = vmul.f32 %v604, %v611
      %v613 = vmul.f32 %v606, %v611
      %v614 = vmul.f32 %v608, %v611
      %v615 = vmul.f32 %v610, %v611
      %v616 = vpack.c.bf16 %v613, %v612
      %v617 = vpack.c.bf16 %v615, %v614
      %618 = vst [vmem:[#allocation2] sm:$0xff] %v616
      %619 = vst [vmem:[#allocation2 + $0x8] sm:$0xff] %v617
      %620 = vrot.lane.b32.xlu0 %v563, 4
      %v621 = vpop.permute.xlu0 %620
      %622 = vrot.lane.b32.xlu0 %v564, 4
      %v623 = vpop.permute.xlu0 %622
      %624 = vrot.lane.b32.xlu0 %v565, 4
      %v625 = vpop.permute.xlu0 %624
      %626 = vrot.lane.b32.xlu0 %v566, 4
      %v627 = vpop.permute.xlu0 %626
      %v628 = vmul.f32 %v579, %v597
      %v629 = vmul.f32 %v621, %v628
      %v630 = vmul.f32 %v623, %v628
      %v631 = vmul.f32 %v625, %v628
      %v632 = vmul.f32 %v627, %v628
      %v633 = vpack.c.bf16 %v630, %v629
      %v634 = vpack.c.bf16 %v632, %v631
      %635 = vst [vmem:[#allocation2 + $0x10] sm:$0xff] %v633
      %636 = vst [vmem:[#allocation2 + $0x18] sm:$0xff] %v634
      %637 = vrot.lane.b32.xlu0 %v563, 3
      %v638 = vpop.permute.xlu0 %637
      %639 = vrot.lane.b32.xlu0 %v564, 3
      %v640 = vpop.permute.xlu0 %639
      %641 = vrot.lane.b32.xlu0 %v565, 3
      %v642 = vpop.permute.xlu0 %641
      %643 = vrot.lane.b32.xlu0 %v566, 3
      %v644 = vpop.permute.xlu0 %643
      %v645 = vmul.f32 %v579, %v602
      %v646 = vmul.f32 %v638, %v645
      %v647 = vmul.f32 %v640, %v645
      %v648 = vmul.f32 %v642, %v645
      %v649 = vmul.f32 %v644, %v645
      %v650 = vpack.c.bf16 %v647, %v646
      %v651 = vpack.c.bf16 %v649, %v648
      %652 = vst [vmem:[#allocation2 + $0x20] sm:$0xff] %v650
      %653 = vst [vmem:[#allocation2 + $0x28] sm:$0xff] %v651
      %654 = vrot.lane.b32.xlu0 %v563, 1
      %v655 = vpop.permute.xlu0 %654
      %656 = vrot.lane.b32.xlu0 %v564, 1
      %v657 = vpop.permute.xlu0 %656
      %658 = vrot.lane.b32.xlu0 %v565, 1
      %v659 = vpop.permute.xlu0 %658
      %660 = vrot.lane.b32.xlu0 %v566, 1
      %v661 = vpop.permute.xlu0 %660
      %v662 = vmul.f32 %v583, %v593
      %v663 = vmul.f32 %v655, %v662
      %v664 = vmul.f32 %v657, %v662
      %v665 = vmul.f32 %v659, %v662
      %v666 = vmul.f32 %v661, %v662
      %v667 = vpack.c.bf16 %v664, %v663
      %v668 = vpack.c.bf16 %v666, %v665
      %669 = vst [vmem:[#allocation2 + $0x30] sm:$0xff] %v667
      %670 = vst [vmem:[#allocation2 + $0x38] sm:$0xff] %v668
      %v671 = vmul.f32 %v583, %v597
      %v672 = vmul.f32 %v563, %v671
      %v673 = vmul.f32 %v564, %v671
      %v674 = vmul.f32 %v565, %v671
      %v675 = vmul.f32 %v566, %v671
      %v676 = vpack.c.bf16 %v673, %v672
      %v677 = vpack.c.bf16 %v675, %v674
      %678 = vst [vmem:[#allocation2 + $0x40] sm:$0xff] %v676
      %679 = vst [vmem:[#allocation2 + $0x48] sm:$0xff] %v677
      %680 = vrot.lane.b32.xlu0 %v563, 127
      %v681 = vpop.permute.xlu0 %680
      %682 = vrot.lane.b32.xlu0 %v564, 127
      %v683 = vpop.permute.xlu0 %682
      %684 = vrot.lane.b32.xlu0 %v565, 127
      %v685 = vpop.permute.xlu0 %684
      %686 = vrot.lane.b32.xlu0 %v566, 127
      %v687 = vpop.permute.xlu0 %686
      %v688 = vmul.f32 %v583, %v602
      %v689 = vmul.f32 %v681, %v688
      %v690 = vmul.f32 %v683, %v688
      %v691 = vmul.f32 %v685, %v688
      %v692 = vmul.f32 %v687, %v688
      %v693 = vpack.c.bf16 %v690, %v689
      %v694 = vpack.c.bf16 %v692, %v691
      %695 = vst [vmem:[#allocation2 + $0x50] sm:$0xff] %v693
      %696 = vst [vmem:[#allocation2 + $0x58] sm:$0xff] %v694
      %697 = vrot.lane.b32.xlu0 %v563, 125
      %v698 = vpop.permute.xlu0 %697
      %699 = vrot.lane.b32.xlu0 %v564, 125
      %v700 = vpop.permute.xlu0 %699
      %701 = vrot.lane.b32.xlu0 %v565, 125
      %v702 = vpop.permute.xlu0 %701
      %703 = vrot.lane.b32.xlu0 %v566, 125
      %v704 = vpop.permute.xlu0 %703
      %v705 = vmul.f32 %v588, %v593
      %v706 = vmul.f32 %v698, %v705
      %v707 = vmul.f32 %v700, %v705
      %v708 = vmul.f32 %v702, %v705
      %v709 = vmul.f32 %v704, %v705
      %v710 = vpack.c.bf16 %v707, %v706
      %v711 = vpack.c.bf16 %v709, %v708
      %712 = vst [vmem:[#allocation2 + $0x60] sm:$0xff] %v710
      %713 = vst [vmem:[#allocation2 + $0x68] sm:$0xff] %v711
      %714 = vrot.lane.b32.xlu0 %v563, 124
      %v715 = vpop.permute.xlu0 %714
      %716 = vrot.lane.b32.xlu0 %v564, 124
      %v717 = vpop.permute.xlu0 %716
      %718 = vrot.lane.b32.xlu0 %v565, 124
      %v719 = vpop.permute.xlu0 %718
      %720 = vrot.lane.b32.xlu0 %v566, 124
      %v721 = vpop.permute.xlu0 %720
      %v722 = vmul.f32 %v588, %v597
      %v723 = vmul.f32 %v715, %v722
      %v724 = vmul.f32 %v717, %v722
      %v725 = vmul.f32 %v719, %v722
      %v726 = vmul.f32 %v721, %v722
      %v727 = vpack.c.bf16 %v724, %v723
      %v728 = vpack.c.bf16 %v726, %v725
      %729 = vst [vmem:[#allocation2 + $0x70] sm:$0xff] %v727
      %730 = vst [vmem:[#allocation2 + $0x78] sm:$0xff] %v728
      %731 = vrot.lane.b32.xlu0 %v563, 123
      %v732 = vpop.permute.xlu0 %731
      %733 = vrot.lane.b32.xlu0 %v564, 123
      %v734 = vpop.permute.xlu0 %733
      %735 = vrot.lane.b32.xlu0 %v565, 123
      %v736 = vpop.permute.xlu0 %735
      %737 = vrot.lane.b32.xlu0 %v566, 123
      %v738 = vpop.permute.xlu0 %737
      %v739 = vmul.f32 %v588, %v602
      %v740 = vmul.f32 %v732, %v739
      %v741 = vmul.f32 %v734, %v739
      %v742 = vmul.f32 %v736, %v739
      %v743 = vmul.f32 %v738, %v739
      %v744 = vpack.c.bf16 %v741, %v740
      %v745 = vpack.c.bf16 %v743, %v742
      %746 = vst [vmem:[#allocation2 + $0x80] sm:$0xff] %v744
      %747 = vst [vmem:[#allocation2 + $0x88] sm:$0xff] %v745
      %v748 = vld [vmem:[%s5] sm:$0xff]
      %v749 = vld [vmem:[%s5 + $0x8] sm:$0xff]
      %v750 = vld [vmem:[%s5 + $0x10] sm:$0xff]
      %v751 = vld [vmem:[%s5 + $0x18] sm:$0xff]
      %v752 = vld [vmem:[%s5 + $0x20] sm:$0xff]
      %v753 = vld [vmem:[%s5 + $0x28] sm:$0xff]
      %v754 = vld [vmem:[%s5 + $0x30] sm:$0xff]
      %v755 = vld [vmem:[%s5 + $0x38] sm:$0xff]
      %v756 = vld [vmem:[%s5 + $0x40] sm:$0xff]
      %v757 = vld [vmem:[%s5 + $0x48] sm:$0xff]
      %v758 = vld [vmem:[%s5 + $0x50] sm:$0xff]
      %v759 = vld [vmem:[%s5 + $0x58] sm:$0xff]
      %v760 = vpack.c.bf16 %v751, %v748
      %v761 = vpack.c.bf16 %v752, %v749
      %v762 = vpack.c.bf16 %v753, %v750
      %v763 = vpack.c.bf16 %v757, %v754
      %v764 = vpack.c.bf16 %v758, %v755
      %v765 = vpack.c.bf16 %v759, %v756
      %v766 = vld [vmem:[#allocation2] sm:$0xff]
      %v767 = vld [vmem:[#allocation2 + $0x8] sm:$0xff]
      %v768 = vld [vmem:[#allocation2 + $0x10] sm:$0xff]
      %v769 = vld [vmem:[#allocation2 + $0x18] sm:$0xff]
      %v770 = vld [vmem:[#allocation2 + $0x20] sm:$0xff]
      %v771 = vld [vmem:[#allocation2 + $0x28] sm:$0xff]
      %v772 = vld [vmem:[#allocation2 + $0x30] sm:$0xff]
      %v773 = vld [vmem:[#allocation2 + $0x38] sm:$0xff]
      %v774 = vld [vmem:[#allocation2 + $0x40] sm:$0xff]
      %v775 = vld [vmem:[#allocation2 + $0x48] sm:$0xff]
      %v776 = vld [vmem:[#allocation2 + $0x50] sm:$0xff]
      %v777 = vld [vmem:[#allocation2 + $0x58] sm:$0xff]
      %v778 = vld [vmem:[#allocation2 + $0x60] sm:$0xff]
      %v779 = vld [vmem:[#allocation2 + $0x68] sm:$0xff]
      %v780 = vld [vmem:[#allocation2 + $0x70] sm:$0xff]
      %v781 = vld [vmem:[#allocation2 + $0x78] sm:$0xff]
      %v782 = vld [vmem:[#allocation2 + $0x80] sm:$0xff]
      %v783 = vld [vmem:[#allocation2 + $0x88] sm:$0xff]
      %v784 = vld [vmem:[%s6] sm:$0xff]
      %v785 = vld [vmem:[%s6 + $0x8] sm:$0xff]
      %v786 = vld [vmem:[%s6 + $0x10] sm:$0xff]
      %v787 = vld [vmem:[%s6 + $0x18] sm:$0xff]
      %789 = vset.pattern.permute.xlu0 0
      %790 = vperm.xlu0 %789, %v784
      %v791 = vpop.permute.xlu0 %790
      %794 = vset.pattern.permute.xlu0 0
      %795 = vperm.xlu0 %794, %v785
      %v796 = vpop.permute.xlu0 %795
      %799 = vset.pattern.permute.xlu0 0
      %800 = vperm.xlu0 %799, %v786
      %v801 = vpop.permute.xlu0 %800
      %804 = vset.pattern.permute.xlu0 0
      %805 = vperm.xlu0 %804, %v787
      %v806 = vpop.permute.xlu0 %805
      %vm808 = vcmask 261120
      %v810 = vsel %vm808, %v762, 0
      %v813 = vsel %vm808, %v765, 0
      %815 = vmatprep.subr.bf16.mxu0 0
      %816 = vmatpush1.bf16.msra.mxu0 %v766
      %817 = vmatprep.subr.bf16.mxu0 0
      %818 = vmatpush1.bf16.msra.mxu0 %v767
      %819 = vmatprep.subr.bf16.mxu0 0
      %820 = vmatpush1.bf16.msra.mxu0 %v768
      %821 = vmatprep.subr.bf16.mxu0 0
      %822 = vmatpush1.bf16.msra.mxu0 %v769
      %823 = vmatprep.subr.bf16.mxu0 0
      %824 = vmatpush1.bf16.msra.mxu0 %v770
      %825 = vmatprep.subr.bf16.mxu0 0
      %826 = vmatpush1.bf16.msra.mxu0 %v771
      %827 = vmatprep.subr.bf16.mxu0 0
      %828 = vmatpush1.bf16.msra.mxu0 %v772
      %829 = vmatprep.subr.bf16.mxu0 0
      %830 = vmatpush1.bf16.msra.mxu0 %v773
      %831 = vmatprep.subr.bf16.mxu0 0
      %832 = vmatpush1.bf16.msra.mxu0 %v774
      %833 = vmatprep.subr.bf16.mxu0 0
      %834 = vmatpush1.bf16.msra.mxu0 %v775
      %835 = vmatprep.subr.bf16.mxu0 0
      %836 = vmatpush1.bf16.msra.mxu0 %v776
      %837 = vmatprep.subr.bf16.mxu0 0
      %838 = vmatpush1.bf16.msra.mxu0 %v777
      %839 = vmatprep.subr.bf16.mxu0 0
      %840 = vmatpush1.bf16.msra.mxu0 %v778
      %841 = vmatprep.subr.bf16.mxu0 0
      %842 = vmatpush1.bf16.msra.mxu0 %v779
      %843 = vmatprep.subr.bf16.mxu0 0
      %844 = vmatpush1.bf16.msra.mxu0 %v780
      %845 = vmatprep.subr.bf16.mxu0 0
      %846 = vmatpush1.bf16.msra.mxu0 %v781
      %847 = vmatprep.mubr.bf16.mxu0 %v761
      %848 = vmatmul.mubr.bf16.gmra.mrb[0].mxu0 %v760
      %v849 = vpop.f32.mrb[0].mxu0
      %v850 = vadd.f32 %v791, %v849
      %v851 = vpop.f32.mrb[0].mxu0
      %v852 = vpop.f32.mrb[0].mxu0
      %v853 = vadd.f32 %v796, %v852
      %v854 = vpop.f32.mrb[0].mxu0
      %855 = vmatprep.mubr.bf16.mxu0 %v764
      %856 = vmatmul.mubr.bf16.gmra.mrb[0].mxu0 %v763
      %v857 = vpop.f32.mrb[0].mxu0
      %v858 = vadd.f32 %v801, %v857
      %v859 = vpop.f32.mrb[0].mxu0
      %v860 = vpop.f32.mrb[0].mxu0
      %v861 = vadd.f32 %v806, %v860
      %v862 = vpop.f32.mrb[0].mxu0
      %863 = vdwg.mxu0
      %864 = vmatprep.subr.bf16.mxu0 0
      %865 = vmatpush1.bf16.msra.mxu0 %v782
      %866 = vmatprep.subr.bf16.mxu0 0
      %867 = vmatpush1.bf16.msra.mxu0 %v783
      %868 = vmatprep.subr.bf16.mxu0 0
      %869 = vmatpush1.bf16.msra.mxu0 0
      %870 = vmatprep.subr.bf16.mxu0 0
      %871 = vmatpush1.bf16.msra.mxu0 0
      %872 = vmatprep.subr.bf16.mxu0 0
      %873 = vmatpush1.bf16.msra.mxu0 0
      %874 = vmatprep.subr.bf16.mxu0 0
      %875 = vmatpush1.bf16.msra.mxu0 0
      %876 = vmatprep.subr.bf16.mxu0 0
      %877 = vmatpush1.bf16.msra.mxu0 0
      %878 = vmatprep.subr.bf16.mxu0 0
      %879 = vmatpush1.bf16.msra.mxu0 0
      %880 = vmatprep.subr.bf16.mxu0 0
      %881 = vmatpush1.bf16.msra.mxu0 0
      %882 = vmatprep.subr.bf16.mxu0 0
      %883 = vmatpush1.bf16.msra.mxu0 0
      %884 = vmatprep.subr.bf16.mxu0 0
      %885 = vmatpush1.bf16.msra.mxu0 0
      %886 = vmatprep.subr.bf16.mxu0 0
      %887 = vmatpush1.bf16.msra.mxu0 0
      %888 = vmatprep.subr.bf16.mxu0 0
      %889 = vmatpush1.bf16.msra.mxu0 0
      %890 = vmatprep.subr.bf16.mxu0 0
      %891 = vmatpush1.bf16.msra.mxu0 0
      %892 = vmatprep.subr.bf16.mxu0 0
      %893 = vmatpush1.bf16.msra.mxu0 0
      %894 = vmatprep.subr.bf16.mxu0 0
      %895 = vmatpush1.bf16.msra.mxu0 0
      %896 = vmatprep.mubr.bf16.mxu0 0
      %897 = vmatmul.mubr.bf16.gmra.mrb[0].mxu0 %v810
      %v898 = vpop.f32.mrb[0].mxu0
      %v899 = vadd.f32 %v850, %v898
      %v900 = vpop.f32.mrb[0].mxu0
      %v901 = vpop.f32.mrb[0].mxu0
      %v902 = vadd.f32 %v853, %v901
      %v903 = vpop.f32.mrb[0].mxu0
      %904 = vmatprep.mubr.bf16.mxu0 0
      %905 = vmatmul.mubr.bf16.gmra.mrb[0].mxu0 %v813
      %v906 = vpop.f32.mrb[0].mxu0
      %v907 = vadd.f32 %v858, %v906
      %v908 = vpop.f32.mrb[0].mxu0
      %v909 = vpop.f32.mrb[0].mxu0
      %v910 = vadd.f32 %v861, %v909
      %v911 = vpop.f32.mrb[0].mxu0
      %912 = vdwg.mxu0
      %913 = vst [vmem:[%s338] sm:$0xff] %v899
      %914 = vst [vmem:[%s338 + $0x8] sm:$0xff] %v902
      %915 = vst [vmem:[%s338 + $0x10] sm:$0xff] %v907
      %916 = vst [vmem:[%s338 + $0x18] sm:$0xff] %v910
      %p917 = scmp.lt.s32.totalorder %s20, 1
      %s918 = scalar_select %p917, %s20, 1
      %s919 = smul.addr %s918, 4
      %s920 = smul.addr %s919, 8
      %s921 = scalar_lea.vmem %s7, %s920
      %p922 = scmp.lt.s32.totalorder %s20, 1
      %s923 = scalar_select %p922, %s20, 1
      %s924 = smul.addr %s923, 4
      %s925 = smul.addr %s924, 8
      %s926 = scalar_lea.vmem %s8, %s925
      // Predicated region
      $region49: #{feature_shrinker_forward.6} parent=47 // pred_check
        %p927 = pneg %p195
      $region50: #{feature_shrinker_forward.6} parent=47 // pred_check_branch
        %929 = sbr.rel (%p927) target = $region52
      $region51: #{feature_shrinker_forward.6} parent=47 // pred_region
        _
      $region52: #{feature_shrinker_forward.6} parent=47 // pred_fallthru
        _
      // Predicated region
      $region53: #{feature_shrinker_forward.6} parent=47 // pred_check
        %p930 = pneg %p221
      $region54: #{feature_shrinker_forward.6} parent=47 // pred_check_branch
        %932 = sbr.rel (%p930) target = $region56
      $region55: #{feature_shrinker_forward.6} parent=47 // pred_region
        _
      $region56: #{feature_shrinker_forward.6} parent=47 // pred_fallthru
        _
    $region48: #{feature_shrinker_forward.6} parent=5 // pred_fallthru
      _
    %p933 = scmp.le.s32.totalorder 2, %s15
    // Predicated region
    $region57: #{feature_shrinker_forward.6} parent=5 // pred_check
      %p934 = pneg %p933
    $region58: #{feature_shrinker_forward.6} parent=5 // pred_check_branch
      %936 = sbr.rel (%p934) target = $region60
    $region59: #{feature_shrinker_forward.6} parent=5 // pred_region
      %s937 = ssub.s32 %s15, 2
      // Predicated region
      $region61: #{feature_shrinker_forward.6} parent=59 // pred_check
        %p938 = pneg %p201
      $region62: #{feature_shrinker_forward.6} parent=59 // pred_check_branch
        %940 = sbr.rel (%p938) target = $region64
      $region63: #{feature_shrinker_forward.6} parent=59 // pred_region
        %p941 = scmp.lt.s32.totalorder %s21, 1
        %s942 = scalar_select %p941, %s21, 1
        %s943 = smul.addr %s942, 4
        %s944 = smul.addr %s943, 8
        %s945 = scalar_lea.vmem %s7, %s944
      $region64: #{feature_shrinker_forward.6} parent=59 // pred_fallthru
        _
      // Predicated region
      $region65: #{feature_shrinker_forward.6} parent=59 // pred_check
        %p946 = pneg %p227
      $region66: #{feature_shrinker_forward.6} parent=59 // pred_check_branch
        %948 = sbr.rel (%p946) target = $region68
      $region67: #{feature_shrinker_forward.6} parent=59 // pred_region
        %p949 = scmp.lt.s32.totalorder %s21, 1
        %s950 = scalar_select %p949, %s21, 1
        %s951 = smul.addr %s950, 4
        %s952 = smul.addr %s951, 8
        %s953 = scalar_lea.vmem %s8, %s952
      $region68: #{feature_shrinker_forward.6} parent=59 // pred_fallthru
        _
    $region60: #{feature_shrinker_forward.6} parent=5 // pred_fallthru
      _
  $region6: #{feature_shrinker_forward.6} parent=0 // loop_footer
    %s19 = sadd.s32 1, %s15
  $region7: #{feature_shrinker_forward.6} parent=0 // loop_footer_branch
    %14 = sbr.rel target = $region3
  $region8: #{feature_shrinker_forward.6} parent=0 // loop_exit
    _

// kernel: feature_shrinker_forward.7
$region0: #{feature_shrinker_forward.7}
  #allocation0 [shape = 'u32[]', space=smem, size = 0x4, offset = 0x4, fixed_abs, tag = 'smem constant byte address 0x4 - core index']
  #allocation1 [shape = 'u32[144,128]{1,0:T(1,128)}', space=vmem, size = 0x12000, scoped, tag = 'internal scratch']
  #allocation2 [shape = 'bf16[288,128]{1,0:T(16,128)(2,1)}', space=vmem, size = 0x12000, scoped, tag = 'scratch operand']
  %s0 = inlined_call_operand.vmem [shape: f32[2,40,128], index: 0, kind: input, shape index: {}]
  %s1 = inlined_call_operand.vmem [shape: f32[2,32,128], index: 1, kind: input, shape index: {}]
  %s2 = inlined_call_operand.vmem [shape: bf16[128,128], index: 2, kind: input, shape index: {}]
  %s3 = inlined_call_operand.vmem [shape: f32[32,40], index: 3, kind: input, shape index: {}]
  %s4 = inlined_call_operand.vmem [shape: f32[32,1], index: 4, kind: input, shape index: {}]
  %s5 = inlined_call_operand.vmem [shape: f32[32,288], index: 5, kind: input, shape index: {}]
  %s6 = inlined_call_operand.vmem [shape: f32[32,1], index: 6, kind: input, shape index: {}]
  %s7 = inlined_call_operand.vmem [shape: f32[2,32,128], index: 7, kind: output, shape index: {0}]
  %s8 = inlined_call_operand.vmem [shape: f32[2,32,128], index: 8, kind: output, shape index: {1}]
  %9 = xla_tuple %s7, %s8
  %s10 = sld [smem:[#allocation0]]
  $region69: #{feature_shrinker_forward.7} parent=0
    _
  %s12 = ssub.s32 1, %s10
  %s13 = scalar_select 0, %s12, %s10
  loop: start=0, step=1, limit=4
  $region2: #{feature_shrinker_forward.7} parent=0 // loop_pre_header
    _
  $region3: #{feature_shrinker_forward.7} parent=0 // loop_header
    %s15 = sphi 0, %s19
    %p16 = scmp.ge.s32.totalorder %s15, 4
    %s25 = sphi 0, %s27
    %s28 = sphi 0, %s25
    %s29 = sphi 0, %s28
    %s45 = sphi 0, %s29
    %s51 = sphi 0, %s53
    %s54 = sphi 0, %s51
    %s55 = sphi 0, %s54
    %s71 = sphi 0, %s55
    %s75 = sphi 0, %s75
    %s77 = sphi 0, %s75
    %s78 = sphi 0, %s77
    %s92 = sphi 0, %s78
    %s96 = sphi 0, %s96
    %s98 = sphi 0, %s96
    %s99 = sphi 0, %s98
    %s113 = sphi 0, %s99
    %s117 = sphi 0, %s117
    %s119 = sphi 0, %s117
    %s120 = sphi 0, %s119
    %s134 = sphi 0, %s120
    %s138 = sphi 0, %s138
    %s140 = sphi 0, %s138
    %s141 = sphi 0, %s140
    %s155 = sphi 0, %s141
    %s159 = sphi 0, %s159
    %s161 = sphi 0, %s159
    %s162 = sphi 0, %s161
    %s176 = sphi 0, %s162
    %s182 = sphi 0, %s184
    %s185 = sphi 0, %s182
    %s186 = sphi 0, %s185
    %s202 = sphi 0, %s186
    %s208 = sphi 0, %s210
    %s211 = sphi 0, %s208
    %s212 = sphi 0, %s211
    %s228 = sphi 0, %s212
  $region4: #{feature_shrinker_forward.7} parent=0 // loop_header_branch
    %18 = sbr.rel (%p16) target = $region8
  $region5: #{feature_shrinker_forward.7} parent=0 // loop_body
    %s20 = ssub.s32 %s15, 1
    %s21 = ssub.s32 %s15, 2
    %s22 = sadd.s32 %s15, 1
    %s23 = ssub.s32 %s15, %s22
    %p24 = scmp.eq.s32.totalorder %s23, 0
    %s26 = sadd.s32 %s25, 1
    %s27 = scalar_select %p24, %s25, %s26
    %p30 = pneg %p24
    %p31 = scmp.eq.s32.totalorder %s15, 1
    %p32 = por %p30, %p31
    %p33 = scmp.ne.s32.totalorder %s25, %s28
    %p34 = scmp.eq.s32.totalorder %s15, 0
    %p35 = por %p33, %p34
    %p36 = scmp.ne.s32.totalorder %s25, %s28
    %p37 = scmp.eq.s32.totalorder %s20, 1
    %p38 = por %p36, %p37
    %p39 = scmp.ne.s32.totalorder %s28, %s29
    %p40 = scmp.eq.s32.totalorder %s20, 0
    %p41 = por %p39, %p40
    %p42 = scmp.ne.s32.totalorder %s28, %s29
    %p43 = scmp.eq.s32.totalorder %s21, 1
    %p44 = por %p42, %p43
    %p46 = scmp.ne.s32.totalorder %s29, %s45
    %p47 = scmp.eq.s32.totalorder %s21, 0
    %p48 = por %p46, %p47
    %s49 = ssub.s32 %s15, %s22
    %p50 = scmp.eq.s32.totalorder %s49, 0
    %s52 = sadd.s32 %s51, 1
    %s53 = scalar_select %p50, %s51, %s52
    %p56 = pneg %p50
    %p57 = scmp.eq.s32.totalorder %s15, 1
    %p58 = por %p56, %p57
    %p59 = scmp.ne.s32.totalorder %s51, %s54
    %p60 = scmp.eq.s32.totalorder %s15, 0
    %p61 = por %p59, %p60
    %p62 = scmp.ne.s32.totalorder %s51, %s54
    %p63 = scmp.eq.s32.totalorder %s20, 1
    %p64 = por %p62, %p63
    %p65 = scmp.ne.s32.totalorder %s54, %s55
    %p66 = scmp.eq.s32.totalorder %s20, 0
    %p67 = por %p65, %p66
    %p68 = scmp.ne.s32.totalorder %s54, %s55
    %p69 = scmp.eq.s32.totalorder %s21, 1
    %p70 = por %p68, %p69
    %p72 = scmp.ne.s32.totalorder %s55, %s71
    %p73 = scmp.eq.s32.totalorder %s21, 0
    %p74 = por %p72, %p73
    %s76 = sadd.s32 %s75, 1
    %p79 = scmp.eq.s32.totalorder %s15, 1
    %p80 = scmp.ne.s32.totalorder %s75, %s77
    %p81 = scmp.eq.s32.totalorder %s15, 0
    %p82 = por %p80, %p81
    %p83 = scmp.ne.s32.totalorder %s75, %s77
    %p84 = scmp.eq.s32.totalorder %s20, 1
    %p85 = por %p83, %p84
    %p86 = scmp.ne.s32.totalorder %s77, %s78
    %p87 = scmp.eq.s32.totalorder %s20, 0
    %p88 = por %p86, %p87
    %p89 = scmp.ne.s32.totalorder %s77, %s78
    %p90 = scmp.eq.s32.totalorder %s21, 1
    %p91 = por %p89, %p90
    %p93 = scmp.ne.s32.totalorder %s78, %s92
    %p94 = scmp.eq.s32.totalorder %s21, 0
    %p95 = por %p93, %p94
    %s97 = sadd.s32 %s96, 1
    %p100 = scmp.eq.s32.totalorder %s15, 1
    %p101 = scmp.ne.s32.totalorder %s96, %s98
    %p102 = scmp.eq.s32.totalorder %s15, 0
    %p103 = por %p101, %p102
    %p104 = scmp.ne.s32.totalorder %s96, %s98
    %p105 = scmp.eq.s32.totalorder %s20, 1
    %p106 = por %p104, %p105
    %p107 = scmp.ne.s32.totalorder %s98, %s99
    %p108 = scmp.eq.s32.totalorder %s20, 0
    %p109 = por %p107, %p108
    %p110 = scmp.ne.s32.totalorder %s98, %s99
    %p111 = scmp.eq.s32.totalorder %s21, 1
    %p112 = por %p110, %p111
    %p114 = scmp.ne.s32.totalorder %s99, %s113
    %p115 = scmp.eq.s32.totalorder %s21, 0
    %p116 = por %p114, %p115
    %s118 = sadd.s32 %s117, 1
    %p121 = scmp.eq.s32.totalorder %s15, 1
    %p122 = scmp.ne.s32.totalorder %s117, %s119
    %p123 = scmp.eq.s32.totalorder %s15, 0
    %p124 = por %p122, %p123
    %p125 = scmp.ne.s32.totalorder %s117, %s119
    %p126 = scmp.eq.s32.totalorder %s20, 1
    %p127 = por %p125, %p126
    %p128 = scmp.ne.s32.totalorder %s119, %s120
    %p129 = scmp.eq.s32.totalorder %s20, 0
    %p130 = por %p128, %p129
    %p131 = scmp.ne.s32.totalorder %s119, %s120
    %p132 = scmp.eq.s32.totalorder %s21, 1
    %p133 = por %p131, %p132
    %p135 = scmp.ne.s32.totalorder %s120, %s134
    %p136 = scmp.eq.s32.totalorder %s21, 0
    %p137 = por %p135, %p136
    %s139 = sadd.s32 %s138, 1
    %p142 = scmp.eq.s32.totalorder %s15, 1
    %p143 = scmp.ne.s32.totalorder %s138, %s140
    %p144 = scmp.eq.s32.totalorder %s15, 0
    %p145 = por %p143, %p144
    %p146 = scmp.ne.s32.totalorder %s138, %s140
    %p147 = scmp.eq.s32.totalorder %s20, 1
    %p148 = por %p146, %p147
    %p149 = scmp.ne.s32.totalorder %s140, %s141
    %p150 = scmp.eq.s32.totalorder %s20, 0
    %p151 = por %p149, %p150
    %p152 = scmp.ne.s32.totalorder %s140, %s141
    %p153 = scmp.eq.s32.totalorder %s21, 1
    %p154 = por %p152, %p153
    %p156 = scmp.ne.s32.totalorder %s141, %s155
    %p157 = scmp.eq.s32.totalorder %s21, 0
    %p158 = por %p156, %p157
    %s160 = sadd.s32 %s159, 1
    %p163 = scmp.eq.s32.totalorder %s15, 1
    %p164 = scmp.ne.s32.totalorder %s159, %s161
    %p165 = scmp.eq.s32.totalorder %s15, 0
    %p166 = por %p164, %p165
    %p167 = scmp.ne.s32.totalorder %s159, %s161
    %p168 = scmp.eq.s32.totalorder %s20, 1
    %p169 = por %p167, %p168
    %p170 = scmp.ne.s32.totalorder %s161, %s162
    %p171 = scmp.eq.s32.totalorder %s20, 0
    %p172 = por %p170, %p171
    %p173 = scmp.ne.s32.totalorder %s161, %s162
    %p174 = scmp.eq.s32.totalorder %s21, 1
    %p175 = por %p173, %p174
    %p177 = scmp.ne.s32.totalorder %s162, %s176
    %p178 = scmp.eq.s32.totalorder %s21, 0
    %p179 = por %p177, %p178
    %s180 = ssub.s32 %s15, %s22
    %p181 = scmp.eq.s32.totalorder %s180, 0
    %s183 = sadd.s32 %s182, 1
    %s184 = scalar_select %p181, %s182, %s183
    %p187 = pneg %p181
    %p188 = scmp.eq.s32.totalorder %s15, 1
    %p189 = por %p187, %p188
    %p190 = scmp.ne.s32.totalorder %s182, %s185
    %p191 = scmp.eq.s32.totalorder %s15, 0
    %p192 = por %p190, %p191
    %p193 = scmp.ne.s32.totalorder %s182, %s185
    %p194 = scmp.eq.s32.totalorder %s20, 1
    %p195 = por %p193, %p194
    %p196 = scmp.ne.s32.totalorder %s185, %s186
    %p197 = scmp.eq.s32.totalorder %s20, 0
    %p198 = por %p196, %p197
    %p199 = scmp.ne.s32.totalorder %s185, %s186
    %p200 = scmp.eq.s32.totalorder %s21, 1
    %p201 = por %p199, %p200
    %p203 = scmp.ne.s32.totalorder %s186, %s202
    %p204 = scmp.eq.s32.totalorder %s21, 0
    %p205 = por %p203, %p204
    %s206 = ssub.s32 %s15, %s22
    %p207 = scmp.eq.s32.totalorder %s206, 0
    %s209 = sadd.s32 %s208, 1
    %s210 = scalar_select %p207, %s208, %s209
    %p213 = pneg %p207
    %p214 = scmp.eq.s32.totalorder %s15, 1
    %p215 = por %p213, %p214
    %p216 = scmp.ne.s32.totalorder %s208, %s211
    %p217 = scmp.eq.s32.totalorder %s15, 0
    %p218 = por %p216, %p217
    %p219 = scmp.ne.s32.totalorder %s208, %s211
    %p220 = scmp.eq.s32.totalorder %s20, 1
    %p221 = por %p219, %p220
    %p222 = scmp.ne.s32.totalorder %s211, %s212
    %p223 = scmp.eq.s32.totalorder %s20, 0
    %p224 = por %p222, %p223
    %p225 = scmp.ne.s32.totalorder %s211, %s212
    %p226 = scmp.eq.s32.totalorder %s21, 1
    %p227 = por %p225, %p226
    %p229 = scmp.ne.s32.totalorder %s212, %s228
    %p230 = scmp.eq.s32.totalorder %s21, 0
    %p231 = por %p229, %p230
    %p232 = scmp.le.s32.totalorder 1, %s15
    %p233 = scmp.lt.s32.totalorder %s15, 3
    %p234 = pnand %p232, %p233
    %p235 = pneg %p234
    // Predicated region
    $region9: #{feature_shrinker_forward.7} parent=5 // pred_check
      _
    $region10: #{feature_shrinker_forward.7} parent=5 // pred_check_branch
      %237 = sbr.rel (%p234) target = $region12
    $region11: #{feature_shrinker_forward.7} parent=5 // pred_region
      %s238 = ssub.s32 %s15, 1
      // Predicated region
      $region13: #{feature_shrinker_forward.7} parent=11 // pred_check
        %p239 = pneg %p88
      $region14: #{feature_shrinker_forward.7} parent=11 // pred_check_branch
        %241 = sbr.rel (%p239) target = $region16
      $region15: #{feature_shrinker_forward.7} parent=11 // pred_region
        _
      $region16: #{feature_shrinker_forward.7} parent=11 // pred_fallthru
        _
      // Predicated region
      $region17: #{feature_shrinker_forward.7} parent=11 // pred_check
        %p242 = pneg %p109
      $region18: #{feature_shrinker_forward.7} parent=11 // pred_check_branch
        %244 = sbr.rel (%p242) target = $region20
      $region19: #{feature_shrinker_forward.7} parent=11 // pred_region
        _
      $region20: #{feature_shrinker_forward.7} parent=11 // pred_fallthru
        _
      // Predicated region
      $region21: #{feature_shrinker_forward.7} parent=11 // pred_check
        %p245 = pneg %p130
      $region22: #{feature_shrinker_forward.7} parent=11 // pred_check_branch
        %247 = sbr.rel (%p245) target = $region24
      $region23: #{feature_shrinker_forward.7} parent=11 // pred_region
        _
      $region24: #{feature_shrinker_forward.7} parent=11 // pred_fallthru
        _
      // Predicated region
      $region25: #{feature_shrinker_forward.7} parent=11 // pred_check
        %p248 = pneg %p151
      $region26: #{feature_shrinker_forward.7} parent=11 // pred_check_branch
        %250 = sbr.rel (%p248) target = $region28
      $region27: #{feature_shrinker_forward.7} parent=11 // pred_region
        _
      $region28: #{feature_shrinker_forward.7} parent=11 // pred_fallthru
        _
      // Predicated region
      $region29: #{feature_shrinker_forward.7} parent=11 // pred_check
        %p251 = pneg %p172
      $region30: #{feature_shrinker_forward.7} parent=11 // pred_check_branch
        %253 = sbr.rel (%p251) target = $region32
      $region31: #{feature_shrinker_forward.7} parent=11 // pred_region
        _
      $region32: #{feature_shrinker_forward.7} parent=11 // pred_fallthru
        _
    $region12: #{feature_shrinker_forward.7} parent=5 // pred_fallthru
      _
    %p254 = scmp.lt.s32.totalorder %s15, 2
    // Predicated region
    $region33: #{feature_shrinker_forward.7} parent=5 // pred_check
      %p255 = pneg %p254
    $region34: #{feature_shrinker_forward.7} parent=5 // pred_check_branch
      %257 = sbr.rel (%p255) target = $region36
    $region35: #{feature_shrinker_forward.7} parent=5 // pred_region
      // Predicated region
      $region37: #{feature_shrinker_forward.7} parent=35 // pred_check
        %p258 = pneg %p35
      $region38: #{feature_shrinker_forward.7} parent=35 // pred_check_branch
        %260 = sbr.rel (%p258) target = $region40
      $region39: #{feature_shrinker_forward.7} parent=35 // pred_region
        %p261 = scmp.lt.s32.totalorder %s15, 1
        %s262 = scalar_select %p261, %s15, 1
        %s263 = smul.addr %s262, 5
        %s264 = smul.addr %s263, 8
        %s265 = scalar_lea.vmem %s0, %s264
      $region40: #{feature_shrinker_forward.7} parent=35 // pred_fallthru
        _
      // Predicated region
      $region41: #{feature_shrinker_forward.7} parent=35 // pred_check
        %p266 = pneg %p61
      $region42: #{feature_shrinker_forward.7} parent=35 // pred_check_branch
        %268 = sbr.rel (%p266) target = $region44
      $region43: #{feature_shrinker_forward.7} parent=35 // pred_region
        %p269 = scmp.lt.s32.totalorder %s15, 1
        %s270 = scalar_select %p269, %s15, 1
        %s271 = smul.addr %s270, 4
        %s272 = smul.addr %s271, 8
        %s273 = scalar_lea.vmem %s1, %s272
      $region44: #{feature_shrinker_forward.7} parent=35 // pred_fallthru
        _
    $region36: #{feature_shrinker_forward.7} parent=5 // pred_fallthru
      _
    %p274 = scmp.le.s32.totalorder 1, %s15
    %p275 = scmp.lt.s32.totalorder %s15, 3
    %p276 = pnand %p274, %p275
    %p277 = pneg %p276
    // Predicated region
    $region45: #{feature_shrinker_forward.7} parent=5 // pred_check
      _
    $region46: #{feature_shrinker_forward.7} parent=5 // pred_check_branch
      %279 = sbr.rel (%p276) target = $region48
    $region47: #{feature_shrinker_forward.7} parent=5 // pred_region
      %s280 = ssub.s32 %s15, 1
      %p281 = scmp.lt.s32.totalorder %s20, 1
      %s282 = scalar_select %p281, %s20, 1
      %s283 = smul.addr %s282, 5
      %s284 = smul.addr %s283, 8
      %s285 = scalar_lea.vmem %s0, %s284
      %p286 = pneg %p41
      %p287 = pneg %p38
      %p288 = scmp.lt.s32.totalorder %s20, 1
      %s289 = scalar_select %p288, %s20, 1
      %s290 = smul.addr %s289, 4
      %s291 = smul.addr %s290, 8
      %s292 = scalar_lea.vmem %s1, %s291
      %p293 = pneg %p67
      %p294 = pneg %p64
      %p295 = pneg %p88
      %p296 = pneg %p85
      %p297 = pneg %p109
      %p298 = pneg %p106
      %p299 = pneg %p130
      %p300 = pneg %p127
      %p301 = pneg %p151
      %p302 = pneg %p148
      %p303 = pneg %p172
      %p304 = pneg %p169
      %p305 = pneg %p198
      %p306 = pneg %p195
      %p307 = scmp.lt.s32.totalorder %s20, 1
      %s308 = scalar_select %p307, %s20, 1
      %s309 = smul.addr %s308, 4
      %s310 = smul.addr %s309, 8
      %s311 = scalar_lea.vmem %s7, %s310
      %p312 = pneg %p224
      %p313 = pneg %p221
      %p314 = scmp.lt.s32.totalorder %s20, 1
      %s315 = scalar_select %p314, %s20, 1
      %s316 = smul.addr %s315, 4
      %s317 = smul.addr %s316, 8
      %s318 = scalar_lea.vmem %s8, %s317
      %p319 = scmp.lt.s32.totalorder %s20, 1
      %s320 = scalar_select %p319, %s20, 1
      %s321 = smul.addr %s320, 5
      %s322 = smul.addr %s321, 8
      %s323 = scalar_lea.vmem %s0, %s322
      %p324 = scmp.lt.s32.totalorder %s20, 1
      %s325 = scalar_select %p324, %s20, 1
      %s326 = smul.addr %s325, 4
      %s327 = smul.addr %s326, 8
      %s328 = scalar_lea.vmem %s1, %s327
      %p329 = scmp.lt.s32.totalorder %s20, 1
      %s330 = scalar_select %p329, %s20, 1
      %s331 = smul.addr %s330, 4
      %s332 = smul.addr %s331, 8
      %s333 = scalar_lea.vmem %s7, %s332
      %p334 = scmp.lt.s32.totalorder %s20, 1
      %s335 = scalar_select %p334, %s20, 1
      %s336 = smul.addr %s335, 4
      %s337 = smul.addr %s336, 8
      %s338 = scalar_lea.vmem %s8, %s337
      %v340 = vld [vmem:[%s3] sm:$0xff]
      %v341 = vld [vmem:[%s3 + $0x8] sm:$0xff]
      %v342 = vld [vmem:[%s3 + $0x10] sm:$0xff]
      %v343 = vld [vmem:[%s3 + $0x18] sm:$0xff]
      %v344 = vpack.c.bf16 %v341, %v340
      %v345 = vpack.c.bf16 %v343, %v342
      %v346 = vld [vmem:[%s323] sm:$0xff]
      %v347 = vld [vmem:[%s323 + $0x8] sm:$0xff]
      %v348 = vld [vmem:[%s323 + $0x10] sm:$0xff]
      %v349 = vld [vmem:[%s323 + $0x18] sm:$0xff]
      %v350 = vld [vmem:[%s323 + $0x20] sm:$0xff]
      %v351 = vpack.c.bf16 %v347, %v346
      %v352 = vpack.c.bf16 %v349, %v348
      %v353 = vpack.c.bf16 %v350, %v350
      %v354 = vld [vmem:[%s4] sm:$0xff]
      %v355 = vld [vmem:[%s4 + $0x8] sm:$0xff]
      %v356 = vld [vmem:[%s4 + $0x10] sm:$0xff]
      %v357 = vld [vmem:[%s4 + $0x18] sm:$0xff]
      %359 = vset.pattern.permute.xlu0 0
      %360 = vperm.xlu0 %359, %v354
      %v361 = vpop.permute.xlu0 %360
      %364 = vset.pattern.permute.xlu0 0
      %365 = vperm.xlu0 %364, %v355
      %v366 = vpop.permute.xlu0 %365
      %369 = vset.pattern.permute.xlu0 0
      %370 = vperm.xlu0 %369, %v356
      %v371 = vpop.permute.xlu0 %370
      %374 = vset.pattern.permute.xlu0 0
      %375 = vperm.xlu0 %374, %v357
      %v376 = vpop.permute.xlu0 %375
      %vm378 = vcmask 326656
      %v380 = vsel %vm378, %v344, 0
      %v383 = vsel %vm378, %v345, 0
      %vm385 = vcmask 1043456
      %v387 = vsel %vm385, %v353, 0
      %389 = vmatprep.subr.bf16.mxu0 0
      %390 = vmatpush1.bf16.msra.mxu0 %v351
      %391 = vmatprep.subr.bf16.mxu0 0
      %392 = vmatpush1.bf16.msra.mxu0 %v352
      %393 = vmatprep.subr.bf16.mxu0 0
      %394 = vmatpush1.bf16.msra.mxu0 %v387
      %395 = vmatprep.subr.bf16.mxu0 0
      %396 = vmatpush1.bf16.msra.mxu0 0
      %397 = vmatprep.subr.bf16.mxu0 0
      %398 = vmatpush1.bf16.msra.mxu0 0
      %399 = vmatprep.subr.bf16.mxu0 0
      %400 = vmatpush1.bf16.msra.mxu0 0
      %401 = vmatprep.subr.bf16.mxu0 0
      %402 = vmatpush1.bf16.msra.mxu0 0
      %403 = vmatprep.subr.bf16.mxu0 0
      %404 = vmatpush1.bf16.msra.mxu0 0
      %405 = vmatprep.subr.bf16.mxu0 0
      %406 = vmatpush1.bf16.msra.mxu0 0
      %407 = vmatprep.subr.bf16.mxu0 0
      %408 = vmatpush1.bf16.msra.mxu0 0
      %409 = vmatprep.subr.bf16.mxu0 0
      %410 = vmatpush1.bf16.msra.mxu0 0
      %411 = vmatprep.subr.bf16.mxu0 0
      %412 = vmatpush1.bf16.msra.mxu0 0
      %413 = vmatprep.subr.bf16.mxu0 0
      %414 = vmatpush1.bf16.msra.mxu0 0
      %415 = vmatprep.subr.bf16.mxu0 0
      %416 = vmatpush1.bf16.msra.mxu0 0
      %417 = vmatprep.subr.bf16.mxu0 0
      %418 = vmatpush1.bf16.msra.mxu0 0
      %419 = vmatprep.subr.bf16.mxu0 0
      %420 = vmatpush1.bf16.msra.mxu0 0
      %421 = vmatprep.mubr.bf16.mxu0 0
      %422 = vmatmul.mubr.bf16.gmra.mrb[0].mxu0 %v380
      %v423 = vpop.f32.mrb[0].mxu0
      %v424 = vadd.f32 %v361, %v423
      %v425 = vpop.f32.mrb[0].mxu0
      %v426 = vpop.f32.mrb[0].mxu0
      %v427 = vadd.f32 %v366, %v426
      %v428 = vpop.f32.mrb[0].mxu0
      %429 = vmatprep.mubr.bf16.mxu0 0
      %430 = vmatmul.mubr.bf16.gmra.mrb[0].mxu0 %v383
      %v431 = vpop.f32.mrb[0].mxu0
      %v432 = vadd.f32 %v371, %v431
      %v433 = vpop.f32.mrb[0].mxu0
      %v434 = vpop.f32.mrb[0].mxu0
      %v435 = vadd.f32 %v376, %v434
      %v436 = vpop.f32.mrb[0].mxu0
      %437 = vdwg.mxu0
      %v438 = vld [vmem:[%s328] sm:$0xff]
      %v439 = vld [vmem:[%s328 + $0x8] sm:$0xff]
      %v440 = vld [vmem:[%s328 + $0x10] sm:$0xff]
      %v441 = vld [vmem:[%s328 + $0x18] sm:$0xff]
      %v442 = vpack.c.bf16 %v439, %v438
      %v443 = vpack.c.bf16 %v441, %v440
      %v444 = vld [vmem:[%s2] sm:$0xf]
      %v445 = vld [vmem:[%s2 + $0x4] sm:$0xf]
      %v446 = vld [vmem:[%s2 + $0x8] sm:$0xf]
      %v447 = vld [vmem:[%s2 + $0xc] sm:$0xf]
      %v448 = vld [vmem:[%s2 + $0x10] sm:$0xf]
      %v449 = vld [vmem:[%s2 + $0x14] sm:$0xf]
      %v450 = vld [vmem:[%s2 + $0x18] sm:$0xf]
      %v451 = vld [vmem:[%s2 + $0x1c] sm:$0xf]
      %v452 = vld [vmem:[%s2 + $0x20] sm:$0xf]
      %v453 = vld [vmem:[%s2 + $0x24] sm:$0xf]
      %v454 = vld [vmem:[%s2 + $0x28] sm:$0xf]
      %v455 = vld [vmem:[%s2 + $0x2c] sm:$0xf]
      %v456 = vld [vmem:[%s2 + $0x30] sm:$0xf]
      %v457 = vld [vmem:[%s2 + $0x34] sm:$0xf]
      %v458 = vld [vmem:[%s2 + $0x38] sm:$0xf]
      %v459 = vld [vmem:[%s2 + $0x3c] sm:$0xf]
      %v476 = vunpack.c.l.b16 %v444
      %v477 = vunpack.c.l.b16 %v445
      %v478 = vunpack.c.l.b16 %v446
      %v479 = vunpack.c.l.b16 %v447
      %v480 = vunpack.c.l.b16 %v448
      %v481 = vunpack.c.l.b16 %v449
      %v482 = vunpack.c.l.b16 %v450
      %v483 = vunpack.c.l.b16 %v451
      %v484 = vunpack.c.l.b16 %v452
      %v485 = vunpack.c.l.b16 %v453
      %v486 = vunpack.c.l.b16 %v454
      %v487 = vunpack.c.l.b16 %v455
      %v488 = vunpack.c.l.b16 %v456
      %v489 = vunpack.c.l.b16 %v457
      %v490 = vunpack.c.l.b16 %v458
      %v491 = vunpack.c.l.b16 %v459
      %v492 = vpack.c.b16 %v477, %v476
      %v493 = vpack.c.b16 %v479, %v478
      %v494 = vpack.c.b16 %v481, %v480
      %v495 = vpack.c.b16 %v483, %v482
      %v496 = vpack.c.b16 %v485, %v484
      %v497 = vpack.c.b16 %v487, %v486
      %v498 = vpack.c.b16 %v489, %v488
      %v499 = vpack.c.b16 %v491, %v490
      %508 = vmatprep.subr.bf16.mxu0 0
      %509 = vmatpush1.bf16.msra.mxu0 %v492
      %510 = vmatprep.subr.bf16.mxu0 0
      %511 = vmatpush1.bf16.msra.mxu0 %v493
      %512 = vmatprep.subr.bf16.mxu0 0
      %513 = vmatpush1.bf16.msra.mxu0 %v494
      %514 = vmatprep.subr.bf16.mxu0 0
      %515 = vmatpush1.bf16.msra.mxu0 %v495
      %516 = vmatprep.subr.bf16.mxu0 0
      %517 = vmatpush1.bf16.msra.mxu0 %v496
      %518 = vmatprep.subr.bf16.mxu0 0
      %519 = vmatpush1.bf16.msra.mxu0 %v497
      %520 = vmatprep.subr.bf16.mxu0 0
      %521 = vmatpush1.bf16.msra.mxu0 %v498
      %522 = vmatprep.subr.bf16.mxu0 0
      %523 = vmatpush1.bf16.msra.mxu0 %v499
      %524 = vmatprep.subr.bf16.mxu0 0
      %525 = vmatpush1.bf16.msra.mxu0 0
      %526 = vmatprep.subr.bf16.mxu0 0
      %527 = vmatpush1.bf16.msra.mxu0 0
      %528 = vmatprep.subr.bf16.mxu0 0
      %529 = vmatpush1.bf16.msra.mxu0 0
      %530 = vmatprep.subr.bf16.mxu0 0
      %531 = vmatpush1.bf16.msra.mxu0 0
      %532 = vmatprep.subr.bf16.mxu0 0
      %533 = vmatpush1.bf16.msra.mxu0 0
      %534 = vmatprep.subr.bf16.mxu0 0
      %535 = vmatpush1.bf16.msra.mxu0 0
      %536 = vmatprep.subr.bf16.mxu0 0
      %537 = vmatpush1.bf16.msra.mxu0 0
      %538 = vmatprep.subr.bf16.mxu0 0
      %539 = vmatpush1.bf16.msra.mxu0 0
      %540 = vmatprep.mubr.bf16.mxu0 0
      %541 = vmatmul.mubr.bf16.gmra.mrb[0].mxu0 %v442
      %v542 = vpop.f32.mrb[0].mxu0
      %v543 = vadd.f32 0.0, %v542
      %v544 = vpop.f32.mrb[0].mxu0
      %v545 = vpop.f32.mrb[0].mxu0
      %v546 = vadd.f32 0.0, %v545
      %v547 = vpop.f32.mrb[0].mxu0
      %548 = vmatprep.mubr.bf16.mxu0 0
      %549 = vmatmul.mubr.bf16.gmra.mrb[0].mxu0 %v443
      %v550 = vpop.f32.mrb[0].mxu0
      %v551 = vadd.f32 0.0, %v550
      %v552 = vpop.f32.mrb[0].mxu0
      %v553 = vpop.f32.mrb[0].mxu0
      %v554 = vadd.f32 0.0, %v553
      %v555 = vpop.f32.mrb[0].mxu0
      %556 = vdwg.mxu0
      %v557 = vadd.f32 %v424, %v543
      %v558 = vadd.f32 %v427, %v546
      %v559 = vadd.f32 %v432, %v551
      %v560 = vadd.f32 %v435, %v554
      %561 = vst [vmem:[%s333] sm:$0xff] %v557
      %562 = vst [vmem:[%s333 + $0x8] sm:$0xff] %v558
      %563 = vst [vmem:[%s333 + $0x10] sm:$0xff] %v559
      %564 = vst [vmem:[%s333 + $0x18] sm:$0xff] %v560
      %v565 = vlaneseq
      %v566 = vand.u32 %v565, 127
      %v567 = vshra.s32 %v566, 3
      %v568 = vand.u32 %v566, 7
      %v569 = vadd.s32 %v567, 4294967295
      %vm570 = vcmp.ge.s32.totalorder %v569, 0
      %vm571 = vcmp.lt.s32.totalorder %v569, 8
      %vm572 = vmand %vm570, %vm571
      %v573 = vsel %vm572, 1.0, 0.0
      %vm574 = vcmp.ge.s32.totalorder %v567, 0
      %vm575 = vcmp.lt.s32.totalorder %v567, 8
      %vm576 = vmand %vm574, %vm575
      %v577 = vsel %vm576, 1.0, 0.0
      %v578 = vadd.s32 %v567, 1
      %vm579 = vcmp.ge.s32.totalorder %v578, 0
      %vm580 = vcmp.lt.s32.totalorder %v578, 8
      %vm581 = vmand %vm579, %vm580
      %v582 = vsel %vm581, 1.0, 0.0
      %v583 = vadd.s32 %v568, 4294967295
      %vm584 = vcmp.ge.s32.totalorder %v583, 0
      %vm585 = vcmp.lt.s32.totalorder %v583, 8
      %vm586 = vmand %vm584, %vm585
      %v587 = vsel %vm586, 1.0, 0.0
      %vm588 = vcmp.ge.s32.totalorder %v568, 0
      %vm589 = vcmp.lt.s32.totalorder %v568, 8
      %vm590 = vmand %vm588, %vm589
      %v591 = vsel %vm590, 1.0, 0.0
      %v592 = vadd.s32 %v568, 1
      %vm593 = vcmp.ge.s32.totalorder %v592, 0
      %vm594 = vcmp.lt.s32.totalorder %v592, 8
      %vm595 = vmand %vm593, %vm594
      %v596 = vsel %vm595, 1.0, 0.0
      %597 = vrot.lane.b32.xlu0 %v557, 9
      %v598 = vpop.permute.xlu0 %597
      %599 = vrot.lane.b32.xlu0 %v558, 9
      %v600 = vpop.permute.xlu0 %599
      %601 = vrot.lane.b32.xlu0 %v559, 9
      %v602 = vpop.permute.xlu0 %601
      %603 = vrot.lane.b32.xlu0 %v560, 9
      %v604 = vpop.permute.xlu0 %603
      %v605 = vmul.f32 %v573, %v587
      %v606 = vmul.f32 %v598, %v605
      %v607 = vmul.f32 %v600, %v605
      %v608 = vmul.f32 %v602, %v605
      %v609 = vmul.f32 %v604, %v605
      %v610 = vpack.c.bf16 %v607, %v606
      %v611 = vpack.c.bf16 %v609, %v608
      %612 = vst [vmem:[#allocation2] sm:$0xff] %v610
      %613 = vst [vmem:[#allocation2 + $0x8] sm:$0xff] %v611
      %614 = vrot.lane.b32.xlu0 %v557, 8
      %v615 = vpop.permute.xlu0 %614
      %616 = vrot.lane.b32.xlu0 %v558, 8
      %v617 = vpop.permute.xlu0 %616
      %618 = vrot.lane.b32.xlu0 %v559, 8
      %v619 = vpop.permute.xlu0 %618
      %620 = vrot.lane.b32.xlu0 %v560, 8
      %v621 = vpop.permute.xlu0 %620
      %v622 = vmul.f32 %v573, %v591
      %v623 = vmul.f32 %v615, %v622
      %v624 = vmul.f32 %v617, %v622
      %v625 = vmul.f32 %v619, %v622
      %v626 = vmul.f32 %v621, %v622
      %v627 = vpack.c.bf16 %v624, %v623
      %v628 = vpack.c.bf16 %v626, %v625
      %629 = vst [vmem:[#allocation2 + $0x10] sm:$0xff] %v627
      %630 = vst [vmem:[#allocation2 + $0x18] sm:$0xff] %v628
      %631 = vrot.lane.b32.xlu0 %v557, 7
      %v632 = vpop.permute.xlu0 %631
      %633 = vrot.lane.b32.xlu0 %v558, 7
      %v634 = vpop.permute.xlu0 %633
      %635 = vrot.lane.b32.xlu0 %v559, 7
      %v636 = vpop.permute.xlu0 %635
      %637 = vrot.lane.b32.xlu0 %v560, 7
      %v638 = vpop.permute.xlu0 %637
      %v639 = vmul.f32 %v573, %v596
      %v640 = vmul.f32 %v632, %v639
      %v641 = vmul.f32 %v634, %v639
      %v642 = vmul.f32 %v636, %v639
      %v643 = vmul.f32 %v638, %v639
      %v644 = vpack.c.bf16 %v641, %v640
      %v645 = vpack.c.bf16 %v643, %v642
      %646 = vst [vmem:[#allocation2 + $0x20] sm:$0xff] %v644
      %647 = vst [vmem:[#allocation2 + $0x28] sm:$0xff] %v645
      %648 = vrot.lane.b32.xlu0 %v557, 1
      %v649 = vpop.permute.xlu0 %648
      %650 = vrot.lane.b32.xlu0 %v558, 1
      %v651 = vpop.permute.xlu0 %650
      %652 = vrot.lane.b32.xlu0 %v559, 1
      %v653 = vpop.permute.xlu0 %652
      %654 = vrot.lane.b32.xlu0 %v560, 1
      %v655 = vpop.permute.xlu0 %654
      %v656 = vmul.f32 %v577, %v587
      %v657 = vmul.f32 %v649, %v656
      %v658 = vmul.f32 %v651, %v656
      %v659 = vmul.f32 %v653, %v656
      %v660 = vmul.f32 %v655, %v656
      %v661 = vpack.c.bf16 %v658, %v657
      %v662 = vpack.c.bf16 %v660, %v659
      %663 = vst [vmem:[#allocation2 + $0x30] sm:$0xff] %v661
      %664 = vst [vmem:[#allocation2 + $0x38] sm:$0xff] %v662
      %v665 = vmul.f32 %v577, %v591
      %v666 = vmul.f32 %v557, %v665
      %v667 = vmul.f32 %v558, %v665
      %v668 = vmul.f32 %v559, %v665
      %v669 = vmul.f32 %v560, %v665
      %v670 = vpack.c.bf16 %v667, %v666
      %v671 = vpack.c.bf16 %v669, %v668
      %672 = vst [vmem:[#allocation2 + $0x40] sm:$0xff] %v670
      %673 = vst [vmem:[#allocation2 + $0x48] sm:$0xff] %v671
      %674 = vrot.lane.b32.xlu0 %v557, 127
      %v675 = vpop.permute.xlu0 %674
      %676 = vrot.lane.b32.xlu0 %v558, 127
      %v677 = vpop.permute.xlu0 %676
      %678 = vrot.lane.b32.xlu0 %v559, 127
      %v679 = vpop.permute.xlu0 %678
      %680 = vrot.lane.b32.xlu0 %v560, 127
      %v681 = vpop.permute.xlu0 %680
      %v682 = vmul.f32 %v577, %v596
      %v683 = vmul.f32 %v675, %v682
      %v684 = vmul.f32 %v677, %v682
      %v685 = vmul.f32 %v679, %v682
      %v686 = vmul.f32 %v681, %v682
      %v687 = vpack.c.bf16 %v684, %v683
      %v688 = vpack.c.bf16 %v686, %v685
      %689 = vst [vmem:[#allocation2 + $0x50] sm:$0xff] %v687
      %690 = vst [vmem:[#allocation2 + $0x58] sm:$0xff] %v688
      %691 = vrot.lane.b32.xlu0 %v557, 121
      %v692 = vpop.permute.xlu0 %691
      %693 = vrot.lane.b32.xlu0 %v558, 121
      %v694 = vpop.permute.xlu0 %693
      %695 = vrot.lane.b32.xlu0 %v559, 121
      %v696 = vpop.permute.xlu0 %695
      %697 = vrot.lane.b32.xlu0 %v560, 121
      %v698 = vpop.permute.xlu0 %697
      %v699 = vmul.f32 %v582, %v587
      %v700 = vmul.f32 %v692, %v699
      %v701 = vmul.f32 %v694, %v699
      %v702 = vmul.f32 %v696, %v699
      %v703 = vmul.f32 %v698, %v699
      %v704 = vpack.c.bf16 %v701, %v700
      %v705 = vpack.c.bf16 %v703, %v702
      %706 = vst [vmem:[#allocation2 + $0x60] sm:$0xff] %v704
      %707 = vst [vmem:[#allocation2 + $0x68] sm:$0xff] %v705
      %708 = vrot.lane.b32.xlu0 %v557, 120
      %v709 = vpop.permute.xlu0 %708
      %710 = vrot.lane.b32.xlu0 %v558, 120
      %v711 = vpop.permute.xlu0 %710
      %712 = vrot.lane.b32.xlu0 %v559, 120
      %v713 = vpop.permute.xlu0 %712
      %714 = vrot.lane.b32.xlu0 %v560, 120
      %v715 = vpop.permute.xlu0 %714
      %v716 = vmul.f32 %v582, %v591
      %v717 = vmul.f32 %v709, %v716
      %v718 = vmul.f32 %v711, %v716
      %v719 = vmul.f32 %v713, %v716
      %v720 = vmul.f32 %v715, %v716
      %v721 = vpack.c.bf16 %v718, %v717
      %v722 = vpack.c.bf16 %v720, %v719
      %723 = vst [vmem:[#allocation2 + $0x70] sm:$0xff] %v721
      %724 = vst [vmem:[#allocation2 + $0x78] sm:$0xff] %v722
      %725 = vrot.lane.b32.xlu0 %v557, 119
      %v726 = vpop.permute.xlu0 %725
      %727 = vrot.lane.b32.xlu0 %v558, 119
      %v728 = vpop.permute.xlu0 %727
      %729 = vrot.lane.b32.xlu0 %v559, 119
      %v730 = vpop.permute.xlu0 %729
      %731 = vrot.lane.b32.xlu0 %v560, 119
      %v732 = vpop.permute.xlu0 %731
      %v733 = vmul.f32 %v582, %v596
      %v734 = vmul.f32 %v726, %v733
      %v735 = vmul.f32 %v728, %v733
      %v736 = vmul.f32 %v730, %v733
      %v737 = vmul.f32 %v732, %v733
      %v738 = vpack.c.bf16 %v735, %v734
      %v739 = vpack.c.bf16 %v737, %v736
      %740 = vst [vmem:[#allocation2 + $0x80] sm:$0xff] %v738
      %741 = vst [vmem:[#allocation2 + $0x88] sm:$0xff] %v739
      %v742 = vld [vmem:[%s5] sm:$0xff]
      %v743 = vld [vmem:[%s5 + $0x8] sm:$0xff]
      %v744 = vld [vmem:[%s5 + $0x10] sm:$0xff]
      %v745 = vld [vmem:[%s5 + $0x18] sm:$0xff]
      %v746 = vld [vmem:[%s5 + $0x20] sm:$0xff]
      %v747 = vld [vmem:[%s5 + $0x28] sm:$0xff]
      %v748 = vld [vmem:[%s5 + $0x30] sm:$0xff]
      %v749 = vld [vmem:[%s5 + $0x38] sm:$0xff]
      %v750 = vld [vmem:[%s5 + $0x40] sm:$0xff]
      %v751 = vld [vmem:[%s5 + $0x48] sm:$0xff]
      %v752 = vld [vmem:[%s5 + $0x50] sm:$0xff]
      %v753 = vld [vmem:[%s5 + $0x58] sm:$0xff]
      %v754 = vpack.c.bf16 %v745, %v742
      %v755 = vpack.c.bf16 %v746, %v743
      %v756 = vpack.c.bf16 %v747, %v744
      %v757 = vpack.c.bf16 %v751, %v748
      %v758 = vpack.c.bf16 %v752, %v749
      %v759 = vpack.c.bf16 %v753, %v750
      %v760 = vld [vmem:[#allocation2] sm:$0xff]
      %v761 = vld [vmem:[#allocation2 + $0x8] sm:$0xff]
      %v762 = vld [vmem:[#allocation2 + $0x10] sm:$0xff]
      %v763 = vld [vmem:[#allocation2 + $0x18] sm:$0xff]
      %v764 = vld [vmem:[#allocation2 + $0x20] sm:$0xff]
      %v765 = vld [vmem:[#allocation2 + $0x28] sm:$0xff]
      %v766 = vld [vmem:[#allocation2 + $0x30] sm:$0xff]
      %v767 = vld [vmem:[#allocation2 + $0x38] sm:$0xff]
      %v768 = vld [vmem:[#allocation2 + $0x40] sm:$0xff]
      %v769 = vld [vmem:[#allocation2 + $0x48] sm:$0xff]
      %v770 = vld [vmem:[#allocation2 + $0x50] sm:$0xff]
      %v771 = vld [vmem:[#allocation2 + $0x58] sm:$0xff]
      %v772 = vld [vmem:[#allocation2 + $0x60] sm:$0xff]
      %v773 = vld [vmem:[#allocation2 + $0x68] sm:$0xff]
      %v774 = vld [vmem:[#allocation2 + $0x70] sm:$0xff]
      %v775 = vld [vmem:[#allocation2 + $0x78] sm:$0xff]
      %v776 = vld [vmem:[#allocation2 + $0x80] sm:$0xff]
      %v777 = vld [vmem:[#allocation2 + $0x88] sm:$0xff]
      %v778 = vld [vmem:[%s6] sm:$0xff]
      %v779 = vld [vmem:[%s6 + $0x8] sm:$0xff]
      %v780 = vld [vmem:[%s6 + $0x10] sm:$0xff]
      %v781 = vld [vmem:[%s6 + $0x18] sm:$0xff]
      %783 = vset.pattern.permute.xlu0 0
      %784 = vperm.xlu0 %783, %v778
      %v785 = vpop.permute.xlu0 %784
      %788 = vset.pattern.permute.xlu0 0
      %789 = vperm.xlu0 %788, %v779
      %v790 = vpop.permute.xlu0 %789
      %793 = vset.pattern.permute.xlu0 0
      %794 = vperm.xlu0 %793, %v780
      %v795 = vpop.permute.xlu0 %794
      %798 = vset.pattern.permute.xlu0 0
      %799 = vperm.xlu0 %798, %v781
      %v800 = vpop.permute.xlu0 %799
      %vm802 = vcmask 261120
      %v804 = vsel %vm802, %v756, 0
      %v807 = vsel %vm802, %v759, 0
      %809 = vmatprep.subr.bf16.mxu0 0
      %810 = vmatpush1.bf16.msra.mxu0 %v760
      %811 = vmatprep.subr.bf16.mxu0 0
      %812 = vmatpush1.bf16.msra.mxu0 %v761
      %813 = vmatprep.subr.bf16.mxu0 0
      %814 = vmatpush1.bf16.msra.mxu0 %v762
      %815 = vmatprep.subr.bf16.mxu0 0
      %816 = vmatpush1.bf16.msra.mxu0 %v763
      %817 = vmatprep.subr.bf16.mxu0 0
      %818 = vmatpush1.bf16.msra.mxu0 %v764
      %819 = vmatprep.subr.bf16.mxu0 0
      %820 = vmatpush1.bf16.msra.mxu0 %v765
      %821 = vmatprep.subr.bf16.mxu0 0
      %822 = vmatpush1.bf16.msra.mxu0 %v766
      %823 = vmatprep.subr.bf16.mxu0 0
      %824 = vmatpush1.bf16.msra.mxu0 %v767
      %825 = vmatprep.subr.bf16.mxu0 0
      %826 = vmatpush1.bf16.msra.mxu0 %v768
      %827 = vmatprep.subr.bf16.mxu0 0
      %828 = vmatpush1.bf16.msra.mxu0 %v769
      %829 = vmatprep.subr.bf16.mxu0 0
      %830 = vmatpush1.bf16.msra.mxu0 %v770
      %831 = vmatprep.subr.bf16.mxu0 0
      %832 = vmatpush1.bf16.msra.mxu0 %v771
      %833 = vmatprep.subr.bf16.mxu0 0
      %834 = vmatpush1.bf16.msra.mxu0 %v772
      %835 = vmatprep.subr.bf16.mxu0 0
      %836 = vmatpush1.bf16.msra.mxu0 %v773
      %837 = vmatprep.subr.bf16.mxu0 0
      %838 = vmatpush1.bf16.msra.mxu0 %v774
      %839 = vmatprep.subr.bf16.mxu0 0
      %840 = vmatpush1.bf16.msra.mxu0 %v775
      %841 = vmatprep.mubr.bf16.mxu0 %v755
      %842 = vmatmul.mubr.bf16.gmra.mrb[0].mxu0 %v754
      %v843 = vpop.f32.mrb[0].mxu0
      %v844 = vadd.f32 %v785, %v843
      %v845 = vpop.f32.mrb[0].mxu0
      %v846 = vpop.f32.mrb[0].mxu0
      %v847 = vadd.f32 %v790, %v846
      %v848 = vpop.f32.mrb[0].mxu0
      %849 = vmatprep.mubr.bf16.mxu0 %v758
      %850 = vmatmul.mubr.bf16.gmra.mrb[0].mxu0 %v757
      %v851 = vpop.f32.mrb[0].mxu0
      %v852 = vadd.f32 %v795, %v851
      %v853 = vpop.f32.mrb[0].mxu0
      %v854 = vpop.f32.mrb[0].mxu0
      %v855 = vadd.f32 %v800, %v854
      %v856 = vpop.f32.mrb[0].mxu0
      %857 = vdwg.mxu0
      %858 = vmatprep.subr.bf16.mxu0 0
      %859 = vmatpush1.bf16.msra.mxu0 %v776
      %860 = vmatprep.subr.bf16.mxu0 0
      %861 = vmatpush1.bf16.msra.mxu0 %v777
      %862 = vmatprep.subr.bf16.mxu0 0
      %863 = vmatpush1.bf16.msra.mxu0 0
      %864 = vmatprep.subr.bf16.mxu0 0
      %865 = vmatpush1.bf16.msra.mxu0 0
      %866 = vmatprep.subr.bf16.mxu0 0
      %867 = vmatpush1.bf16.msra.mxu0 0
      %868 = vmatprep.subr.bf16.mxu0 0
      %869 = vmatpush1.bf16.msra.mxu0 0
      %870 = vmatprep.subr.bf16.mxu0 0
      %871 = vmatpush1.bf16.msra.mxu0 0
      %872 = vmatprep.subr.bf16.mxu0 0
      %873 = vmatpush1.bf16.msra.mxu0 0
      %874 = vmatprep.subr.bf16.mxu0 0
      %875 = vmatpush1.bf16.msra.mxu0 0
      %876 = vmatprep.subr.bf16.mxu0 0
      %877 = vmatpush1.bf16.msra.mxu0 0
      %878 = vmatprep.subr.bf16.mxu0 0
      %879 = vmatpush1.bf16.msra.mxu0 0
      %880 = vmatprep.subr.bf16.mxu0 0
      %881 = vmatpush1.bf16.msra.mxu0 0
      %882 = vmatprep.subr.bf16.mxu0 0
      %883 = vmatpush1.bf16.msra.mxu0 0
      %884 = vmatprep.subr.bf16.mxu0 0
      %885 = vmatpush1.bf16.msra.mxu0 0
      %886 = vmatprep.subr.bf16.mxu0 0
      %887 = vmatpush1.bf16.msra.mxu0 0
      %888 = vmatprep.subr.bf16.mxu0 0
      %889 = vmatpush1.bf16.msra.mxu0 0
      %890 = vmatprep.mubr.bf16.mxu0 0
      %891 = vmatmul.mubr.bf16.gmra.mrb[0].mxu0 %v804
      %v892 = vpop.f32.mrb[0].mxu0
      %v893 = vadd.f32 %v844, %v892
      %v894 = vpop.f32.mrb[0].mxu0
      %v895 = vpop.f32.mrb[0].mxu0
      %v896 = vadd.f32 %v847, %v895
      %v897 = vpop.f32.mrb[0].mxu0
      %898 = vmatprep.mubr.bf16.mxu0 0
      %899 = vmatmul.mubr.bf16.gmra.mrb[0].mxu0 %v807
      %v900 = vpop.f32.mrb[0].mxu0
      %v901 = vadd.f32 %v852, %v900
      %v902 = vpop.f32.mrb[0].mxu0
      %v903 = vpop.f32.mrb[0].mxu0
      %v904 = vadd.f32 %v855, %v903
      %v905 = vpop.f32.mrb[0].mxu0
      %906 = vdwg.mxu0
      %907 = vst [vmem:[%s338] sm:$0xff] %v893
      %908 = vst [vmem:[%s338 + $0x8] sm:$0xff] %v896
      %909 = vst [vmem:[%s338 + $0x10] sm:$0xff] %v901
      %910 = vst [vmem:[%s338 + $0x18] sm:$0xff] %v904
      %p911 = scmp.lt.s32.totalorder %s20, 1
      %s912 = scalar_select %p911, %s20, 1
      %s913 = smul.addr %s912, 4
      %s914 = smul.addr %s913, 8
      %s915 = scalar_lea.vmem %s7, %s914
      %p916 = scmp.lt.s32.totalorder %s20, 1
      %s917 = scalar_select %p916, %s20, 1
      %s918 = smul.addr %s917, 4
      %s919 = smul.addr %s918, 8
      %s920 = scalar_lea.vmem %s8, %s919
      // Predicated region
      $region49: #{feature_shrinker_forward.7} parent=47 // pred_check
        %p921 = pneg %p195
      $region50: #{feature_shrinker_forward.7} parent=47 // pred_check_branch
        %923 = sbr.rel (%p921) target = $region52
      $region51: #{feature_shrinker_forward.7} parent=47 // pred_region
        _
      $region52: #{feature_shrinker_forward.7} parent=47 // pred_fallthru
        _
      // Predicated region
      $region53: #{feature_shrinker_forward.7} parent=47 // pred_check
        %p924 = pneg %p221
      $region54: #{feature_shrinker_forward.7} parent=47 // pred_check_branch
        %926 = sbr.rel (%p924) target = $region56
      $region55: #{feature_shrinker_forward.7} parent=47 // pred_region
        _
      $region56: #{feature_shrinker_forward.7} parent=47 // pred_fallthru
        _
    $region48: #{feature_shrinker_forward.7} parent=5 // pred_fallthru
      _
    %p927 = scmp.le.s32.totalorder 2, %s15
    // Predicated region
    $region57: #{feature_shrinker_forward.7} parent=5 // pred_check
      %p928 = pneg %p927
    $region58: #{feature_shrinker_forward.7} parent=5 // pred_check_branch
      %930 = sbr.rel (%p928) target = $region60
    $region59: #{feature_shrinker_forward.7} parent=5 // pred_region
      %s931 = ssub.s32 %s15, 2
      // Predicated region
      $region61: #{feature_shrinker_forward.7} parent=59 // pred_check
        %p932 = pneg %p201
      $region62: #{feature_shrinker_forward.7} parent=59 // pred_check_branch
        %934 = sbr.rel (%p932) target = $region64
      $region63: #{feature_shrinker_forward.7} parent=59 // pred_region
        %p935 = scmp.lt.s32.totalorder %s21, 1
        %s936 = scalar_select %p935, %s21, 1
        %s937 = smul.addr %s936, 4
        %s938 = smul.addr %s937, 8
        %s939 = scalar_lea.vmem %s7, %s938
      $region64: #{feature_shrinker_forward.7} parent=59 // pred_fallthru
        _
      // Predicated region
      $region65: #{feature_shrinker_forward.7} parent=59 // pred_check
        %p940 = pneg %p227
      $region66: #{feature_shrinker_forward.7} parent=59 // pred_check_branch
        %942 = sbr.rel (%p940) target = $region68
      $region67: #{feature_shrinker_forward.7} parent=59 // pred_region
        %p943 = scmp.lt.s32.totalorder %s21, 1
        %s944 = scalar_select %p943, %s21, 1
        %s945 = smul.addr %s944, 4
        %s946 = smul.addr %s945, 8
        %s947 = scalar_lea.vmem %s8, %s946
      $region68: #{feature_shrinker_forward.7} parent=59 // pred_fallthru
        _
    $region60: #{feature_shrinker_forward.7} parent=5 // pred_fallthru
      _
  $region6: #{feature_shrinker_forward.7} parent=0 // loop_footer
    %s19 = sadd.s32 1, %s15
  $region7: #{feature_shrinker_forward.7} parent=0 // loop_footer_branch
    %14 = sbr.rel target = $region3
  $region8: #{feature_shrinker_forward.7} parent=0 // loop_exit
    _

// kernel: feature_shrinker_forward.8
$region0: #{feature_shrinker_forward.8}
  #allocation0 [shape = 'u32[]', space=smem, size = 0x4, offset = 0x4, fixed_abs, tag = 'smem constant byte address 0x4 - core index']
  #allocation1 [shape = 'u32[144,128]{1,0:T(1,128)}', space=vmem, size = 0x12000, scoped, tag = 'internal scratch']
  #allocation2 [shape = 'bf16[288,256]{1,0:T(16,128)(2,1)}', space=vmem, size = 0x24000, scoped, tag = 'scratch operand']
  %s0 = inlined_call_operand.vmem [shape: f32[2,24,256], index: 0, kind: input, shape index: {}]
  %s1 = inlined_call_operand.vmem [shape: f32[2,32,128], index: 1, kind: input, shape index: {}]
  %s2 = inlined_call_operand.vmem [shape: bf16[128,256], index: 2, kind: input, shape index: {}]
  %s3 = inlined_call_operand.vmem [shape: f32[32,24], index: 3, kind: input, shape index: {}]
  %s4 = inlined_call_operand.vmem [shape: f32[32,1], index: 4, kind: input, shape index: {}]
  %s5 = inlined_call_operand.vmem [shape: f32[32,288], index: 5, kind: input, shape index: {}]
  %s6 = inlined_call_operand.vmem [shape: f32[32,1], index: 6, kind: input, shape index: {}]
  %s7 = inlined_call_operand.vmem [shape: f32[2,32,256], index: 7, kind: output, shape index: {0}]
  %s8 = inlined_call_operand.vmem [shape: f32[2,32,256], index: 8, kind: output, shape index: {1}]
  %9 = xla_tuple %s7, %s8
  %s10 = sld [smem:[#allocation0]]
  $region69: #{feature_shrinker_forward.8} parent=0
    _
  %s12 = ssub.s32 1, %s10
  %s13 = scalar_select 0, %s12, %s10
  loop: start=0, step=1, limit=4
  $region2: #{feature_shrinker_forward.8} parent=0 // loop_pre_header
    _
  $region3: #{feature_shrinker_forward.8} parent=0 // loop_header
    %s15 = sphi 0, %s19
    %p16 = scmp.ge.s32.totalorder %s15, 4
    %s25 = sphi 0, %s27
    %s28 = sphi 0, %s25
    %s29 = sphi 0, %s28
    %s45 = sphi 0, %s29
    %s51 = sphi 0, %s53
    %s54 = sphi 0, %s51
    %s55 = sphi 0, %s54
    %s71 = sphi 0, %s55
    %s75 = sphi 0, %s75
    %s77 = sphi 0, %s75
    %s78 = sphi 0, %s77
    %s92 = sphi 0, %s78
    %s96 = sphi 0, %s96
    %s98 = sphi 0, %s96
    %s99 = sphi 0, %s98
    %s113 = sphi 0, %s99
    %s117 = sphi 0, %s117
    %s119 = sphi 0, %s117
    %s120 = sphi 0, %s119
    %s134 = sphi 0, %s120
    %s138 = sphi 0, %s138
    %s140 = sphi 0, %s138
    %s141 = sphi 0, %s140
    %s155 = sphi 0, %s141
    %s159 = sphi 0, %s159
    %s161 = sphi 0, %s159
    %s162 = sphi 0, %s161
    %s176 = sphi 0, %s162
    %s182 = sphi 0, %s184
    %s185 = sphi 0, %s182
    %s186 = sphi 0, %s185
    %s202 = sphi 0, %s186
    %s208 = sphi 0, %s210
    %s211 = sphi 0, %s208
    %s212 = sphi 0, %s211
    %s228 = sphi 0, %s212
  $region4: #{feature_shrinker_forward.8} parent=0 // loop_header_branch
    %18 = sbr.rel (%p16) target = $region8
  $region5: #{feature_shrinker_forward.8} parent=0 // loop_body
    %s20 = ssub.s32 %s15, 1
    %s21 = ssub.s32 %s15, 2
    %s22 = sadd.s32 %s15, 1
    %s23 = ssub.s32 %s15, %s22
    %p24 = scmp.eq.s32.totalorder %s23, 0
    %s26 = sadd.s32 %s25, 1
    %s27 = scalar_select %p24, %s25, %s26
    %p30 = pneg %p24
    %p31 = scmp.eq.s32.totalorder %s15, 1
    %p32 = por %p30, %p31
    %p33 = scmp.ne.s32.totalorder %s25, %s28
    %p34 = scmp.eq.s32.totalorder %s15, 0
    %p35 = por %p33, %p34
    %p36 = scmp.ne.s32.totalorder %s25, %s28
    %p37 = scmp.eq.s32.totalorder %s20, 1
    %p38 = por %p36, %p37
    %p39 = scmp.ne.s32.totalorder %s28, %s29
    %p40 = scmp.eq.s32.totalorder %s20, 0
    %p41 = por %p39, %p40
    %p42 = scmp.ne.s32.totalorder %s28, %s29
    %p43 = scmp.eq.s32.totalorder %s21, 1
    %p44 = por %p42, %p43
    %p46 = scmp.ne.s32.totalorder %s29, %s45
    %p47 = scmp.eq.s32.totalorder %s21, 0
    %p48 = por %p46, %p47
    %s49 = ssub.s32 %s15, %s22
    %p50 = scmp.eq.s32.totalorder %s49, 0
    %s52 = sadd.s32 %s51, 1
    %s53 = scalar_select %p50, %s51, %s52
    %p56 = pneg %p50
    %p57 = scmp.eq.s32.totalorder %s15, 1
    %p58 = por %p56, %p57
    %p59 = scmp.ne.s32.totalorder %s51, %s54
    %p60 = scmp.eq.s32.totalorder %s15, 0
    %p61 = por %p59, %p60
    %p62 = scmp.ne.s32.totalorder %s51, %s54
    %p63 = scmp.eq.s32.totalorder %s20, 1
    %p64 = por %p62, %p63
    %p65 = scmp.ne.s32.totalorder %s54, %s55
    %p66 = scmp.eq.s32.totalorder %s20, 0
    %p67 = por %p65, %p66
    %p68 = scmp.ne.s32.totalorder %s54, %s55
    %p69 = scmp.eq.s32.totalorder %s21, 1
    %p70 = por %p68, %p69
    %p72 = scmp.ne.s32.totalorder %s55, %s71
    %p73 = scmp.eq.s32.totalorder %s21, 0
    %p74 = por %p72, %p73
    %s76 = sadd.s32 %s75, 1
    %p79 = scmp.eq.s32.totalorder %s15, 1
    %p80 = scmp.ne.s32.totalorder %s75, %s77
    %p81 = scmp.eq.s32.totalorder %s15, 0
    %p82 = por %p80, %p81
    %p83 = scmp.ne.s32.totalorder %s75, %s77
    %p84 = scmp.eq.s32.totalorder %s20, 1
    %p85 = por %p83, %p84
    %p86 = scmp.ne.s32.totalorder %s77, %s78
    %p87 = scmp.eq.s32.totalorder %s20, 0
    %p88 = por %p86, %p87
    %p89 = scmp.ne.s32.totalorder %s77, %s78
    %p90 = scmp.eq.s32.totalorder %s21, 1
    %p91 = por %p89, %p90
    %p93 = scmp.ne.s32.totalorder %s78, %s92
    %p94 = scmp.eq.s32.totalorder %s21, 0
    %p95 = por %p93, %p94
    %s97 = sadd.s32 %s96, 1
    %p100 = scmp.eq.s32.totalorder %s15, 1
    %p101 = scmp.ne.s32.totalorder %s96, %s98
    %p102 = scmp.eq.s32.totalorder %s15, 0
    %p103 = por %p101, %p102
    %p104 = scmp.ne.s32.totalorder %s96, %s98
    %p105 = scmp.eq.s32.totalorder %s20, 1
    %p106 = por %p104, %p105
    %p107 = scmp.ne.s32.totalorder %s98, %s99
    %p108 = scmp.eq.s32.totalorder %s20, 0
    %p109 = por %p107, %p108
    %p110 = scmp.ne.s32.totalorder %s98, %s99
    %p111 = scmp.eq.s32.totalorder %s21, 1
    %p112 = por %p110, %p111
    %p114 = scmp.ne.s32.totalorder %s99, %s113
    %p115 = scmp.eq.s32.totalorder %s21, 0
    %p116 = por %p114, %p115
    %s118 = sadd.s32 %s117, 1
    %p121 = scmp.eq.s32.totalorder %s15, 1
    %p122 = scmp.ne.s32.totalorder %s117, %s119
    %p123 = scmp.eq.s32.totalorder %s15, 0
    %p124 = por %p122, %p123
    %p125 = scmp.ne.s32.totalorder %s117, %s119
    %p126 = scmp.eq.s32.totalorder %s20, 1
    %p127 = por %p125, %p126
    %p128 = scmp.ne.s32.totalorder %s119, %s120
    %p129 = scmp.eq.s32.totalorder %s20, 0
    %p130 = por %p128, %p129
    %p131 = scmp.ne.s32.totalorder %s119, %s120
    %p132 = scmp.eq.s32.totalorder %s21, 1
    %p133 = por %p131, %p132
    %p135 = scmp.ne.s32.totalorder %s120, %s134
    %p136 = scmp.eq.s32.totalorder %s21, 0
    %p137 = por %p135, %p136
    %s139 = sadd.s32 %s138, 1
    %p142 = scmp.eq.s32.totalorder %s15, 1
    %p143 = scmp.ne.s32.totalorder %s138, %s140
    %p144 = scmp.eq.s32.totalorder %s15, 0
    %p145 = por %p143, %p144
    %p146 = scmp.ne.s32.totalorder %s138, %s140
    %p147 = scmp.eq.s32.totalorder %s20, 1
    %p148 = por %p146, %p147
    %p149 = scmp.ne.s32.totalorder %s140, %s141
    %p150 = scmp.eq.s32.totalorder %s20, 0
    %p151 = por %p149, %p150
    %p152 = scmp.ne.s32.totalorder %s140, %s141
    %p153 = scmp.eq.s32.totalorder %s21, 1
    %p154 = por %p152, %p153
    %p156 = scmp.ne.s32.totalorder %s141, %s155
    %p157 = scmp.eq.s32.totalorder %s21, 0
    %p158 = por %p156, %p157
    %s160 = sadd.s32 %s159, 1
    %p163 = scmp.eq.s32.totalorder %s15, 1
    %p164 = scmp.ne.s32.totalorder %s159, %s161
    %p165 = scmp.eq.s32.totalorder %s15, 0
    %p166 = por %p164, %p165
    %p167 = scmp.ne.s32.totalorder %s159, %s161
    %p168 = scmp.eq.s32.totalorder %s20, 1
    %p169 = por %p167, %p168
    %p170 = scmp.ne.s32.totalorder %s161, %s162
    %p171 = scmp.eq.s32.totalorder %s20, 0
    %p172 = por %p170, %p171
    %p173 = scmp.ne.s32.totalorder %s161, %s162
    %p174 = scmp.eq.s32.totalorder %s21, 1
    %p175 = por %p173, %p174
    %p177 = scmp.ne.s32.totalorder %s162, %s176
    %p178 = scmp.eq.s32.totalorder %s21, 0
    %p179 = por %p177, %p178
    %s180 = ssub.s32 %s15, %s22
    %p181 = scmp.eq.s32.totalorder %s180, 0
    %s183 = sadd.s32 %s182, 1
    %s184 = scalar_select %p181, %s182, %s183
    %p187 = pneg %p181
    %p188 = scmp.eq.s32.totalorder %s15, 1
    %p189 = por %p187, %p188
    %p190 = scmp.ne.s32.totalorder %s182, %s185
    %p191 = scmp.eq.s32.totalorder %s15, 0
    %p192 = por %p190, %p191
    %p193 = scmp.ne.s32.totalorder %s182, %s185
    %p194 = scmp.eq.s32.totalorder %s20, 1
    %p195 = por %p193, %p194
    %p196 = scmp.ne.s32.totalorder %s185, %s186
    %p197 = scmp.eq.s32.totalorder %s20, 0
    %p198 = por %p196, %p197
    %p199 = scmp.ne.s32.totalorder %s185, %s186
    %p200 = scmp.eq.s32.totalorder %s21, 1
    %p201 = por %p199, %p200
    %p203 = scmp.ne.s32.totalorder %s186, %s202
    %p204 = scmp.eq.s32.totalorder %s21, 0
    %p205 = por %p203, %p204
    %s206 = ssub.s32 %s15, %s22
    %p207 = scmp.eq.s32.totalorder %s206, 0
    %s209 = sadd.s32 %s208, 1
    %s210 = scalar_select %p207, %s208, %s209
    %p213 = pneg %p207
    %p214 = scmp.eq.s32.totalorder %s15, 1
    %p215 = por %p213, %p214
    %p216 = scmp.ne.s32.totalorder %s208, %s211
    %p217 = scmp.eq.s32.totalorder %s15, 0
    %p218 = por %p216, %p217
    %p219 = scmp.ne.s32.totalorder %s208, %s211
    %p220 = scmp.eq.s32.totalorder %s20, 1
    %p221 = por %p219, %p220
    %p222 = scmp.ne.s32.totalorder %s211, %s212
    %p223 = scmp.eq.s32.totalorder %s20, 0
    %p224 = por %p222, %p223
    %p225 = scmp.ne.s32.totalorder %s211, %s212
    %p226 = scmp.eq.s32.totalorder %s21, 1
    %p227 = por %p225, %p226
    %p229 = scmp.ne.s32.totalorder %s212, %s228
    %p230 = scmp.eq.s32.totalorder %s21, 0
    %p231 = por %p229, %p230
    %p232 = scmp.le.s32.totalorder 1, %s15
    %p233 = scmp.lt.s32.totalorder %s15, 3
    %p234 = pnand %p232, %p233
    %p235 = pneg %p234
    // Predicated region
    $region9: #{feature_shrinker_forward.8} parent=5 // pred_check
      _
    $region10: #{feature_shrinker_forward.8} parent=5 // pred_check_branch
      %237 = sbr.rel (%p234) target = $region12
    $region11: #{feature_shrinker_forward.8} parent=5 // pred_region
      %s238 = ssub.s32 %s15, 1
      // Predicated region
      $region13: #{feature_shrinker_forward.8} parent=11 // pred_check
        %p239 = pneg %p88
      $region14: #{feature_shrinker_forward.8} parent=11 // pred_check_branch
        %241 = sbr.rel (%p239) target = $region16
      $region15: #{feature_shrinker_forward.8} parent=11 // pred_region
        _
      $region16: #{feature_shrinker_forward.8} parent=11 // pred_fallthru
        _
      // Predicated region
      $region17: #{feature_shrinker_forward.8} parent=11 // pred_check
        %p242 = pneg %p109
      $region18: #{feature_shrinker_forward.8} parent=11 // pred_check_branch
        %244 = sbr.rel (%p242) target = $region20
      $region19: #{feature_shrinker_forward.8} parent=11 // pred_region
        _
      $region20: #{feature_shrinker_forward.8} parent=11 // pred_fallthru
        _
      // Predicated region
      $region21: #{feature_shrinker_forward.8} parent=11 // pred_check
        %p245 = pneg %p130
      $region22: #{feature_shrinker_forward.8} parent=11 // pred_check_branch
        %247 = sbr.rel (%p245) target = $region24
      $region23: #{feature_shrinker_forward.8} parent=11 // pred_region
        _
      $region24: #{feature_shrinker_forward.8} parent=11 // pred_fallthru
        _
      // Predicated region
      $region25: #{feature_shrinker_forward.8} parent=11 // pred_check
        %p248 = pneg %p151
      $region26: #{feature_shrinker_forward.8} parent=11 // pred_check_branch
        %250 = sbr.rel (%p248) target = $region28
      $region27: #{feature_shrinker_forward.8} parent=11 // pred_region
        _
      $region28: #{feature_shrinker_forward.8} parent=11 // pred_fallthru
        _
      // Predicated region
      $region29: #{feature_shrinker_forward.8} parent=11 // pred_check
        %p251 = pneg %p172
      $region30: #{feature_shrinker_forward.8} parent=11 // pred_check_branch
        %253 = sbr.rel (%p251) target = $region32
      $region31: #{feature_shrinker_forward.8} parent=11 // pred_region
        _
      $region32: #{feature_shrinker_forward.8} parent=11 // pred_fallthru
        _
    $region12: #{feature_shrinker_forward.8} parent=5 // pred_fallthru
      _
    %p254 = scmp.lt.s32.totalorder %s15, 2
    // Predicated region
    $region33: #{feature_shrinker_forward.8} parent=5 // pred_check
      %p255 = pneg %p254
    $region34: #{feature_shrinker_forward.8} parent=5 // pred_check_branch
      %257 = sbr.rel (%p255) target = $region36
    $region35: #{feature_shrinker_forward.8} parent=5 // pred_region
      // Predicated region
      $region37: #{feature_shrinker_forward.8} parent=35 // pred_check
        %p258 = pneg %p35
      $region38: #{feature_shrinker_forward.8} parent=35 // pred_check_branch
        %260 = sbr.rel (%p258) target = $region40
      $region39: #{feature_shrinker_forward.8} parent=35 // pred_region
        %p261 = scmp.lt.s32.totalorder %s15, 1
        %s262 = scalar_select %p261, %s15, 1
        %s263 = smul.addr %s262, 6
        %s264 = smul.addr %s263, 8
        %s265 = scalar_lea.vmem %s0, %s264
      $region40: #{feature_shrinker_forward.8} parent=35 // pred_fallthru
        _
      // Predicated region
      $region41: #{feature_shrinker_forward.8} parent=35 // pred_check
        %p266 = pneg %p61
      $region42: #{feature_shrinker_forward.8} parent=35 // pred_check_branch
        %268 = sbr.rel (%p266) target = $region44
      $region43: #{feature_shrinker_forward.8} parent=35 // pred_region
        %p269 = scmp.lt.s32.totalorder %s15, 1
        %s270 = scalar_select %p269, %s15, 1
        %s271 = smul.addr %s270, 4
        %s272 = smul.addr %s271, 8
        %s273 = scalar_lea.vmem %s1, %s272
      $region44: #{feature_shrinker_forward.8} parent=35 // pred_fallthru
        _
    $region36: #{feature_shrinker_forward.8} parent=5 // pred_fallthru
      _
    %p274 = scmp.le.s32.totalorder 1, %s15
    %p275 = scmp.lt.s32.totalorder %s15, 3
    %p276 = pnand %p274, %p275
    %p277 = pneg %p276
    // Predicated region
    $region45: #{feature_shrinker_forward.8} parent=5 // pred_check
      _
    $region46: #{feature_shrinker_forward.8} parent=5 // pred_check_branch
      %279 = sbr.rel (%p276) target = $region48
    $region47: #{feature_shrinker_forward.8} parent=5 // pred_region
      %s280 = ssub.s32 %s15, 1
      %p281 = scmp.lt.s32.totalorder %s20, 1
      %s282 = scalar_select %p281, %s20, 1
      %s283 = smul.addr %s282, 6
      %s284 = smul.addr %s283, 8
      %s285 = scalar_lea.vmem %s0, %s284
      %p286 = pneg %p41
      %p287 = pneg %p38
      %p288 = scmp.lt.s32.totalorder %s20, 1
      %s289 = scalar_select %p288, %s20, 1
      %s290 = smul.addr %s289, 4
      %s291 = smul.addr %s290, 8
      %s292 = scalar_lea.vmem %s1, %s291
      %p293 = pneg %p67
      %p294 = pneg %p64
      %p295 = pneg %p88
      %p296 = pneg %p85
      %p297 = pneg %p109
      %p298 = pneg %p106
      %p299 = pneg %p130
      %p300 = pneg %p127
      %p301 = pneg %p151
      %p302 = pneg %p148
      %p303 = pneg %p172
      %p304 = pneg %p169
      %p305 = pneg %p198
      %p306 = pneg %p195
      %p307 = scmp.lt.s32.totalorder %s20, 1
      %s308 = scalar_select %p307, %s20, 1
      %s309 = smul.addr %s308, 8
      %s310 = smul.addr %s309, 8
      %s311 = scalar_lea.vmem %s7, %s310
      %p312 = pneg %p224
      %p313 = pneg %p221
      %p314 = scmp.lt.s32.totalorder %s20, 1
      %s315 = scalar_select %p314, %s20, 1
      %s316 = smul.addr %s315, 8
      %s317 = smul.addr %s316, 8
      %s318 = scalar_lea.vmem %s8, %s317
      %p319 = scmp.lt.s32.totalorder %s20, 1
      %s320 = scalar_select %p319, %s20, 1
      %s321 = smul.addr %s320, 6
      %s322 = smul.addr %s321, 8
      %s323 = scalar_lea.vmem %s0, %s322
      %p324 = scmp.lt.s32.totalorder %s20, 1
      %s325 = scalar_select %p324, %s20, 1
      %s326 = smul.addr %s325, 4
      %s327 = smul.addr %s326, 8
      %s328 = scalar_lea.vmem %s1, %s327
      %p329 = scmp.lt.s32.totalorder %s20, 1
      %s330 = scalar_select %p329, %s20, 1
      %s331 = smul.addr %s330, 8
      %s332 = smul.addr %s331, 8
      %s333 = scalar_lea.vmem %s7, %s332
      %p334 = scmp.lt.s32.totalorder %s20, 1
      %s335 = scalar_select %p334, %s20, 1
      %s336 = smul.addr %s335, 8
      %s337 = smul.addr %s336, 8
      %s338 = scalar_lea.vmem %s8, %s337
      %v340 = vld [vmem:[%s3] sm:$0xff]
      %v341 = vld [vmem:[%s3 + $0x8] sm:$0xff]
      %v342 = vld [vmem:[%s3 + $0x10] sm:$0xff]
      %v343 = vld [vmem:[%s3 + $0x18] sm:$0xff]
      %v344 = vpack.c.bf16 %v341, %v340
      %v345 = vpack.c.bf16 %v343, %v342
      %v346 = vld [vmem:[%s323] sm:$0xff]
      %v347 = vld [vmem:[%s323 + $0x8] sm:$0xff]
      %v348 = vld [vmem:[%s323 + $0x10] sm:$0xff]
      %v349 = vld [vmem:[%s323 + $0x18] sm:$0xff]
      %v350 = vld [vmem:[%s323 + $0x20] sm:$0xff]
      %v351 = vld [vmem:[%s323 + $0x28] sm:$0xff]
      %v352 = vpack.c.bf16 %v348, %v346
      %v353 = vpack.c.bf16 %v349, %v347
      %v354 = vpack.c.bf16 %v350, %v350
      %v355 = vpack.c.bf16 %v351, %v351
      %v356 = vld [vmem:[%s4] sm:$0xff]
      %v357 = vld [vmem:[%s4 + $0x8] sm:$0xff]
      %v358 = vld [vmem:[%s4 + $0x10] sm:$0xff]
      %v359 = vld [vmem:[%s4 + $0x18] sm:$0xff]
      %361 = vset.pattern.permute.xlu0 0
      %362 = vperm.xlu0 %361, %v356
      %v363 = vpop.permute.xlu0 %362
      %366 = vset.pattern.permute.xlu0 0
      %367 = vperm.xlu0 %366, %v357
      %v368 = vpop.permute.xlu0 %367
      %371 = vset.pattern.permute.xlu0 0
      %372 = vperm.xlu0 %371, %v358
      %v373 = vpop.permute.xlu0 %372
      %376 = vset.pattern.permute.xlu0 0
      %377 = vperm.xlu0 %376, %v359
      %v378 = vpop.permute.xlu0 %377
      %vm380 = vcmask 195584
      %v382 = vsel %vm380, %v344, 0
      %v385 = vsel %vm380, %v345, 0
      %vm387 = vcmask 1043456
      %v389 = vsel %vm387, %v354, 0
      %v392 = vsel %vm387, %v355, 0
      %394 = vmatprep.subr.bf16.mxu0 %v353
      %395 = vmatpush1.bf16.msra.mxu0 %v352
      %396 = vmatprep.subr.bf16.mxu0 %v392
      %397 = vmatpush1.bf16.msra.mxu0 %v389
      %398 = vmatprep.subr.bf16.mxu0 0
      %399 = vmatpush1.bf16.msra.mxu0 0
      %400 = vmatprep.subr.bf16.mxu0 0
      %401 = vmatpush1.bf16.msra.mxu0 0
      %402 = vmatprep.subr.bf16.mxu0 0
      %403 = vmatpush1.bf16.msra.mxu0 0
      %404 = vmatprep.subr.bf16.mxu0 0
      %405 = vmatpush1.bf16.msra.mxu0 0
      %406 = vmatprep.subr.bf16.mxu0 0
      %407 = vmatpush1.bf16.msra.mxu0 0
      %408 = vmatprep.subr.bf16.mxu0 0
      %409 = vmatpush1.bf16.msra.mxu0 0
      %410 = vmatprep.subr.bf16.mxu0 0
      %411 = vmatpush1.bf16.msra.mxu0 0
      %412 = vmatprep.subr.bf16.mxu0 0
      %413 = vmatpush1.bf16.msra.mxu0 0
      %414 = vmatprep.subr.bf16.mxu0 0
      %415 = vmatpush1.bf16.msra.mxu0 0
      %416 = vmatprep.subr.bf16.mxu0 0
      %417 = vmatpush1.bf16.msra.mxu0 0
      %418 = vmatprep.subr.bf16.mxu0 0
      %419 = vmatpush1.bf16.msra.mxu0 0
      %420 = vmatprep.subr.bf16.mxu0 0
      %421 = vmatpush1.bf16.msra.mxu0 0
      %422 = vmatprep.subr.bf16.mxu0 0
      %423 = vmatpush1.bf16.msra.mxu0 0
      %424 = vmatprep.subr.bf16.mxu0 0
      %425 = vmatpush1.bf16.msra.mxu0 0
      %426 = vmatprep.mubr.bf16.mxu0 0
      %427 = vmatmul.mubr.bf16.gmra.mrb[0].mxu0 %v382
      %v428 = vpop.f32.mrb[0].mxu0
      %v429 = vadd.f32 %v363, %v428
      %v430 = vpop.f32.mrb[0].mxu0
      %v431 = vadd.f32 %v363, %v430
      %v432 = vpop.f32.mrb[0].mxu0
      %v433 = vadd.f32 %v368, %v432
      %v434 = vpop.f32.mrb[0].mxu0
      %v435 = vadd.f32 %v368, %v434
      %436 = vmatprep.mubr.bf16.mxu0 0
      %437 = vmatmul.mubr.bf16.gmra.mrb[0].mxu0 %v385
      %v438 = vpop.f32.mrb[0].mxu0
      %v439 = vadd.f32 %v373, %v438
      %v440 = vpop.f32.mrb[0].mxu0
      %v441 = vadd.f32 %v373, %v440
      %v442 = vpop.f32.mrb[0].mxu0
      %v443 = vadd.f32 %v378, %v442
      %v444 = vpop.f32.mrb[0].mxu0
      %v445 = vadd.f32 %v378, %v444
      %446 = vdwg.mxu0
      %v447 = vld [vmem:[%s328] sm:$0xff]
      %v448 = vld [vmem:[%s328 + $0x8] sm:$0xff]
      %v449 = vld [vmem:[%s328 + $0x10] sm:$0xff]
      %v450 = vld [vmem:[%s328 + $0x18] sm:$0xff]
      %v451 = vpack.c.bf16 %v448, %v447
      %v452 = vpack.c.bf16 %v450, %v449
      %v453 = vld [vmem:[%s2] sm:$0xff]
      %v454 = vld [vmem:[%s2 + $0x8] sm:$0xff]
      %v455 = vld [vmem:[%s2 + $0x10] sm:$0xff]
      %v456 = vld [vmem:[%s2 + $0x18] sm:$0xff]
      %v457 = vld [vmem:[%s2 + $0x20] sm:$0xff]
      %v458 = vld [vmem:[%s2 + $0x28] sm:$0xff]
      %v459 = vld [vmem:[%s2 + $0x30] sm:$0xff]
      %v460 = vld [vmem:[%s2 + $0x38] sm:$0xff]
      %v461 = vld [vmem:[%s2 + $0x40] sm:$0xff]
      %v462 = vld [vmem:[%s2 + $0x48] sm:$0xff]
      %v463 = vld [vmem:[%s2 + $0x50] sm:$0xff]
      %v464 = vld [vmem:[%s2 + $0x58] sm:$0xff]
      %v465 = vld [vmem:[%s2 + $0x60] sm:$0xff]
      %v466 = vld [vmem:[%s2 + $0x68] sm:$0xff]
      %v467 = vld [vmem:[%s2 + $0x70] sm:$0xff]
      %v468 = vld [vmem:[%s2 + $0x78] sm:$0xff]
      %v485 = vunpack.c.l.b16 %v453
      %v486 = vunpack.c.h.b16 %v453
      %v487 = vunpack.c.l.b16 %v454
      %v488 = vunpack.c.h.b16 %v454
      %v489 = vunpack.c.l.b16 %v455
      %v490 = vunpack.c.h.b16 %v455
      %v491 = vunpack.c.l.b16 %v456
      %v492 = vunpack.c.h.b16 %v456
      %v493 = vunpack.c.l.b16 %v457
      %v494 = vunpack.c.h.b16 %v457
      %v495 = vunpack.c.l.b16 %v458
      %v496 = vunpack.c.h.b16 %v458
      %v497 = vunpack.c.l.b16 %v459
      %v498 = vunpack.c.h.b16 %v459
      %v499 = vunpack.c.l.b16 %v460
      %v500 = vunpack.c.h.b16 %v460
      %v501 = vunpack.c.l.b16 %v461
      %v502 = vunpack.c.h.b16 %v461
      %v503 = vunpack.c.l.b16 %v462
      %v504 = vunpack.c.h.b16 %v462
      %v505 = vunpack.c.l.b16 %v463
      %v506 = vunpack.c.h.b16 %v463
      %v507 = vunpack.c.l.b16 %v464
      %v508 = vunpack.c.h.b16 %v464
      %v509 = vunpack.c.l.b16 %v465
      %v510 = vunpack.c.h.b16 %v465
      %v511 = vunpack.c.l.b16 %v466
      %v512 = vunpack.c.h.b16 %v466
      %v513 = vunpack.c.l.b16 %v467
      %v514 = vunpack.c.h.b16 %v467
      %v515 = vunpack.c.l.b16 %v468
      %v516 = vunpack.c.h.b16 %v468
      %v517 = vpack.c.b16 %v487, %v485
      %v518 = vpack.c.b16 %v488, %v486
      %v519 = vpack.c.b16 %v491, %v489
      %v520 = vpack.c.b16 %v492, %v490
      %v521 = vpack.c.b16 %v495, %v493
      %v522 = vpack.c.b16 %v496, %v494
      %v523 = vpack.c.b16 %v499, %v497
      %v524 = vpack.c.b16 %v500, %v498
      %v525 = vpack.c.b16 %v503, %v501
      %v526 = vpack.c.b16 %v504, %v502
      %v527 = vpack.c.b16 %v507, %v505
      %v528 = vpack.c.b16 %v508, %v506
      %v529 = vpack.c.b16 %v511, %v509
      %v530 = vpack.c.b16 %v512, %v510
      %v531 = vpack.c.b16 %v515, %v513
      %v532 = vpack.c.b16 %v516, %v514
      %549 = vmatprep.subr.bf16.mxu0 %v518
      %550 = vmatpush1.bf16.msra.mxu0 %v517
      %551 = vmatprep.subr.bf16.mxu0 %v520
      %552 = vmatpush1.bf16.msra.mxu0 %v519
      %553 = vmatprep.subr.bf16.mxu0 %v522
      %554 = vmatpush1.bf16.msra.mxu0 %v521
      %555 = vmatprep.subr.bf16.mxu0 %v524
      %556 = vmatpush1.bf16.msra.mxu0 %v523
      %557 = vmatprep.subr.bf16.mxu0 %v526
      %558 = vmatpush1.bf16.msra.mxu0 %v525
      %559 = vmatprep.subr.bf16.mxu0 %v528
      %560 = vmatpush1.bf16.msra.mxu0 %v527
      %561 = vmatprep.subr.bf16.mxu0 %v530
      %562 = vmatpush1.bf16.msra.mxu0 %v529
      %563 = vmatprep.subr.bf16.mxu0 %v532
      %564 = vmatpush1.bf16.msra.mxu0 %v531
      %565 = vmatprep.subr.bf16.mxu0 0
      %566 = vmatpush1.bf16.msra.mxu0 0
      %567 = vmatprep.subr.bf16.mxu0 0
      %568 = vmatpush1.bf16.msra.mxu0 0
      %569 = vmatprep.subr.bf16.mxu0 0
      %570 = vmatpush1.bf16.msra.mxu0 0
      %571 = vmatprep.subr.bf16.mxu0 0
      %572 = vmatpush1.bf16.msra.mxu0 0
      %573 = vmatprep.subr.bf16.mxu0 0
      %574 = vmatpush1.bf16.msra.mxu0 0
      %575 = vmatprep.subr.bf16.mxu0 0
      %576 = vmatpush1.bf16.msra.mxu0 0
      %577 = vmatprep.subr.bf16.mxu0 0
      %578 = vmatpush1.bf16.msra.mxu0 0
      %579 = vmatprep.subr.bf16.mxu0 0
      %580 = vmatpush1.bf16.msra.mxu0 0
      %581 = vmatprep.mubr.bf16.mxu0 0
      %582 = vmatmul.mubr.bf16.gmra.mrb[0].mxu0 %v451
      %v583 = vpop.f32.mrb[0].mxu0
      %v584 = vadd.f32 0.0, %v583
      %v585 = vpop.f32.mrb[0].mxu0
      %v586 = vadd.f32 0.0, %v585
      %v587 = vpop.f32.mrb[0].mxu0
      %v588 = vadd.f32 0.0, %v587
      %v589 = vpop.f32.mrb[0].mxu0
      %v590 = vadd.f32 0.0, %v589
      %591 = vmatprep.mubr.bf16.mxu0 0
      %592 = vmatmul.mubr.bf16.gmra.mrb[0].mxu0 %v452
      %v593 = vpop.f32.mrb[0].mxu0
      %v594 = vadd.f32 0.0, %v593
      %v595 = vpop.f32.mrb[0].mxu0
      %v596 = vadd.f32 0.0, %v595
      %v597 = vpop.f32.mrb[0].mxu0
      %v598 = vadd.f32 0.0, %v597
      %v599 = vpop.f32.mrb[0].mxu0
      %v600 = vadd.f32 0.0, %v599
      %601 = vdwg.mxu0
      %v602 = vadd.f32 %v429, %v584
      %v603 = vadd.f32 %v431, %v586
      %v604 = vadd.f32 %v433, %v588
      %v605 = vadd.f32 %v435, %v590
      %v606 = vadd.f32 %v439, %v594
      %v607 = vadd.f32 %v441, %v596
      %v608 = vadd.f32 %v443, %v598
      %v609 = vadd.f32 %v445, %v600
      %610 = vst [vmem:[%s333] sm:$0xff] %v602
      %611 = vst [vmem:[%s333 + $0x8] sm:$0xff] %v603
      %612 = vst [vmem:[%s333 + $0x10] sm:$0xff] %v604
      %613 = vst [vmem:[%s333 + $0x18] sm:$0xff] %v605
      %614 = vst [vmem:[%s333 + $0x20] sm:$0xff] %v606
      %615 = vst [vmem:[%s333 + $0x28] sm:$0xff] %v607
      %616 = vst [vmem:[%s333 + $0x30] sm:$0xff] %v608
      %617 = vst [vmem:[%s333 + $0x38] sm:$0xff] %v609
      %v618 = vlaneseq
      %v619 = vand.u32 %v618, 127
      %v620 = vadd.s32 %v619, 128
      %v621 = vshra.s32 %v619, 4
      %v622 = vshra.s32 %v620, 4
      %v623 = vand.u32 %v619, 15
      %v624 = vand.u32 %v620, 15
      %v625 = vadd.s32 %v621, 4294967295
      %v626 = vadd.s32 %v622, 4294967295
      %vm627 = vcmp.ge.s32.totalorder %v625, 0
      %vm628 = vcmp.ge.s32.totalorder %v626, 0
      %vm629 = vcmp.lt.s32.totalorder %v625, 16
      %vm630 = vcmp.lt.s32.totalorder %v626, 16
      %vm631 = vmand %vm627, %vm629
      %vm632 = vmand %vm628, %vm630
      %v633 = vsel %vm631, 1.0, 0.0
      %v634 = vsel %vm632, 1.0, 0.0
      %vm635 = vcmp.ge.s32.totalorder %v621, 0
      %vm636 = vcmp.ge.s32.totalorder %v622, 0
      %vm637 = vcmp.lt.s32.totalorder %v621, 16
      %vm638 = vcmp.lt.s32.totalorder %v622, 16
      %vm639 = vmand %vm635, %vm637
      %vm640 = vmand %vm636, %vm638
      %v641 = vsel %vm639, 1.0, 0.0
      %v642 = vsel %vm640, 1.0, 0.0
      %v643 = vadd.s32 %v621, 1
      %v644 = vadd.s32 %v622, 1
      %vm645 = vcmp.ge.s32.totalorder %v643, 0
      %vm646 = vcmp.ge.s32.totalorder %v644, 0
      %vm647 = vcmp.lt.s32.totalorder %v643, 16
      %vm648 = vcmp.lt.s32.totalorder %v644, 16
      %vm649 = vmand %vm645, %vm647
      %vm650 = vmand %vm646, %vm648
      %v651 = vsel %vm649, 1.0, 0.0
      %v652 = vsel %vm650, 1.0, 0.0
      %v653 = vadd.s32 %v623, 4294967295
      %v654 = vadd.s32 %v624, 4294967295
      %vm655 = vcmp.ge.s32.totalorder %v653, 0
      %vm656 = vcmp.ge.s32.totalorder %v654, 0
      %vm657 = vcmp.lt.s32.totalorder %v653, 16
      %vm658 = vcmp.lt.s32.totalorder %v654, 16
      %vm659 = vmand %vm655, %vm657
      %vm660 = vmand %vm656, %vm658
      %v661 = vsel %vm659, 1.0, 0.0
      %v662 = vsel %vm660, 1.0, 0.0
      %vm663 = vcmp.ge.s32.totalorder %v623, 0
      %vm664 = vcmp.ge.s32.totalorder %v624, 0
      %vm665 = vcmp.lt.s32.totalorder %v623, 16
      %vm666 = vcmp.lt.s32.totalorder %v624, 16
      %vm667 = vmand %vm663, %vm665
      %vm668 = vmand %vm664, %vm666
      %v669 = vsel %vm667, 1.0, 0.0
      %v670 = vsel %vm668, 1.0, 0.0
      %v671 = vadd.s32 %v623, 1
      %v672 = vadd.s32 %v624, 1
      %vm673 = vcmp.ge.s32.totalorder %v671, 0
      %vm674 = vcmp.ge.s32.totalorder %v672, 0
      %vm675 = vcmp.lt.s32.totalorder %v671, 16
      %vm676 = vcmp.lt.s32.totalorder %v672, 16
      %vm677 = vmand %vm673, %vm675
      %vm678 = vmand %vm674, %vm676
      %v679 = vsel %vm677, 1.0, 0.0
      %v680 = vsel %vm678, 1.0, 0.0
      %681 = vrot.lane.b32.xlu0 %v602, 17
      %v682 = vpop.permute.xlu0 %681
      %683 = vrot.lane.b32.xlu0 %v604, 17
      %v684 = vpop.permute.xlu0 %683
      %685 = vrot.lane.b32.xlu0 %v606, 17
      %v686 = vpop.permute.xlu0 %685
      %687 = vrot.lane.b32.xlu0 %v608, 17
      %v688 = vpop.permute.xlu0 %687
      %689 = vrot.lane.b32.xlu0 %v603, 17
      %v690 = vpop.permute.xlu0 %689
      %691 = vrot.lane.b32.xlu0 %v605, 17
      %v692 = vpop.permute.xlu0 %691
      %693 = vrot.lane.b32.xlu0 %v607, 17
      %v694 = vpop.permute.xlu0 %693
      %695 = vrot.lane.b32.xlu0 %v609, 17
      %v696 = vpop.permute.xlu0 %695
      %vm697 = vcmp.lt.s32.totalorder %v619, 17
      %v698 = vsel %vm697, %v682, %v690
      %v699 = vsel %vm697, %v684, %v692
      %v700 = vsel %vm697, %v686, %v694
      %v701 = vsel %vm697, %v688, %v696
      %v702 = vsel %vm697, %v690, %v682
      %v703 = vsel %vm697, %v692, %v684
      %v704 = vsel %vm697, %v694, %v686
      %v705 = vsel %vm697, %v696, %v688
      %v706 = vmul.f32 %v633, %v661
      %v707 = vmul.f32 %v634, %v662
      %v708 = vmul.f32 %v702, %v706
      %v709 = vmul.f32 %v698, %v707
      %v710 = vmul.f32 %v703, %v706
      %v711 = vmul.f32 %v699, %v707
      %v712 = vmul.f32 %v704, %v706
      %v713 = vmul.f32 %v700, %v707
      %v714 = vmul.f32 %v705, %v706
      %v715 = vmul.f32 %v701, %v707
      %v716 = vpack.c.bf16 %v710, %v708
      %v717 = vpack.c.bf16 %v711, %v709
      %v718 = vpack.c.bf16 %v714, %v712
      %v719 = vpack.c.bf16 %v715, %v713
      %720 = vst [vmem:[#allocation2] sm:$0xff] %v716
      %721 = vst [vmem:[#allocation2 + $0x8] sm:$0xff] %v717
      %722 = vst [vmem:[#allocation2 + $0x10] sm:$0xff] %v718
      %723 = vst [vmem:[#allocation2 + $0x18] sm:$0xff] %v719
      %724 = vrot.lane.b32.xlu0 %v602, 16
      %v725 = vpop.permute.xlu0 %724
      %726 = vrot.lane.b32.xlu0 %v604, 16
      %v727 = vpop.permute.xlu0 %726
      %728 = vrot.lane.b32.xlu0 %v606, 16
      %v729 = vpop.permute.xlu0 %728
      %730 = vrot.lane.b32.xlu0 %v608, 16
      %v731 = vpop.permute.xlu0 %730
      %732 = vrot.lane.b32.xlu0 %v603, 16
      %v733 = vpop.permute.xlu0 %732
      %734 = vrot.lane.b32.xlu0 %v605, 16
      %v735 = vpop.permute.xlu0 %734
      %736 = vrot.lane.b32.xlu0 %v607, 16
      %v737 = vpop.permute.xlu0 %736
      %738 = vrot.lane.b32.xlu0 %v609, 16
      %v739 = vpop.permute.xlu0 %738
      %vm740 = vcmp.lt.s32.totalorder %v619, 16
      %v741 = vsel %vm740, %v725, %v733
      %v742 = vsel %vm740, %v727, %v735
      %v743 = vsel %vm740, %v729, %v737
      %v744 = vsel %vm740, %v731, %v739
      %v745 = vsel %vm740, %v733, %v725
      %v746 = vsel %vm740, %v735, %v727
      %v747 = vsel %vm740, %v737, %v729
      %v748 = vsel %vm740, %v739, %v731
      %v749 = vmul.f32 %v633, %v669
      %v750 = vmul.f32 %v634, %v670
      %v751 = vmul.f32 %v745, %v749
      %v752 = vmul.f32 %v741, %v750
      %v753 = vmul.f32 %v746, %v749
      %v754 = vmul.f32 %v742, %v750
      %v755 = vmul.f32 %v747, %v749
      %v756 = vmul.f32 %v743, %v750
      %v757 = vmul.f32 %v748, %v749
      %v758 = vmul.f32 %v744, %v750
      %v759 = vpack.c.bf16 %v753, %v751
      %v760 = vpack.c.bf16 %v754, %v752
      %v761 = vpack.c.bf16 %v757, %v755
      %v762 = vpack.c.bf16 %v758, %v756
      %763 = vst [vmem:[#allocation2 + $0x20] sm:$0xff] %v759
      %764 = vst [vmem:[#allocation2 + $0x28] sm:$0xff] %v760
      %765 = vst [vmem:[#allocation2 + $0x30] sm:$0xff] %v761
      %766 = vst [vmem:[#allocation2 + $0x38] sm:$0xff] %v762
      %767 = vrot.lane.b32.xlu0 %v602, 15
      %v768 = vpop.permute.xlu0 %767
      %769 = vrot.lane.b32.xlu0 %v604, 15
      %v770 = vpop.permute.xlu0 %769
      %771 = vrot.lane.b32.xlu0 %v606, 15
      %v772 = vpop.permute.xlu0 %771
      %773 = vrot.lane.b32.xlu0 %v608, 15
      %v774 = vpop.permute.xlu0 %773
      %775 = vrot.lane.b32.xlu0 %v603, 15
      %v776 = vpop.permute.xlu0 %775
      %777 = vrot.lane.b32.xlu0 %v605, 15
      %v778 = vpop.permute.xlu0 %777
      %779 = vrot.lane.b32.xlu0 %v607, 15
      %v780 = vpop.permute.xlu0 %779
      %781 = vrot.lane.b32.xlu0 %v609, 15
      %v782 = vpop.permute.xlu0 %781
      %vm783 = vcmp.lt.s32.totalorder %v619, 15
      %v784 = vsel %vm783, %v768, %v776
      %v785 = vsel %vm783, %v770, %v778
      %v786 = vsel %vm783, %v772, %v780
      %v787 = vsel %vm783, %v774, %v782
      %v788 = vsel %vm783, %v776, %v768
      %v789 = vsel %vm783, %v778, %v770
      %v790 = vsel %vm783, %v780, %v772
      %v791 = vsel %vm783, %v782, %v774
      %v792 = vmul.f32 %v633, %v679
      %v793 = vmul.f32 %v634, %v680
      %v794 = vmul.f32 %v788, %v792
      %v795 = vmul.f32 %v784, %v793
      %v796 = vmul.f32 %v789, %v792
      %v797 = vmul.f32 %v785, %v793
      %v798 = vmul.f32 %v790, %v792
      %v799 = vmul.f32 %v786, %v793
      %v800 = vmul.f32 %v791, %v792
      %v801 = vmul.f32 %v787, %v793
      %v802 = vpack.c.bf16 %v796, %v794
      %v803 = vpack.c.bf16 %v797, %v795
      %v804 = vpack.c.bf16 %v800, %v798
      %v805 = vpack.c.bf16 %v801, %v799
      %806 = vst [vmem:[#allocation2 + $0x40] sm:$0xff] %v802
      %807 = vst [vmem:[#allocation2 + $0x48] sm:$0xff] %v803
      %808 = vst [vmem:[#allocation2 + $0x50] sm:$0xff] %v804
      %809 = vst [vmem:[#allocation2 + $0x58] sm:$0xff] %v805
      %810 = vrot.lane.b32.xlu0 %v602, 1
      %v811 = vpop.permute.xlu0 %810
      %812 = vrot.lane.b32.xlu0 %v604, 1
      %v813 = vpop.permute.xlu0 %812
      %814 = vrot.lane.b32.xlu0 %v606, 1
      %v815 = vpop.permute.xlu0 %814
      %816 = vrot.lane.b32.xlu0 %v608, 1
      %v817 = vpop.permute.xlu0 %816
      %818 = vrot.lane.b32.xlu0 %v603, 1
      %v819 = vpop.permute.xlu0 %818
      %820 = vrot.lane.b32.xlu0 %v605, 1
      %v821 = vpop.permute.xlu0 %820
      %822 = vrot.lane.b32.xlu0 %v607, 1
      %v823 = vpop.permute.xlu0 %822
      %824 = vrot.lane.b32.xlu0 %v609, 1
      %v825 = vpop.permute.xlu0 %824
      %vm826 = vcmp.lt.s32.totalorder %v619, 1
      %v827 = vsel %vm826, %v811, %v819
      %v828 = vsel %vm826, %v813, %v821
      %v829 = vsel %vm826, %v815, %v823
      %v830 = vsel %vm826, %v817, %v825
      %v831 = vsel %vm826, %v819, %v811
      %v832 = vsel %vm826, %v821, %v813
      %v833 = vsel %vm826, %v823, %v815
      %v834 = vsel %vm826, %v825, %v817
      %v835 = vmul.f32 %v641, %v661
      %v836 = vmul.f32 %v642, %v662
      %v837 = vmul.f32 %v831, %v835
      %v838 = vmul.f32 %v827, %v836
      %v839 = vmul.f32 %v832, %v835
      %v840 = vmul.f32 %v828, %v836
      %v841 = vmul.f32 %v833, %v835
      %v842 = vmul.f32 %v829, %v836
      %v843 = vmul.f32 %v834, %v835
      %v844 = vmul.f32 %v830, %v836
      %v845 = vpack.c.bf16 %v839, %v837
      %v846 = vpack.c.bf16 %v840, %v838
      %v847 = vpack.c.bf16 %v843, %v841
      %v848 = vpack.c.bf16 %v844, %v842
      %849 = vst [vmem:[#allocation2 + $0x60] sm:$0xff] %v845
      %850 = vst [vmem:[#allocation2 + $0x68] sm:$0xff] %v846
      %851 = vst [vmem:[#allocation2 + $0x70] sm:$0xff] %v847
      %852 = vst [vmem:[#allocation2 + $0x78] sm:$0xff] %v848
      %v853 = vmul.f32 %v641, %v669
      %v854 = vmul.f32 %v642, %v670
      %v855 = vmul.f32 %v602, %v853
      %v856 = vmul.f32 %v603, %v854
      %v857 = vmul.f32 %v604, %v853
      %v858 = vmul.f32 %v605, %v854
      %v859 = vmul.f32 %v606, %v853
      %v860 = vmul.f32 %v607, %v854
      %v861 = vmul.f32 %v608, %v853
      %v862 = vmul.f32 %v609, %v854
      %v863 = vpack.c.bf16 %v857, %v855
      %v864 = vpack.c.bf16 %v858, %v856
      %v865 = vpack.c.bf16 %v861, %v859
      %v866 = vpack.c.bf16 %v862, %v860
      %867 = vst [vmem:[#allocation2 + $0x80] sm:$0xff] %v863
      %868 = vst [vmem:[#allocation2 + $0x88] sm:$0xff] %v864
      %869 = vst [vmem:[#allocation2 + $0x90] sm:$0xff] %v865
      %870 = vst [vmem:[#allocation2 + $0x98] sm:$0xff] %v866
      %871 = vrot.lane.b32.xlu0 %v602, 127
      %v872 = vpop.permute.xlu0 %871
      %873 = vrot.lane.b32.xlu0 %v604, 127
      %v874 = vpop.permute.xlu0 %873
      %875 = vrot.lane.b32.xlu0 %v606, 127
      %v876 = vpop.permute.xlu0 %875
      %877 = vrot.lane.b32.xlu0 %v608, 127
      %v878 = vpop.permute.xlu0 %877
      %879 = vrot.lane.b32.xlu0 %v603, 127
      %v880 = vpop.permute.xlu0 %879
      %881 = vrot.lane.b32.xlu0 %v605, 127
      %v882 = vpop.permute.xlu0 %881
      %883 = vrot.lane.b32.xlu0 %v607, 127
      %v884 = vpop.permute.xlu0 %883
      %885 = vrot.lane.b32.xlu0 %v609, 127
      %v886 = vpop.permute.xlu0 %885
      %vm887 = vcmp.lt.s32.totalorder %v619, 127
      %v888 = vsel %vm887, %v872, %v880
      %v889 = vsel %vm887, %v874, %v882
      %v890 = vsel %vm887, %v876, %v884
      %v891 = vsel %vm887, %v878, %v886
      %v892 = vsel %vm887, %v880, %v872
      %v893 = vsel %vm887, %v882, %v874
      %v894 = vsel %vm887, %v884, %v876
      %v895 = vsel %vm887, %v886, %v878
      %v896 = vmul.f32 %v641, %v679
      %v897 = vmul.f32 %v642, %v680
      %v898 = vmul.f32 %v888, %v896
      %v899 = vmul.f32 %v892, %v897
      %v900 = vmul.f32 %v889, %v896
      %v901 = vmul.f32 %v893, %v897
      %v902 = vmul.f32 %v890, %v896
      %v903 = vmul.f32 %v894, %v897
      %v904 = vmul.f32 %v891, %v896
      %v905 = vmul.f32 %v895, %v897
      %v906 = vpack.c.bf16 %v900, %v898
      %v907 = vpack.c.bf16 %v901, %v899
      %v908 = vpack.c.bf16 %v904, %v902
      %v909 = vpack.c.bf16 %v905, %v903
      %910 = vst [vmem:[#allocation2 + $0xa0] sm:$0xff] %v906
      %911 = vst [vmem:[#allocation2 + $0xa8] sm:$0xff] %v907
      %912 = vst [vmem:[#allocation2 + $0xb0] sm:$0xff] %v908
      %913 = vst [vmem:[#allocation2 + $0xb8] sm:$0xff] %v909
      %914 = vrot.lane.b32.xlu0 %v602, 113
      %v915 = vpop.permute.xlu0 %914
      %916 = vrot.lane.b32.xlu0 %v604, 113
      %v917 = vpop.permute.xlu0 %916
      %918 = vrot.lane.b32.xlu0 %v606, 113
      %v919 = vpop.permute.xlu0 %918
      %920 = vrot.lane.b32.xlu0 %v608, 113
      %v921 = vpop.permute.xlu0 %920
      %922 = vrot.lane.b32.xlu0 %v603, 113
      %v923 = vpop.permute.xlu0 %922
      %924 = vrot.lane.b32.xlu0 %v605, 113
      %v925 = vpop.permute.xlu0 %924
      %926 = vrot.lane.b32.xlu0 %v607, 113
      %v927 = vpop.permute.xlu0 %926
      %928 = vrot.lane.b32.xlu0 %v609, 113
      %v929 = vpop.permute.xlu0 %928
      %vm930 = vcmp.lt.s32.totalorder %v619, 113
      %v931 = vsel %vm930, %v915, %v923
      %v932 = vsel %vm930, %v917, %v925
      %v933 = vsel %vm930, %v919, %v927
      %v934 = vsel %vm930, %v921, %v929
      %v935 = vsel %vm930, %v923, %v915
      %v936 = vsel %vm930, %v925, %v917
      %v937 = vsel %vm930, %v927, %v919
      %v938 = vsel %vm930, %v929, %v921
      %v939 = vmul.f32 %v651, %v661
      %v940 = vmul.f32 %v652, %v662
      %v941 = vmul.f32 %v931, %v939
      %v942 = vmul.f32 %v935, %v940
      %v943 = vmul.f32 %v932, %v939
      %v944 = vmul.f32 %v936, %v940
      %v945 = vmul.f32 %v933, %v939
      %v946 = vmul.f32 %v937, %v940
      %v947 = vmul.f32 %v934, %v939
      %v948 = vmul.f32 %v938, %v940
      %v949 = vpack.c.bf16 %v943, %v941
      %v950 = vpack.c.bf16 %v944, %v942
      %v951 = vpack.c.bf16 %v947, %v945
      %v952 = vpack.c.bf16 %v948, %v946
      %953 = vst [vmem:[#allocation2 + $0xc0] sm:$0xff] %v949
      %954 = vst [vmem:[#allocation2 + $0xc8] sm:$0xff] %v950
      %955 = vst [vmem:[#allocation2 + $0xd0] sm:$0xff] %v951
      %956 = vst [vmem:[#allocation2 + $0xd8] sm:$0xff] %v952
      %957 = vrot.lane.b32.xlu0 %v602, 112
      %v958 = vpop.permute.xlu0 %957
      %959 = vrot.lane.b32.xlu0 %v604, 112
      %v960 = vpop.permute.xlu0 %959
      %961 = vrot.lane.b32.xlu0 %v606, 112
      %v962 = vpop.permute.xlu0 %961
      %963 = vrot.lane.b32.xlu0 %v608, 112
      %v964 = vpop.permute.xlu0 %963
      %965 = vrot.lane.b32.xlu0 %v603, 112
      %v966 = vpop.permute.xlu0 %965
      %967 = vrot.lane.b32.xlu0 %v605, 112
      %v968 = vpop.permute.xlu0 %967
      %969 = vrot.lane.b32.xlu0 %v607, 112
      %v970 = vpop.permute.xlu0 %969
      %971 = vrot.lane.b32.xlu0 %v609, 112
      %v972 = vpop.permute.xlu0 %971
      %vm973 = vcmp.lt.s32.totalorder %v619, 112
      %v974 = vsel %vm973, %v958, %v966
      %v975 = vsel %vm973, %v960, %v968
      %v976 = vsel %vm973, %v962, %v970
      %v977 = vsel %vm973, %v964, %v972
      %v978 = vsel %vm973, %v966, %v958
      %v979 = vsel %vm973, %v968, %v960
      %v980 = vsel %vm973, %v970, %v962
      %v981 = vsel %vm973, %v972, %v964
      %v982 = vmul.f32 %v651, %v669
      %v983 = vmul.f32 %v652, %v670
      %v984 = vmul.f32 %v974, %v982
      %v985 = vmul.f32 %v978, %v983
      %v986 = vmul.f32 %v975, %v982
      %v987 = vmul.f32 %v979, %v983
      %v988 = vmul.f32 %v976, %v982
      %v989 = vmul.f32 %v980, %v983
      %v990 = vmul.f32 %v977, %v982
      %v991 = vmul.f32 %v981, %v983
      %v992 = vpack.c.bf16 %v986, %v984
      %v993 = vpack.c.bf16 %v987, %v985
      %v994 = vpack.c.bf16 %v990, %v988
      %v995 = vpack.c.bf16 %v991, %v989
      %996 = vst [vmem:[#allocation2 + $0xe0] sm:$0xff] %v992
      %997 = vst [vmem:[#allocation2 + $0xe8] sm:$0xff] %v993
      %998 = vst [vmem:[#allocation2 + $0xf0] sm:$0xff] %v994
      %999 = vst [vmem:[#allocation2 + $0xf8] sm:$0xff] %v995
      %1000 = vrot.lane.b32.xlu0 %v602, 111
      %v1001 = vpop.permute.xlu0 %1000
      %1002 = vrot.lane.b32.xlu0 %v604, 111
      %v1003 = vpop.permute.xlu0 %1002
      %1004 = vrot.lane.b32.xlu0 %v606, 111
      %v1005 = vpop.permute.xlu0 %1004
      %1006 = vrot.lane.b32.xlu0 %v608, 111
      %v1007 = vpop.permute.xlu0 %1006
      %1008 = vrot.lane.b32.xlu0 %v603, 111
      %v1009 = vpop.permute.xlu0 %1008
      %1010 = vrot.lane.b32.xlu0 %v605, 111
      %v1011 = vpop.permute.xlu0 %1010
      %1012 = vrot.lane.b32.xlu0 %v607, 111
      %v1013 = vpop.permute.xlu0 %1012
      %1014 = vrot.lane.b32.xlu0 %v609, 111
      %v1015 = vpop.permute.xlu0 %1014
      %vm1016 = vcmp.lt.s32.totalorder %v619, 111
      %v1017 = vsel %vm1016, %v1001, %v1009
      %v1018 = vsel %vm1016, %v1003, %v1011
      %v1019 = vsel %vm1016, %v1005, %v1013
      %v1020 = vsel %vm1016, %v1007, %v1015
      %v1021 = vsel %vm1016, %v1009, %v1001
      %v1022 = vsel %vm1016, %v1011, %v1003
      %v1023 = vsel %vm1016, %v1013, %v1005
      %v1024 = vsel %vm1016, %v1015, %v1007
      %v1025 = vmul.f32 %v651, %v679
      %v1026 = vmul.f32 %v652, %v680
      %v1027 = vmul.f32 %v1017, %v1025
      %v1028 = vmul.f32 %v1021, %v1026
      %v1029 = vmul.f32 %v1018, %v1025
      %v1030 = vmul.f32 %v1022, %v1026
      %v1031 = vmul.f32 %v1019, %v1025
      %v1032 = vmul.f32 %v1023, %v1026
      %v1033 = vmul.f32 %v1020, %v1025
      %v1034 = vmul.f32 %v1024, %v1026
      %v1035 = vpack.c.bf16 %v1029, %v1027
      %v1036 = vpack.c.bf16 %v1030, %v1028
      %v1037 = vpack.c.bf16 %v1033, %v1031
      %v1038 = vpack.c.bf16 %v1034, %v1032
      %1039 = vst [vmem:[#allocation2 + $0x100] sm:$0xff] %v1035
      %1040 = vst [vmem:[#allocation2 + $0x108] sm:$0xff] %v1036
      %1041 = vst [vmem:[#allocation2 + $0x110] sm:$0xff] %v1037
      %1042 = vst [vmem:[#allocation2 + $0x118] sm:$0xff] %v1038
      %v1043 = vld [vmem:[%s5] sm:$0xff]
      %v1044 = vld [vmem:[%s5 + $0x8] sm:$0xff]
      %v1045 = vld [vmem:[%s5 + $0x10] sm:$0xff]
      %v1046 = vld [vmem:[%s5 + $0x18] sm:$0xff]
      %v1047 = vld [vmem:[%s5 + $0x20] sm:$0xff]
      %v1048 = vld [vmem:[%s5 + $0x28] sm:$0xff]
      %v1049 = vld [vmem:[%s5 + $0x30] sm:$0xff]
      %v1050 = vld [vmem:[%s5 + $0x38] sm:$0xff]
      %v1051 = vld [vmem:[%s5 + $0x40] sm:$0xff]
      %v1052 = vld [vmem:[%s5 + $0x48] sm:$0xff]
      %v1053 = vld [vmem:[%s5 + $0x50] sm:$0xff]
      %v1054 = vld [vmem:[%s5 + $0x58] sm:$0xff]
      %v1055 = vpack.c.bf16 %v1046, %v1043
      %v1056 = vpack.c.bf16 %v1047, %v1044
      %v1057 = vpack.c.bf16 %v1048, %v1045
      %v1058 = vpack.c.bf16 %v1052, %v1049
      %v1059 = vpack.c.bf16 %v1053, %v1050
      %v1060 = vpack.c.bf16 %v1054, %v1051
      %v1061 = vld [vmem:[#allocation2] sm:$0xff]
      %v1062 = vld [vmem:[#allocation2 + $0x8] sm:$0xff]
      %v1063 = vld [vmem:[#allocation2 + $0x10] sm:$0xff]
      %v1064 = vld [vmem:[#allocation2 + $0x18] sm:$0xff]
      %v1065 = vld [vmem:[#allocation2 + $0x20] sm:$0xff]
      %v1066 = vld [vmem:[#allocation2 + $0x28] sm:$0xff]
      %v1067 = vld [vmem:[#allocation2 + $0x30] sm:$0xff]
      %v1068 = vld [vmem:[#allocation2 + $0x38] sm:$0xff]
      %v1069 = vld [vmem:[#allocation2 + $0x40] sm:$0xff]
      %v1070 = vld [vmem:[#allocation2 + $0x48] sm:$0xff]
      %v1071 = vld [vmem:[#allocation2 + $0x50] sm:$0xff]
      %v1072 = vld [vmem:[#allocation2 + $0x58] sm:$0xff]
      %v1073 = vld [vmem:[#allocation2 + $0x60] sm:$0xff]
      %v1074 = vld [vmem:[#allocation2 + $0x68] sm:$0xff]
      %v1075 = vld [vmem:[#allocation2 + $0x70] sm:$0xff]
      %v1076 = vld [vmem:[#allocation2 + $0x78] sm:$0xff]
      %v1077 = vld [vmem:[#allocation2 + $0x80] sm:$0xff]
      %v1078 = vld [vmem:[#allocation2 + $0x88] sm:$0xff]
      %v1079 = vld [vmem:[#allocation2 + $0x90] sm:$0xff]
      %v1080 = vld [vmem:[#allocation2 + $0x98] sm:$0xff]
      %v1081 = vld [vmem:[#allocation2 + $0xa0] sm:$0xff]
      %v1082 = vld [vmem:[#allocation2 + $0xa8] sm:$0xff]
      %v1083 = vld [vmem:[#allocation2 + $0xb0] sm:$0xff]
      %v1084 = vld [vmem:[#allocation2 + $0xb8] sm:$0xff]
      %v1085 = vld [vmem:[#allocation2 + $0xc0] sm:$0xff]
      %v1086 = vld [vmem:[#allocation2 + $0xc8] sm:$0xff]
      %v1087 = vld [vmem:[#allocation2 + $0xd0] sm:$0xff]
      %v1088 = vld [vmem:[#allocation2 + $0xd8] sm:$0xff]
      %v1089 = vld [vmem:[#allocation2 + $0xe0] sm:$0xff]
      %v1090 = vld [vmem:[#allocation2 + $0xe8] sm:$0xff]
      %v1091 = vld [vmem:[#allocation2 + $0xf0] sm:$0xff]
      %v1092 = vld [vmem:[#allocation2 + $0xf8] sm:$0xff]
      %v1093 = vld [vmem:[#allocation2 + $0x100] sm:$0xff]
      %v1094 = vld [vmem:[#allocation2 + $0x108] sm:$0xff]
      %v1095 = vld [vmem:[#allocation2 + $0x110] sm:$0xff]
      %v1096 = vld [vmem:[#allocation2 + $0x118] sm:$0xff]
      %v1097 = vld [vmem:[%s6] sm:$0xff]
      %v1098 = vld [vmem:[%s6 + $0x8] sm:$0xff]
      %v1099 = vld [vmem:[%s6 + $0x10] sm:$0xff]
      %v1100 = vld [vmem:[%s6 + $0x18] sm:$0xff]
      %1102 = vset.pattern.permute.xlu0 0
      %1103 = vperm.xlu0 %1102, %v1097
      %v1104 = vpop.permute.xlu0 %1103
      %1107 = vset.pattern.permute.xlu0 0
      %1108 = vperm.xlu0 %1107, %v1098
      %v1109 = vpop.permute.xlu0 %1108
      %1112 = vset.pattern.permute.xlu0 0
      %1113 = vperm.xlu0 %1112, %v1099
      %v1114 = vpop.permute.xlu0 %1113
      %1117 = vset.pattern.permute.xlu0 0
      %1118 = vperm.xlu0 %1117, %v1100
      %v1119 = vpop.permute.xlu0 %1118
      %vm1121 = vcmask 261120
      %v1123 = vsel %vm1121, %v1057, 0
      %v1126 = vsel %vm1121, %v1060, 0
      %1128 = vmatprep.subr.bf16.mxu0 %v1062
      %1129 = vmatpush1.bf16.msra.mxu0 %v1061
      %1130 = vmatprep.subr.bf16.mxu0 %v1064
      %1131 = vmatpush1.bf16.msra.mxu0 %v1063
      %1132 = vmatprep.subr.bf16.mxu0 %v1066
      %1133 = vmatpush1.bf16.msra.mxu0 %v1065
      %1134 = vmatprep.subr.bf16.mxu0 %v1068
      %1135 = vmatpush1.bf16.msra.mxu0 %v1067
      %1136 = vmatprep.subr.bf16.mxu0 %v1070
      %1137 = vmatpush1.bf16.msra.mxu0 %v1069
      %1138 = vmatprep.subr.bf16.mxu0 %v1072
      %1139 = vmatpush1.bf16.msra.mxu0 %v1071
      %1140 = vmatprep.subr.bf16.mxu0 %v1074
      %1141 = vmatpush1.bf16.msra.mxu0 %v1073
      %1142 = vmatprep.subr.bf16.mxu0 %v1076
      %1143 = vmatpush1.bf16.msra.mxu0 %v1075
      %1144 = vmatprep.subr.bf16.mxu0 %v1078
      %1145 = vmatpush1.bf16.msra.mxu0 %v1077
      %1146 = vmatprep.subr.bf16.mxu0 %v1080
      %1147 = vmatpush1.bf16.msra.mxu0 %v1079
      %1148 = vmatprep.subr.bf16.mxu0 %v1082
      %1149 = vmatpush1.bf16.msra.mxu0 %v1081
      %1150 = vmatprep.subr.bf16.mxu0 %v1084
      %1151 = vmatpush1.bf16.msra.mxu0 %v1083
      %1152 = vmatprep.subr.bf16.mxu0 %v1086
      %1153 = vmatpush1.bf16.msra.mxu0 %v1085
      %1154 = vmatprep.subr.bf16.mxu0 %v1088
      %1155 = vmatpush1.bf16.msra.mxu0 %v1087
      %1156 = vmatprep.subr.bf16.mxu0 %v1090
      %1157 = vmatpush1.bf16.msra.mxu0 %v1089
      %1158 = vmatprep.subr.bf16.mxu0 %v1092
      %1159 = vmatpush1.bf16.msra.mxu0 %v1091
      %1160 = vmatprep.mubr.bf16.mxu0 %v1056
      %1161 = vmatmul.mubr.bf16.gmra.mrb[0].mxu0 %v1055
      %v1162 = vpop.f32.mrb[0].mxu0
      %v1163 = vadd.f32 %v1104, %v1162
      %v1164 = vpop.f32.mrb[0].mxu0
      %v1165 = vadd.f32 %v1104, %v1164
      %v1166 = vpop.f32.mrb[0].mxu0
      %v1167 = vadd.f32 %v1109, %v1166
      %v1168 = vpop.f32.mrb[0].mxu0
      %v1169 = vadd.f32 %v1109, %v1168
      %1170 = vmatprep.mubr.bf16.mxu0 %v1059
      %1171 = vmatmul.mubr.bf16.gmra.mrb[0].mxu0 %v1058
      %v1172 = vpop.f32.mrb[0].mxu0
      %v1173 = vadd.f32 %v1114, %v1172
      %v1174 = vpop.f32.mrb[0].mxu0
      %v1175 = vadd.f32 %v1114, %v1174
      %v1176 = vpop.f32.mrb[0].mxu0
      %v1177 = vadd.f32 %v1119, %v1176
      %v1178 = vpop.f32.mrb[0].mxu0
      %v1179 = vadd.f32 %v1119, %v1178
      %1180 = vdwg.mxu0
      %1181 = vmatprep.subr.bf16.mxu0 %v1094
      %1182 = vmatpush1.bf16.msra.mxu0 %v1093
      %1183 = vmatprep.subr.bf16.mxu0 %v1096
      %1184 = vmatpush1.bf16.msra.mxu0 %v1095
      %1185 = vmatprep.subr.bf16.mxu0 0
      %1186 = vmatpush1.bf16.msra.mxu0 0
      %1187 = vmatprep.subr.bf16.mxu0 0
      %1188 = vmatpush1.bf16.msra.mxu0 0
      %1189 = vmatprep.subr.bf16.mxu0 0
      %1190 = vmatpush1.bf16.msra.mxu0 0
      %1191 = vmatprep.subr.bf16.mxu0 0
      %1192 = vmatpush1.bf16.msra.mxu0 0
      %1193 = vmatprep.subr.bf16.mxu0 0
      %1194 = vmatpush1.bf16.msra.mxu0 0
      %1195 = vmatprep.subr.bf16.mxu0 0
      %1196 = vmatpush1.bf16.msra.mxu0 0
      %1197 = vmatprep.subr.bf16.mxu0 0
      %1198 = vmatpush1.bf16.msra.mxu0 0
      %1199 = vmatprep.subr.bf16.mxu0 0
      %1200 = vmatpush1.bf16.msra.mxu0 0
      %1201 = vmatprep.subr.bf16.mxu0 0
      %1202 = vmatpush1.bf16.msra.mxu0 0
      %1203 = vmatprep.subr.bf16.mxu0 0
      %1204 = vmatpush1.bf16.msra.mxu0 0
      %1205 = vmatprep.subr.bf16.mxu0 0
      %1206 = vmatpush1.bf16.msra.mxu0 0
      %1207 = vmatprep.subr.bf16.mxu0 0
      %1208 = vmatpush1.bf16.msra.mxu0 0
      %1209 = vmatprep.subr.bf16.mxu0 0
      %1210 = vmatpush1.bf16.msra.mxu0 0
      %1211 = vmatprep.subr.bf16.mxu0 0
      %1212 = vmatpush1.bf16.msra.mxu0 0
      %1213 = vmatprep.mubr.bf16.mxu0 0
      %1214 = vmatmul.mubr.bf16.gmra.mrb[0].mxu0 %v1123
      %v1215 = vpop.f32.mrb[0].mxu0
      %v1216 = vadd.f32 %v1163, %v1215
      %v1217 = vpop.f32.mrb[0].mxu0
      %v1218 = vadd.f32 %v1165, %v1217
      %v1219 = vpop.f32.mrb[0].mxu0
      %v1220 = vadd.f32 %v1167, %v1219
      %v1221 = vpop.f32.mrb[0].mxu0
      %v1222 = vadd.f32 %v1169, %v1221
      %1223 = vmatprep.mubr.bf16.mxu0 0
      %1224 = vmatmul.mubr.bf16.gmra.mrb[0].mxu0 %v1126
      %v1225 = vpop.f32.mrb[0].mxu0
      %v1226 = vadd.f32 %v1173, %v1225
      %v1227 = vpop.f32.mrb[0].mxu0
      %v1228 = vadd.f32 %v1175, %v1227
      %v1229 = vpop.f32.mrb[0].mxu0
      %v1230 = vadd.f32 %v1177, %v1229
      %v1231 = vpop.f32.mrb[0].mxu0
      %v1232 = vadd.f32 %v1179, %v1231
      %1233 = vdwg.mxu0
      %1234 = vst [vmem:[%s338] sm:$0xff] %v1216
      %1235 = vst [vmem:[%s338 + $0x8] sm:$0xff] %v1218
      %1236 = vst [vmem:[%s338 + $0x10] sm:$0xff] %v1220
      %1237 = vst [vmem:[%s338 + $0x18] sm:$0xff] %v1222
      %1238 = vst [vmem:[%s338 + $0x20] sm:$0xff] %v1226
      %1239 = vst [vmem:[%s338 + $0x28] sm:$0xff] %v1228
      %1240 = vst [vmem:[%s338 + $0x30] sm:$0xff] %v1230
      %1241 = vst [vmem:[%s338 + $0x38] sm:$0xff] %v1232
      %p1242 = scmp.lt.s32.totalorder %s20, 1
      %s1243 = scalar_select %p1242, %s20, 1
      %s1244 = smul.addr %s1243, 8
      %s1245 = smul.addr %s1244, 8
      %s1246 = scalar_lea.vmem %s7, %s1245
      %p1247 = scmp.lt.s32.totalorder %s20, 1
      %s1248 = scalar_select %p1247, %s20, 1
      %s1249 = smul.addr %s1248, 8
      %s1250 = smul.addr %s1249, 8
      %s1251 = scalar_lea.vmem %s8, %s1250
      // Predicated region
      $region49: #{feature_shrinker_forward.8} parent=47 // pred_check
        %p1252 = pneg %p195
      $region50: #{feature_shrinker_forward.8} parent=47 // pred_check_branch
        %1254 = sbr.rel (%p1252) target = $region52
      $region51: #{feature_shrinker_forward.8} parent=47 // pred_region
        _
      $region52: #{feature_shrinker_forward.8} parent=47 // pred_fallthru
        _
      // Predicated region
      $region53: #{feature_shrinker_forward.8} parent=47 // pred_check
        %p1255 = pneg %p221
      $region54: #{feature_shrinker_forward.8} parent=47 // pred_check_branch
        %1257 = sbr.rel (%p1255) target = $region56
      $region55: #{feature_shrinker_forward.8} parent=47 // pred_region
        _
      $region56: #{feature_shrinker_forward.8} parent=47 // pred_fallthru
        _
    $region48: #{feature_shrinker_forward.8} parent=5 // pred_fallthru
      _
    %p1258 = scmp.le.s32.totalorder 2, %s15
    // Predicated region
    $region57: #{feature_shrinker_forward.8} parent=5 // pred_check
      %p1259 = pneg %p1258
    $region58: #{feature_shrinker_forward.8} parent=5 // pred_check_branch
      %1261 = sbr.rel (%p1259) target = $region60
    $region59: #{feature_shrinker_forward.8} parent=5 // pred_region
      %s1262 = ssub.s32 %s15, 2
      // Predicated region
      $region61: #{feature_shrinker_forward.8} parent=59 // pred_check
        %p1263 = pneg %p201
      $region62: #{feature_shrinker_forward.8} parent=59 // pred_check_branch
        %1265 = sbr.rel (%p1263) target = $region64
      $region63: #{feature_shrinker_forward.8} parent=59 // pred_region
        %p1266 = scmp.lt.s32.totalorder %s21, 1
        %s1267 = scalar_select %p1266, %s21, 1
        %s1268 = smul.addr %s1267, 8
        %s1269 = smul.addr %s1268, 8
        %s1270 = scalar_lea.vmem %s7, %s1269
      $region64: #{feature_shrinker_forward.8} parent=59 // pred_fallthru
        _
      // Predicated region
      $region65: #{feature_shrinker_forward.8} parent=59 // pred_check
        %p1271 = pneg %p227
      $region66: #{feature_shrinker_forward.8} parent=59 // pred_check_branch
        %1273 = sbr.rel (%p1271) target = $region68
      $region67: #{feature_shrinker_forward.8} parent=59 // pred_region
        %p1274 = scmp.lt.s32.totalorder %s21, 1
        %s1275 = scalar_select %p1274, %s21, 1
        %s1276 = smul.addr %s1275, 8
        %s1277 = smul.addr %s1276, 8
        %s1278 = scalar_lea.vmem %s8, %s1277
      $region68: #{feature_shrinker_forward.8} parent=59 // pred_fallthru
        _
    $region60: #{feature_shrinker_forward.8} parent=5 // pred_fallthru
      _
  $region6: #{feature_shrinker_forward.8} parent=0 // loop_footer
    %s19 = sadd.s32 1, %s15
  $region7: #{feature_shrinker_forward.8} parent=0 // loop_footer_branch
    %14 = sbr.rel target = $region3
  $region8: #{feature_shrinker_forward.8} parent=0 // loop_exit
    _

// kernel: feature_shrinker_forward.9
$region0: #{feature_shrinker_forward.9}
  #allocation0 [shape = 'u32[]', space=smem, size = 0x4, offset = 0x4, fixed_abs, tag = 'smem constant byte address 0x4 - core index']
  #allocation1 [shape = 'u32[144,128]{1,0:T(1,128)}', space=vmem, size = 0x12000, scoped, tag = 'internal scratch']
  #allocation2 [shape = 'bf16[288,1024]{1,0:T(16,128)(2,1)}', space=vmem, size = 0x90000, scoped, tag = 'scratch operand']
  %s0 = inlined_call_operand.vmem [shape: f32[2,16,1024], index: 0, kind: input, shape index: {}]
  %s1 = inlined_call_operand.vmem [shape: f32[2,32,256], index: 1, kind: input, shape index: {}]
  %s2 = inlined_call_operand.vmem [shape: bf16[256,1024], index: 2, kind: input, shape index: {}]
  %s3 = inlined_call_operand.vmem [shape: f32[32,16], index: 3, kind: input, shape index: {}]
  %s4 = inlined_call_operand.vmem [shape: f32[32,1], index: 4, kind: input, shape index: {}]
  %s5 = inlined_call_operand.vmem [shape: f32[32,288], index: 5, kind: input, shape index: {}]
  %s6 = inlined_call_operand.vmem [shape: f32[32,1], index: 6, kind: input, shape index: {}]
  %s7 = inlined_call_operand.hbm [shape: f32[2,32,1024], index: 7, kind: output, shape index: {0}]
  %s8 = inlined_call_operand.vmem [shape: f32[2,32,1024], index: 8, kind: output, shape index: {1}]
  %9 = xla_tuple %s7, %s8
  %s10 = sld [smem:[#allocation0]]
  $region69: #{feature_shrinker_forward.9} parent=0
    _
  %s12 = ssub.s32 1, %s10
  %s13 = scalar_select 0, %s12, %s10
  $region1: #{feature_shrinker_forward.9} parent=0
    #allocation3 [shape = 'u8[262144]{0}', space=vmem, size = 0x40000, scoped, tag = 'output window, operand 0']
    #allocation4 [shape = 's32[2]{0}', space=sflag, size = 0x8, scoped, tag = 'scoped memory for feature_shrinker_forward.9']
    %14 = vsyncpa [#allocation4], 0
    %s15 = scalar_lea.sflag [#allocation4], 1
    %16 = vsyncpa %s15, 0
    loop: start=0, step=1, limit=4
    $region2: #{feature_shrinker_forward.9} parent=1 // loop_pre_header
      _
    $region3: #{feature_shrinker_forward.9} parent=1 // loop_header
      %s18 = sphi 0, %s22
      %p19 = scmp.ge.s32.totalorder %s18, 4
      %s28 = sphi 0, %s30
      %s31 = sphi 0, %s28
      %s32 = sphi 0, %s31
      %s48 = sphi 0, %s32
      %s54 = sphi 0, %s56
      %s57 = sphi 0, %s54
      %s58 = sphi 0, %s57
      %s74 = sphi 0, %s58
      %s78 = sphi 0, %s78
      %s80 = sphi 0, %s78
      %s81 = sphi 0, %s80
      %s95 = sphi 0, %s81
      %s99 = sphi 0, %s99
      %s101 = sphi 0, %s99
      %s102 = sphi 0, %s101
      %s116 = sphi 0, %s102
      %s120 = sphi 0, %s120
      %s122 = sphi 0, %s120
      %s123 = sphi 0, %s122
      %s137 = sphi 0, %s123
      %s141 = sphi 0, %s141
      %s143 = sphi 0, %s141
      %s144 = sphi 0, %s143
      %s158 = sphi 0, %s144
      %s162 = sphi 0, %s162
      %s164 = sphi 0, %s162
      %s165 = sphi 0, %s164
      %s179 = sphi 0, %s165
      %s185 = sphi 0, %s187
      %s188 = sphi 0, %s185
      %s189 = sphi 0, %s188
      %s205 = sphi 0, %s189
      %s211 = sphi 0, %s213
      %s214 = sphi 0, %s211
      %s215 = sphi 0, %s214
      %s231 = sphi 0, %s215
    $region4: #{feature_shrinker_forward.9} parent=1 // loop_header_branch
      %21 = sbr.rel (%p19) target = $region8
    $region5: #{feature_shrinker_forward.9} parent=1 // loop_body
      %s23 = ssub.s32 %s18, 1
      %s24 = ssub.s32 %s18, 2
      %s25 = sadd.s32 %s18, 1
      %s26 = ssub.s32 %s18, %s25
      %p27 = scmp.eq.s32.totalorder %s26, 0
      %s29 = sadd.s32 %s28, 1
      %s30 = scalar_select %p27, %s28, %s29
      %p33 = pneg %p27
      %p34 = scmp.eq.s32.totalorder %s18, 1
      %p35 = por %p33, %p34
      %p36 = scmp.ne.s32.totalorder %s28, %s31
      %p37 = scmp.eq.s32.totalorder %s18, 0
      %p38 = por %p36, %p37
      %p39 = scmp.ne.s32.totalorder %s28, %s31
      %p40 = scmp.eq.s32.totalorder %s23, 1
      %p41 = por %p39, %p40
      %p42 = scmp.ne.s32.totalorder %s31, %s32
      %p43 = scmp.eq.s32.totalorder %s23, 0
      %p44 = por %p42, %p43
      %p45 = scmp.ne.s32.totalorder %s31, %s32
      %p46 = scmp.eq.s32.totalorder %s24, 1
      %p47 = por %p45, %p46
      %p49 = scmp.ne.s32.totalorder %s32, %s48
      %p50 = scmp.eq.s32.totalorder %s24, 0
      %p51 = por %p49, %p50
      %s52 = ssub.s32 %s18, %s25
      %p53 = scmp.eq.s32.totalorder %s52, 0
      %s55 = sadd.s32 %s54, 1
      %s56 = scalar_select %p53, %s54, %s55
      %p59 = pneg %p53
      %p60 = scmp.eq.s32.totalorder %s18, 1
      %p61 = por %p59, %p60
      %p62 = scmp.ne.s32.totalorder %s54, %s57
      %p63 = scmp.eq.s32.totalorder %s18, 0
      %p64 = por %p62, %p63
      %p65 = scmp.ne.s32.totalorder %s54, %s57
      %p66 = scmp.eq.s32.totalorder %s23, 1
      %p67 = por %p65, %p66
      %p68 = scmp.ne.s32.totalorder %s57, %s58
      %p69 = scmp.eq.s32.totalorder %s23, 0
      %p70 = por %p68, %p69
      %p71 = scmp.ne.s32.totalorder %s57, %s58
      %p72 = scmp.eq.s32.totalorder %s24, 1
      %p73 = por %p71, %p72
      %p75 = scmp.ne.s32.totalorder %s58, %s74
      %p76 = scmp.eq.s32.totalorder %s24, 0
      %p77 = por %p75, %p76
      %s79 = sadd.s32 %s78, 1
      %p82 = scmp.eq.s32.totalorder %s18, 1
      %p83 = scmp.ne.s32.totalorder %s78, %s80
      %p84 = scmp.eq.s32.totalorder %s18, 0
      %p85 = por %p83, %p84
      %p86 = scmp.ne.s32.totalorder %s78, %s80
      %p87 = scmp.eq.s32.totalorder %s23, 1
      %p88 = por %p86, %p87
      %p89 = scmp.ne.s32.totalorder %s80, %s81
      %p90 = scmp.eq.s32.totalorder %s23, 0
      %p91 = por %p89, %p90
      %p92 = scmp.ne.s32.totalorder %s80, %s81
      %p93 = scmp.eq.s32.totalorder %s24, 1
      %p94 = por %p92, %p93
      %p96 = scmp.ne.s32.totalorder %s81, %s95
      %p97 = scmp.eq.s32.totalorder %s24, 0
      %p98 = por %p96, %p97
      %s100 = sadd.s32 %s99, 1
      %p103 = scmp.eq.s32.totalorder %s18, 1
      %p104 = scmp.ne.s32.totalorder %s99, %s101
      %p105 = scmp.eq.s32.totalorder %s18, 0
      %p106 = por %p104, %p105
      %p107 = scmp.ne.s32.totalorder %s99, %s101
      %p108 = scmp.eq.s32.totalorder %s23, 1
      %p109 = por %p107, %p108
      %p110 = scmp.ne.s32.totalorder %s101, %s102
      %p111 = scmp.eq.s32.totalorder %s23, 0
      %p112 = por %p110, %p111
      %p113 = scmp.ne.s32.totalorder %s101, %s102
      %p114 = scmp.eq.s32.totalorder %s24, 1
      %p115 = por %p113, %p114
      %p117 = scmp.ne.s32.totalorder %s102, %s116
      %p118 = scmp.eq.s32.totalorder %s24, 0
      %p119 = por %p117, %p118
      %s121 = sadd.s32 %s120, 1
      %p124 = scmp.eq.s32.totalorder %s18, 1
      %p125 = scmp.ne.s32.totalorder %s120, %s122
      %p126 = scmp.eq.s32.totalorder %s18, 0
      %p127 = por %p125, %p126
      %p128 = scmp.ne.s32.totalorder %s120, %s122
      %p129 = scmp.eq.s32.totalorder %s23, 1
      %p130 = por %p128, %p129
      %p131 = scmp.ne.s32.totalorder %s122, %s123
      %p132 = scmp.eq.s32.totalorder %s23, 0
      %p133 = por %p131, %p132
      %p134 = scmp.ne.s32.totalorder %s122, %s123
      %p135 = scmp.eq.s32.totalorder %s24, 1
      %p136 = por %p134, %p135
      %p138 = scmp.ne.s32.totalorder %s123, %s137
      %p139 = scmp.eq.s32.totalorder %s24, 0
      %p140 = por %p138, %p139
      %s142 = sadd.s32 %s141, 1
      %p145 = scmp.eq.s32.totalorder %s18, 1
      %p146 = scmp.ne.s32.totalorder %s141, %s143
      %p147 = scmp.eq.s32.totalorder %s18, 0
      %p148 = por %p146, %p147
      %p149 = scmp.ne.s32.totalorder %s141, %s143
      %p150 = scmp.eq.s32.totalorder %s23, 1
      %p151 = por %p149, %p150
      %p152 = scmp.ne.s32.totalorder %s143, %s144
      %p153 = scmp.eq.s32.totalorder %s23, 0
      %p154 = por %p152, %p153
      %p155 = scmp.ne.s32.totalorder %s143, %s144
      %p156 = scmp.eq.s32.totalorder %s24, 1
      %p157 = por %p155, %p156
      %p159 = scmp.ne.s32.totalorder %s144, %s158
      %p160 = scmp.eq.s32.totalorder %s24, 0
      %p161 = por %p159, %p160
      %s163 = sadd.s32 %s162, 1
      %p166 = scmp.eq.s32.totalorder %s18, 1
      %p167 = scmp.ne.s32.totalorder %s162, %s164
      %p168 = scmp.eq.s32.totalorder %s18, 0
      %p169 = por %p167, %p168
      %p170 = scmp.ne.s32.totalorder %s162, %s164
      %p171 = scmp.eq.s32.totalorder %s23, 1
      %p172 = por %p170, %p171
      %p173 = scmp.ne.s32.totalorder %s164, %s165
      %p174 = scmp.eq.s32.totalorder %s23, 0
      %p175 = por %p173, %p174
      %p176 = scmp.ne.s32.totalorder %s164, %s165
      %p177 = scmp.eq.s32.totalorder %s24, 1
      %p178 = por %p176, %p177
      %p180 = scmp.ne.s32.totalorder %s165, %s179
      %p181 = scmp.eq.s32.totalorder %s24, 0
      %p182 = por %p180, %p181
      %s183 = ssub.s32 %s18, %s25
      %p184 = scmp.eq.s32.totalorder %s183, 0
      %s186 = sadd.s32 %s185, 1
      %s187 = scalar_select %p184, %s185, %s186
      %p190 = pneg %p184
      %p191 = scmp.eq.s32.totalorder %s18, 1
      %p192 = por %p190, %p191
      %p193 = scmp.ne.s32.totalorder %s185, %s188
      %p194 = scmp.eq.s32.totalorder %s18, 0
      %p195 = por %p193, %p194
      %p196 = scmp.ne.s32.totalorder %s185, %s188
      %p197 = scmp.eq.s32.totalorder %s23, 1
      %p198 = por %p196, %p197
      %p199 = scmp.ne.s32.totalorder %s188, %s189
      %p200 = scmp.eq.s32.totalorder %s23, 0
      %p201 = por %p199, %p200
      %p202 = scmp.ne.s32.totalorder %s188, %s189
      %p203 = scmp.eq.s32.totalorder %s24, 1
      %p204 = por %p202, %p203
      %p206 = scmp.ne.s32.totalorder %s189, %s205
      %p207 = scmp.eq.s32.totalorder %s24, 0
      %p208 = por %p206, %p207
      %s209 = ssub.s32 %s18, %s25
      %p210 = scmp.eq.s32.totalorder %s209, 0
      %s212 = sadd.s32 %s211, 1
      %s213 = scalar_select %p210, %s211, %s212
      %p216 = pneg %p210
      %p217 = scmp.eq.s32.totalorder %s18, 1
      %p218 = por %p216, %p217
      %p219 = scmp.ne.s32.totalorder %s211, %s214
      %p220 = scmp.eq.s32.totalorder %s18, 0
      %p221 = por %p219, %p220
      %p222 = scmp.ne.s32.totalorder %s211, %s214
      %p223 = scmp.eq.s32.totalorder %s23, 1
      %p224 = por %p222, %p223
      %p225 = scmp.ne.s32.totalorder %s214, %s215
      %p226 = scmp.eq.s32.totalorder %s23, 0
      %p227 = por %p225, %p226
      %p228 = scmp.ne.s32.totalorder %s214, %s215
      %p229 = scmp.eq.s32.totalorder %s24, 1
      %p230 = por %p228, %p229
      %p232 = scmp.ne.s32.totalorder %s215, %s231
      %p233 = scmp.eq.s32.totalorder %s24, 0
      %p234 = por %p232, %p233
      %p235 = scmp.le.s32.totalorder 1, %s18
      %p236 = scmp.lt.s32.totalorder %s18, 3
      %p237 = pnand %p235, %p236
      %p238 = pneg %p237
      // Predicated region
      $region9: #{feature_shrinker_forward.9} parent=5 // pred_check
        _
      $region10: #{feature_shrinker_forward.9} parent=5 // pred_check_branch
        %240 = sbr.rel (%p237) target = $region12
      $region11: #{feature_shrinker_forward.9} parent=5 // pred_region
        %s241 = ssub.s32 %s18, 1
        // Predicated region
        $region13: #{feature_shrinker_forward.9} parent=11 // pred_check
          %p242 = pneg %p91
        $region14: #{feature_shrinker_forward.9} parent=11 // pred_check_branch
          %244 = sbr.rel (%p242) target = $region16
        $region15: #{feature_shrinker_forward.9} parent=11 // pred_region
          _
        $region16: #{feature_shrinker_forward.9} parent=11 // pred_fallthru
          _
        // Predicated region
        $region17: #{feature_shrinker_forward.9} parent=11 // pred_check
          %p245 = pneg %p112
        $region18: #{feature_shrinker_forward.9} parent=11 // pred_check_branch
          %247 = sbr.rel (%p245) target = $region20
        $region19: #{feature_shrinker_forward.9} parent=11 // pred_region
          _
        $region20: #{feature_shrinker_forward.9} parent=11 // pred_fallthru
          _
        // Predicated region
        $region21: #{feature_shrinker_forward.9} parent=11 // pred_check
          %p248 = pneg %p133
        $region22: #{feature_shrinker_forward.9} parent=11 // pred_check_branch
          %250 = sbr.rel (%p248) target = $region24
        $region23: #{feature_shrinker_forward.9} parent=11 // pred_region
          _
        $region24: #{feature_shrinker_forward.9} parent=11 // pred_fallthru
          _
        // Predicated region
        $region25: #{feature_shrinker_forward.9} parent=11 // pred_check
          %p251 = pneg %p154
        $region26: #{feature_shrinker_forward.9} parent=11 // pred_check_branch
          %253 = sbr.rel (%p251) target = $region28
        $region27: #{feature_shrinker_forward.9} parent=11 // pred_region
          _
        $region28: #{feature_shrinker_forward.9} parent=11 // pred_fallthru
          _
        // Predicated region
        $region29: #{feature_shrinker_forward.9} parent=11 // pred_check
          %p254 = pneg %p175
        $region30: #{feature_shrinker_forward.9} parent=11 // pred_check_branch
          %256 = sbr.rel (%p254) target = $region32
        $region31: #{feature_shrinker_forward.9} parent=11 // pred_region
          _
        $region32: #{feature_shrinker_forward.9} parent=11 // pred_fallthru
          _
      $region12: #{feature_shrinker_forward.9} parent=5 // pred_fallthru
        _
      %p257 = scmp.lt.s32.totalorder %s18, 2
      // Predicated region
      $region33: #{feature_shrinker_forward.9} parent=5 // pred_check
        %p258 = pneg %p257
      $region34: #{feature_shrinker_forward.9} parent=5 // pred_check_branch
        %260 = sbr.rel (%p258) target = $region36
      $region35: #{feature_shrinker_forward.9} parent=5 // pred_region
        // Predicated region
        $region37: #{feature_shrinker_forward.9} parent=35 // pred_check
          %p261 = pneg %p38
        $region38: #{feature_shrinker_forward.9} parent=35 // pred_check_branch
          %263 = sbr.rel (%p261) target = $region40
        $region39: #{feature_shrinker_forward.9} parent=35 // pred_region
          %p264 = scmp.lt.s32.totalorder %s18, 1
          %s265 = scalar_select %p264, %s18, 1
          %s266 = smul.addr %s265, 16
          %s267 = smul.addr %s266, 8
          %s268 = scalar_lea.vmem %s0, %s267
        $region40: #{feature_shrinker_forward.9} parent=35 // pred_fallthru
          _
        // Predicated region
        $region41: #{feature_shrinker_forward.9} parent=35 // pred_check
          %p269 = pneg %p64
        $region42: #{feature_shrinker_forward.9} parent=35 // pred_check_branch
          %271 = sbr.rel (%p269) target = $region44
        $region43: #{feature_shrinker_forward.9} parent=35 // pred_region
          %p272 = scmp.lt.s32.totalorder %s18, 1
          %s273 = scalar_select %p272, %s18, 1
          %s274 = smul.addr %s273, 8
          %s275 = smul.addr %s274, 8
          %s276 = scalar_lea.vmem %s1, %s275
        $region44: #{feature_shrinker_forward.9} parent=35 // pred_fallthru
          _
      $region36: #{feature_shrinker_forward.9} parent=5 // pred_fallthru
        _
      %p277 = scmp.le.s32.totalorder 1, %s18
      %p278 = scmp.lt.s32.totalorder %s18, 3
      %p279 = pnand %p277, %p278
      %p280 = pneg %p279
      // Predicated region
      $region45: #{feature_shrinker_forward.9} parent=5 // pred_check
        _
      $region46: #{feature_shrinker_forward.9} parent=5 // pred_check_branch
        %282 = sbr.rel (%p279) target = $region48
      $region47: #{feature_shrinker_forward.9} parent=5 // pred_region
        %s283 = ssub.s32 %s18, 1
        %p284 = scmp.lt.s32.totalorder %s23, 1
        %s285 = scalar_select %p284, %s23, 1
        %s286 = smul.addr %s285, 16
        %s287 = smul.addr %s286, 8
        %s288 = scalar_lea.vmem %s0, %s287
        %p289 = pneg %p44
        %p290 = pneg %p41
        %p291 = scmp.lt.s32.totalorder %s23, 1
        %s292 = scalar_select %p291, %s23, 1
        %s293 = smul.addr %s292, 8
        %s294 = smul.addr %s293, 8
        %s295 = scalar_lea.vmem %s1, %s294
        %p296 = pneg %p70
        %p297 = pneg %p67
        %p298 = pneg %p91
        %p299 = pneg %p88
        %p300 = pneg %p112
        %p301 = pneg %p109
        %p302 = pneg %p133
        %p303 = pneg %p130
        %p304 = pneg %p154
        %p305 = pneg %p151
        %p306 = pneg %p175
        %p307 = pneg %p172
        %p308 = pneg %p201
        %p309 = pneg %p198
        %s310 = sand.u32 %s188, 1
        %s311 = scalar_lea.sflag [#allocation4], %s310
        %s312 = sand.u32 %s188, 1
        %s313 = smul.addr %s312, 256
        %s314 = scalar_lea.vmem [#allocation3], %s313
        %p315 = pneg %p227
        %p316 = pneg %p224
        %p317 = scmp.lt.s32.totalorder %s23, 1
        %s318 = scalar_select %p317, %s23, 1
        %s319 = smul.addr %s318, 32
        %s320 = smul.addr %s319, 8
        %s321 = scalar_lea.vmem %s8, %s320
        %p322 = scmp.lt.s32.totalorder %s23, 1
        %s323 = scalar_select %p322, %s23, 1
        %s324 = smul.addr %s323, 16
        %s325 = smul.addr %s324, 8
        %s326 = scalar_lea.vmem %s0, %s325
        %p327 = scmp.lt.s32.totalorder %s23, 1
        %s328 = scalar_select %p327, %s23, 1
        %s329 = smul.addr %s328, 8
        %s330 = smul.addr %s329, 8
        %s331 = scalar_lea.vmem %s1, %s330
        %p332 = scmp.lt.s32.totalorder %s23, 1
        %s333 = scalar_select %p332, %s23, 1
        %s334 = smul.addr %s333, 32
        %s335 = smul.addr %s334, 8
        %s336 = scalar_lea.vmem %s8, %s335
        %v338 = vld [vmem:[%s3] sm:$0xff]
        %v339 = vld [vmem:[%s3 + $0x8] sm:$0xff]
        %v340 = vld [vmem:[%s3 + $0x10] sm:$0xff]
        %v341 = vld [vmem:[%s3 + $0x18] sm:$0xff]
        %v342 = vpack.c.bf16 %v339, %v338
        %v343 = vpack.c.bf16 %v341, %v340
        %v344 = vld [vmem:[%s326] sm:$0xff]
        %v345 = vld [vmem:[%s326 + $0x8] sm:$0xff]
        %v346 = vld [vmem:[%s326 + $0x10] sm:$0xff]
        %v347 = vld [vmem:[%s326 + $0x18] sm:$0xff]
        %v348 = vld [vmem:[%s326 + $0x20] sm:$0xff]
        %v349 = vld [vmem:[%s326 + $0x28] sm:$0xff]
        %v350 = vld [vmem:[%s326 + $0x30] sm:$0xff]
        %v351 = vld [vmem:[%s326 + $0x38] sm:$0xff]
        %v352 = vld [vmem:[%s326 + $0x40] sm:$0xff]
        %v353 = vld [vmem:[%s326 + $0x48] sm:$0xff]
        %v354 = vld [vmem:[%s326 + $0x50] sm:$0xff]
        %v355 = vld [vmem:[%s326 + $0x58] sm:$0xff]
        %v356 = vld [vmem:[%s326 + $0x60] sm:$0xff]
        %v357 = vld [vmem:[%s326 + $0x68] sm:$0xff]
        %v358 = vld [vmem:[%s326 + $0x70] sm:$0xff]
        %v359 = vld [vmem:[%s326 + $0x78] sm:$0xff]
        %v360 = vpack.c.bf16 %v352, %v344
        %v361 = vpack.c.bf16 %v353, %v345
        %v362 = vpack.c.bf16 %v354, %v346
        %v363 = vpack.c.bf16 %v355, %v347
        %v364 = vpack.c.bf16 %v356, %v348
        %v365 = vpack.c.bf16 %v357, %v349
        %v366 = vpack.c.bf16 %v358, %v350
        %v367 = vpack.c.bf16 %v359, %v351
        %v368 = vld [vmem:[%s4] sm:$0xff]
        %v369 = vld [vmem:[%s4 + $0x8] sm:$0xff]
        %v370 = vld [vmem:[%s4 + $0x10] sm:$0xff]
        %v371 = vld [vmem:[%s4 + $0x18] sm:$0xff]
        %373 = vset.pattern.permute.xlu0 0
        %374 = vperm.xlu0 %373, %v368
        %v375 = vpop.permute.xlu0 %374
        %378 = vset.pattern.permute.xlu0 0
        %379 = vperm.xlu0 %378, %v369
        %v380 = vpop.permute.xlu0 %379
        %383 = vset.pattern.permute.xlu0 0
        %384 = vperm.xlu0 %383, %v370
        %v385 = vpop.permute.xlu0 %384
        %388 = vset.pattern.permute.xlu0 0
        %389 = vperm.xlu0 %388, %v371
        %v390 = vpop.permute.xlu0 %389
        %vm392 = vcmask 130048
        %v394 = vsel %vm392, %v342, 0
        %v397 = vsel %vm392, %v343, 0
        %399 = vmatprep.subr.bf16.mxu0 %v361
        %400 = vmatpush1.bf16.msra.mxu0 %v360
        %401 = vmatprep.subr.bf16.mxu0 0
        %402 = vmatpush1.bf16.msra.mxu0 0
        %403 = vmatprep.subr.bf16.mxu0 0
        %404 = vmatpush1.bf16.msra.mxu0 0
        %405 = vmatprep.subr.bf16.mxu0 0
        %406 = vmatpush1.bf16.msra.mxu0 0
        %407 = vmatprep.subr.bf16.mxu0 0
        %408 = vmatpush1.bf16.msra.mxu0 0
        %409 = vmatprep.subr.bf16.mxu0 0
        %410 = vmatpush1.bf16.msra.mxu0 0
        %411 = vmatprep.subr.bf16.mxu0 0
        %412 = vmatpush1.bf16.msra.mxu0 0
        %413 = vmatprep.subr.bf16.mxu0 0
        %414 = vmatpush1.bf16.msra.mxu0 0
        %415 = vmatprep.subr.bf16.mxu0 0
        %416 = vmatpush1.bf16.msra.mxu0 0
        %417 = vmatprep.subr.bf16.mxu0 0
        %418 = vmatpush1.bf16.msra.mxu0 0
        %419 = vmatprep.subr.bf16.mxu0 0
        %420 = vmatpush1.bf16.msra.mxu0 0
        %421 = vmatprep.subr.bf16.mxu0 0
        %422 = vmatpush1.bf16.msra.mxu0 0
        %423 = vmatprep.subr.bf16.mxu0 0
        %424 = vmatpush1.bf16.msra.mxu0 0
        %425 = vmatprep.subr.bf16.mxu0 0
        %426 = vmatpush1.bf16.msra.mxu0 0
        %427 = vmatprep.subr.bf16.mxu0 0
        %428 = vmatpush1.bf16.msra.mxu0 0
        %429 = vmatprep.subr.bf16.mxu0 0
        %430 = vmatpush1.bf16.msra.mxu0 0
        %431 = vmatprep.mubr.bf16.mxu0 0
        %432 = vmatmul.mubr.bf16.gmra.mrb[0].mxu0 %v394
        %v433 = vpop.f32.mrb[0].mxu0
        %v434 = vadd.f32 %v375, %v433
        %v435 = vpop.f32.mrb[0].mxu0
        %v436 = vadd.f32 %v375, %v435
        %v437 = vpop.f32.mrb[0].mxu0
        %v438 = vadd.f32 %v380, %v437
        %v439 = vpop.f32.mrb[0].mxu0
        %v440 = vadd.f32 %v380, %v439
        %441 = vmatprep.mubr.bf16.mxu0 0
        %442 = vmatmul.mubr.bf16.gmra.mrb[0].mxu0 %v397
        %v443 = vpop.f32.mrb[0].mxu0
        %v444 = vadd.f32 %v385, %v443
        %v445 = vpop.f32.mrb[0].mxu0
        %v446 = vadd.f32 %v385, %v445
        %v447 = vpop.f32.mrb[0].mxu0
        %v448 = vadd.f32 %v390, %v447
        %v449 = vpop.f32.mrb[0].mxu0
        %v450 = vadd.f32 %v390, %v449
        %451 = vdwg.mxu0
        %452 = vmatprep.subr.bf16.mxu0 %v363
        %453 = vmatpush1.bf16.msra.mxu0 %v362
        %454 = vmatprep.subr.bf16.mxu0 0
        %455 = vmatpush1.bf16.msra.mxu0 0
        %456 = vmatprep.subr.bf16.mxu0 0
        %457 = vmatpush1.bf16.msra.mxu0 0
        %458 = vmatprep.subr.bf16.mxu0 0
        %459 = vmatpush1.bf16.msra.mxu0 0
        %460 = vmatprep.subr.bf16.mxu0 0
        %461 = vmatpush1.bf16.msra.mxu0 0
        %462 = vmatprep.subr.bf16.mxu0 0
        %463 = vmatpush1.bf16.msra.mxu0 0
        %464 = vmatprep.subr.bf16.mxu0 0
        %465 = vmatpush1.bf16.msra.mxu0 0
        %466 = vmatprep.subr.bf16.mxu0 0
        %467 = vmatpush1.bf16.msra.mxu0 0
        %468 = vmatprep.subr.bf16.mxu0 0
        %469 = vmatpush1.bf16.msra.mxu0 0
        %470 = vmatprep.subr.bf16.mxu0 0
        %471 = vmatpush1.bf16.msra.mxu0 0
        %472 = vmatprep.subr.bf16.mxu0 0
        %473 = vmatpush1.bf16.msra.mxu0 0
        %474 = vmatprep.subr.bf16.mxu0 0
        %475 = vmatpush1.bf16.msra.mxu0 0
        %476 = vmatprep.subr.bf16.mxu0 0
        %477 = vmatpush1.bf16.msra.mxu0 0
        %478 = vmatprep.subr.bf16.mxu0 0
        %479 = vmatpush1.bf16.msra.mxu0 0
        %480 = vmatprep.subr.bf16.mxu0 0
        %481 = vmatpush1.bf16.msra.mxu0 0
        %482 = vmatprep.subr.bf16.mxu0 0
        %483 = vmatpush1.bf16.msra.mxu0 0
        %484 = vmatprep.mubr.bf16.mxu0 0
        %485 = vmatmul.mubr.bf16.gmra.mrb[0].mxu0 %v394
        %v486 = vpop.f32.mrb[0].mxu0
        %v487 = vadd.f32 %v375, %v486
        %v488 = vpop.f32.mrb[0].mxu0
        %v489 = vadd.f32 %v375, %v488
        %v490 = vpop.f32.mrb[0].mxu0
        %v491 = vadd.f32 %v380, %v490
        %v492 = vpop.f32.mrb[0].mxu0
        %v493 = vadd.f32 %v380, %v492
        %494 = vmatprep.mubr.bf16.mxu0 0
        %495 = vmatmul.mubr.bf16.gmra.mrb[0].mxu0 %v397
        %v496 = vpop.f32.mrb[0].mxu0
        %v497 = vadd.f32 %v385, %v496
        %v498 = vpop.f32.mrb[0].mxu0
        %v499 = vadd.f32 %v385, %v498
        %v500 = vpop.f32.mrb[0].mxu0
        %v501 = vadd.f32 %v390, %v500
        %v502 = vpop.f32.mrb[0].mxu0
        %v503 = vadd.f32 %v390, %v502
        %504 = vdwg.mxu0
        %505 = vmatprep.subr.bf16.mxu0 %v365
        %506 = vmatpush1.bf16.msra.mxu0 %v364
        %507 = vmatprep.subr.bf16.mxu0 0
        %508 = vmatpush1.bf16.msra.mxu0 0
        %509 = vmatprep.subr.bf16.mxu0 0
        %510 = vmatpush1.bf16.msra.mxu0 0
        %511 = vmatprep.subr.bf16.mxu0 0
        %512 = vmatpush1.bf16.msra.mxu0 0
        %513 = vmatprep.subr.bf16.mxu0 0
        %514 = vmatpush1.bf16.msra.mxu0 0
        %515 = vmatprep.subr.bf16.mxu0 0
        %516 = vmatpush1.bf16.msra.mxu0 0
        %517 = vmatprep.subr.bf16.mxu0 0
        %518 = vmatpush1.bf16.msra.mxu0 0
        %519 = vmatprep.subr.bf16.mxu0 0
        %520 = vmatpush1.bf16.msra.mxu0 0
        %521 = vmatprep.subr.bf16.mxu0 0
        %522 = vmatpush1.bf16.msra.mxu0 0
        %523 = vmatprep.subr.bf16.mxu0 0
        %524 = vmatpush1.bf16.msra.mxu0 0
        %525 = vmatprep.subr.bf16.mxu0 0
        %526 = vmatpush1.bf16.msra.mxu0 0
        %527 = vmatprep.subr.bf16.mxu0 0
        %528 = vmatpush1.bf16.msra.mxu0 0
        %529 = vmatprep.subr.bf16.mxu0 0
        %530 = vmatpush1.bf16.msra.mxu0 0
        %531 = vmatprep.subr.bf16.mxu0 0
        %532 = vmatpush1.bf16.msra.mxu0 0
        %533 = vmatprep.subr.bf16.mxu0 0
        %534 = vmatpush1.bf16.msra.mxu0 0
        %535 = vmatprep.subr.bf16.mxu0 0
        %536 = vmatpush1.bf16.msra.mxu0 0
        %537 = vmatprep.mubr.bf16.mxu0 0
        %538 = vmatmul.mubr.bf16.gmra.mrb[0].mxu0 %v394
        %v539 = vpop.f32.mrb[0].mxu0
        %v540 = vadd.f32 %v375, %v539
        %v541 = vpop.f32.mrb[0].mxu0
        %v542 = vadd.f32 %v375, %v541
        %v543 = vpop.f32.mrb[0].mxu0
        %v544 = vadd.f32 %v380, %v543
        %v545 = vpop.f32.mrb[0].mxu0
        %v546 = vadd.f32 %v380, %v545
        %547 = vmatprep.mubr.bf16.mxu0 0
        %548 = vmatmul.mubr.bf16.gmra.mrb[0].mxu0 %v397
        %v549 = vpop.f32.mrb[0].mxu0
        %v550 = vadd.f32 %v385, %v549
        %v551 = vpop.f32.mrb[0].mxu0
        %v552 = vadd.f32 %v385, %v551
        %v553 = vpop.f32.mrb[0].mxu0
        %v554 = vadd.f32 %v390, %v553
        %v555 = vpop.f32.mrb[0].mxu0
        %v556 = vadd.f32 %v390, %v555
        %557 = vdwg.mxu0
        %558 = vmatprep.subr.bf16.mxu0 %v367
        %559 = vmatpush1.bf16.msra.mxu0 %v366
        %560 = vmatprep.subr.bf16.mxu0 0
        %561 = vmatpush1.bf16.msra.mxu0 0
        %562 = vmatprep.subr.bf16.mxu0 0
        %563 = vmatpush1.bf16.msra.mxu0 0
        %564 = vmatprep.subr.bf16.mxu0 0
        %565 = vmatpush1.bf16.msra.mxu0 0
        %566 = vmatprep.subr.bf16.mxu0 0
        %567 = vmatpush1.bf16.msra.mxu0 0
        %568 = vmatprep.subr.bf16.mxu0 0
        %569 = vmatpush1.bf16.msra.mxu0 0
        %570 = vmatprep.subr.bf16.mxu0 0
        %571 = vmatpush1.bf16.msra.mxu0 0
        %572 = vmatprep.subr.bf16.mxu0 0
        %573 = vmatpush1.bf16.msra.mxu0 0
        %574 = vmatprep.subr.bf16.mxu0 0
        %575 = vmatpush1.bf16.msra.mxu0 0
        %576 = vmatprep.subr.bf16.mxu0 0
        %577 = vmatpush1.bf16.msra.mxu0 0
        %578 = vmatprep.subr.bf16.mxu0 0
        %579 = vmatpush1.bf16.msra.mxu0 0
        %580 = vmatprep.subr.bf16.mxu0 0
        %581 = vmatpush1.bf16.msra.mxu0 0
        %582 = vmatprep.subr.bf16.mxu0 0
        %583 = vmatpush1.bf16.msra.mxu0 0
        %584 = vmatprep.subr.bf16.mxu0 0
        %585 = vmatpush1.bf16.msra.mxu0 0
        %586 = vmatprep.subr.bf16.mxu0 0
        %587 = vmatpush1.bf16.msra.mxu0 0
        %588 = vmatprep.subr.bf16.mxu0 0
        %589 = vmatpush1.bf16.msra.mxu0 0
        %590 = vmatprep.mubr.bf16.mxu0 0
        %591 = vmatmul.mubr.bf16.gmra.mrb[0].mxu0 %v394
        %v592 = vpop.f32.mrb[0].mxu0
        %v593 = vadd.f32 %v375, %v592
        %v594 = vpop.f32.mrb[0].mxu0
        %v595 = vadd.f32 %v375, %v594
        %v596 = vpop.f32.mrb[0].mxu0
        %v597 = vadd.f32 %v380, %v596
        %v598 = vpop.f32.mrb[0].mxu0
        %v599 = vadd.f32 %v380, %v598
        %600 = vmatprep.mubr.bf16.mxu0 0
        %601 = vmatmul.mubr.bf16.gmra.mrb[0].mxu0 %v397
        %v602 = vpop.f32.mrb[0].mxu0
        %v603 = vadd.f32 %v385, %v602
        %v604 = vpop.f32.mrb[0].mxu0
        %v605 = vadd.f32 %v385, %v604
        %v606 = vpop.f32.mrb[0].mxu0
        %v607 = vadd.f32 %v390, %v606
        %v608 = vpop.f32.mrb[0].mxu0
        %v609 = vadd.f32 %v390, %v608
        %610 = vdwg.mxu0
        %v611 = vld [vmem:[%s331] sm:$0xff]
        %v612 = vld [vmem:[%s331 + $0x8] sm:$0xff]
        %v613 = vld [vmem:[%s331 + $0x10] sm:$0xff]
        %v614 = vld [vmem:[%s331 + $0x18] sm:$0xff]
        %v615 = vld [vmem:[%s331 + $0x20] sm:$0xff]
        %v616 = vld [vmem:[%s331 + $0x28] sm:$0xff]
        %v617 = vld [vmem:[%s331 + $0x30] sm:$0xff]
        %v618 = vld [vmem:[%s331 + $0x38] sm:$0xff]
        %v619 = vpack.c.bf16 %v613, %v611
        %v620 = vpack.c.bf16 %v614, %v612
        %v621 = vpack.c.bf16 %v617, %v615
        %v622 = vpack.c.bf16 %v618, %v616
        %v623 = vld [vmem:[%s2] sm:$0xff]
        %v624 = vld [vmem:[%s2 + $0x8] sm:$0xff]
        %v625 = vld [vmem:[%s2 + $0x10] sm:$0xff]
        %v626 = vld [vmem:[%s2 + $0x18] sm:$0xff]
        %v627 = vld [vmem:[%s2 + $0x20] sm:$0xff]
        %v628 = vld [vmem:[%s2 + $0x28] sm:$0xff]
        %v629 = vld [vmem:[%s2 + $0x30] sm:$0xff]
        %v630 = vld [vmem:[%s2 + $0x38] sm:$0xff]
        %v631 = vld [vmem:[%s2 + $0x40] sm:$0xff]
        %v632 = vld [vmem:[%s2 + $0x48] sm:$0xff]
        %v633 = vld [vmem:[%s2 + $0x50] sm:$0xff]
        %v634 = vld [vmem:[%s2 + $0x58] sm:$0xff]
        %v635 = vld [vmem:[%s2 + $0x60] sm:$0xff]
        %v636 = vld [vmem:[%s2 + $0x68] sm:$0xff]
        %v637 = vld [vmem:[%s2 + $0x70] sm:$0xff]
        %v638 = vld [vmem:[%s2 + $0x78] sm:$0xff]
        %v639 = vld [vmem:[%s2 + $0x80] sm:$0xff]
        %v640 = vld [vmem:[%s2 + $0x88] sm:$0xff]
        %v641 = vld [vmem:[%s2 + $0x90] sm:$0xff]
        %v642 = vld [vmem:[%s2 + $0x98] sm:$0xff]
        %v643 = vld [vmem:[%s2 + $0xa0] sm:$0xff]
        %v644 = vld [vmem:[%s2 + $0xa8] sm:$0xff]
        %v645 = vld [vmem:[%s2 + $0xb0] sm:$0xff]
        %v646 = vld [vmem:[%s2 + $0xb8] sm:$0xff]
        %v647 = vld [vmem:[%s2 + $0xc0] sm:$0xff]
        %v648 = vld [vmem:[%s2 + $0xc8] sm:$0xff]
        %v649 = vld [vmem:[%s2 + $0xd0] sm:$0xff]
        %v650 = vld [vmem:[%s2 + $0xd8] sm:$0xff]
        %v651 = vld [vmem:[%s2 + $0xe0] sm:$0xff]
        %v652 = vld [vmem:[%s2 + $0xe8] sm:$0xff]
        %v653 = vld [vmem:[%s2 + $0xf0] sm:$0xff]
        %v654 = vld [vmem:[%s2 + $0xf8] sm:$0xff]
        %v655 = vld [vmem:[%s2 + $0x100] sm:$0xff]
        %v656 = vld [vmem:[%s2 + $0x108] sm:$0xff]
        %v657 = vld [vmem:[%s2 + $0x110] sm:$0xff]
        %v658 = vld [vmem:[%s2 + $0x118] sm:$0xff]
        %v659 = vld [vmem:[%s2 + $0x120] sm:$0xff]
        %v660 = vld [vmem:[%s2 + $0x128] sm:$0xff]
        %v661 = vld [vmem:[%s2 + $0x130] sm:$0xff]
        %v662 = vld [vmem:[%s2 + $0x138] sm:$0xff]
        %v663 = vld [vmem:[%s2 + $0x140] sm:$0xff]
        %v664 = vld [vmem:[%s2 + $0x148] sm:$0xff]
        %v665 = vld [vmem:[%s2 + $0x150] sm:$0xff]
        %v666 = vld [vmem:[%s2 + $0x158] sm:$0xff]
        %v667 = vld [vmem:[%s2 + $0x160] sm:$0xff]
        %v668 = vld [vmem:[%s2 + $0x168] sm:$0xff]
        %v669 = vld [vmem:[%s2 + $0x170] sm:$0xff]
        %v670 = vld [vmem:[%s2 + $0x178] sm:$0xff]
        %v671 = vld [vmem:[%s2 + $0x180] sm:$0xff]
        %v672 = vld [vmem:[%s2 + $0x188] sm:$0xff]
        %v673 = vld [vmem:[%s2 + $0x190] sm:$0xff]
        %v674 = vld [vmem:[%s2 + $0x198] sm:$0xff]
        %v675 = vld [vmem:[%s2 + $0x1a0] sm:$0xff]
        %v676 = vld [vmem:[%s2 + $0x1a8] sm:$0xff]
        %v677 = vld [vmem:[%s2 + $0x1b0] sm:$0xff]
        %v678 = vld [vmem:[%s2 + $0x1b8] sm:$0xff]
        %v679 = vld [vmem:[%s2 + $0x1c0] sm:$0xff]
        %v680 = vld [vmem:[%s2 + $0x1c8] sm:$0xff]
        %v681 = vld [vmem:[%s2 + $0x1d0] sm:$0xff]
        %v682 = vld [vmem:[%s2 + $0x1d8] sm:$0xff]
        %v683 = vld [vmem:[%s2 + $0x1e0] sm:$0xff]
        %v684 = vld [vmem:[%s2 + $0x1e8] sm:$0xff]
        %v685 = vld [vmem:[%s2 + $0x1f0] sm:$0xff]
        %v686 = vld [vmem:[%s2 + $0x1f8] sm:$0xff]
        %v687 = vld [vmem:[%s2 + $0x200] sm:$0xff]
        %v688 = vld [vmem:[%s2 + $0x208] sm:$0xff]
        %v689 = vld [vmem:[%s2 + $0x210] sm:$0xff]
        %v690 = vld [vmem:[%s2 + $0x218] sm:$0xff]
        %v691 = vld [vmem:[%s2 + $0x220] sm:$0xff]
        %v692 = vld [vmem:[%s2 + $0x228] sm:$0xff]
        %v693 = vld [vmem:[%s2 + $0x230] sm:$0xff]
        %v694 = vld [vmem:[%s2 + $0x238] sm:$0xff]
        %v695 = vld [vmem:[%s2 + $0x240] sm:$0xff]
        %v696 = vld [vmem:[%s2 + $0x248] sm:$0xff]
        %v697 = vld [vmem:[%s2 + $0x250] sm:$0xff]
        %v698 = vld [vmem:[%s2 + $0x258] sm:$0xff]
        %v699 = vld [vmem:[%s2 + $0x260] sm:$0xff]
        %v700 = vld [vmem:[%s2 + $0x268] sm:$0xff]
        %v701 = vld [vmem:[%s2 + $0x270] sm:$0xff]
        %v702 = vld [vmem:[%s2 + $0x278] sm:$0xff]
        %v703 = vld [vmem:[%s2 + $0x280] sm:$0xff]
        %v704 = vld [vmem:[%s2 + $0x288] sm:$0xff]
        %v705 = vld [vmem:[%s2 + $0x290] sm:$0xff]
        %v706 = vld [vmem:[%s2 + $0x298] sm:$0xff]
        %v707 = vld [vmem:[%s2 + $0x2a0] sm:$0xff]
        %v708 = vld [vmem:[%s2 + $0x2a8] sm:$0xff]
        %v709 = vld [vmem:[%s2 + $0x2b0] sm:$0xff]
        %v710 = vld [vmem:[%s2 + $0x2b8] sm:$0xff]
        %v711 = vld [vmem:[%s2 + $0x2c0] sm:$0xff]
        %v712 = vld [vmem:[%s2 + $0x2c8] sm:$0xff]
        %v713 = vld [vmem:[%s2 + $0x2d0] sm:$0xff]
        %v714 = vld [vmem:[%s2 + $0x2d8] sm:$0xff]
        %v715 = vld [vmem:[%s2 + $0x2e0] sm:$0xff]
        %v716 = vld [vmem:[%s2 + $0x2e8] sm:$0xff]
        %v717 = vld [vmem:[%s2 + $0x2f0] sm:$0xff]
        %v718 = vld [vmem:[%s2 + $0x2f8] sm:$0xff]
        %v719 = vld [vmem:[%s2 + $0x300] sm:$0xff]
        %v720 = vld [vmem:[%s2 + $0x308] sm:$0xff]
        %v721 = vld [vmem:[%s2 + $0x310] sm:$0xff]
        %v722 = vld [vmem:[%s2 + $0x318] sm:$0xff]
        %v723 = vld [vmem:[%s2 + $0x320] sm:$0xff]
        %v724 = vld [vmem:[%s2 + $0x328] sm:$0xff]
        %v725 = vld [vmem:[%s2 + $0x330] sm:$0xff]
        %v726 = vld [vmem:[%s2 + $0x338] sm:$0xff]
        %v727 = vld [vmem:[%s2 + $0x340] sm:$0xff]
        %v728 = vld [vmem:[%s2 + $0x348] sm:$0xff]
        %v729 = vld [vmem:[%s2 + $0x350] sm:$0xff]
        %v730 = vld [vmem:[%s2 + $0x358] sm:$0xff]
        %v731 = vld [vmem:[%s2 + $0x360] sm:$0xff]
        %v732 = vld [vmem:[%s2 + $0x368] sm:$0xff]
        %v733 = vld [vmem:[%s2 + $0x370] sm:$0xff]
        %v734 = vld [vmem:[%s2 + $0x378] sm:$0xff]
        %v735 = vld [vmem:[%s2 + $0x380] sm:$0xff]
        %v736 = vld [vmem:[%s2 + $0x388] sm:$0xff]
        %v737 = vld [vmem:[%s2 + $0x390] sm:$0xff]
        %v738 = vld [vmem:[%s2 + $0x398] sm:$0xff]
        %v739 = vld [vmem:[%s2 + $0x3a0] sm:$0xff]
        %v740 = vld [vmem:[%s2 + $0x3a8] sm:$0xff]
        %v741 = vld [vmem:[%s2 + $0x3b0] sm:$0xff]
        %v742 = vld [vmem:[%s2 + $0x3b8] sm:$0xff]
        %v743 = vld [vmem:[%s2 + $0x3c0] sm:$0xff]
        %v744 = vld [vmem:[%s2 + $0x3c8] sm:$0xff]
        %v745 = vld [vmem:[%s2 + $0x3d0] sm:$0xff]
        %v746 = vld [vmem:[%s2 + $0x3d8] sm:$0xff]
        %v747 = vld [vmem:[%s2 + $0x3e0] sm:$0xff]
        %v748 = vld [vmem:[%s2 + $0x3e8] sm:$0xff]
        %v749 = vld [vmem:[%s2 + $0x3f0] sm:$0xff]
        %v750 = vld [vmem:[%s2 + $0x3f8] sm:$0xff]
        %v879 = vunpack.c.l.b16 %v623
        %v880 = vunpack.c.h.b16 %v623
        %v881 = vunpack.c.l.b16 %v624
        %v882 = vunpack.c.h.b16 %v624
        %v883 = vunpack.c.l.b16 %v625
        %v884 = vunpack.c.h.b16 %v625
        %v885 = vunpack.c.l.b16 %v626
        %v886 = vunpack.c.h.b16 %v626
        %v887 = vunpack.c.l.b16 %v627
        %v888 = vunpack.c.h.b16 %v627
        %v889 = vunpack.c.l.b16 %v628
        %v890 = vunpack.c.h.b16 %v628
        %v891 = vunpack.c.l.b16 %v629
        %v892 = vunpack.c.h.b16 %v629
        %v893 = vunpack.c.l.b16 %v630
        %v894 = vunpack.c.h.b16 %v630
        %v895 = vunpack.c.l.b16 %v631
        %v896 = vunpack.c.h.b16 %v631
        %v897 = vunpack.c.l.b16 %v632
        %v898 = vunpack.c.h.b16 %v632
        %v899 = vunpack.c.l.b16 %v633
        %v900 = vunpack.c.h.b16 %v633
        %v901 = vunpack.c.l.b16 %v634
        %v902 = vunpack.c.h.b16 %v634
        %v903 = vunpack.c.l.b16 %v635
        %v904 = vunpack.c.h.b16 %v635
        %v905 = vunpack.c.l.b16 %v636
        %v906 = vunpack.c.h.b16 %v636
        %v907 = vunpack.c.l.b16 %v637
        %v908 = vunpack.c.h.b16 %v637
        %v909 = vunpack.c.l.b16 %v638
        %v910 = vunpack.c.h.b16 %v638
        %v911 = vunpack.c.l.b16 %v639
        %v912 = vunpack.c.h.b16 %v639
        %v913 = vunpack.c.l.b16 %v640
        %v914 = vunpack.c.h.b16 %v640
        %v915 = vunpack.c.l.b16 %v641
        %v916 = vunpack.c.h.b16 %v641
        %v917 = vunpack.c.l.b16 %v642
        %v918 = vunpack.c.h.b16 %v642
        %v919 = vunpack.c.l.b16 %v643
        %v920 = vunpack.c.h.b16 %v643
        %v921 = vunpack.c.l.b16 %v644
        %v922 = vunpack.c.h.b16 %v644
        %v923 = vunpack.c.l.b16 %v645
        %v924 = vunpack.c.h.b16 %v645
        %v925 = vunpack.c.l.b16 %v646
        %v926 = vunpack.c.h.b16 %v646
        %v927 = vunpack.c.l.b16 %v647
        %v928 = vunpack.c.h.b16 %v647
        %v929 = vunpack.c.l.b16 %v648
        %v930 = vunpack.c.h.b16 %v648
        %v931 = vunpack.c.l.b16 %v649
        %v932 = vunpack.c.h.b16 %v649
        %v933 = vunpack.c.l.b16 %v650
        %v934 = vunpack.c.h.b16 %v650
        %v935 = vunpack.c.l.b16 %v651
        %v936 = vunpack.c.h.b16 %v651
        %v937 = vunpack.c.l.b16 %v652
        %v938 = vunpack.c.h.b16 %v652
        %v939 = vunpack.c.l.b16 %v653
        %v940 = vunpack.c.h.b16 %v653
        %v941 = vunpack.c.l.b16 %v654
        %v942 = vunpack.c.h.b16 %v654
        %v943 = vunpack.c.l.b16 %v655
        %v944 = vunpack.c.h.b16 %v655
        %v945 = vunpack.c.l.b16 %v656
        %v946 = vunpack.c.h.b16 %v656
        %v947 = vunpack.c.l.b16 %v657
        %v948 = vunpack.c.h.b16 %v657
        %v949 = vunpack.c.l.b16 %v658
        %v950 = vunpack.c.h.b16 %v658
        %v951 = vunpack.c.l.b16 %v659
        %v952 = vunpack.c.h.b16 %v659
        %v953 = vunpack.c.l.b16 %v660
        %v954 = vunpack.c.h.b16 %v660
        %v955 = vunpack.c.l.b16 %v661
        %v956 = vunpack.c.h.b16 %v661
        %v957 = vunpack.c.l.b16 %v662
        %v958 = vunpack.c.h.b16 %v662
        %v959 = vunpack.c.l.b16 %v663
        %v960 = vunpack.c.h.b16 %v663
        %v961 = vunpack.c.l.b16 %v664
        %v962 = vunpack.c.h.b16 %v664
        %v963 = vunpack.c.l.b16 %v665
        %v964 = vunpack.c.h.b16 %v665
        %v965 = vunpack.c.l.b16 %v666
        %v966 = vunpack.c.h.b16 %v666
        %v967 = vunpack.c.l.b16 %v667
        %v968 = vunpack.c.h.b16 %v667
        %v969 = vunpack.c.l.b16 %v668
        %v970 = vunpack.c.h.b16 %v668
        %v971 = vunpack.c.l.b16 %v669
        %v972 = vunpack.c.h.b16 %v669
        %v973 = vunpack.c.l.b16 %v670
        %v974 = vunpack.c.h.b16 %v670
        %v975 = vunpack.c.l.b16 %v671
        %v976 = vunpack.c.h.b16 %v671
        %v977 = vunpack.c.l.b16 %v672
        %v978 = vunpack.c.h.b16 %v672
        %v979 = vunpack.c.l.b16 %v673
        %v980 = vunpack.c.h.b16 %v673
        %v981 = vunpack.c.l.b16 %v674
        %v982 = vunpack.c.h.b16 %v674
        %v983 = vunpack.c.l.b16 %v675
        %v984 = vunpack.c.h.b16 %v675
        %v985 = vunpack.c.l.b16 %v676
        %v986 = vunpack.c.h.b16 %v676
        %v987 = vunpack.c.l.b16 %v677
        %v988 = vunpack.c.h.b16 %v677
        %v989 = vunpack.c.l.b16 %v678
        %v990 = vunpack.c.h.b16 %v678
        %v991 = vunpack.c.l.b16 %v679
        %v992 = vunpack.c.h.b16 %v679
        %v993 = vunpack.c.l.b16 %v680
        %v994 = vunpack.c.h.b16 %v680
        %v995 = vunpack.c.l.b16 %v681
        %v996 = vunpack.c.h.b16 %v681
        %v997 = vunpack.c.l.b16 %v682
        %v998 = vunpack.c.h.b16 %v682
        %v999 = vunpack.c.l.b16 %v683
        %v1000 = vunpack.c.h.b16 %v683
        %v1001 = vunpack.c.l.b16 %v684
        %v1002 = vunpack.c.h.b16 %v684
        %v1003 = vunpack.c.l.b16 %v685
        %v1004 = vunpack.c.h.b16 %v685
        %v1005 = vunpack.c.l.b16 %v686
        %v1006 = vunpack.c.h.b16 %v686
        %v1007 = vunpack.c.l.b16 %v687
        %v1008 = vunpack.c.h.b16 %v687
        %v1009 = vunpack.c.l.b16 %v688
        %v1010 = vunpack.c.h.b16 %v688
        %v1011 = vunpack.c.l.b16 %v689
        %v1012 = vunpack.c.h.b16 %v689
        %v1013 = vunpack.c.l.b16 %v690
        %v1014 = vunpack.c.h.b16 %v690
        %v1015 = vunpack.c.l.b16 %v691
        %v1016 = vunpack.c.h.b16 %v691
        %v1017 = vunpack.c.l.b16 %v692
        %v1018 = vunpack.c.h.b16 %v692
        %v1019 = vunpack.c.l.b16 %v693
        %v1020 = vunpack.c.h.b16 %v693
        %v1021 = vunpack.c.l.b16 %v694
        %v1022 = vunpack.c.h.b16 %v694
        %v1023 = vunpack.c.l.b16 %v695
        %v1024 = vunpack.c.h.b16 %v695
        %v1025 = vunpack.c.l.b16 %v696
        %v1026 = vunpack.c.h.b16 %v696
        %v1027 = vunpack.c.l.b16 %v697
        %v1028 = vunpack.c.h.b16 %v697
        %v1029 = vunpack.c.l.b16 %v698
        %v1030 = vunpack.c.h.b16 %v698
        %v1031 = vunpack.c.l.b16 %v699
        %v1032 = vunpack.c.h.b16 %v699
        %v1033 = vunpack.c.l.b16 %v700
        %v1034 = vunpack.c.h.b16 %v700
        %v1035 = vunpack.c.l.b16 %v701
        %v1036 = vunpack.c.h.b16 %v701
        %v1037 = vunpack.c.l.b16 %v702
        %v1038 = vunpack.c.h.b16 %v702
        %v1039 = vunpack.c.l.b16 %v703
        %v1040 = vunpack.c.h.b16 %v703
        %v1041 = vunpack.c.l.b16 %v704
        %v1042 = vunpack.c.h.b16 %v704
        %v1043 = vunpack.c.l.b16 %v705
        %v1044 = vunpack.c.h.b16 %v705
        %v1045 = vunpack.c.l.b16 %v706
        %v1046 = vunpack.c.h.b16 %v706
        %v1047 = vunpack.c.l.b16 %v707
        %v1048 = vunpack.c.h.b16 %v707
        %v1049 = vunpack.c.l.b16 %v708
        %v1050 = vunpack.c.h.b16 %v708
        %v1051 = vunpack.c.l.b16 %v709
        %v1052 = vunpack.c.h.b16 %v709
        %v1053 = vunpack.c.l.b16 %v710
        %v1054 = vunpack.c.h.b16 %v710
        %v1055 = vunpack.c.l.b16 %v711
        %v1056 = vunpack.c.h.b16 %v711
        %v1057 = vunpack.c.l.b16 %v712
        %v1058 = vunpack.c.h.b16 %v712
        %v1059 = vunpack.c.l.b16 %v713
        %v1060 = vunpack.c.h.b16 %v713
        %v1061 = vunpack.c.l.b16 %v714
        %v1062 = vunpack.c.h.b16 %v714
        %v1063 = vunpack.c.l.b16 %v715
        %v1064 = vunpack.c.h.b16 %v715
        %v1065 = vunpack.c.l.b16 %v716
        %v1066 = vunpack.c.h.b16 %v716
        %v1067 = vunpack.c.l.b16 %v717
        %v1068 = vunpack.c.h.b16 %v717
        %v1069 = vunpack.c.l.b16 %v718
        %v1070 = vunpack.c.h.b16 %v718
        %v1071 = vunpack.c.l.b16 %v719
        %v1072 = vunpack.c.h.b16 %v719
        %v1073 = vunpack.c.l.b16 %v720
        %v1074 = vunpack.c.h.b16 %v720
        %v1075 = vunpack.c.l.b16 %v721
        %v1076 = vunpack.c.h.b16 %v721
        %v1077 = vunpack.c.l.b16 %v722
        %v1078 = vunpack.c.h.b16 %v722
        %v1079 = vunpack.c.l.b16 %v723
        %v1080 = vunpack.c.h.b16 %v723
        %v1081 = vunpack.c.l.b16 %v724
        %v1082 = vunpack.c.h.b16 %v724
        %v1083 = vunpack.c.l.b16 %v725
        %v1084 = vunpack.c.h.b16 %v725
        %v1085 = vunpack.c.l.b16 %v726
        %v1086 = vunpack.c.h.b16 %v726
        %v1087 = vunpack.c.l.b16 %v727
        %v1088 = vunpack.c.h.b16 %v727
        %v1089 = vunpack.c.l.b16 %v728
        %v1090 = vunpack.c.h.b16 %v728
        %v1091 = vunpack.c.l.b16 %v729
        %v1092 = vunpack.c.h.b16 %v729
        %v1093 = vunpack.c.l.b16 %v730
        %v1094 = vunpack.c.h.b16 %v730
        %v1095 = vunpack.c.l.b16 %v731
        %v1096 = vunpack.c.h.b16 %v731
        %v1097 = vunpack.c.l.b16 %v732
        %v1098 = vunpack.c.h.b16 %v732
        %v1099 = vunpack.c.l.b16 %v733
        %v1100 = vunpack.c.h.b16 %v733
        %v1101 = vunpack.c.l.b16 %v734
        %v1102 = vunpack.c.h.b16 %v734
        %v1103 = vunpack.c.l.b16 %v735
        %v1104 = vunpack.c.h.b16 %v735
        %v1105 = vunpack.c.l.b16 %v736
        %v1106 = vunpack.c.h.b16 %v736
        %v1107 = vunpack.c.l.b16 %v737
        %v1108 = vunpack.c.h.b16 %v737
        %v1109 = vunpack.c.l.b16 %v738
        %v1110 = vunpack.c.h.b16 %v738
        %v1111 = vunpack.c.l.b16 %v739
        %v1112 = vunpack.c.h.b16 %v739
        %v1113 = vunpack.c.l.b16 %v740
        %v1114 = vunpack.c.h.b16 %v740
        %v1115 = vunpack.c.l.b16 %v741
        %v1116 = vunpack.c.h.b16 %v741
        %v1117 = vunpack.c.l.b16 %v742
        %v1118 = vunpack.c.h.b16 %v742
        %v1119 = vunpack.c.l.b16 %v743
        %v1120 = vunpack.c.h.b16 %v743
        %v1121 = vunpack.c.l.b16 %v744
        %v1122 = vunpack.c.h.b16 %v744
        %v1123 = vunpack.c.l.b16 %v745
        %v1124 = vunpack.c.h.b16 %v745
        %v1125 = vunpack.c.l.b16 %v746
        %v1126 = vunpack.c.h.b16 %v746
        %v1127 = vunpack.c.l.b16 %v747
        %v1128 = vunpack.c.h.b16 %v747
        %v1129 = vunpack.c.l.b16 %v748
        %v1130 = vunpack.c.h.b16 %v748
        %v1131 = vunpack.c.l.b16 %v749
        %v1132 = vunpack.c.h.b16 %v749
        %v1133 = vunpack.c.l.b16 %v750
        %v1134 = vunpack.c.h.b16 %v750
        %v1135 = vpack.c.b16 %v887, %v879
        %v1136 = vpack.c.b16 %v888, %v880
        %v1137 = vpack.c.b16 %v889, %v881
        %v1138 = vpack.c.b16 %v890, %v882
        %v1139 = vpack.c.b16 %v891, %v883
        %v1140 = vpack.c.b16 %v892, %v884
        %v1141 = vpack.c.b16 %v893, %v885
        %v1142 = vpack.c.b16 %v894, %v886
        %v1143 = vpack.c.b16 %v903, %v895
        %v1144 = vpack.c.b16 %v904, %v896
        %v1145 = vpack.c.b16 %v905, %v897
        %v1146 = vpack.c.b16 %v906, %v898
        %v1147 = vpack.c.b16 %v907, %v899
        %v1148 = vpack.c.b16 %v908, %v900
        %v1149 = vpack.c.b16 %v909, %v901
        %v1150 = vpack.c.b16 %v910, %v902
        %v1151 = vpack.c.b16 %v919, %v911
        %v1152 = vpack.c.b16 %v920, %v912
        %v1153 = vpack.c.b16 %v921, %v913
        %v1154 = vpack.c.b16 %v922, %v914
        %v1155 = vpack.c.b16 %v923, %v915
        %v1156 = vpack.c.b16 %v924, %v916
        %v1157 = vpack.c.b16 %v925, %v917
        %v1158 = vpack.c.b16 %v926, %v918
        %v1159 = vpack.c.b16 %v935, %v927
        %v1160 = vpack.c.b16 %v936, %v928
        %v1161 = vpack.c.b16 %v937, %v929
        %v1162 = vpack.c.b16 %v938, %v930
        %v1163 = vpack.c.b16 %v939, %v931
        %v1164 = vpack.c.b16 %v940, %v932
        %v1165 = vpack.c.b16 %v941, %v933
        %v1166 = vpack.c.b16 %v942, %v934
        %v1167 = vpack.c.b16 %v951, %v943
        %v1168 = vpack.c.b16 %v952, %v944
        %v1169 = vpack.c.b16 %v953, %v945
        %v1170 = vpack.c.b16 %v954, %v946
        %v1171 = vpack.c.b16 %v955, %v947
        %v1172 = vpack.c.b16 %v956, %v948
        %v1173 = vpack.c.b16 %v957, %v949
        %v1174 = vpack.c.b16 %v958, %v950
        %v1175 = vpack.c.b16 %v967, %v959
        %v1176 = vpack.c.b16 %v968, %v960
        %v1177 = vpack.c.b16 %v969, %v961
        %v1178 = vpack.c.b16 %v970, %v962
        %v1179 = vpack.c.b16 %v971, %v963
        %v1180 = vpack.c.b16 %v972, %v964
        %v1181 = vpack.c.b16 %v973, %v965
        %v1182 = vpack.c.b16 %v974, %v966
        %v1183 = vpack.c.b16 %v983, %v975
        %v1184 = vpack.c.b16 %v984, %v976
        %v1185 = vpack.c.b16 %v985, %v977
        %v1186 = vpack.c.b16 %v986, %v978
        %v1187 = vpack.c.b16 %v987, %v979
        %v1188 = vpack.c.b16 %v988, %v980
        %v1189 = vpack.c.b16 %v989, %v981
        %v1190 = vpack.c.b16 %v990, %v982
        %v1191 = vpack.c.b16 %v999, %v991
        %v1192 = vpack.c.b16 %v1000, %v992
        %v1193 = vpack.c.b16 %v1001, %v993
        %v1194 = vpack.c.b16 %v1002, %v994
        %v1195 = vpack.c.b16 %v1003, %v995
        %v1196 = vpack.c.b16 %v1004, %v996
        %v1197 = vpack.c.b16 %v1005, %v997
        %v1198 = vpack.c.b16 %v1006, %v998
        %v1199 = vpack.c.b16 %v1015, %v1007
        %v1200 = vpack.c.b16 %v1016, %v1008
        %v1201 = vpack.c.b16 %v1017, %v1009
        %v1202 = vpack.c.b16 %v1018, %v1010
        %v1203 = vpack.c.b16 %v1019, %v1011
        %v1204 = vpack.c.b16 %v1020, %v1012
        %v1205 = vpack.c.b16 %v1021, %v1013
        %v1206 = vpack.c.b16 %v1022, %v1014
        %v1207 = vpack.c.b16 %v1031, %v1023
        %v1208 = vpack.c.b16 %v1032, %v1024
        %v1209 = vpack.c.b16 %v1033, %v1025
        %v1210 = vpack.c.b16 %v1034, %v1026
        %v1211 = vpack.c.b16 %v1035, %v1027
        %v1212 = vpack.c.b16 %v1036, %v1028
        %v1213 = vpack.c.b16 %v1037, %v1029
        %v1214 = vpack.c.b16 %v1038, %v1030
        %v1215 = vpack.c.b16 %v1047, %v1039
        %v1216 = vpack.c.b16 %v1048, %v1040
        %v1217 = vpack.c.b16 %v1049, %v1041
        %v1218 = vpack.c.b16 %v1050, %v1042
        %v1219 = vpack.c.b16 %v1051, %v1043
        %v1220 = vpack.c.b16 %v1052, %v1044
        %v1221 = vpack.c.b16 %v1053, %v1045
        %v1222 = vpack.c.b16 %v1054, %v1046
        %v1223 = vpack.c.b16 %v1063, %v1055
        %v1224 = vpack.c.b16 %v1064, %v1056
        %v1225 = vpack.c.b16 %v1065, %v1057
        %v1226 = vpack.c.b16 %v1066, %v1058
        %v1227 = vpack.c.b16 %v1067, %v1059
        %v1228 = vpack.c.b16 %v1068, %v1060
        %v1229 = vpack.c.b16 %v1069, %v1061
        %v1230 = vpack.c.b16 %v1070, %v1062
        %v1231 = vpack.c.b16 %v1079, %v1071
        %v1232 = vpack.c.b16 %v1080, %v1072
        %v1233 = vpack.c.b16 %v1081, %v1073
        %v1234 = vpack.c.b16 %v1082, %v1074
        %v1235 = vpack.c.b16 %v1083, %v1075
        %v1236 = vpack.c.b16 %v1084, %v1076
        %v1237 = vpack.c.b16 %v1085, %v1077
        %v1238 = vpack.c.b16 %v1086, %v1078
        %v1239 = vpack.c.b16 %v1095, %v1087
        %v1240 = vpack.c.b16 %v1096, %v1088
        %v1241 = vpack.c.b16 %v1097, %v1089
        %v1242 = vpack.c.b16 %v1098, %v1090
        %v1243 = vpack.c.b16 %v1099, %v1091
        %v1244 = vpack.c.b16 %v1100, %v1092
        %v1245 = vpack.c.b16 %v1101, %v1093
        %v1246 = vpack.c.b16 %v1102, %v1094
        %v1247 = vpack.c.b16 %v1111, %v1103
        %v1248 = vpack.c.b16 %v1112, %v1104
        %v1249 = vpack.c.b16 %v1113, %v1105
        %v1250 = vpack.c.b16 %v1114, %v1106
        %v1251 = vpack.c.b16 %v1115, %v1107
        %v1252 = vpack.c.b16 %v1116, %v1108
        %v1253 = vpack.c.b16 %v1117, %v1109
        %v1254 = vpack.c.b16 %v1118, %v1110
        %v1255 = vpack.c.b16 %v1127, %v1119
        %v1256 = vpack.c.b16 %v1128, %v1120
        %v1257 = vpack.c.b16 %v1129, %v1121
        %v1258 = vpack.c.b16 %v1130, %v1122
        %v1259 = vpack.c.b16 %v1131, %v1123
        %v1260 = vpack.c.b16 %v1132, %v1124
        %v1261 = vpack.c.b16 %v1133, %v1125
        %v1262 = vpack.c.b16 %v1134, %v1126
        %1391 = vmatprep.subr.bf16.mxu0 %v1136
        %1392 = vmatpush1.bf16.msra.mxu0 %v1135
        %1393 = vmatprep.subr.bf16.mxu0 %v1144
        %1394 = vmatpush1.bf16.msra.mxu0 %v1143
        %1395 = vmatprep.subr.bf16.mxu0 %v1152
        %1396 = vmatpush1.bf16.msra.mxu0 %v1151
        %1397 = vmatprep.subr.bf16.mxu0 %v1160
        %1398 = vmatpush1.bf16.msra.mxu0 %v1159
        %1399 = vmatprep.subr.bf16.mxu0 %v1168
        %1400 = vmatpush1.bf16.msra.mxu0 %v1167
        %1401 = vmatprep.subr.bf16.mxu0 %v1176
        %1402 = vmatpush1.bf16.msra.mxu0 %v1175
        %1403 = vmatprep.subr.bf16.mxu0 %v1184
        %1404 = vmatpush1.bf16.msra.mxu0 %v1183
        %1405 = vmatprep.subr.bf16.mxu0 %v1192
        %1406 = vmatpush1.bf16.msra.mxu0 %v1191
        %1407 = vmatprep.subr.bf16.mxu0 %v1200
        %1408 = vmatpush1.bf16.msra.mxu0 %v1199
        %1409 = vmatprep.subr.bf16.mxu0 %v1208
        %1410 = vmatpush1.bf16.msra.mxu0 %v1207
        %1411 = vmatprep.subr.bf16.mxu0 %v1216
        %1412 = vmatpush1.bf16.msra.mxu0 %v1215
        %1413 = vmatprep.subr.bf16.mxu0 %v1224
        %1414 = vmatpush1.bf16.msra.mxu0 %v1223
        %1415 = vmatprep.subr.bf16.mxu0 %v1232
        %1416 = vmatpush1.bf16.msra.mxu0 %v1231
        %1417 = vmatprep.subr.bf16.mxu0 %v1240
        %1418 = vmatpush1.bf16.msra.mxu0 %v1239
        %1419 = vmatprep.subr.bf16.mxu0 %v1248
        %1420 = vmatpush1.bf16.msra.mxu0 %v1247
        %1421 = vmatprep.subr.bf16.mxu0 %v1256
        %1422 = vmatpush1.bf16.msra.mxu0 %v1255
        %1423 = vmatprep.mubr.bf16.mxu0 %v620
        %1424 = vmatmul.mubr.bf16.gmra.mrb[0].mxu0 %v619
        %v1425 = vpop.f32.mrb[0].mxu0
        %v1426 = vadd.f32 0.0, %v1425
        %v1427 = vpop.f32.mrb[0].mxu0
        %v1428 = vadd.f32 0.0, %v1427
        %v1429 = vpop.f32.mrb[0].mxu0
        %v1430 = vadd.f32 0.0, %v1429
        %v1431 = vpop.f32.mrb[0].mxu0
        %v1432 = vadd.f32 0.0, %v1431
        %1433 = vmatprep.mubr.bf16.mxu0 %v622
        %1434 = vmatmul.mubr.bf16.gmra.mrb[0].mxu0 %v621
        %v1435 = vpop.f32.mrb[0].mxu0
        %v1436 = vadd.f32 0.0, %v1435
        %v1437 = vpop.f32.mrb[0].mxu0
        %v1438 = vadd.f32 0.0, %v1437
        %v1439 = vpop.f32.mrb[0].mxu0
        %v1440 = vadd.f32 0.0, %v1439
        %v1441 = vpop.f32.mrb[0].mxu0
        %v1442 = vadd.f32 0.0, %v1441
        %1443 = vdwg.mxu0
        %1444 = vmatprep.subr.bf16.mxu0 %v1138
        %1445 = vmatpush1.bf16.msra.mxu0 %v1137
        %1446 = vmatprep.subr.bf16.mxu0 %v1146
        %1447 = vmatpush1.bf16.msra.mxu0 %v1145
        %1448 = vmatprep.subr.bf16.mxu0 %v1154
        %1449 = vmatpush1.bf16.msra.mxu0 %v1153
        %1450 = vmatprep.subr.bf16.mxu0 %v1162
        %1451 = vmatpush1.bf16.msra.mxu0 %v1161
        %1452 = vmatprep.subr.bf16.mxu0 %v1170
        %1453 = vmatpush1.bf16.msra.mxu0 %v1169
        %1454 = vmatprep.subr.bf16.mxu0 %v1178
        %1455 = vmatpush1.bf16.msra.mxu0 %v1177
        %1456 = vmatprep.subr.bf16.mxu0 %v1186
        %1457 = vmatpush1.bf16.msra.mxu0 %v1185
        %1458 = vmatprep.subr.bf16.mxu0 %v1194
        %1459 = vmatpush1.bf16.msra.mxu0 %v1193
        %1460 = vmatprep.subr.bf16.mxu0 %v1202
        %1461 = vmatpush1.bf16.msra.mxu0 %v1201
        %1462 = vmatprep.subr.bf16.mxu0 %v1210
        %1463 = vmatpush1.bf16.msra.mxu0 %v1209
        %1464 = vmatprep.subr.bf16.mxu0 %v1218
        %1465 = vmatpush1.bf16.msra.mxu0 %v1217
        %1466 = vmatprep.subr.bf16.mxu0 %v1226
        %1467 = vmatpush1.bf16.msra.mxu0 %v1225
        %1468 = vmatprep.subr.bf16.mxu0 %v1234
        %1469 = vmatpush1.bf16.msra.mxu0 %v1233
        %1470 = vmatprep.subr.bf16.mxu0 %v1242
        %1471 = vmatpush1.bf16.msra.mxu0 %v1241
        %1472 = vmatprep.subr.bf16.mxu0 %v1250
        %1473 = vmatpush1.bf16.msra.mxu0 %v1249
        %1474 = vmatprep.subr.bf16.mxu0 %v1258
        %1475 = vmatpush1.bf16.msra.mxu0 %v1257
        %1476 = vmatprep.mubr.bf16.mxu0 %v620
        %1477 = vmatmul.mubr.bf16.gmra.mrb[0].mxu0 %v619
        %v1478 = vpop.f32.mrb[0].mxu0
        %v1479 = vadd.f32 0.0, %v1478
        %v1480 = vpop.f32.mrb[0].mxu0
        %v1481 = vadd.f32 0.0, %v1480
        %v1482 = vpop.f32.mrb[0].mxu0
        %v1483 = vadd.f32 0.0, %v1482
        %v1484 = vpop.f32.mrb[0].mxu0
        %v1485 = vadd.f32 0.0, %v1484
        %1486 = vmatprep.mubr.bf16.mxu0 %v622
        %1487 = vmatmul.mubr.bf16.gmra.mrb[0].mxu0 %v621
        %v1488 = vpop.f32.mrb[0].mxu0
        %v1489 = vadd.f32 0.0, %v1488
        %v1490 = vpop.f32.mrb[0].mxu0
        %v1491 = vadd.f32 0.0, %v1490
        %v1492 = vpop.f32.mrb[0].mxu0
        %v1493 = vadd.f32 0.0, %v1492
        %v1494 = vpop.f32.mrb[0].mxu0
        %v1495 = vadd.f32 0.0, %v1494
        %1496 = vdwg.mxu0
        %1497 = vmatprep.subr.bf16.mxu0 %v1140
        %1498 = vmatpush1.bf16.msra.mxu0 %v1139
        %1499 = vmatprep.subr.bf16.mxu0 %v1148
        %1500 = vmatpush1.bf16.msra.mxu0 %v1147
        %1501 = vmatprep.subr.bf16.mxu0 %v1156
        %1502 = vmatpush1.bf16.msra.mxu0 %v1155
        %1503 = vmatprep.subr.bf16.mxu0 %v1164
        %1504 = vmatpush1.bf16.msra.mxu0 %v1163
        %1505 = vmatprep.subr.bf16.mxu0 %v1172
        %1506 = vmatpush1.bf16.msra.mxu0 %v1171
        %1507 = vmatprep.subr.bf16.mxu0 %v1180
        %1508 = vmatpush1.bf16.msra.mxu0 %v1179
        %1509 = vmatprep.subr.bf16.mxu0 %v1188
        %1510 = vmatpush1.bf16.msra.mxu0 %v1187
        %1511 = vmatprep.subr.bf16.mxu0 %v1196
        %1512 = vmatpush1.bf16.msra.mxu0 %v1195
        %1513 = vmatprep.subr.bf16.mxu0 %v1204
        %1514 = vmatpush1.bf16.msra.mxu0 %v1203
        %1515 = vmatprep.subr.bf16.mxu0 %v1212
        %1516 = vmatpush1.bf16.msra.mxu0 %v1211
        %1517 = vmatprep.subr.bf16.mxu0 %v1220
        %1518 = vmatpush1.bf16.msra.mxu0 %v1219
        %1519 = vmatprep.subr.bf16.mxu0 %v1228
        %1520 = vmatpush1.bf16.msra.mxu0 %v1227
        %1521 = vmatprep.subr.bf16.mxu0 %v1236
        %1522 = vmatpush1.bf16.msra.mxu0 %v1235
        %1523 = vmatprep.subr.bf16.mxu0 %v1244
        %1524 = vmatpush1.bf16.msra.mxu0 %v1243
        %1525 = vmatprep.subr.bf16.mxu0 %v1252
        %1526 = vmatpush1.bf16.msra.mxu0 %v1251
        %1527 = vmatprep.subr.bf16.mxu0 %v1260
        %1528 = vmatpush1.bf16.msra.mxu0 %v1259
        %1529 = vmatprep.mubr.bf16.mxu0 %v620
        %1530 = vmatmul.mubr.bf16.gmra.mrb[0].mxu0 %v619
        %v1531 = vpop.f32.mrb[0].mxu0
        %v1532 = vadd.f32 0.0, %v1531
        %v1533 = vpop.f32.mrb[0].mxu0
        %v1534 = vadd.f32 0.0, %v1533
        %v1535 = vpop.f32.mrb[0].mxu0
        %v1536 = vadd.f32 0.0, %v1535
        %v1537 = vpop.f32.mrb[0].mxu0
        %v1538 = vadd.f32 0.0, %v1537
        %1539 = vmatprep.mubr.bf16.mxu0 %v622
        %1540 = vmatmul.mubr.bf16.gmra.mrb[0].mxu0 %v621
        %v1541 = vpop.f32.mrb[0].mxu0
        %v1542 = vadd.f32 0.0, %v1541
        %v1543 = vpop.f32.mrb[0].mxu0
        %v1544 = vadd.f32 0.0, %v1543
        %v1545 = vpop.f32.mrb[0].mxu0
        %v1546 = vadd.f32 0.0, %v1545
        %v1547 = vpop.f32.mrb[0].mxu0
        %v1548 = vadd.f32 0.0, %v1547
        %1549 = vdwg.mxu0
        %1550 = vmatprep.subr.bf16.mxu0 %v1142
        %1551 = vmatpush1.bf16.msra.mxu0 %v1141
        %1552 = vmatprep.subr.bf16.mxu0 %v1150
        %1553 = vmatpush1.bf16.msra.mxu0 %v1149
        %1554 = vmatprep.subr.bf16.mxu0 %v1158
        %1555 = vmatpush1.bf16.msra.mxu0 %v1157
        %1556 = vmatprep.subr.bf16.mxu0 %v1166
        %1557 = vmatpush1.bf16.msra.mxu0 %v1165
        %1558 = vmatprep.subr.bf16.mxu0 %v1174
        %1559 = vmatpush1.bf16.msra.mxu0 %v1173
        %1560 = vmatprep.subr.bf16.mxu0 %v1182
        %1561 = vmatpush1.bf16.msra.mxu0 %v1181
        %1562 = vmatprep.subr.bf16.mxu0 %v1190
        %1563 = vmatpush1.bf16.msra.mxu0 %v1189
        %1564 = vmatprep.subr.bf16.mxu0 %v1198
        %1565 = vmatpush1.bf16.msra.mxu0 %v1197
        %1566 = vmatprep.subr.bf16.mxu0 %v1206
        %1567 = vmatpush1.bf16.msra.mxu0 %v1205
        %1568 = vmatprep.subr.bf16.mxu0 %v1214
        %1569 = vmatpush1.bf16.msra.mxu0 %v1213
        %1570 = vmatprep.subr.bf16.mxu0 %v1222
        %1571 = vmatpush1.bf16.msra.mxu0 %v1221
        %1572 = vmatprep.subr.bf16.mxu0 %v1230
        %1573 = vmatpush1.bf16.msra.mxu0 %v1229
        %1574 = vmatprep.subr.bf16.mxu0 %v1238
        %1575 = vmatpush1.bf16.msra.mxu0 %v1237
        %1576 = vmatprep.subr.bf16.mxu0 %v1246
        %1577 = vmatpush1.bf16.msra.mxu0 %v1245
        %1578 = vmatprep.subr.bf16.mxu0 %v1254
        %1579 = vmatpush1.bf16.msra.mxu0 %v1253
        %1580 = vmatprep.subr.bf16.mxu0 %v1262
        %1581 = vmatpush1.bf16.msra.mxu0 %v1261
        %1582 = vmatprep.mubr.bf16.mxu0 %v620
        %1583 = vmatmul.mubr.bf16.gmra.mrb[0].mxu0 %v619
        %v1584 = vpop.f32.mrb[0].mxu0
        %v1585 = vadd.f32 0.0, %v1584
        %v1586 = vpop.f32.mrb[0].mxu0
        %v1587 = vadd.f32 0.0, %v1586
        %v1588 = vpop.f32.mrb[0].mxu0
        %v1589 = vadd.f32 0.0, %v1588
        %v1590 = vpop.f32.mrb[0].mxu0
        %v1591 = vadd.f32 0.0, %v1590
        %1592 = vmatprep.mubr.bf16.mxu0 %v622
        %1593 = vmatmul.mubr.bf16.gmra.mrb[0].mxu0 %v621
        %v1594 = vpop.f32.mrb[0].mxu0
        %v1595 = vadd.f32 0.0, %v1594
        %v1596 = vpop.f32.mrb[0].mxu0
        %v1597 = vadd.f32 0.0, %v1596
        %v1598 = vpop.f32.mrb[0].mxu0
        %v1599 = vadd.f32 0.0, %v1598
        %v1600 = vpop.f32.mrb[0].mxu0
        %v1601 = vadd.f32 0.0, %v1600
        %1602 = vdwg.mxu0
        %v1603 = vadd.f32 %v434, %v1426
        %v1604 = vadd.f32 %v436, %v1428
        %v1605 = vadd.f32 %v487, %v1479
        %v1606 = vadd.f32 %v489, %v1481
        %v1607 = vadd.f32 %v540, %v1532
        %v1608 = vadd.f32 %v542, %v1534
        %v1609 = vadd.f32 %v593, %v1585
        %v1610 = vadd.f32 %v595, %v1587
        %v1611 = vadd.f32 %v438, %v1430
        %v1612 = vadd.f32 %v440, %v1432
        %v1613 = vadd.f32 %v491, %v1483
        %v1614 = vadd.f32 %v493, %v1485
        %v1615 = vadd.f32 %v544, %v1536
        %v1616 = vadd.f32 %v546, %v1538
        %v1617 = vadd.f32 %v597, %v1589
        %v1618 = vadd.f32 %v599, %v1591
        %v1619 = vadd.f32 %v444, %v1436
        %v1620 = vadd.f32 %v446, %v1438
        %v1621 = vadd.f32 %v497, %v1489
        %v1622 = vadd.f32 %v499, %v1491
        %v1623 = vadd.f32 %v550, %v1542
        %v1624 = vadd.f32 %v552, %v1544
        %v1625 = vadd.f32 %v603, %v1595
        %v1626 = vadd.f32 %v605, %v1597
        %v1627 = vadd.f32 %v448, %v1440
        %v1628 = vadd.f32 %v450, %v1442
        %v1629 = vadd.f32 %v501, %v1493
        %v1630 = vadd.f32 %v503, %v1495
        %v1631 = vadd.f32 %v554, %v1546
        %v1632 = vadd.f32 %v556, %v1548
        %v1633 = vadd.f32 %v607, %v1599
        %v1634 = vadd.f32 %v609, %v1601
        %1635 = vst [vmem:[%s314] sm:$0xff] %v1603
        %1636 = vst [vmem:[%s314 + $0x8] sm:$0xff] %v1604
        %1637 = vst [vmem:[%s314 + $0x10] sm:$0xff] %v1605
        %1638 = vst [vmem:[%s314 + $0x18] sm:$0xff] %v1606
        %1639 = vst [vmem:[%s314 + $0x20] sm:$0xff] %v1607
        %1640 = vst [vmem:[%s314 + $0x28] sm:$0xff] %v1608
        %1641 = vst [vmem:[%s314 + $0x30] sm:$0xff] %v1609
        %1642 = vst [vmem:[%s314 + $0x38] sm:$0xff] %v1610
        %1643 = vst [vmem:[%s314 + $0x40] sm:$0xff] %v1611
        %1644 = vst [vmem:[%s314 + $0x48] sm:$0xff] %v1612
        %1645 = vst [vmem:[%s314 + $0x50] sm:$0xff] %v1613
        %1646 = vst [vmem:[%s314 + $0x58] sm:$0xff] %v1614
        %1647 = vst [vmem:[%s314 + $0x60] sm:$0xff] %v1615
        %1648 = vst [vmem:[%s314 + $0x68] sm:$0xff] %v1616
        %1649 = vst [vmem:[%s314 + $0x70] sm:$0xff] %v1617
        %1650 = vst [vmem:[%s314 + $0x78] sm:$0xff] %v1618
        %1651 = vst [vmem:[%s314 + $0x80] sm:$0xff] %v1619
        %1652 = vst [vmem:[%s314 + $0x88] sm:$0xff] %v1620
        %1653 = vst [vmem:[%s314 + $0x90] sm:$0xff] %v1621
        %1654 = vst [vmem:[%s314 + $0x98] sm:$0xff] %v1622
        %1655 = vst [vmem:[%s314 + $0xa0] sm:$0xff] %v1623
        %1656 = vst [vmem:[%s314 + $0xa8] sm:$0xff] %v1624
        %1657 = vst [vmem:[%s314 + $0xb0] sm:$0xff] %v1625
        %1658 = vst [vmem:[%s314 + $0xb8] sm:$0xff] %v1626
        %1659 = vst [vmem:[%s314 + $0xc0] sm:$0xff] %v1627
        %1660 = vst [vmem:[%s314 + $0xc8] sm:$0xff] %v1628
        %1661 = vst [vmem:[%s314 + $0xd0] sm:$0xff] %v1629
        %1662 = vst [vmem:[%s314 + $0xd8] sm:$0xff] %v1630
        %1663 = vst [vmem:[%s314 + $0xe0] sm:$0xff] %v1631
        %1664 = vst [vmem:[%s314 + $0xe8] sm:$0xff] %v1632
        %1665 = vst [vmem:[%s314 + $0xf0] sm:$0xff] %v1633
        %1666 = vst [vmem:[%s314 + $0xf8] sm:$0xff] %v1634
        %v1667 = vlaneseq
        %v1668 = vand.u32 %v1667, 127
        %v1669 = vadd.s32 %v1668, 128
        %v1670 = vadd.s32 %v1668, 256
        %v1671 = vadd.s32 %v1668, 384
        %v1672 = vadd.s32 %v1668, 512
        %v1673 = vadd.s32 %v1668, 640
        %v1674 = vadd.s32 %v1668, 768
        %v1675 = vadd.s32 %v1668, 896
        %v1676 = vshra.s32 %v1668, 5
        %v1677 = vshra.s32 %v1669, 5
        %v1678 = vshra.s32 %v1670, 5
        %v1679 = vshra.s32 %v1671, 5
        %v1680 = vshra.s32 %v1672, 5
        %v1681 = vshra.s32 %v1673, 5
        %v1682 = vshra.s32 %v1674, 5
        %v1683 = vshra.s32 %v1675, 5
        %v1684 = vand.u32 %v1668, 31
        %v1685 = vand.u32 %v1669, 31
        %v1686 = vand.u32 %v1670, 31
        %v1687 = vand.u32 %v1671, 31
        %v1688 = vand.u32 %v1672, 31
        %v1689 = vand.u32 %v1673, 31
        %v1690 = vand.u32 %v1674, 31
        %v1691 = vand.u32 %v1675, 31
        %v1692 = vadd.s32 %v1676, 4294967295
        %v1693 = vadd.s32 %v1677, 4294967295
        %v1694 = vadd.s32 %v1678, 4294967295
        %v1695 = vadd.s32 %v1679, 4294967295
        %v1696 = vadd.s32 %v1680, 4294967295
        %v1697 = vadd.s32 %v1681, 4294967295
        %v1698 = vadd.s32 %v1682, 4294967295
        %v1699 = vadd.s32 %v1683, 4294967295
        %vm1700 = vcmp.ge.s32.totalorder %v1692, 0
        %vm1701 = vcmp.ge.s32.totalorder %v1693, 0
        %vm1702 = vcmp.ge.s32.totalorder %v1694, 0
        %vm1703 = vcmp.ge.s32.totalorder %v1695, 0
        %vm1704 = vcmp.ge.s32.totalorder %v1696, 0
        %vm1705 = vcmp.ge.s32.totalorder %v1697, 0
        %vm1706 = vcmp.ge.s32.totalorder %v1698, 0
        %vm1707 = vcmp.ge.s32.totalorder %v1699, 0
        %vm1708 = vcmp.lt.s32.totalorder %v1692, 32
        %vm1709 = vcmp.lt.s32.totalorder %v1693, 32
        %vm1710 = vcmp.lt.s32.totalorder %v1694, 32
        %vm1711 = vcmp.lt.s32.totalorder %v1695, 32
        %vm1712 = vcmp.lt.s32.totalorder %v1696, 32
        %vm1713 = vcmp.lt.s32.totalorder %v1697, 32
        %vm1714 = vcmp.lt.s32.totalorder %v1698, 32
        %vm1715 = vcmp.lt.s32.totalorder %v1699, 32
        %vm1716 = vmand %vm1700, %vm1708
        %vm1717 = vmand %vm1701, %vm1709
        %vm1718 = vmand %vm1702, %vm1710
        %vm1719 = vmand %vm1703, %vm1711
        %vm1720 = vmand %vm1704, %vm1712
        %vm1721 = vmand %vm1705, %vm1713
        %vm1722 = vmand %vm1706, %vm1714
        %vm1723 = vmand %vm1707, %vm1715
        %v1724 = vsel %vm1716, 1.0, 0.0
        %v1725 = vsel %vm1717, 1.0, 0.0
        %v1726 = vsel %vm1718, 1.0, 0.0
        %v1727 = vsel %vm1719, 1.0, 0.0
        %v1728 = vsel %vm1720, 1.0, 0.0
        %v1729 = vsel %vm1721, 1.0, 0.0
        %v1730 = vsel %vm1722, 1.0, 0.0
        %v1731 = vsel %vm1723, 1.0, 0.0
        %vm1732 = vcmp.ge.s32.totalorder %v1676, 0
        %vm1733 = vcmp.ge.s32.totalorder %v1677, 0
        %vm1734 = vcmp.ge.s32.totalorder %v1678, 0
        %vm1735 = vcmp.ge.s32.totalorder %v1679, 0
        %vm1736 = vcmp.ge.s32.totalorder %v1680, 0
        %vm1737 = vcmp.ge.s32.totalorder %v1681, 0
        %vm1738 = vcmp.ge.s32.totalorder %v1682, 0
        %vm1739 = vcmp.ge.s32.totalorder %v1683, 0
        %vm1740 = vcmp.lt.s32.totalorder %v1676, 32
        %vm1741 = vcmp.lt.s32.totalorder %v1677, 32
        %vm1742 = vcmp.lt.s32.totalorder %v1678, 32
        %vm1743 = vcmp.lt.s32.totalorder %v1679, 32
        %vm1744 = vcmp.lt.s32.totalorder %v1680, 32
        %vm1745 = vcmp.lt.s32.totalorder %v1681, 32
        %vm1746 = vcmp.lt.s32.totalorder %v1682, 32
        %vm1747 = vcmp.lt.s32.totalorder %v1683, 32
        %vm1748 = vmand %vm1732, %vm1740
        %vm1749 = vmand %vm1733, %vm1741
        %vm1750 = vmand %vm1734, %vm1742
        %vm1751 = vmand %vm1735, %vm1743
        %vm1752 = vmand %vm1736, %vm1744
        %vm1753 = vmand %vm1737, %vm1745
        %vm1754 = vmand %vm1738, %vm1746
        %vm1755 = vmand %vm1739, %vm1747
        %v1756 = vsel %vm1748, 1.0, 0.0
        %v1757 = vsel %vm1749, 1.0, 0.0
        %v1758 = vsel %vm1750, 1.0, 0.0
        %v1759 = vsel %vm1751, 1.0, 0.0
        %v1760 = vsel %vm1752, 1.0, 0.0
        %v1761 = vsel %vm1753, 1.0, 0.0
        %v1762 = vsel %vm1754, 1.0, 0.0
        %v1763 = vsel %vm1755, 1.0, 0.0
        %v1764 = vadd.s32 %v1676, 1
        %v1765 = vadd.s32 %v1677, 1
        %v1766 = vadd.s32 %v1678, 1
        %v1767 = vadd.s32 %v1679, 1
        %v1768 = vadd.s32 %v1680, 1
        %v1769 = vadd.s32 %v1681, 1
        %v1770 = vadd.s32 %v1682, 1
        %v1771 = vadd.s32 %v1683, 1
        %vm1772 = vcmp.ge.s32.totalorder %v1764, 0
        %vm1773 = vcmp.ge.s32.totalorder %v1765, 0
        %vm1774 = vcmp.ge.s32.totalorder %v1766, 0
        %vm1775 = vcmp.ge.s32.totalorder %v1767, 0
        %vm1776 = vcmp.ge.s32.totalorder %v1768, 0
        %vm1777 = vcmp.ge.s32.totalorder %v1769, 0
        %vm1778 = vcmp.ge.s32.totalorder %v1770, 0
        %vm1779 = vcmp.ge.s32.totalorder %v1771, 0
        %vm1780 = vcmp.lt.s32.totalorder %v1764, 32
        %vm1781 = vcmp.lt.s32.totalorder %v1765, 32
        %vm1782 = vcmp.lt.s32.totalorder %v1766, 32
        %vm1783 = vcmp.lt.s32.totalorder %v1767, 32
        %vm1784 = vcmp.lt.s32.totalorder %v1768, 32
        %vm1785 = vcmp.lt.s32.totalorder %v1769, 32
        %vm1786 = vcmp.lt.s32.totalorder %v1770, 32
        %vm1787 = vcmp.lt.s32.totalorder %v1771, 32
        %vm1788 = vmand %vm1772, %vm1780
        %vm1789 = vmand %vm1773, %vm1781
        %vm1790 = vmand %vm1774, %vm1782
        %vm1791 = vmand %vm1775, %vm1783
        %vm1792 = vmand %vm1776, %vm1784
        %vm1793 = vmand %vm1777, %vm1785
        %vm1794 = vmand %vm1778, %vm1786
        %vm1795 = vmand %vm1779, %vm1787
        %v1796 = vsel %vm1788, 1.0, 0.0
        %v1797 = vsel %vm1789, 1.0, 0.0
        %v1798 = vsel %vm1790, 1.0, 0.0
        %v1799 = vsel %vm1791, 1.0, 0.0
        %v1800 = vsel %vm1792, 1.0, 0.0
        %v1801 = vsel %vm1793, 1.0, 0.0
        %v1802 = vsel %vm1794, 1.0, 0.0
        %v1803 = vsel %vm1795, 1.0, 0.0
        %v1804 = vadd.s32 %v1684, 4294967295
        %v1805 = vadd.s32 %v1685, 4294967295
        %v1806 = vadd.s32 %v1686, 4294967295
        %v1807 = vadd.s32 %v1687, 4294967295
        %v1808 = vadd.s32 %v1688, 4294967295
        %v1809 = vadd.s32 %v1689, 4294967295
        %v1810 = vadd.s32 %v1690, 4294967295
        %v1811 = vadd.s32 %v1691, 4294967295
        %vm1812 = vcmp.ge.s32.totalorder %v1804, 0
        %vm1813 = vcmp.ge.s32.totalorder %v1805, 0
        %vm1814 = vcmp.ge.s32.totalorder %v1806, 0
        %vm1815 = vcmp.ge.s32.totalorder %v1807, 0
        %vm1816 = vcmp.ge.s32.totalorder %v1808, 0
        %vm1817 = vcmp.ge.s32.totalorder %v1809, 0
        %vm1818 = vcmp.ge.s32.totalorder %v1810, 0
        %vm1819 = vcmp.ge.s32.totalorder %v1811, 0
        %vm1820 = vcmp.lt.s32.totalorder %v1804, 32
        %vm1821 = vcmp.lt.s32.totalorder %v1805, 32
        %vm1822 = vcmp.lt.s32.totalorder %v1806, 32
        %vm1823 = vcmp.lt.s32.totalorder %v1807, 32
        %vm1824 = vcmp.lt.s32.totalorder %v1808, 32
        %vm1825 = vcmp.lt.s32.totalorder %v1809, 32
        %vm1826 = vcmp.lt.s32.totalorder %v1810, 32
        %vm1827 = vcmp.lt.s32.totalorder %v1811, 32
        %vm1828 = vmand %vm1812, %vm1820
        %vm1829 = vmand %vm1813, %vm1821
        %vm1830 = vmand %vm1814, %vm1822
        %vm1831 = vmand %vm1815, %vm1823
        %vm1832 = vmand %vm1816, %vm1824
        %vm1833 = vmand %vm1817, %vm1825
        %vm1834 = vmand %vm1818, %vm1826
        %vm1835 = vmand %vm1819, %vm1827
        %v1836 = vsel %vm1828, 1.0, 0.0
        %v1837 = vsel %vm1829, 1.0, 0.0
        %v1838 = vsel %vm1830, 1.0, 0.0
        %v1839 = vsel %vm1831, 1.0, 0.0
        %v1840 = vsel %vm1832, 1.0, 0.0
        %v1841 = vsel %vm1833, 1.0, 0.0
        %v1842 = vsel %vm1834, 1.0, 0.0
        %v1843 = vsel %vm1835, 1.0, 0.0
        %vm1844 = vcmp.ge.s32.totalorder %v1684, 0
        %vm1845 = vcmp.ge.s32.totalorder %v1685, 0
        %vm1846 = vcmp.ge.s32.totalorder %v1686, 0
        %vm1847 = vcmp.ge.s32.totalorder %v1687, 0
        %vm1848 = vcmp.ge.s32.totalorder %v1688, 0
        %vm1849 = vcmp.ge.s32.totalorder %v1689, 0
        %vm1850 = vcmp.ge.s32.totalorder %v1690, 0
        %vm1851 = vcmp.ge.s32.totalorder %v1691, 0
        %vm1852 = vcmp.lt.s32.totalorder %v1684, 32
        %vm1853 = vcmp.lt.s32.totalorder %v1685, 32
        %vm1854 = vcmp.lt.s32.totalorder %v1686, 32
        %vm1855 = vcmp.lt.s32.totalorder %v1687, 32
        %vm1856 = vcmp.lt.s32.totalorder %v1688, 32
        %vm1857 = vcmp.lt.s32.totalorder %v1689, 32
        %vm1858 = vcmp.lt.s32.totalorder %v1690, 32
        %vm1859 = vcmp.lt.s32.totalorder %v1691, 32
        %vm1860 = vmand %vm1844, %vm1852
        %vm1861 = vmand %vm1845, %vm1853
        %vm1862 = vmand %vm1846, %vm1854
        %vm1863 = vmand %vm1847, %vm1855
        %vm1864 = vmand %vm1848, %vm1856
        %vm1865 = vmand %vm1849, %vm1857
        %vm1866 = vmand %vm1850, %vm1858
        %vm1867 = vmand %vm1851, %vm1859
        %v1868 = vsel %vm1860, 1.0, 0.0
        %v1869 = vsel %vm1861, 1.0, 0.0
        %v1870 = vsel %vm1862, 1.0, 0.0
        %v1871 = vsel %vm1863, 1.0, 0.0
        %v1872 = vsel %vm1864, 1.0, 0.0
        %v1873 = vsel %vm1865, 1.0, 0.0
        %v1874 = vsel %vm1866, 1.0, 0.0
        %v1875 = vsel %vm1867, 1.0, 0.0
        %v1876 = vadd.s32 %v1684, 1
        %v1877 = vadd.s32 %v1685, 1
        %v1878 = vadd.s32 %v1686, 1
        %v1879 = vadd.s32 %v1687, 1
        %v1880 = vadd.s32 %v1688, 1
        %v1881 = vadd.s32 %v1689, 1
        %v1882 = vadd.s32 %v1690, 1
        %v1883 = vadd.s32 %v1691, 1
        %vm1884 = vcmp.ge.s32.totalorder %v1876, 0
        %vm1885 = vcmp.ge.s32.totalorder %v1877, 0
        %vm1886 = vcmp.ge.s32.totalorder %v1878, 0
        %vm1887 = vcmp.ge.s32.totalorder %v1879, 0
        %vm1888 = vcmp.ge.s32.totalorder %v1880, 0
        %vm1889 = vcmp.ge.s32.totalorder %v1881, 0
        %vm1890 = vcmp.ge.s32.totalorder %v1882, 0
        %vm1891 = vcmp.ge.s32.totalorder %v1883, 0
        %vm1892 = vcmp.lt.s32.totalorder %v1876, 32
        %vm1893 = vcmp.lt.s32.totalorder %v1877, 32
        %vm1894 = vcmp.lt.s32.totalorder %v1878, 32
        %vm1895 = vcmp.lt.s32.totalorder %v1879, 32
        %vm1896 = vcmp.lt.s32.totalorder %v1880, 32
        %vm1897 = vcmp.lt.s32.totalorder %v1881, 32
        %vm1898 = vcmp.lt.s32.totalorder %v1882, 32
        %vm1899 = vcmp.lt.s32.totalorder %v1883, 32
        %vm1900 = vmand %vm1884, %vm1892
        %vm1901 = vmand %vm1885, %vm1893
        %vm1902 = vmand %vm1886, %vm1894
        %vm1903 = vmand %vm1887, %vm1895
        %vm1904 = vmand %vm1888, %vm1896
        %vm1905 = vmand %vm1889, %vm1897
        %vm1906 = vmand %vm1890, %vm1898
        %vm1907 = vmand %vm1891, %vm1899
        %v1908 = vsel %vm1900, 1.0, 0.0
        %v1909 = vsel %vm1901, 1.0, 0.0
        %v1910 = vsel %vm1902, 1.0, 0.0
        %v1911 = vsel %vm1903, 1.0, 0.0
        %v1912 = vsel %vm1904, 1.0, 0.0
        %v1913 = vsel %vm1905, 1.0, 0.0
        %v1914 = vsel %vm1906, 1.0, 0.0
        %v1915 = vsel %vm1907, 1.0, 0.0
        %1916 = vrot.lane.b32.xlu0 %v1603, 33
        %v1917 = vpop.permute.xlu0 %1916
        %1918 = vrot.lane.b32.xlu0 %v1611, 33
        %v1919 = vpop.permute.xlu0 %1918
        %1920 = vrot.lane.b32.xlu0 %v1619, 33
        %v1921 = vpop.permute.xlu0 %1920
        %1922 = vrot.lane.b32.xlu0 %v1627, 33
        %v1923 = vpop.permute.xlu0 %1922
        %1924 = vrot.lane.b32.xlu0 %v1604, 33
        %v1925 = vpop.permute.xlu0 %1924
        %1926 = vrot.lane.b32.xlu0 %v1612, 33
        %v1927 = vpop.permute.xlu0 %1926
        %1928 = vrot.lane.b32.xlu0 %v1620, 33
        %v1929 = vpop.permute.xlu0 %1928
        %1930 = vrot.lane.b32.xlu0 %v1628, 33
        %v1931 = vpop.permute.xlu0 %1930
        %1932 = vrot.lane.b32.xlu0 %v1605, 33
        %v1933 = vpop.permute.xlu0 %1932
        %1934 = vrot.lane.b32.xlu0 %v1613, 33
        %v1935 = vpop.permute.xlu0 %1934
        %1936 = vrot.lane.b32.xlu0 %v1621, 33
        %v1937 = vpop.permute.xlu0 %1936
        %1938 = vrot.lane.b32.xlu0 %v1629, 33
        %v1939 = vpop.permute.xlu0 %1938
        %1940 = vrot.lane.b32.xlu0 %v1606, 33
        %v1941 = vpop.permute.xlu0 %1940
        %1942 = vrot.lane.b32.xlu0 %v1614, 33
        %v1943 = vpop.permute.xlu0 %1942
        %1944 = vrot.lane.b32.xlu0 %v1622, 33
        %v1945 = vpop.permute.xlu0 %1944
        %1946 = vrot.lane.b32.xlu0 %v1630, 33
        %v1947 = vpop.permute.xlu0 %1946
        %1948 = vrot.lane.b32.xlu0 %v1607, 33
        %v1949 = vpop.permute.xlu0 %1948
        %1950 = vrot.lane.b32.xlu0 %v1615, 33
        %v1951 = vpop.permute.xlu0 %1950
        %1952 = vrot.lane.b32.xlu0 %v1623, 33
        %v1953 = vpop.permute.xlu0 %1952
        %1954 = vrot.lane.b32.xlu0 %v1631, 33
        %v1955 = vpop.permute.xlu0 %1954
        %1956 = vrot.lane.b32.xlu0 %v1608, 33
        %v1957 = vpop.permute.xlu0 %1956
        %1958 = vrot.lane.b32.xlu0 %v1616, 33
        %v1959 = vpop.permute.xlu0 %1958
        %1960 = vrot.lane.b32.xlu0 %v1624, 33
        %v1961 = vpop.permute.xlu0 %1960
        %1962 = vrot.lane.b32.xlu0 %v1632, 33
        %v1963 = vpop.permute.xlu0 %1962
        %1964 = vrot.lane.b32.xlu0 %v1609, 33
        %v1965 = vpop.permute.xlu0 %1964
        %1966 = vrot.lane.b32.xlu0 %v1617, 33
        %v1967 = vpop.permute.xlu0 %1966
        %1968 = vrot.lane.b32.xlu0 %v1625, 33
        %v1969 = vpop.permute.xlu0 %1968
        %1970 = vrot.lane.b32.xlu0 %v1633, 33
        %v1971 = vpop.permute.xlu0 %1970
        %1972 = vrot.lane.b32.xlu0 %v1610, 33
        %v1973 = vpop.permute.xlu0 %1972
        %1974 = vrot.lane.b32.xlu0 %v1618, 33
        %v1975 = vpop.permute.xlu0 %1974
        %1976 = vrot.lane.b32.xlu0 %v1626, 33
        %v1977 = vpop.permute.xlu0 %1976
        %1978 = vrot.lane.b32.xlu0 %v1634, 33
        %v1979 = vpop.permute.xlu0 %1978
        %vm1980 = vcmp.lt.s32.totalorder %v1668, 33
        %v1981 = vsel %vm1980, %v1965, %v1973
        %v1982 = vsel %vm1980, %v1967, %v1975
        %v1983 = vsel %vm1980, %v1969, %v1977
        %v1984 = vsel %vm1980, %v1971, %v1979
        %v1985 = vsel %vm1980, %v1957, %v1965
        %v1986 = vsel %vm1980, %v1959, %v1967
        %v1987 = vsel %vm1980, %v1961, %v1969
        %v1988 = vsel %vm1980, %v1963, %v1971
        %v1989 = vsel %vm1980, %v1949, %v1957
        %v1990 = vsel %vm1980, %v1951, %v1959
        %v1991 = vsel %vm1980, %v1953, %v1961
        %v1992 = vsel %vm1980, %v1955, %v1963
        %v1993 = vsel %vm1980, %v1941, %v1949
        %v1994 = vsel %vm1980, %v1943, %v1951
        %v1995 = vsel %vm1980, %v1945, %v1953
        %v1996 = vsel %vm1980, %v1947, %v1955
        %v1997 = vsel %vm1980, %v1933, %v1941
        %v1998 = vsel %vm1980, %v1935, %v1943
        %v1999 = vsel %vm1980, %v1937, %v1945
        %v2000 = vsel %vm1980, %v1939, %v1947
        %v2001 = vsel %vm1980, %v1925, %v1933
        %v2002 = vsel %vm1980, %v1927, %v1935
        %v2003 = vsel %vm1980, %v1929, %v1937
        %v2004 = vsel %vm1980, %v1931, %v1939
        %v2005 = vsel %vm1980, %v1917, %v1925
        %v2006 = vsel %vm1980, %v1919, %v1927
        %v2007 = vsel %vm1980, %v1921, %v1929
        %v2008 = vsel %vm1980, %v1923, %v1931
        %v2009 = vsel %vm1980, %v1973, %v1917
        %v2010 = vsel %vm1980, %v1975, %v1919
        %v2011 = vsel %vm1980, %v1977, %v1921
        %v2012 = vsel %vm1980, %v1979, %v1923
        %v2013 = vmul.f32 %v1724, %v1836
        %v2014 = vmul.f32 %v1725, %v1837
        %v2015 = vmul.f32 %v1726, %v1838
        %v2016 = vmul.f32 %v1727, %v1839
        %v2017 = vmul.f32 %v1728, %v1840
        %v2018 = vmul.f32 %v1729, %v1841
        %v2019 = vmul.f32 %v1730, %v1842
        %v2020 = vmul.f32 %v1731, %v1843
        %v2021 = vmul.f32 %v2009, %v2013
        %v2022 = vmul.f32 %v2005, %v2014
        %v2023 = vmul.f32 %v2001, %v2015
        %v2024 = vmul.f32 %v1997, %v2016
        %v2025 = vmul.f32 %v1993, %v2017
        %v2026 = vmul.f32 %v1989, %v2018
        %v2027 = vmul.f32 %v1985, %v2019
        %v2028 = vmul.f32 %v1981, %v2020
        %v2029 = vmul.f32 %v2010, %v2013
        %v2030 = vmul.f32 %v2006, %v2014
        %v2031 = vmul.f32 %v2002, %v2015
        %v2032 = vmul.f32 %v1998, %v2016
        %v2033 = vmul.f32 %v1994, %v2017
        %v2034 = vmul.f32 %v1990, %v2018
        %v2035 = vmul.f32 %v1986, %v2019
        %v2036 = vmul.f32 %v1982, %v2020
        %v2037 = vmul.f32 %v2011, %v2013
        %v2038 = vmul.f32 %v2007, %v2014
        %v2039 = vmul.f32 %v2003, %v2015
        %v2040 = vmul.f32 %v1999, %v2016
        %v2041 = vmul.f32 %v1995, %v2017
        %v2042 = vmul.f32 %v1991, %v2018
        %v2043 = vmul.f32 %v1987, %v2019
        %v2044 = vmul.f32 %v1983, %v2020
        %v2045 = vmul.f32 %v2012, %v2013
        %v2046 = vmul.f32 %v2008, %v2014
        %v2047 = vmul.f32 %v2004, %v2015
        %v2048 = vmul.f32 %v2000, %v2016
        %v2049 = vmul.f32 %v1996, %v2017
        %v2050 = vmul.f32 %v1992, %v2018
        %v2051 = vmul.f32 %v1988, %v2019
        %v2052 = vmul.f32 %v1984, %v2020
        %v2053 = vpack.c.bf16 %v2029, %v2021
        %v2054 = vpack.c.bf16 %v2030, %v2022
        %v2055 = vpack.c.bf16 %v2031, %v2023
        %v2056 = vpack.c.bf16 %v2032, %v2024
        %v2057 = vpack.c.bf16 %v2033, %v2025
        %v2058 = vpack.c.bf16 %v2034, %v2026
        %v2059 = vpack.c.bf16 %v2035, %v2027
        %v2060 = vpack.c.bf16 %v2036, %v2028
        %v2061 = vpack.c.bf16 %v2045, %v2037
        %v2062 = vpack.c.bf16 %v2046, %v2038
        %v2063 = vpack.c.bf16 %v2047, %v2039
        %v2064 = vpack.c.bf16 %v2048, %v2040
        %v2065 = vpack.c.bf16 %v2049, %v2041
        %v2066 = vpack.c.bf16 %v2050, %v2042
        %v2067 = vpack.c.bf16 %v2051, %v2043
        %v2068 = vpack.c.bf16 %v2052, %v2044
        %2069 = vst [vmem:[#allocation2] sm:$0xff] %v2053
        %2070 = vst [vmem:[#allocation2 + $0x8] sm:$0xff] %v2054
        %2071 = vst [vmem:[#allocation2 + $0x10] sm:$0xff] %v2055
        %2072 = vst [vmem:[#allocation2 + $0x18] sm:$0xff] %v2056
        %2073 = vst [vmem:[#allocation2 + $0x20] sm:$0xff] %v2057
        %2074 = vst [vmem:[#allocation2 + $0x28] sm:$0xff] %v2058
        %2075 = vst [vmem:[#allocation2 + $0x30] sm:$0xff] %v2059
        %2076 = vst [vmem:[#allocation2 + $0x38] sm:$0xff] %v2060
        %2077 = vst [vmem:[#allocation2 + $0x40] sm:$0xff] %v2061
        %2078 = vst [vmem:[#allocation2 + $0x48] sm:$0xff] %v2062
        %2079 = vst [vmem:[#allocation2 + $0x50] sm:$0xff] %v2063
        %2080 = vst [vmem:[#allocation2 + $0x58] sm:$0xff] %v2064
        %2081 = vst [vmem:[#allocation2 + $0x60] sm:$0xff] %v2065
        %2082 = vst [vmem:[#allocation2 + $0x68] sm:$0xff] %v2066
        %2083 = vst [vmem:[#allocation2 + $0x70] sm:$0xff] %v2067
        %2084 = vst [vmem:[#allocation2 + $0x78] sm:$0xff] %v2068
        %2085 = vrot.lane.b32.xlu0 %v1603, 32
        %v2086 = vpop.permute.xlu0 %2085
        %2087 = vrot.lane.b32.xlu0 %v1611, 32
        %v2088 = vpop.permute.xlu0 %2087
        %2089 = vrot.lane.b32.xlu0 %v1619, 32
        %v2090 = vpop.permute.xlu0 %2089
        %2091 = vrot.lane.b32.xlu0 %v1627, 32
        %v2092 = vpop.permute.xlu0 %2091
        %2093 = vrot.lane.b32.xlu0 %v1604, 32
        %v2094 = vpop.permute.xlu0 %2093
        %2095 = vrot.lane.b32.xlu0 %v1612, 32
        %v2096 = vpop.permute.xlu0 %2095
        %2097 = vrot.lane.b32.xlu0 %v1620, 32
        %v2098 = vpop.permute.xlu0 %2097
        %2099 = vrot.lane.b32.xlu0 %v1628, 32
        %v2100 = vpop.permute.xlu0 %2099
        %2101 = vrot.lane.b32.xlu0 %v1605, 32
        %v2102 = vpop.permute.xlu0 %2101
        %2103 = vrot.lane.b32.xlu0 %v1613, 32
        %v2104 = vpop.permute.xlu0 %2103
        %2105 = vrot.lane.b32.xlu0 %v1621, 32
        %v2106 = vpop.permute.xlu0 %2105
        %2107 = vrot.lane.b32.xlu0 %v1629, 32
        %v2108 = vpop.permute.xlu0 %2107
        %2109 = vrot.lane.b32.xlu0 %v1606, 32
        %v2110 = vpop.permute.xlu0 %2109
        %2111 = vrot.lane.b32.xlu0 %v1614, 32
        %v2112 = vpop.permute.xlu0 %2111
        %2113 = vrot.lane.b32.xlu0 %v1622, 32
        %v2114 = vpop.permute.xlu0 %2113
        %2115 = vrot.lane.b32.xlu0 %v1630, 32
        %v2116 = vpop.permute.xlu0 %2115
        %2117 = vrot.lane.b32.xlu0 %v1607, 32
        %v2118 = vpop.permute.xlu0 %2117
        %2119 = vrot.lane.b32.xlu0 %v1615, 32
        %v2120 = vpop.permute.xlu0 %2119
        %2121 = vrot.lane.b32.xlu0 %v1623, 32
        %v2122 = vpop.permute.xlu0 %2121
        %2123 = vrot.lane.b32.xlu0 %v1631, 32
        %v2124 = vpop.permute.xlu0 %2123
        %2125 = vrot.lane.b32.xlu0 %v1608, 32
        %v2126 = vpop.permute.xlu0 %2125
        %2127 = vrot.lane.b32.xlu0 %v1616, 32
        %v2128 = vpop.permute.xlu0 %2127
        %2129 = vrot.lane.b32.xlu0 %v1624, 32
        %v2130 = vpop.permute.xlu0 %2129
        %2131 = vrot.lane.b32.xlu0 %v1632, 32
        %v2132 = vpop.permute.xlu0 %2131
        %2133 = vrot.lane.b32.xlu0 %v1609, 32
        %v2134 = vpop.permute.xlu0 %2133
        %2135 = vrot.lane.b32.xlu0 %v1617, 32
        %v2136 = vpop.permute.xlu0 %2135
        %2137 = vrot.lane.b32.xlu0 %v1625, 32
        %v2138 = vpop.permute.xlu0 %2137
        %2139 = vrot.lane.b32.xlu0 %v1633, 32
        %v2140 = vpop.permute.xlu0 %2139
        %2141 = vrot.lane.b32.xlu0 %v1610, 32
        %v2142 = vpop.permute.xlu0 %2141
        %2143 = vrot.lane.b32.xlu0 %v1618, 32
        %v2144 = vpop.permute.xlu0 %2143
        %2145 = vrot.lane.b32.xlu0 %v1626, 32
        %v2146 = vpop.permute.xlu0 %2145
        %2147 = vrot.lane.b32.xlu0 %v1634, 32
        %v2148 = vpop.permute.xlu0 %2147
        %vm2149 = vcmp.lt.s32.totalorder %v1668, 32
        %v2150 = vsel %vm2149, %v2134, %v2142
        %v2151 = vsel %vm2149, %v2136, %v2144
        %v2152 = vsel %vm2149, %v2138, %v2146
        %v2153 = vsel %vm2149, %v2140, %v2148
        %v2154 = vsel %vm2149, %v2126, %v2134
        %v2155 = vsel %vm2149, %v2128, %v2136
        %v2156 = vsel %vm2149, %v2130, %v2138
        %v2157 = vsel %vm2149, %v2132, %v2140
        %v2158 = vsel %vm2149, %v2118, %v2126
        %v2159 = vsel %vm2149, %v2120, %v2128
        %v2160 = vsel %vm2149, %v2122, %v2130
        %v2161 = vsel %vm2149, %v2124, %v2132
        %v2162 = vsel %vm2149, %v2110, %v2118
        %v2163 = vsel %vm2149, %v2112, %v2120
        %v2164 = vsel %vm2149, %v2114, %v2122
        %v2165 = vsel %vm2149, %v2116, %v2124
        %v2166 = vsel %vm2149, %v2102, %v2110
        %v2167 = vsel %vm2149, %v2104, %v2112
        %v2168 = vsel %vm2149, %v2106, %v2114
        %v2169 = vsel %vm2149, %v2108, %v2116
        %v2170 = vsel %vm2149, %v2094, %v2102
        %v2171 = vsel %vm2149, %v2096, %v2104
        %v2172 = vsel %vm2149, %v2098, %v2106
        %v2173 = vsel %vm2149, %v2100, %v2108
        %v2174 = vsel %vm2149, %v2086, %v2094
        %v2175 = vsel %vm2149, %v2088, %v2096
        %v2176 = vsel %vm2149, %v2090, %v2098
        %v2177 = vsel %vm2149, %v2092, %v2100
        %v2178 = vsel %vm2149, %v2142, %v2086
        %v2179 = vsel %vm2149, %v2144, %v2088
        %v2180 = vsel %vm2149, %v2146, %v2090
        %v2181 = vsel %vm2149, %v2148, %v2092
        %v2182 = vmul.f32 %v1724, %v1868
        %v2183 = vmul.f32 %v1725, %v1869
        %v2184 = vmul.f32 %v1726, %v1870
        %v2185 = vmul.f32 %v1727, %v1871
        %v2186 = vmul.f32 %v1728, %v1872
        %v2187 = vmul.f32 %v1729, %v1873
        %v2188 = vmul.f32 %v1730, %v1874
        %v2189 = vmul.f32 %v1731, %v1875
        %v2190 = vmul.f32 %v2178, %v2182
        %v2191 = vmul.f32 %v2174, %v2183
        %v2192 = vmul.f32 %v2170, %v2184
        %v2193 = vmul.f32 %v2166, %v2185
        %v2194 = vmul.f32 %v2162, %v2186
        %v2195 = vmul.f32 %v2158, %v2187
        %v2196 = vmul.f32 %v2154, %v2188
        %v2197 = vmul.f32 %v2150, %v2189
        %v2198 = vmul.f32 %v2179, %v2182
        %v2199 = vmul.f32 %v2175, %v2183
        %v2200 = vmul.f32 %v2171, %v2184
        %v2201 = vmul.f32 %v2167, %v2185
        %v2202 = vmul.f32 %v2163, %v2186
        %v2203 = vmul.f32 %v2159, %v2187
        %v2204 = vmul.f32 %v2155, %v2188
        %v2205 = vmul.f32 %v2151, %v2189
        %v2206 = vmul.f32 %v2180, %v2182
        %v2207 = vmul.f32 %v2176, %v2183
        %v2208 = vmul.f32 %v2172, %v2184
        %v2209 = vmul.f32 %v2168, %v2185
        %v2210 = vmul.f32 %v2164, %v2186
        %v2211 = vmul.f32 %v2160, %v2187
        %v2212 = vmul.f32 %v2156, %v2188
        %v2213 = vmul.f32 %v2152, %v2189
        %v2214 = vmul.f32 %v2181, %v2182
        %v2215 = vmul.f32 %v2177, %v2183
        %v2216 = vmul.f32 %v2173, %v2184
        %v2217 = vmul.f32 %v2169, %v2185
        %v2218 = vmul.f32 %v2165, %v2186
        %v2219 = vmul.f32 %v2161, %v2187
        %v2220 = vmul.f32 %v2157, %v2188
        %v2221 = vmul.f32 %v2153, %v2189
        %v2222 = vpack.c.bf16 %v2198, %v2190
        %v2223 = vpack.c.bf16 %v2199, %v2191
        %v2224 = vpack.c.bf16 %v2200, %v2192
        %v2225 = vpack.c.bf16 %v2201, %v2193
        %v2226 = vpack.c.bf16 %v2202, %v2194
        %v2227 = vpack.c.bf16 %v2203, %v2195
        %v2228 = vpack.c.bf16 %v2204, %v2196
        %v2229 = vpack.c.bf16 %v2205, %v2197
        %v2230 = vpack.c.bf16 %v2214, %v2206
        %v2231 = vpack.c.bf16 %v2215, %v2207
        %v2232 = vpack.c.bf16 %v2216, %v2208
        %v2233 = vpack.c.bf16 %v2217, %v2209
        %v2234 = vpack.c.bf16 %v2218, %v2210
        %v2235 = vpack.c.bf16 %v2219, %v2211
        %v2236 = vpack.c.bf16 %v2220, %v2212
        %v2237 = vpack.c.bf16 %v2221, %v2213
        %2238 = vst [vmem:[#allocation2 + $0x80] sm:$0xff] %v2222
        %2239 = vst [vmem:[#allocation2 + $0x88] sm:$0xff] %v2223
        %2240 = vst [vmem:[#allocation2 + $0x90] sm:$0xff] %v2224
        %2241 = vst [vmem:[#allocation2 + $0x98] sm:$0xff] %v2225
        %2242 = vst [vmem:[#allocation2 + $0xa0] sm:$0xff] %v2226
        %2243 = vst [vmem:[#allocation2 + $0xa8] sm:$0xff] %v2227
        %2244 = vst [vmem:[#allocation2 + $0xb0] sm:$0xff] %v2228
        %2245 = vst [vmem:[#allocation2 + $0xb8] sm:$0xff] %v2229
        %2246 = vst [vmem:[#allocation2 + $0xc0] sm:$0xff] %v2230
        %2247 = vst [vmem:[#allocation2 + $0xc8] sm:$0xff] %v2231
        %2248 = vst [vmem:[#allocation2 + $0xd0] sm:$0xff] %v2232
        %2249 = vst [vmem:[#allocation2 + $0xd8] sm:$0xff] %v2233
        %2250 = vst [vmem:[#allocation2 + $0xe0] sm:$0xff] %v2234
        %2251 = vst [vmem:[#allocation2 + $0xe8] sm:$0xff] %v2235
        %2252 = vst [vmem:[#allocation2 + $0xf0] sm:$0xff] %v2236
        %2253 = vst [vmem:[#allocation2 + $0xf8] sm:$0xff] %v2237
        %2254 = vrot.lane.b32.xlu0 %v1603, 31
        %v2255 = vpop.permute.xlu0 %2254
        %2256 = vrot.lane.b32.xlu0 %v1611, 31
        %v2257 = vpop.permute.xlu0 %2256
        %2258 = vrot.lane.b32.xlu0 %v1619, 31
        %v2259 = vpop.permute.xlu0 %2258
        %2260 = vrot.lane.b32.xlu0 %v1627, 31
        %v2261 = vpop.permute.xlu0 %2260
        %2262 = vrot.lane.b32.xlu0 %v1604, 31
        %v2263 = vpop.permute.xlu0 %2262
        %2264 = vrot.lane.b32.xlu0 %v1612, 31
        %v2265 = vpop.permute.xlu0 %2264
        %2266 = vrot.lane.b32.xlu0 %v1620, 31
        %v2267 = vpop.permute.xlu0 %2266
        %2268 = vrot.lane.b32.xlu0 %v1628, 31
        %v2269 = vpop.permute.xlu0 %2268
        %2270 = vrot.lane.b32.xlu0 %v1605, 31
        %v2271 = vpop.permute.xlu0 %2270
        %2272 = vrot.lane.b32.xlu0 %v1613, 31
        %v2273 = vpop.permute.xlu0 %2272
        %2274 = vrot.lane.b32.xlu0 %v1621, 31
        %v2275 = vpop.permute.xlu0 %2274
        %2276 = vrot.lane.b32.xlu0 %v1629, 31
        %v2277 = vpop.permute.xlu0 %2276
        %2278 = vrot.lane.b32.xlu0 %v1606, 31
        %v2279 = vpop.permute.xlu0 %2278
        %2280 = vrot.lane.b32.xlu0 %v1614, 31
        %v2281 = vpop.permute.xlu0 %2280
        %2282 = vrot.lane.b32.xlu0 %v1622, 31
        %v2283 = vpop.permute.xlu0 %2282
        %2284 = vrot.lane.b32.xlu0 %v1630, 31
        %v2285 = vpop.permute.xlu0 %2284
        %2286 = vrot.lane.b32.xlu0 %v1607, 31
        %v2287 = vpop.permute.xlu0 %2286
        %2288 = vrot.lane.b32.xlu0 %v1615, 31
        %v2289 = vpop.permute.xlu0 %2288
        %2290 = vrot.lane.b32.xlu0 %v1623, 31
        %v2291 = vpop.permute.xlu0 %2290
        %2292 = vrot.lane.b32.xlu0 %v1631, 31
        %v2293 = vpop.permute.xlu0 %2292
        %2294 = vrot.lane.b32.xlu0 %v1608, 31
        %v2295 = vpop.permute.xlu0 %2294
        %2296 = vrot.lane.b32.xlu0 %v1616, 31
        %v2297 = vpop.permute.xlu0 %2296
        %2298 = vrot.lane.b32.xlu0 %v1624, 31
        %v2299 = vpop.permute.xlu0 %2298
        %2300 = vrot.lane.b32.xlu0 %v1632, 31
        %v2301 = vpop.permute.xlu0 %2300
        %2302 = vrot.lane.b32.xlu0 %v1609, 31
        %v2303 = vpop.permute.xlu0 %2302
        %2304 = vrot.lane.b32.xlu0 %v1617, 31
        %v2305 = vpop.permute.xlu0 %2304
        %2306 = vrot.lane.b32.xlu0 %v1625, 31
        %v2307 = vpop.permute.xlu0 %2306
        %2308 = vrot.lane.b32.xlu0 %v1633, 31
        %v2309 = vpop.permute.xlu0 %2308
        %2310 = vrot.lane.b32.xlu0 %v1610, 31
        %v2311 = vpop.permute.xlu0 %2310
        %2312 = vrot.lane.b32.xlu0 %v1618, 31
        %v2313 = vpop.permute.xlu0 %2312
        %2314 = vrot.lane.b32.xlu0 %v1626, 31
        %v2315 = vpop.permute.xlu0 %2314
        %2316 = vrot.lane.b32.xlu0 %v1634, 31
        %v2317 = vpop.permute.xlu0 %2316
        %vm2318 = vcmp.lt.s32.totalorder %v1668, 31
        %v2319 = vsel %vm2318, %v2303, %v2311
        %v2320 = vsel %vm2318, %v2305, %v2313
        %v2321 = vsel %vm2318, %v2307, %v2315
        %v2322 = vsel %vm2318, %v2309, %v2317
        %v2323 = vsel %vm2318, %v2295, %v2303
        %v2324 = vsel %vm2318, %v2297, %v2305
        %v2325 = vsel %vm2318, %v2299, %v2307
        %v2326 = vsel %vm2318, %v2301, %v2309
        %v2327 = vsel %vm2318, %v2287, %v2295
        %v2328 = vsel %vm2318, %v2289, %v2297
        %v2329 = vsel %vm2318, %v2291, %v2299
        %v2330 = vsel %vm2318, %v2293, %v2301
        %v2331 = vsel %vm2318, %v2279, %v2287
        %v2332 = vsel %vm2318, %v2281, %v2289
        %v2333 = vsel %vm2318, %v2283, %v2291
        %v2334 = vsel %vm2318, %v2285, %v2293
        %v2335 = vsel %vm2318, %v2271, %v2279
        %v2336 = vsel %vm2318, %v2273, %v2281
        %v2337 = vsel %vm2318, %v2275, %v2283
        %v2338 = vsel %vm2318, %v2277, %v2285
        %v2339 = vsel %vm2318, %v2263, %v2271
        %v2340 = vsel %vm2318, %v2265, %v2273
        %v2341 = vsel %vm2318, %v2267, %v2275
        %v2342 = vsel %vm2318, %v2269, %v2277
        %v2343 = vsel %vm2318, %v2255, %v2263
        %v2344 = vsel %vm2318, %v2257, %v2265
        %v2345 = vsel %vm2318, %v2259, %v2267
        %v2346 = vsel %vm2318, %v2261, %v2269
        %v2347 = vsel %vm2318, %v2311, %v2255
        %v2348 = vsel %vm2318, %v2313, %v2257
        %v2349 = vsel %vm2318, %v2315, %v2259
        %v2350 = vsel %vm2318, %v2317, %v2261
        %v2351 = vmul.f32 %v1724, %v1908
        %v2352 = vmul.f32 %v1725, %v1909
        %v2353 = vmul.f32 %v1726, %v1910
        %v2354 = vmul.f32 %v1727, %v1911
        %v2355 = vmul.f32 %v1728, %v1912
        %v2356 = vmul.f32 %v1729, %v1913
        %v2357 = vmul.f32 %v1730, %v1914
        %v2358 = vmul.f32 %v1731, %v1915
        %v2359 = vmul.f32 %v2347, %v2351
        %v2360 = vmul.f32 %v2343, %v2352
        %v2361 = vmul.f32 %v2339, %v2353
        %v2362 = vmul.f32 %v2335, %v2354
        %v2363 = vmul.f32 %v2331, %v2355
        %v2364 = vmul.f32 %v2327, %v2356
        %v2365 = vmul.f32 %v2323, %v2357
        %v2366 = vmul.f32 %v2319, %v2358
        %v2367 = vmul.f32 %v2348, %v2351
        %v2368 = vmul.f32 %v2344, %v2352
        %v2369 = vmul.f32 %v2340, %v2353
        %v2370 = vmul.f32 %v2336, %v2354
        %v2371 = vmul.f32 %v2332, %v2355
        %v2372 = vmul.f32 %v2328, %v2356
        %v2373 = vmul.f32 %v2324, %v2357
        %v2374 = vmul.f32 %v2320, %v2358
        %v2375 = vmul.f32 %v2349, %v2351
        %v2376 = vmul.f32 %v2345, %v2352
        %v2377 = vmul.f32 %v2341, %v2353
        %v2378 = vmul.f32 %v2337, %v2354
        %v2379 = vmul.f32 %v2333, %v2355
        %v2380 = vmul.f32 %v2329, %v2356
        %v2381 = vmul.f32 %v2325, %v2357
        %v2382 = vmul.f32 %v2321, %v2358
        %v2383 = vmul.f32 %v2350, %v2351
        %v2384 = vmul.f32 %v2346, %v2352
        %v2385 = vmul.f32 %v2342, %v2353
        %v2386 = vmul.f32 %v2338, %v2354
        %v2387 = vmul.f32 %v2334, %v2355
        %v2388 = vmul.f32 %v2330, %v2356
        %v2389 = vmul.f32 %v2326, %v2357
        %v2390 = vmul.f32 %v2322, %v2358
        %v2391 = vpack.c.bf16 %v2367, %v2359
        %v2392 = vpack.c.bf16 %v2368, %v2360
        %v2393 = vpack.c.bf16 %v2369, %v2361
        %v2394 = vpack.c.bf16 %v2370, %v2362
        %v2395 = vpack.c.bf16 %v2371, %v2363
        %v2396 = vpack.c.bf16 %v2372, %v2364
        %v2397 = vpack.c.bf16 %v2373, %v2365
        %v2398 = vpack.c.bf16 %v2374, %v2366
        %v2399 = vpack.c.bf16 %v2383, %v2375
        %v2400 = vpack.c.bf16 %v2384, %v2376
        %v2401 = vpack.c.bf16 %v2385, %v2377
        %v2402 = vpack.c.bf16 %v2386, %v2378
        %v2403 = vpack.c.bf16 %v2387, %v2379
        %v2404 = vpack.c.bf16 %v2388, %v2380
        %v2405 = vpack.c.bf16 %v2389, %v2381
        %v2406 = vpack.c.bf16 %v2390, %v2382
        %2407 = vst [vmem:[#allocation2 + $0x100] sm:$0xff] %v2391
        %2408 = vst [vmem:[#allocation2 + $0x108] sm:$0xff] %v2392
        %2409 = vst [vmem:[#allocation2 + $0x110] sm:$0xff] %v2393
        %2410 = vst [vmem:[#allocation2 + $0x118] sm:$0xff] %v2394
        %2411 = vst [vmem:[#allocation2 + $0x120] sm:$0xff] %v2395
        %2412 = vst [vmem:[#allocation2 + $0x128] sm:$0xff] %v2396
        %2413 = vst [vmem:[#allocation2 + $0x130] sm:$0xff] %v2397
        %2414 = vst [vmem:[#allocation2 + $0x138] sm:$0xff] %v2398
        %2415 = vst [vmem:[#allocation2 + $0x140] sm:$0xff] %v2399
        %2416 = vst [vmem:[#allocation2 + $0x148] sm:$0xff] %v2400
        %2417 = vst [vmem:[#allocation2 + $0x150] sm:$0xff] %v2401
        %2418 = vst [vmem:[#allocation2 + $0x158] sm:$0xff] %v2402
        %2419 = vst [vmem:[#allocation2 + $0x160] sm:$0xff] %v2403
        %2420 = vst [vmem:[#allocation2 + $0x168] sm:$0xff] %v2404
        %2421 = vst [vmem:[#allocation2 + $0x170] sm:$0xff] %v2405
        %2422 = vst [vmem:[#allocation2 + $0x178] sm:$0xff] %v2406
        %2423 = vrot.lane.b32.xlu0 %v1603, 1
        %v2424 = vpop.permute.xlu0 %2423
        %2425 = vrot.lane.b32.xlu0 %v1611, 1
        %v2426 = vpop.permute.xlu0 %2425
        %2427 = vrot.lane.b32.xlu0 %v1619, 1
        %v2428 = vpop.permute.xlu0 %2427
        %2429 = vrot.lane.b32.xlu0 %v1627, 1
        %v2430 = vpop.permute.xlu0 %2429
        %2431 = vrot.lane.b32.xlu0 %v1604, 1
        %v2432 = vpop.permute.xlu0 %2431
        %2433 = vrot.lane.b32.xlu0 %v1612, 1
        %v2434 = vpop.permute.xlu0 %2433
        %2435 = vrot.lane.b32.xlu0 %v1620, 1
        %v2436 = vpop.permute.xlu0 %2435
        %2437 = vrot.lane.b32.xlu0 %v1628, 1
        %v2438 = vpop.permute.xlu0 %2437
        %2439 = vrot.lane.b32.xlu0 %v1605, 1
        %v2440 = vpop.permute.xlu0 %2439
        %2441 = vrot.lane.b32.xlu0 %v1613, 1
        %v2442 = vpop.permute.xlu0 %2441
        %2443 = vrot.lane.b32.xlu0 %v1621, 1
        %v2444 = vpop.permute.xlu0 %2443
        %2445 = vrot.lane.b32.xlu0 %v1629, 1
        %v2446 = vpop.permute.xlu0 %2445
        %2447 = vrot.lane.b32.xlu0 %v1606, 1
        %v2448 = vpop.permute.xlu0 %2447
        %2449 = vrot.lane.b32.xlu0 %v1614, 1
        %v2450 = vpop.permute.xlu0 %2449
        %2451 = vrot.lane.b32.xlu0 %v1622, 1
        %v2452 = vpop.permute.xlu0 %2451
        %2453 = vrot.lane.b32.xlu0 %v1630, 1
        %v2454 = vpop.permute.xlu0 %2453
        %2455 = vrot.lane.b32.xlu0 %v1607, 1
        %v2456 = vpop.permute.xlu0 %2455
        %2457 = vrot.lane.b32.xlu0 %v1615, 1
        %v2458 = vpop.permute.xlu0 %2457
        %2459 = vrot.lane.b32.xlu0 %v1623, 1
        %v2460 = vpop.permute.xlu0 %2459
        %2461 = vrot.lane.b32.xlu0 %v1631, 1
        %v2462 = vpop.permute.xlu0 %2461
        %2463 = vrot.lane.b32.xlu0 %v1608, 1
        %v2464 = vpop.permute.xlu0 %2463
        %2465 = vrot.lane.b32.xlu0 %v1616, 1
        %v2466 = vpop.permute.xlu0 %2465
        %2467 = vrot.lane.b32.xlu0 %v1624, 1
        %v2468 = vpop.permute.xlu0 %2467
        %2469 = vrot.lane.b32.xlu0 %v1632, 1
        %v2470 = vpop.permute.xlu0 %2469
        %2471 = vrot.lane.b32.xlu0 %v1609, 1
        %v2472 = vpop.permute.xlu0 %2471
        %2473 = vrot.lane.b32.xlu0 %v1617, 1
        %v2474 = vpop.permute.xlu0 %2473
        %2475 = vrot.lane.b32.xlu0 %v1625, 1
        %v2476 = vpop.permute.xlu0 %2475
        %2477 = vrot.lane.b32.xlu0 %v1633, 1
        %v2478 = vpop.permute.xlu0 %2477
        %2479 = vrot.lane.b32.xlu0 %v1610, 1
        %v2480 = vpop.permute.xlu0 %2479
        %2481 = vrot.lane.b32.xlu0 %v1618, 1
        %v2482 = vpop.permute.xlu0 %2481
        %2483 = vrot.lane.b32.xlu0 %v1626, 1
        %v2484 = vpop.permute.xlu0 %2483
        %2485 = vrot.lane.b32.xlu0 %v1634, 1
        %v2486 = vpop.permute.xlu0 %2485
        %vm2487 = vcmp.lt.s32.totalorder %v1668, 1
        %v2488 = vsel %vm2487, %v2472, %v2480
        %v2489 = vsel %vm2487, %v2474, %v2482
        %v2490 = vsel %vm2487, %v2476, %v2484
        %v2491 = vsel %vm2487, %v2478, %v2486
        %v2492 = vsel %vm2487, %v2464, %v2472
        %v2493 = vsel %vm2487, %v2466, %v2474
        %v2494 = vsel %vm2487, %v2468, %v2476
        %v2495 = vsel %vm2487, %v2470, %v2478
        %v2496 = vsel %vm2487, %v2456, %v2464
        %v2497 = vsel %vm2487, %v2458, %v2466
        %v2498 = vsel %vm2487, %v2460, %v2468
        %v2499 = vsel %vm2487, %v2462, %v2470
        %v2500 = vsel %vm2487, %v2448, %v2456
        %v2501 = vsel %vm2487, %v2450, %v2458
        %v2502 = vsel %vm2487, %v2452, %v2460
        %v2503 = vsel %vm2487, %v2454, %v2462
        %v2504 = vsel %vm2487, %v2440, %v2448
        %v2505 = vsel %vm2487, %v2442, %v2450
        %v2506 = vsel %vm2487, %v2444, %v2452
        %v2507 = vsel %vm2487, %v2446, %v2454
        %v2508 = vsel %vm2487, %v2432, %v2440
        %v2509 = vsel %vm2487, %v2434, %v2442
        %v2510 = vsel %vm2487, %v2436, %v2444
        %v2511 = vsel %vm2487, %v2438, %v2446
        %v2512 = vsel %vm2487, %v2424, %v2432
        %v2513 = vsel %vm2487, %v2426, %v2434
        %v2514 = vsel %vm2487, %v2428, %v2436
        %v2515 = vsel %vm2487, %v2430, %v2438
        %v2516 = vsel %vm2487, %v2480, %v2424
        %v2517 = vsel %vm2487, %v2482, %v2426
        %v2518 = vsel %vm2487, %v2484, %v2428
        %v2519 = vsel %vm2487, %v2486, %v2430
        %v2520 = vmul.f32 %v1756, %v1836
        %v2521 = vmul.f32 %v1757, %v1837
        %v2522 = vmul.f32 %v1758, %v1838
        %v2523 = vmul.f32 %v1759, %v1839
        %v2524 = vmul.f32 %v1760, %v1840
        %v2525 = vmul.f32 %v1761, %v1841
        %v2526 = vmul.f32 %v1762, %v1842
        %v2527 = vmul.f32 %v1763, %v1843
        %v2528 = vmul.f32 %v2516, %v2520
        %v2529 = vmul.f32 %v2512, %v2521
        %v2530 = vmul.f32 %v2508, %v2522
        %v2531 = vmul.f32 %v2504, %v2523
        %v2532 = vmul.f32 %v2500, %v2524
        %v2533 = vmul.f32 %v2496, %v2525
        %v2534 = vmul.f32 %v2492, %v2526
        %v2535 = vmul.f32 %v2488, %v2527
        %v2536 = vmul.f32 %v2517, %v2520
        %v2537 = vmul.f32 %v2513, %v2521
        %v2538 = vmul.f32 %v2509, %v2522
        %v2539 = vmul.f32 %v2505, %v2523
        %v2540 = vmul.f32 %v2501, %v2524
        %v2541 = vmul.f32 %v2497, %v2525
        %v2542 = vmul.f32 %v2493, %v2526
        %v2543 = vmul.f32 %v2489, %v2527
        %v2544 = vmul.f32 %v2518, %v2520
        %v2545 = vmul.f32 %v2514, %v2521
        %v2546 = vmul.f32 %v2510, %v2522
        %v2547 = vmul.f32 %v2506, %v2523
        %v2548 = vmul.f32 %v2502, %v2524
        %v2549 = vmul.f32 %v2498, %v2525
        %v2550 = vmul.f32 %v2494, %v2526
        %v2551 = vmul.f32 %v2490, %v2527
        %v2552 = vmul.f32 %v2519, %v2520
        %v2553 = vmul.f32 %v2515, %v2521
        %v2554 = vmul.f32 %v2511, %v2522
        %v2555 = vmul.f32 %v2507, %v2523
        %v2556 = vmul.f32 %v2503, %v2524
        %v2557 = vmul.f32 %v2499, %v2525
        %v2558 = vmul.f32 %v2495, %v2526
        %v2559 = vmul.f32 %v2491, %v2527
        %v2560 = vpack.c.bf16 %v2536, %v2528
        %v2561 = vpack.c.bf16 %v2537, %v2529
        %v2562 = vpack.c.bf16 %v2538, %v2530
        %v2563 = vpack.c.bf16 %v2539, %v2531
        %v2564 = vpack.c.bf16 %v2540, %v2532
        %v2565 = vpack.c.bf16 %v2541, %v2533
        %v2566 = vpack.c.bf16 %v2542, %v2534
        %v2567 = vpack.c.bf16 %v2543, %v2535
        %v2568 = vpack.c.bf16 %v2552, %v2544
        %v2569 = vpack.c.bf16 %v2553, %v2545
        %v2570 = vpack.c.bf16 %v2554, %v2546
        %v2571 = vpack.c.bf16 %v2555, %v2547
        %v2572 = vpack.c.bf16 %v2556, %v2548
        %v2573 = vpack.c.bf16 %v2557, %v2549
        %v2574 = vpack.c.bf16 %v2558, %v2550
        %v2575 = vpack.c.bf16 %v2559, %v2551
        %2576 = vst [vmem:[#allocation2 + $0x180] sm:$0xff] %v2560
        %2577 = vst [vmem:[#allocation2 + $0x188] sm:$0xff] %v2561
        %2578 = vst [vmem:[#allocation2 + $0x190] sm:$0xff] %v2562
        %2579 = vst [vmem:[#allocation2 + $0x198] sm:$0xff] %v2563
        %2580 = vst [vmem:[#allocation2 + $0x1a0] sm:$0xff] %v2564
        %2581 = vst [vmem:[#allocation2 + $0x1a8] sm:$0xff] %v2565
        %2582 = vst [vmem:[#allocation2 + $0x1b0] sm:$0xff] %v2566
        %2583 = vst [vmem:[#allocation2 + $0x1b8] sm:$0xff] %v2567
        %2584 = vst [vmem:[#allocation2 + $0x1c0] sm:$0xff] %v2568
        %2585 = vst [vmem:[#allocation2 + $0x1c8] sm:$0xff] %v2569
        %2586 = vst [vmem:[#allocation2 + $0x1d0] sm:$0xff] %v2570
        %2587 = vst [vmem:[#allocation2 + $0x1d8] sm:$0xff] %v2571
        %2588 = vst [vmem:[#allocation2 + $0x1e0] sm:$0xff] %v2572
        %2589 = vst [vmem:[#allocation2 + $0x1e8] sm:$0xff] %v2573
        %2590 = vst [vmem:[#allocation2 + $0x1f0] sm:$0xff] %v2574
        %2591 = vst [vmem:[#allocation2 + $0x1f8] sm:$0xff] %v2575
        %v2592 = vmul.f32 %v1756, %v1868
        %v2593 = vmul.f32 %v1757, %v1869
        %v2594 = vmul.f32 %v1758, %v1870
        %v2595 = vmul.f32 %v1759, %v1871
        %v2596 = vmul.f32 %v1760, %v1872
        %v2597 = vmul.f32 %v1761, %v1873
        %v2598 = vmul.f32 %v1762, %v1874
        %v2599 = vmul.f32 %v1763, %v1875
        %v2600 = vmul.f32 %v1603, %v2592
        %v2601 = vmul.f32 %v1604, %v2593
        %v2602 = vmul.f32 %v1605, %v2594
        %v2603 = vmul.f32 %v1606, %v2595
        %v2604 = vmul.f32 %v1607, %v2596
        %v2605 = vmul.f32 %v1608, %v2597
        %v2606 = vmul.f32 %v1609, %v2598
        %v2607 = vmul.f32 %v1610, %v2599
        %v2608 = vmul.f32 %v1611, %v2592
        %v2609 = vmul.f32 %v1612, %v2593
        %v2610 = vmul.f32 %v1613, %v2594
        %v2611 = vmul.f32 %v1614, %v2595
        %v2612 = vmul.f32 %v1615, %v2596
        %v2613 = vmul.f32 %v1616, %v2597
        %v2614 = vmul.f32 %v1617, %v2598
        %v2615 = vmul.f32 %v1618, %v2599
        %v2616 = vmul.f32 %v1619, %v2592
        %v2617 = vmul.f32 %v1620, %v2593
        %v2618 = vmul.f32 %v1621, %v2594
        %v2619 = vmul.f32 %v1622, %v2595
        %v2620 = vmul.f32 %v1623, %v2596
        %v2621 = vmul.f32 %v1624, %v2597
        %v2622 = vmul.f32 %v1625, %v2598
        %v2623 = vmul.f32 %v1626, %v2599
        %v2624 = vmul.f32 %v1627, %v2592
        %v2625 = vmul.f32 %v1628, %v2593
        %v2626 = vmul.f32 %v1629, %v2594
        %v2627 = vmul.f32 %v1630, %v2595
        %v2628 = vmul.f32 %v1631, %v2596
        %v2629 = vmul.f32 %v1632, %v2597
        %v2630 = vmul.f32 %v1633, %v2598
        %v2631 = vmul.f32 %v1634, %v2599
        %v2632 = vpack.c.bf16 %v2608, %v2600
        %v2633 = vpack.c.bf16 %v2609, %v2601
        %v2634 = vpack.c.bf16 %v2610, %v2602
        %v2635 = vpack.c.bf16 %v2611, %v2603
        %v2636 = vpack.c.bf16 %v2612, %v2604
        %v2637 = vpack.c.bf16 %v2613, %v2605
        %v2638 = vpack.c.bf16 %v2614, %v2606
        %v2639 = vpack.c.bf16 %v2615, %v2607
        %v2640 = vpack.c.bf16 %v2624, %v2616
        %v2641 = vpack.c.bf16 %v2625, %v2617
        %v2642 = vpack.c.bf16 %v2626, %v2618
        %v2643 = vpack.c.bf16 %v2627, %v2619
        %v2644 = vpack.c.bf16 %v2628, %v2620
        %v2645 = vpack.c.bf16 %v2629, %v2621
        %v2646 = vpack.c.bf16 %v2630, %v2622
        %v2647 = vpack.c.bf16 %v2631, %v2623
        %2648 = vst [vmem:[#allocation2 + $0x200] sm:$0xff] %v2632
        %2649 = vst [vmem:[#allocation2 + $0x208] sm:$0xff] %v2633
        %2650 = vst [vmem:[#allocation2 + $0x210] sm:$0xff] %v2634
        %2651 = vst [vmem:[#allocation2 + $0x218] sm:$0xff] %v2635
        %2652 = vst [vmem:[#allocation2 + $0x220] sm:$0xff] %v2636
        %2653 = vst [vmem:[#allocation2 + $0x228] sm:$0xff] %v2637
        %2654 = vst [vmem:[#allocation2 + $0x230] sm:$0xff] %v2638
        %2655 = vst [vmem:[#allocation2 + $0x238] sm:$0xff] %v2639
        %2656 = vst [vmem:[#allocation2 + $0x240] sm:$0xff] %v2640
        %2657 = vst [vmem:[#allocation2 + $0x248] sm:$0xff] %v2641
        %2658 = vst [vmem:[#allocation2 + $0x250] sm:$0xff] %v2642
        %2659 = vst [vmem:[#allocation2 + $0x258] sm:$0xff] %v2643
        %2660 = vst [vmem:[#allocation2 + $0x260] sm:$0xff] %v2644
        %2661 = vst [vmem:[#allocation2 + $0x268] sm:$0xff] %v2645
        %2662 = vst [vmem:[#allocation2 + $0x270] sm:$0xff] %v2646
        %2663 = vst [vmem:[#allocation2 + $0x278] sm:$0xff] %v2647
        %2664 = vrot.lane.b32.xlu0 %v1603, 127
        %v2665 = vpop.permute.xlu0 %2664
        %2666 = vrot.lane.b32.xlu0 %v1611, 127
        %v2667 = vpop.permute.xlu0 %2666
        %2668 = vrot.lane.b32.xlu0 %v1619, 127
        %v2669 = vpop.permute.xlu0 %2668
        %2670 = vrot.lane.b32.xlu0 %v1627, 127
        %v2671 = vpop.permute.xlu0 %2670
        %2672 = vrot.lane.b32.xlu0 %v1604, 127
        %v2673 = vpop.permute.xlu0 %2672
        %2674 = vrot.lane.b32.xlu0 %v1612, 127
        %v2675 = vpop.permute.xlu0 %2674
        %2676 = vrot.lane.b32.xlu0 %v1620, 127
        %v2677 = vpop.permute.xlu0 %2676
        %2678 = vrot.lane.b32.xlu0 %v1628, 127
        %v2679 = vpop.permute.xlu0 %2678
        %2680 = vrot.lane.b32.xlu0 %v1605, 127
        %v2681 = vpop.permute.xlu0 %2680
        %2682 = vrot.lane.b32.xlu0 %v1613, 127
        %v2683 = vpop.permute.xlu0 %2682
        %2684 = vrot.lane.b32.xlu0 %v1621, 127
        %v2685 = vpop.permute.xlu0 %2684
        %2686 = vrot.lane.b32.xlu0 %v1629, 127
        %v2687 = vpop.permute.xlu0 %2686
        %2688 = vrot.lane.b32.xlu0 %v1606, 127
        %v2689 = vpop.permute.xlu0 %2688
        %2690 = vrot.lane.b32.xlu0 %v1614, 127
        %v2691 = vpop.permute.xlu0 %2690
        %2692 = vrot.lane.b32.xlu0 %v1622, 127
        %v2693 = vpop.permute.xlu0 %2692
        %2694 = vrot.lane.b32.xlu0 %v1630, 127
        %v2695 = vpop.permute.xlu0 %2694
        %2696 = vrot.lane.b32.xlu0 %v1607, 127
        %v2697 = vpop.permute.xlu0 %2696
        %2698 = vrot.lane.b32.xlu0 %v1615, 127
        %v2699 = vpop.permute.xlu0 %2698
        %2700 = vrot.lane.b32.xlu0 %v1623, 127
        %v2701 = vpop.permute.xlu0 %2700
        %2702 = vrot.lane.b32.xlu0 %v1631, 127
        %v2703 = vpop.permute.xlu0 %2702
        %2704 = vrot.lane.b32.xlu0 %v1608, 127
        %v2705 = vpop.permute.xlu0 %2704
        %2706 = vrot.lane.b32.xlu0 %v1616, 127
        %v2707 = vpop.permute.xlu0 %2706
        %2708 = vrot.lane.b32.xlu0 %v1624, 127
        %v2709 = vpop.permute.xlu0 %2708
        %2710 = vrot.lane.b32.xlu0 %v1632, 127
        %v2711 = vpop.permute.xlu0 %2710
        %2712 = vrot.lane.b32.xlu0 %v1609, 127
        %v2713 = vpop.permute.xlu0 %2712
        %2714 = vrot.lane.b32.xlu0 %v1617, 127
        %v2715 = vpop.permute.xlu0 %2714
        %2716 = vrot.lane.b32.xlu0 %v1625, 127
        %v2717 = vpop.permute.xlu0 %2716
        %2718 = vrot.lane.b32.xlu0 %v1633, 127
        %v2719 = vpop.permute.xlu0 %2718
        %2720 = vrot.lane.b32.xlu0 %v1610, 127
        %v2721 = vpop.permute.xlu0 %2720
        %2722 = vrot.lane.b32.xlu0 %v1618, 127
        %v2723 = vpop.permute.xlu0 %2722
        %2724 = vrot.lane.b32.xlu0 %v1626, 127
        %v2725 = vpop.permute.xlu0 %2724
        %2726 = vrot.lane.b32.xlu0 %v1634, 127
        %v2727 = vpop.permute.xlu0 %2726
        %vm2728 = vcmp.lt.s32.totalorder %v1668, 127
        %v2729 = vsel %vm2728, %v2713, %v2721
        %v2730 = vsel %vm2728, %v2715, %v2723
        %v2731 = vsel %vm2728, %v2717, %v2725
        %v2732 = vsel %vm2728, %v2719, %v2727
        %v2733 = vsel %vm2728, %v2705, %v2713
        %v2734 = vsel %vm2728, %v2707, %v2715
        %v2735 = vsel %vm2728, %v2709, %v2717
        %v2736 = vsel %vm2728, %v2711, %v2719
        %v2737 = vsel %vm2728, %v2697, %v2705
        %v2738 = vsel %vm2728, %v2699, %v2707
        %v2739 = vsel %vm2728, %v2701, %v2709
        %v2740 = vsel %vm2728, %v2703, %v2711
        %v2741 = vsel %vm2728, %v2689, %v2697
        %v2742 = vsel %vm2728, %v2691, %v2699
        %v2743 = vsel %vm2728, %v2693, %v2701
        %v2744 = vsel %vm2728, %v2695, %v2703
        %v2745 = vsel %vm2728, %v2681, %v2689
        %v2746 = vsel %vm2728, %v2683, %v2691
        %v2747 = vsel %vm2728, %v2685, %v2693
        %v2748 = vsel %vm2728, %v2687, %v2695
        %v2749 = vsel %vm2728, %v2673, %v2681
        %v2750 = vsel %vm2728, %v2675, %v2683
        %v2751 = vsel %vm2728, %v2677, %v2685
        %v2752 = vsel %vm2728, %v2679, %v2687
        %v2753 = vsel %vm2728, %v2665, %v2673
        %v2754 = vsel %vm2728, %v2667, %v2675
        %v2755 = vsel %vm2728, %v2669, %v2677
        %v2756 = vsel %vm2728, %v2671, %v2679
        %v2757 = vsel %vm2728, %v2721, %v2665
        %v2758 = vsel %vm2728, %v2723, %v2667
        %v2759 = vsel %vm2728, %v2725, %v2669
        %v2760 = vsel %vm2728, %v2727, %v2671
        %v2761 = vmul.f32 %v1756, %v1908
        %v2762 = vmul.f32 %v1757, %v1909
        %v2763 = vmul.f32 %v1758, %v1910
        %v2764 = vmul.f32 %v1759, %v1911
        %v2765 = vmul.f32 %v1760, %v1912
        %v2766 = vmul.f32 %v1761, %v1913
        %v2767 = vmul.f32 %v1762, %v1914
        %v2768 = vmul.f32 %v1763, %v1915
        %v2769 = vmul.f32 %v2753, %v2761
        %v2770 = vmul.f32 %v2749, %v2762
        %v2771 = vmul.f32 %v2745, %v2763
        %v2772 = vmul.f32 %v2741, %v2764
        %v2773 = vmul.f32 %v2737, %v2765
        %v2774 = vmul.f32 %v2733, %v2766
        %v2775 = vmul.f32 %v2729, %v2767
        %v2776 = vmul.f32 %v2757, %v2768
        %v2777 = vmul.f32 %v2754, %v2761
        %v2778 = vmul.f32 %v2750, %v2762
        %v2779 = vmul.f32 %v2746, %v2763
        %v2780 = vmul.f32 %v2742, %v2764
        %v2781 = vmul.f32 %v2738, %v2765
        %v2782 = vmul.f32 %v2734, %v2766
        %v2783 = vmul.f32 %v2730, %v2767
        %v2784 = vmul.f32 %v2758, %v2768
        %v2785 = vmul.f32 %v2755, %v2761
        %v2786 = vmul.f32 %v2751, %v2762
        %v2787 = vmul.f32 %v2747, %v2763
        %v2788 = vmul.f32 %v2743, %v2764
        %v2789 = vmul.f32 %v2739, %v2765
        %v2790 = vmul.f32 %v2735, %v2766
        %v2791 = vmul.f32 %v2731, %v2767
        %v2792 = vmul.f32 %v2759, %v2768
        %v2793 = vmul.f32 %v2756, %v2761
        %v2794 = vmul.f32 %v2752, %v2762
        %v2795 = vmul.f32 %v2748, %v2763
        %v2796 = vmul.f32 %v2744, %v2764
        %v2797 = vmul.f32 %v2740, %v2765
        %v2798 = vmul.f32 %v2736, %v2766
        %v2799 = vmul.f32 %v2732, %v2767
        %v2800 = vmul.f32 %v2760, %v2768
        %v2801 = vpack.c.bf16 %v2777, %v2769
        %v2802 = vpack.c.bf16 %v2778, %v2770
        %v2803 = vpack.c.bf16 %v2779, %v2771
        %v2804 = vpack.c.bf16 %v2780, %v2772
        %v2805 = vpack.c.bf16 %v2781, %v2773
        %v2806 = vpack.c.bf16 %v2782, %v2774
        %v2807 = vpack.c.bf16 %v2783, %v2775
        %v2808 = vpack.c.bf16 %v2784, %v2776
        %v2809 = vpack.c.bf16 %v2793, %v2785
        %v2810 = vpack.c.bf16 %v2794, %v2786
        %v2811 = vpack.c.bf16 %v2795, %v2787
        %v2812 = vpack.c.bf16 %v2796, %v2788
        %v2813 = vpack.c.bf16 %v2797, %v2789
        %v2814 = vpack.c.bf16 %v2798, %v2790
        %v2815 = vpack.c.bf16 %v2799, %v2791
        %v2816 = vpack.c.bf16 %v2800, %v2792
        %2817 = vst [vmem:[#allocation2 + $0x280] sm:$0xff] %v2801
        %2818 = vst [vmem:[#allocation2 + $0x288] sm:$0xff] %v2802
        %2819 = vst [vmem:[#allocation2 + $0x290] sm:$0xff] %v2803
        %2820 = vst [vmem:[#allocation2 + $0x298] sm:$0xff] %v2804
        %2821 = vst [vmem:[#allocation2 + $0x2a0] sm:$0xff] %v2805
        %2822 = vst [vmem:[#allocation2 + $0x2a8] sm:$0xff] %v2806
        %2823 = vst [vmem:[#allocation2 + $0x2b0] sm:$0xff] %v2807
        %2824 = vst [vmem:[#allocation2 + $0x2b8] sm:$0xff] %v2808
        %2825 = vst [vmem:[#allocation2 + $0x2c0] sm:$0xff] %v2809
        %2826 = vst [vmem:[#allocation2 + $0x2c8] sm:$0xff] %v2810
        %2827 = vst [vmem:[#allocation2 + $0x2d0] sm:$0xff] %v2811
        %2828 = vst [vmem:[#allocation2 + $0x2d8] sm:$0xff] %v2812
        %2829 = vst [vmem:[#allocation2 + $0x2e0] sm:$0xff] %v2813
        %2830 = vst [vmem:[#allocation2 + $0x2e8] sm:$0xff] %v2814
        %2831 = vst [vmem:[#allocation2 + $0x2f0] sm:$0xff] %v2815
        %2832 = vst [vmem:[#allocation2 + $0x2f8] sm:$0xff] %v2816
        %2833 = vrot.lane.b32.xlu0 %v1603, 97
        %v2834 = vpop.permute.xlu0 %2833
        %2835 = vrot.lane.b32.xlu0 %v1611, 97
        %v2836 = vpop.permute.xlu0 %2835
        %2837 = vrot.lane.b32.xlu0 %v1619, 97
        %v2838 = vpop.permute.xlu0 %2837
        %2839 = vrot.lane.b32.xlu0 %v1627, 97
        %v2840 = vpop.permute.xlu0 %2839
        %2841 = vrot.lane.b32.xlu0 %v1604, 97
        %v2842 = vpop.permute.xlu0 %2841
        %2843 = vrot.lane.b32.xlu0 %v1612, 97
        %v2844 = vpop.permute.xlu0 %2843
        %2845 = vrot.lane.b32.xlu0 %v1620, 97
        %v2846 = vpop.permute.xlu0 %2845
        %2847 = vrot.lane.b32.xlu0 %v1628, 97
        %v2848 = vpop.permute.xlu0 %2847
        %2849 = vrot.lane.b32.xlu0 %v1605, 97
        %v2850 = vpop.permute.xlu0 %2849
        %2851 = vrot.lane.b32.xlu0 %v1613, 97
        %v2852 = vpop.permute.xlu0 %2851
        %2853 = vrot.lane.b32.xlu0 %v1621, 97
        %v2854 = vpop.permute.xlu0 %2853
        %2855 = vrot.lane.b32.xlu0 %v1629, 97
        %v2856 = vpop.permute.xlu0 %2855
        %2857 = vrot.lane.b32.xlu0 %v1606, 97
        %v2858 = vpop.permute.xlu0 %2857
        %2859 = vrot.lane.b32.xlu0 %v1614, 97
        %v2860 = vpop.permute.xlu0 %2859
        %2861 = vrot.lane.b32.xlu0 %v1622, 97
        %v2862 = vpop.permute.xlu0 %2861
        %2863 = vrot.lane.b32.xlu0 %v1630, 97
        %v2864 = vpop.permute.xlu0 %2863
        %2865 = vrot.lane.b32.xlu0 %v1607, 97
        %v2866 = vpop.permute.xlu0 %2865
        %2867 = vrot.lane.b32.xlu0 %v1615, 97
        %v2868 = vpop.permute.xlu0 %2867
        %2869 = vrot.lane.b32.xlu0 %v1623, 97
        %v2870 = vpop.permute.xlu0 %2869
        %2871 = vrot.lane.b32.xlu0 %v1631, 97
        %v2872 = vpop.permute.xlu0 %2871
        %2873 = vrot.lane.b32.xlu0 %v1608, 97
        %v2874 = vpop.permute.xlu0 %2873
        %2875 = vrot.lane.b32.xlu0 %v1616, 97
        %v2876 = vpop.permute.xlu0 %2875
        %2877 = vrot.lane.b32.xlu0 %v1624, 97
        %v2878 = vpop.permute.xlu0 %2877
        %2879 = vrot.lane.b32.xlu0 %v1632, 97
        %v2880 = vpop.permute.xlu0 %2879
        %2881 = vrot.lane.b32.xlu0 %v1609, 97
        %v2882 = vpop.permute.xlu0 %2881
        %2883 = vrot.lane.b32.xlu0 %v1617, 97
        %v2884 = vpop.permute.xlu0 %2883
        %2885 = vrot.lane.b32.xlu0 %v1625, 97
        %v2886 = vpop.permute.xlu0 %2885
        %2887 = vrot.lane.b32.xlu0 %v1633, 97
        %v2888 = vpop.permute.xlu0 %2887
        %2889 = vrot.lane.b32.xlu0 %v1610, 97
        %v2890 = vpop.permute.xlu0 %2889
        %2891 = vrot.lane.b32.xlu0 %v1618, 97
        %v2892 = vpop.permute.xlu0 %2891
        %2893 = vrot.lane.b32.xlu0 %v1626, 97
        %v2894 = vpop.permute.xlu0 %2893
        %2895 = vrot.lane.b32.xlu0 %v1634, 97
        %v2896 = vpop.permute.xlu0 %2895
        %vm2897 = vcmp.lt.s32.totalorder %v1668, 97
        %v2898 = vsel %vm2897, %v2882, %v2890
        %v2899 = vsel %vm2897, %v2884, %v2892
        %v2900 = vsel %vm2897, %v2886, %v2894
        %v2901 = vsel %vm2897, %v2888, %v2896
        %v2902 = vsel %vm2897, %v2874, %v2882
        %v2903 = vsel %vm2897, %v2876, %v2884
        %v2904 = vsel %vm2897, %v2878, %v2886
        %v2905 = vsel %vm2897, %v2880, %v2888
        %v2906 = vsel %vm2897, %v2866, %v2874
        %v2907 = vsel %vm2897, %v2868, %v2876
        %v2908 = vsel %vm2897, %v2870, %v2878
        %v2909 = vsel %vm2897, %v2872, %v2880
        %v2910 = vsel %vm2897, %v2858, %v2866
        %v2911 = vsel %vm2897, %v2860, %v2868
        %v2912 = vsel %vm2897, %v2862, %v2870
        %v2913 = vsel %vm2897, %v2864, %v2872
        %v2914 = vsel %vm2897, %v2850, %v2858
        %v2915 = vsel %vm2897, %v2852, %v2860
        %v2916 = vsel %vm2897, %v2854, %v2862
        %v2917 = vsel %vm2897, %v2856, %v2864
        %v2918 = vsel %vm2897, %v2842, %v2850
        %v2919 = vsel %vm2897, %v2844, %v2852
        %v2920 = vsel %vm2897, %v2846, %v2854
        %v2921 = vsel %vm2897, %v2848, %v2856
        %v2922 = vsel %vm2897, %v2834, %v2842
        %v2923 = vsel %vm2897, %v2836, %v2844
        %v2924 = vsel %vm2897, %v2838, %v2846
        %v2925 = vsel %vm2897, %v2840, %v2848
        %v2926 = vsel %vm2897, %v2890, %v2834
        %v2927 = vsel %vm2897, %v2892, %v2836
        %v2928 = vsel %vm2897, %v2894, %v2838
        %v2929 = vsel %vm2897, %v2896, %v2840
        %v2930 = vmul.f32 %v1796, %v1836
        %v2931 = vmul.f32 %v1797, %v1837
        %v2932 = vmul.f32 %v1798, %v1838
        %v2933 = vmul.f32 %v1799, %v1839
        %v2934 = vmul.f32 %v1800, %v1840
        %v2935 = vmul.f32 %v1801, %v1841
        %v2936 = vmul.f32 %v1802, %v1842
        %v2937 = vmul.f32 %v1803, %v1843
        %v2938 = vmul.f32 %v2922, %v2930
        %v2939 = vmul.f32 %v2918, %v2931
        %v2940 = vmul.f32 %v2914, %v2932
        %v2941 = vmul.f32 %v2910, %v2933
        %v2942 = vmul.f32 %v2906, %v2934
        %v2943 = vmul.f32 %v2902, %v2935
        %v2944 = vmul.f32 %v2898, %v2936
        %v2945 = vmul.f32 %v2926, %v2937
        %v2946 = vmul.f32 %v2923, %v2930
        %v2947 = vmul.f32 %v2919, %v2931
        %v2948 = vmul.f32 %v2915, %v2932
        %v2949 = vmul.f32 %v2911, %v2933
        %v2950 = vmul.f32 %v2907, %v2934
        %v2951 = vmul.f32 %v2903, %v2935
        %v2952 = vmul.f32 %v2899, %v2936
        %v2953 = vmul.f32 %v2927, %v2937
        %v2954 = vmul.f32 %v2924, %v2930
        %v2955 = vmul.f32 %v2920, %v2931
        %v2956 = vmul.f32 %v2916, %v2932
        %v2957 = vmul.f32 %v2912, %v2933
        %v2958 = vmul.f32 %v2908, %v2934
        %v2959 = vmul.f32 %v2904, %v2935
        %v2960 = vmul.f32 %v2900, %v2936
        %v2961 = vmul.f32 %v2928, %v2937
        %v2962 = vmul.f32 %v2925, %v2930
        %v2963 = vmul.f32 %v2921, %v2931
        %v2964 = vmul.f32 %v2917, %v2932
        %v2965 = vmul.f32 %v2913, %v2933
        %v2966 = vmul.f32 %v2909, %v2934
        %v2967 = vmul.f32 %v2905, %v2935
        %v2968 = vmul.f32 %v2901, %v2936
        %v2969 = vmul.f32 %v2929, %v2937
        %v2970 = vpack.c.bf16 %v2946, %v2938
        %v2971 = vpack.c.bf16 %v2947, %v2939
        %v2972 = vpack.c.bf16 %v2948, %v2940
        %v2973 = vpack.c.bf16 %v2949, %v2941
        %v2974 = vpack.c.bf16 %v2950, %v2942
        %v2975 = vpack.c.bf16 %v2951, %v2943
        %v2976 = vpack.c.bf16 %v2952, %v2944
        %v2977 = vpack.c.bf16 %v2953, %v2945
        %v2978 = vpack.c.bf16 %v2962, %v2954
        %v2979 = vpack.c.bf16 %v2963, %v2955
        %v2980 = vpack.c.bf16 %v2964, %v2956
        %v2981 = vpack.c.bf16 %v2965, %v2957
        %v2982 = vpack.c.bf16 %v2966, %v2958
        %v2983 = vpack.c.bf16 %v2967, %v2959
        %v2984 = vpack.c.bf16 %v2968, %v2960
        %v2985 = vpack.c.bf16 %v2969, %v2961
        %2986 = vst [vmem:[#allocation2 + $0x300] sm:$0xff] %v2970
        %2987 = vst [vmem:[#allocation2 + $0x308] sm:$0xff] %v2971
        %2988 = vst [vmem:[#allocation2 + $0x310] sm:$0xff] %v2972
        %2989 = vst [vmem:[#allocation2 + $0x318] sm:$0xff] %v2973
        %2990 = vst [vmem:[#allocation2 + $0x320] sm:$0xff] %v2974
        %2991 = vst [vmem:[#allocation2 + $0x328] sm:$0xff] %v2975
        %2992 = vst [vmem:[#allocation2 + $0x330] sm:$0xff] %v2976
        %2993 = vst [vmem:[#allocation2 + $0x338] sm:$0xff] %v2977
        %2994 = vst [vmem:[#allocation2 + $0x340] sm:$0xff] %v2978
        %2995 = vst [vmem:[#allocation2 + $0x348] sm:$0xff] %v2979
        %2996 = vst [vmem:[#allocation2 + $0x350] sm:$0xff] %v2980
        %2997 = vst [vmem:[#allocation2 + $0x358] sm:$0xff] %v2981
        %2998 = vst [vmem:[#allocation2 + $0x360] sm:$0xff] %v2982
        %2999 = vst [vmem:[#allocation2 + $0x368] sm:$0xff] %v2983
        %3000 = vst [vmem:[#allocation2 + $0x370] sm:$0xff] %v2984
        %3001 = vst [vmem:[#allocation2 + $0x378] sm:$0xff] %v2985
        %3002 = vrot.lane.b32.xlu0 %v1603, 96
        %v3003 = vpop.permute.xlu0 %3002
        %3004 = vrot.lane.b32.xlu0 %v1611, 96
        %v3005 = vpop.permute.xlu0 %3004
        %3006 = vrot.lane.b32.xlu0 %v1619, 96
        %v3007 = vpop.permute.xlu0 %3006
        %3008 = vrot.lane.b32.xlu0 %v1627, 96
        %v3009 = vpop.permute.xlu0 %3008
        %3010 = vrot.lane.b32.xlu0 %v1604, 96
        %v3011 = vpop.permute.xlu0 %3010
        %3012 = vrot.lane.b32.xlu0 %v1612, 96
        %v3013 = vpop.permute.xlu0 %3012
        %3014 = vrot.lane.b32.xlu0 %v1620, 96
        %v3015 = vpop.permute.xlu0 %3014
        %3016 = vrot.lane.b32.xlu0 %v1628, 96
        %v3017 = vpop.permute.xlu0 %3016
        %3018 = vrot.lane.b32.xlu0 %v1605, 96
        %v3019 = vpop.permute.xlu0 %3018
        %3020 = vrot.lane.b32.xlu0 %v1613, 96
        %v3021 = vpop.permute.xlu0 %3020
        %3022 = vrot.lane.b32.xlu0 %v1621, 96
        %v3023 = vpop.permute.xlu0 %3022
        %3024 = vrot.lane.b32.xlu0 %v1629, 96
        %v3025 = vpop.permute.xlu0 %3024
        %3026 = vrot.lane.b32.xlu0 %v1606, 96
        %v3027 = vpop.permute.xlu0 %3026
        %3028 = vrot.lane.b32.xlu0 %v1614, 96
        %v3029 = vpop.permute.xlu0 %3028
        %3030 = vrot.lane.b32.xlu0 %v1622, 96
        %v3031 = vpop.permute.xlu0 %3030
        %3032 = vrot.lane.b32.xlu0 %v1630, 96
        %v3033 = vpop.permute.xlu0 %3032
        %3034 = vrot.lane.b32.xlu0 %v1607, 96
        %v3035 = vpop.permute.xlu0 %3034
        %3036 = vrot.lane.b32.xlu0 %v1615, 96
        %v3037 = vpop.permute.xlu0 %3036
        %3038 = vrot.lane.b32.xlu0 %v1623, 96
        %v3039 = vpop.permute.xlu0 %3038
        %3040 = vrot.lane.b32.xlu0 %v1631, 96
        %v3041 = vpop.permute.xlu0 %3040
        %3042 = vrot.lane.b32.xlu0 %v1608, 96
        %v3043 = vpop.permute.xlu0 %3042
        %3044 = vrot.lane.b32.xlu0 %v1616, 96
        %v3045 = vpop.permute.xlu0 %3044
        %3046 = vrot.lane.b32.xlu0 %v1624, 96
        %v3047 = vpop.permute.xlu0 %3046
        %3048 = vrot.lane.b32.xlu0 %v1632, 96
        %v3049 = vpop.permute.xlu0 %3048
        %3050 = vrot.lane.b32.xlu0 %v1609, 96
        %v3051 = vpop.permute.xlu0 %3050
        %3052 = vrot.lane.b32.xlu0 %v1617, 96
        %v3053 = vpop.permute.xlu0 %3052
        %3054 = vrot.lane.b32.xlu0 %v1625, 96
        %v3055 = vpop.permute.xlu0 %3054
        %3056 = vrot.lane.b32.xlu0 %v1633, 96
        %v3057 = vpop.permute.xlu0 %3056
        %3058 = vrot.lane.b32.xlu0 %v1610, 96
        %v3059 = vpop.permute.xlu0 %3058
        %3060 = vrot.lane.b32.xlu0 %v1618, 96
        %v3061 = vpop.permute.xlu0 %3060
        %3062 = vrot.lane.b32.xlu0 %v1626, 96
        %v3063 = vpop.permute.xlu0 %3062
        %3064 = vrot.lane.b32.xlu0 %v1634, 96
        %v3065 = vpop.permute.xlu0 %3064
        %vm3066 = vcmp.lt.s32.totalorder %v1668, 96
        %v3067 = vsel %vm3066, %v3051, %v3059
        %v3068 = vsel %vm3066, %v3053, %v3061
        %v3069 = vsel %vm3066, %v3055, %v3063
        %v3070 = vsel %vm3066, %v3057, %v3065
        %v3071 = vsel %vm3066, %v3043, %v3051
        %v3072 = vsel %vm3066, %v3045, %v3053
        %v3073 = vsel %vm3066, %v3047, %v3055
        %v3074 = vsel %vm3066, %v3049, %v3057
        %v3075 = vsel %vm3066, %v3035, %v3043
        %v3076 = vsel %vm3066, %v3037, %v3045
        %v3077 = vsel %vm3066, %v3039, %v3047
        %v3078 = vsel %vm3066, %v3041, %v3049
        %v3079 = vsel %vm3066, %v3027, %v3035
        %v3080 = vsel %vm3066, %v3029, %v3037
        %v3081 = vsel %vm3066, %v3031, %v3039
        %v3082 = vsel %vm3066, %v3033, %v3041
        %v3083 = vsel %vm3066, %v3019, %v3027
        %v3084 = vsel %vm3066, %v3021, %v3029
        %v3085 = vsel %vm3066, %v3023, %v3031
        %v3086 = vsel %vm3066, %v3025, %v3033
        %v3087 = vsel %vm3066, %v3011, %v3019
        %v3088 = vsel %vm3066, %v3013, %v3021
        %v3089 = vsel %vm3066, %v3015, %v3023
        %v3090 = vsel %vm3066, %v3017, %v3025
        %v3091 = vsel %vm3066, %v3003, %v3011
        %v3092 = vsel %vm3066, %v3005, %v3013
        %v3093 = vsel %vm3066, %v3007, %v3015
        %v3094 = vsel %vm3066, %v3009, %v3017
        %v3095 = vsel %vm3066, %v3059, %v3003
        %v3096 = vsel %vm3066, %v3061, %v3005
        %v3097 = vsel %vm3066, %v3063, %v3007
        %v3098 = vsel %vm3066, %v3065, %v3009
        %v3099 = vmul.f32 %v1796, %v1868
        %v3100 = vmul.f32 %v1797, %v1869
        %v3101 = vmul.f32 %v1798, %v1870
        %v3102 = vmul.f32 %v1799, %v1871
        %v3103 = vmul.f32 %v1800, %v1872
        %v3104 = vmul.f32 %v1801, %v1873
        %v3105 = vmul.f32 %v1802, %v1874
        %v3106 = vmul.f32 %v1803, %v1875
        %v3107 = vmul.f32 %v3091, %v3099
        %v3108 = vmul.f32 %v3087, %v3100
        %v3109 = vmul.f32 %v3083, %v3101
        %v3110 = vmul.f32 %v3079, %v3102
        %v3111 = vmul.f32 %v3075, %v3103
        %v3112 = vmul.f32 %v3071, %v3104
        %v3113 = vmul.f32 %v3067, %v3105
        %v3114 = vmul.f32 %v3095, %v3106
        %v3115 = vmul.f32 %v3092, %v3099
        %v3116 = vmul.f32 %v3088, %v3100
        %v3117 = vmul.f32 %v3084, %v3101
        %v3118 = vmul.f32 %v3080, %v3102
        %v3119 = vmul.f32 %v3076, %v3103
        %v3120 = vmul.f32 %v3072, %v3104
        %v3121 = vmul.f32 %v3068, %v3105
        %v3122 = vmul.f32 %v3096, %v3106
        %v3123 = vmul.f32 %v3093, %v3099
        %v3124 = vmul.f32 %v3089, %v3100
        %v3125 = vmul.f32 %v3085, %v3101
        %v3126 = vmul.f32 %v3081, %v3102
        %v3127 = vmul.f32 %v3077, %v3103
        %v3128 = vmul.f32 %v3073, %v3104
        %v3129 = vmul.f32 %v3069, %v3105
        %v3130 = vmul.f32 %v3097, %v3106
        %v3131 = vmul.f32 %v3094, %v3099
        %v3132 = vmul.f32 %v3090, %v3100
        %v3133 = vmul.f32 %v3086, %v3101
        %v3134 = vmul.f32 %v3082, %v3102
        %v3135 = vmul.f32 %v3078, %v3103
        %v3136 = vmul.f32 %v3074, %v3104
        %v3137 = vmul.f32 %v3070, %v3105
        %v3138 = vmul.f32 %v3098, %v3106
        %v3139 = vpack.c.bf16 %v3115, %v3107
        %v3140 = vpack.c.bf16 %v3116, %v3108
        %v3141 = vpack.c.bf16 %v3117, %v3109
        %v3142 = vpack.c.bf16 %v3118, %v3110
        %v3143 = vpack.c.bf16 %v3119, %v3111
        %v3144 = vpack.c.bf16 %v3120, %v3112
        %v3145 = vpack.c.bf16 %v3121, %v3113
        %v3146 = vpack.c.bf16 %v3122, %v3114
        %v3147 = vpack.c.bf16 %v3131, %v3123
        %v3148 = vpack.c.bf16 %v3132, %v3124
        %v3149 = vpack.c.bf16 %v3133, %v3125
        %v3150 = vpack.c.bf16 %v3134, %v3126
        %v3151 = vpack.c.bf16 %v3135, %v3127
        %v3152 = vpack.c.bf16 %v3136, %v3128
        %v3153 = vpack.c.bf16 %v3137, %v3129
        %v3154 = vpack.c.bf16 %v3138, %v3130
        %3155 = vst [vmem:[#allocation2 + $0x380] sm:$0xff] %v3139
        %3156 = vst [vmem:[#allocation2 + $0x388] sm:$0xff] %v3140
        %3157 = vst [vmem:[#allocation2 + $0x390] sm:$0xff] %v3141
        %3158 = vst [vmem:[#allocation2 + $0x398] sm:$0xff] %v3142
        %3159 = vst [vmem:[#allocation2 + $0x3a0] sm:$0xff] %v3143
        %3160 = vst [vmem:[#allocation2 + $0x3a8] sm:$0xff] %v3144
        %3161 = vst [vmem:[#allocation2 + $0x3b0] sm:$0xff] %v3145
        %3162 = vst [vmem:[#allocation2 + $0x3b8] sm:$0xff] %v3146
        %3163 = vst [vmem:[#allocation2 + $0x3c0] sm:$0xff] %v3147
        %3164 = vst [vmem:[#allocation2 + $0x3c8] sm:$0xff] %v3148
        %3165 = vst [vmem:[#allocation2 + $0x3d0] sm:$0xff] %v3149
        %3166 = vst [vmem:[#allocation2 + $0x3d8] sm:$0xff] %v3150
        %3167 = vst [vmem:[#allocation2 + $0x3e0] sm:$0xff] %v3151
        %3168 = vst [vmem:[#allocation2 + $0x3e8] sm:$0xff] %v3152
        %3169 = vst [vmem:[#allocation2 + $0x3f0] sm:$0xff] %v3153
        %3170 = vst [vmem:[#allocation2 + $0x3f8] sm:$0xff] %v3154
        %3171 = vrot.lane.b32.xlu0 %v1603, 95
        %v3172 = vpop.permute.xlu0 %3171
        %3173 = vrot.lane.b32.xlu0 %v1611, 95
        %v3174 = vpop.permute.xlu0 %3173
        %3175 = vrot.lane.b32.xlu0 %v1619, 95
        %v3176 = vpop.permute.xlu0 %3175
        %3177 = vrot.lane.b32.xlu0 %v1627, 95
        %v3178 = vpop.permute.xlu0 %3177
        %3179 = vrot.lane.b32.xlu0 %v1604, 95
        %v3180 = vpop.permute.xlu0 %3179
        %3181 = vrot.lane.b32.xlu0 %v1612, 95
        %v3182 = vpop.permute.xlu0 %3181
        %3183 = vrot.lane.b32.xlu0 %v1620, 95
        %v3184 = vpop.permute.xlu0 %3183
        %3185 = vrot.lane.b32.xlu0 %v1628, 95
        %v3186 = vpop.permute.xlu0 %3185
        %3187 = vrot.lane.b32.xlu0 %v1605, 95
        %v3188 = vpop.permute.xlu0 %3187
        %3189 = vrot.lane.b32.xlu0 %v1613, 95
        %v3190 = vpop.permute.xlu0 %3189
        %3191 = vrot.lane.b32.xlu0 %v1621, 95
        %v3192 = vpop.permute.xlu0 %3191
        %3193 = vrot.lane.b32.xlu0 %v1629, 95
        %v3194 = vpop.permute.xlu0 %3193
        %3195 = vrot.lane.b32.xlu0 %v1606, 95
        %v3196 = vpop.permute.xlu0 %3195
        %3197 = vrot.lane.b32.xlu0 %v1614, 95
        %v3198 = vpop.permute.xlu0 %3197
        %3199 = vrot.lane.b32.xlu0 %v1622, 95
        %v3200 = vpop.permute.xlu0 %3199
        %3201 = vrot.lane.b32.xlu0 %v1630, 95
        %v3202 = vpop.permute.xlu0 %3201
        %3203 = vrot.lane.b32.xlu0 %v1607, 95
        %v3204 = vpop.permute.xlu0 %3203
        %3205 = vrot.lane.b32.xlu0 %v1615, 95
        %v3206 = vpop.permute.xlu0 %3205
        %3207 = vrot.lane.b32.xlu0 %v1623, 95
        %v3208 = vpop.permute.xlu0 %3207
        %3209 = vrot.lane.b32.xlu0 %v1631, 95
        %v3210 = vpop.permute.xlu0 %3209
        %3211 = vrot.lane.b32.xlu0 %v1608, 95
        %v3212 = vpop.permute.xlu0 %3211
        %3213 = vrot.lane.b32.xlu0 %v1616, 95
        %v3214 = vpop.permute.xlu0 %3213
        %3215 = vrot.lane.b32.xlu0 %v1624, 95
        %v3216 = vpop.permute.xlu0 %3215
        %3217 = vrot.lane.b32.xlu0 %v1632, 95
        %v3218 = vpop.permute.xlu0 %3217
        %3219 = vrot.lane.b32.xlu0 %v1609, 95
        %v3220 = vpop.permute.xlu0 %3219
        %3221 = vrot.lane.b32.xlu0 %v1617, 95
        %v3222 = vpop.permute.xlu0 %3221
        %3223 = vrot.lane.b32.xlu0 %v1625, 95
        %v3224 = vpop.permute.xlu0 %3223
        %3225 = vrot.lane.b32.xlu0 %v1633, 95
        %v3226 = vpop.permute.xlu0 %3225
        %3227 = vrot.lane.b32.xlu0 %v1610, 95
        %v3228 = vpop.permute.xlu0 %3227
        %3229 = vrot.lane.b32.xlu0 %v1618, 95
        %v3230 = vpop.permute.xlu0 %3229
        %3231 = vrot.lane.b32.xlu0 %v1626, 95
        %v3232 = vpop.permute.xlu0 %3231
        %3233 = vrot.lane.b32.xlu0 %v1634, 95
        %v3234 = vpop.permute.xlu0 %3233
        %vm3235 = vcmp.lt.s32.totalorder %v1668, 95
        %v3236 = vsel %vm3235, %v3220, %v3228
        %v3237 = vsel %vm3235, %v3222, %v3230
        %v3238 = vsel %vm3235, %v3224, %v3232
        %v3239 = vsel %vm3235, %v3226, %v3234
        %v3240 = vsel %vm3235, %v3212, %v3220
        %v3241 = vsel %vm3235, %v3214, %v3222
        %v3242 = vsel %vm3235, %v3216, %v3224
        %v3243 = vsel %vm3235, %v3218, %v3226
        %v3244 = vsel %vm3235, %v3204, %v3212
        %v3245 = vsel %vm3235, %v3206, %v3214
        %v3246 = vsel %vm3235, %v3208, %v3216
        %v3247 = vsel %vm3235, %v3210, %v3218
        %v3248 = vsel %vm3235, %v3196, %v3204
        %v3249 = vsel %vm3235, %v3198, %v3206
        %v3250 = vsel %vm3235, %v3200, %v3208
        %v3251 = vsel %vm3235, %v3202, %v3210
        %v3252 = vsel %vm3235, %v3188, %v3196
        %v3253 = vsel %vm3235, %v3190, %v3198
        %v3254 = vsel %vm3235, %v3192, %v3200
        %v3255 = vsel %vm3235, %v3194, %v3202
        %v3256 = vsel %vm3235, %v3180, %v3188
        %v3257 = vsel %vm3235, %v3182, %v3190
        %v3258 = vsel %vm3235, %v3184, %v3192
        %v3259 = vsel %vm3235, %v3186, %v3194
        %v3260 = vsel %vm3235, %v3172, %v3180
        %v3261 = vsel %vm3235, %v3174, %v3182
        %v3262 = vsel %vm3235, %v3176, %v3184
        %v3263 = vsel %vm3235, %v3178, %v3186
        %v3264 = vsel %vm3235, %v3228, %v3172
        %v3265 = vsel %vm3235, %v3230, %v3174
        %v3266 = vsel %vm3235, %v3232, %v3176
        %v3267 = vsel %vm3235, %v3234, %v3178
        %v3268 = vmul.f32 %v1796, %v1908
        %v3269 = vmul.f32 %v1797, %v1909
        %v3270 = vmul.f32 %v1798, %v1910
        %v3271 = vmul.f32 %v1799, %v1911
        %v3272 = vmul.f32 %v1800, %v1912
        %v3273 = vmul.f32 %v1801, %v1913
        %v3274 = vmul.f32 %v1802, %v1914
        %v3275 = vmul.f32 %v1803, %v1915
        %v3276 = vmul.f32 %v3260, %v3268
        %v3277 = vmul.f32 %v3256, %v3269
        %v3278 = vmul.f32 %v3252, %v3270
        %v3279 = vmul.f32 %v3248, %v3271
        %v3280 = vmul.f32 %v3244, %v3272
        %v3281 = vmul.f32 %v3240, %v3273
        %v3282 = vmul.f32 %v3236, %v3274
        %v3283 = vmul.f32 %v3264, %v3275
        %v3284 = vmul.f32 %v3261, %v3268
        %v3285 = vmul.f32 %v3257, %v3269
        %v3286 = vmul.f32 %v3253, %v3270
        %v3287 = vmul.f32 %v3249, %v3271
        %v3288 = vmul.f32 %v3245, %v3272
        %v3289 = vmul.f32 %v3241, %v3273
        %v3290 = vmul.f32 %v3237, %v3274
        %v3291 = vmul.f32 %v3265, %v3275
        %v3292 = vmul.f32 %v3262, %v3268
        %v3293 = vmul.f32 %v3258, %v3269
        %v3294 = vmul.f32 %v3254, %v3270
        %v3295 = vmul.f32 %v3250, %v3271
        %v3296 = vmul.f32 %v3246, %v3272
        %v3297 = vmul.f32 %v3242, %v3273
        %v3298 = vmul.f32 %v3238, %v3274
        %v3299 = vmul.f32 %v3266, %v3275
        %v3300 = vmul.f32 %v3263, %v3268
        %v3301 = vmul.f32 %v3259, %v3269
        %v3302 = vmul.f32 %v3255, %v3270
        %v3303 = vmul.f32 %v3251, %v3271
        %v3304 = vmul.f32 %v3247, %v3272
        %v3305 = vmul.f32 %v3243, %v3273
        %v3306 = vmul.f32 %v3239, %v3274
        %v3307 = vmul.f32 %v3267, %v3275
        %v3308 = vpack.c.bf16 %v3284, %v3276
        %v3309 = vpack.c.bf16 %v3285, %v3277
        %v3310 = vpack.c.bf16 %v3286, %v3278
        %v3311 = vpack.c.bf16 %v3287, %v3279
        %v3312 = vpack.c.bf16 %v3288, %v3280
        %v3313 = vpack.c.bf16 %v3289, %v3281
        %v3314 = vpack.c.bf16 %v3290, %v3282
        %v3315 = vpack.c.bf16 %v3291, %v3283
        %v3316 = vpack.c.bf16 %v3300, %v3292
        %v3317 = vpack.c.bf16 %v3301, %v3293
        %v3318 = vpack.c.bf16 %v3302, %v3294
        %v3319 = vpack.c.bf16 %v3303, %v3295
        %v3320 = vpack.c.bf16 %v3304, %v3296
        %v3321 = vpack.c.bf16 %v3305, %v3297
        %v3322 = vpack.c.bf16 %v3306, %v3298
        %v3323 = vpack.c.bf16 %v3307, %v3299
        %3324 = vst [vmem:[#allocation2 + $0x400] sm:$0xff] %v3308
        %3325 = vst [vmem:[#allocation2 + $0x408] sm:$0xff] %v3309
        %3326 = vst [vmem:[#allocation2 + $0x410] sm:$0xff] %v3310
        %3327 = vst [vmem:[#allocation2 + $0x418] sm:$0xff] %v3311
        %3328 = vst [vmem:[#allocation2 + $0x420] sm:$0xff] %v3312
        %3329 = vst [vmem:[#allocation2 + $0x428] sm:$0xff] %v3313
        %3330 = vst [vmem:[#allocation2 + $0x430] sm:$0xff] %v3314
        %3331 = vst [vmem:[#allocation2 + $0x438] sm:$0xff] %v3315
        %3332 = vst [vmem:[#allocation2 + $0x440] sm:$0xff] %v3316
        %3333 = vst [vmem:[#allocation2 + $0x448] sm:$0xff] %v3317
        %3334 = vst [vmem:[#allocation2 + $0x450] sm:$0xff] %v3318
        %3335 = vst [vmem:[#allocation2 + $0x458] sm:$0xff] %v3319
        %3336 = vst [vmem:[#allocation2 + $0x460] sm:$0xff] %v3320
        %3337 = vst [vmem:[#allocation2 + $0x468] sm:$0xff] %v3321
        %3338 = vst [vmem:[#allocation2 + $0x470] sm:$0xff] %v3322
        %3339 = vst [vmem:[#allocation2 + $0x478] sm:$0xff] %v3323
        %v3340 = vld [vmem:[%s5] sm:$0xff]
        %v3341 = vld [vmem:[%s5 + $0x8] sm:$0xff]
        %v3342 = vld [vmem:[%s5 + $0x10] sm:$0xff]
        %v3343 = vld [vmem:[%s5 + $0x18] sm:$0xff]
        %v3344 = vld [vmem:[%s5 + $0x20] sm:$0xff]
        %v3345 = vld [vmem:[%s5 + $0x28] sm:$0xff]
        %v3346 = vld [vmem:[%s5 + $0x30] sm:$0xff]
        %v3347 = vld [vmem:[%s5 + $0x38] sm:$0xff]
        %v3348 = vld [vmem:[%s5 + $0x40] sm:$0xff]
        %v3349 = vld [vmem:[%s5 + $0x48] sm:$0xff]
        %v3350 = vld [vmem:[%s5 + $0x50] sm:$0xff]
        %v3351 = vld [vmem:[%s5 + $0x58] sm:$0xff]
        %v3352 = vpack.c.bf16 %v3343, %v3340
        %v3353 = vpack.c.bf16 %v3344, %v3341
        %v3354 = vpack.c.bf16 %v3345, %v3342
        %v3355 = vpack.c.bf16 %v3349, %v3346
        %v3356 = vpack.c.bf16 %v3350, %v3347
        %v3357 = vpack.c.bf16 %v3351, %v3348
        %v3358 = vld [vmem:[#allocation2] sm:$0xff]
        %v3359 = vld [vmem:[#allocation2 + $0x8] sm:$0xff]
        %v3360 = vld [vmem:[#allocation2 + $0x10] sm:$0xff]
        %v3361 = vld [vmem:[#allocation2 + $0x18] sm:$0xff]
        %v3362 = vld [vmem:[#allocation2 + $0x20] sm:$0xff]
        %v3363 = vld [vmem:[#allocation2 + $0x28] sm:$0xff]
        %v3364 = vld [vmem:[#allocation2 + $0x30] sm:$0xff]
        %v3365 = vld [vmem:[#allocation2 + $0x38] sm:$0xff]
        %v3366 = vld [vmem:[#allocation2 + $0x40] sm:$0xff]
        %v3367 = vld [vmem:[#allocation2 + $0x48] sm:$0xff]
        %v3368 = vld [vmem:[#allocation2 + $0x50] sm:$0xff]
        %v3369 = vld [vmem:[#allocation2 + $0x58] sm:$0xff]
        %v3370 = vld [vmem:[#allocation2 + $0x60] sm:$0xff]
        %v3371 = vld [vmem:[#allocation2 + $0x68] sm:$0xff]
        %v3372 = vld [vmem:[#allocation2 + $0x70] sm:$0xff]
        %v3373 = vld [vmem:[#allocation2 + $0x78] sm:$0xff]
        %v3374 = vld [vmem:[#allocation2 + $0x80] sm:$0xff]
        %v3375 = vld [vmem:[#allocation2 + $0x88] sm:$0xff]
        %v3376 = vld [vmem:[#allocation2 + $0x90] sm:$0xff]
        %v3377 = vld [vmem:[#allocation2 + $0x98] sm:$0xff]
        %v3378 = vld [vmem:[#allocation2 + $0xa0] sm:$0xff]
        %v3379 = vld [vmem:[#allocation2 + $0xa8] sm:$0xff]
        %v3380 = vld [vmem:[#allocation2 + $0xb0] sm:$0xff]
        %v3381 = vld [vmem:[#allocation2 + $0xb8] sm:$0xff]
        %v3382 = vld [vmem:[#allocation2 + $0xc0] sm:$0xff]
        %v3383 = vld [vmem:[#allocation2 + $0xc8] sm:$0xff]
        %v3384 = vld [vmem:[#allocation2 + $0xd0] sm:$0xff]
        %v3385 = vld [vmem:[#allocation2 + $0xd8] sm:$0xff]
        %v3386 = vld [vmem:[#allocation2 + $0xe0] sm:$0xff]
        %v3387 = vld [vmem:[#allocation2 + $0xe8] sm:$0xff]
        %v3388 = vld [vmem:[#allocation2 + $0xf0] sm:$0xff]
        %v3389 = vld [vmem:[#allocation2 + $0xf8] sm:$0xff]
        %v3390 = vld [vmem:[#allocation2 + $0x100] sm:$0xff]
        %v3391 = vld [vmem:[#allocation2 + $0x108] sm:$0xff]
        %v3392 = vld [vmem:[#allocation2 + $0x110] sm:$0xff]
        %v3393 = vld [vmem:[#allocation2 + $0x118] sm:$0xff]
        %v3394 = vld [vmem:[#allocation2 + $0x120] sm:$0xff]
        %v3395 = vld [vmem:[#allocation2 + $0x128] sm:$0xff]
        %v3396 = vld [vmem:[#allocation2 + $0x130] sm:$0xff]
        %v3397 = vld [vmem:[#allocation2 + $0x138] sm:$0xff]
        %v3398 = vld [vmem:[#allocation2 + $0x140] sm:$0xff]
        %v3399 = vld [vmem:[#allocation2 + $0x148] sm:$0xff]
        %v3400 = vld [vmem:[#allocation2 + $0x150] sm:$0xff]
        %v3401 = vld [vmem:[#allocation2 + $0x158] sm:$0xff]
        %v3402 = vld [vmem:[#allocation2 + $0x160] sm:$0xff]
        %v3403 = vld [vmem:[#allocation2 + $0x168] sm:$0xff]
        %v3404 = vld [vmem:[#allocation2 + $0x170] sm:$0xff]
        %v3405 = vld [vmem:[#allocation2 + $0x178] sm:$0xff]
        %v3406 = vld [vmem:[#allocation2 + $0x180] sm:$0xff]
        %v3407 = vld [vmem:[#allocation2 + $0x188] sm:$0xff]
        %v3408 = vld [vmem:[#allocation2 + $0x190] sm:$0xff]
        %v3409 = vld [vmem:[#allocation2 + $0x198] sm:$0xff]
        %v3410 = vld [vmem:[#allocation2 + $0x1a0] sm:$0xff]
        %v3411 = vld [vmem:[#allocation2 + $0x1a8] sm:$0xff]
        %v3412 = vld [vmem:[#allocation2 + $0x1b0] sm:$0xff]
        %v3413 = vld [vmem:[#allocation2 + $0x1b8] sm:$0xff]
        %v3414 = vld [vmem:[#allocation2 + $0x1c0] sm:$0xff]
        %v3415 = vld [vmem:[#allocation2 + $0x1c8] sm:$0xff]
        %v3416 = vld [vmem:[#allocation2 + $0x1d0] sm:$0xff]
        %v3417 = vld [vmem:[#allocation2 + $0x1d8] sm:$0xff]
        %v3418 = vld [vmem:[#allocation2 + $0x1e0] sm:$0xff]
        %v3419 = vld [vmem:[#allocation2 + $0x1e8] sm:$0xff]
        %v3420 = vld [vmem:[#allocation2 + $0x1f0] sm:$0xff]
        %v3421 = vld [vmem:[#allocation2 + $0x1f8] sm:$0xff]
        %v3422 = vld [vmem:[#allocation2 + $0x200] sm:$0xff]
        %v3423 = vld [vmem:[#allocation2 + $0x208] sm:$0xff]
        %v3424 = vld [vmem:[#allocation2 + $0x210] sm:$0xff]
        %v3425 = vld [vmem:[#allocation2 + $0x218] sm:$0xff]
        %v3426 = vld [vmem:[#allocation2 + $0x220] sm:$0xff]
        %v3427 = vld [vmem:[#allocation2 + $0x228] sm:$0xff]
        %v3428 = vld [vmem:[#allocation2 + $0x230] sm:$0xff]
        %v3429 = vld [vmem:[#allocation2 + $0x238] sm:$0xff]
        %v3430 = vld [vmem:[#allocation2 + $0x240] sm:$0xff]
        %v3431 = vld [vmem:[#allocation2 + $0x248] sm:$0xff]
        %v3432 = vld [vmem:[#allocation2 + $0x250] sm:$0xff]
        %v3433 = vld [vmem:[#allocation2 + $0x258] sm:$0xff]
        %v3434 = vld [vmem:[#allocation2 + $0x260] sm:$0xff]
        %v3435 = vld [vmem:[#allocation2 + $0x268] sm:$0xff]
        %v3436 = vld [vmem:[#allocation2 + $0x270] sm:$0xff]
        %v3437 = vld [vmem:[#allocation2 + $0x278] sm:$0xff]
        %v3438 = vld [vmem:[#allocation2 + $0x280] sm:$0xff]
        %v3439 = vld [vmem:[#allocation2 + $0x288] sm:$0xff]
        %v3440 = vld [vmem:[#allocation2 + $0x290] sm:$0xff]
        %v3441 = vld [vmem:[#allocation2 + $0x298] sm:$0xff]
        %v3442 = vld [vmem:[#allocation2 + $0x2a0] sm:$0xff]
        %v3443 = vld [vmem:[#allocation2 + $0x2a8] sm:$0xff]
        %v3444 = vld [vmem:[#allocation2 + $0x2b0] sm:$0xff]
        %v3445 = vld [vmem:[#allocation2 + $0x2b8] sm:$0xff]
        %v3446 = vld [vmem:[#allocation2 + $0x2c0] sm:$0xff]
        %v3447 = vld [vmem:[#allocation2 + $0x2c8] sm:$0xff]
        %v3448 = vld [vmem:[#allocation2 + $0x2d0] sm:$0xff]
        %v3449 = vld [vmem:[#allocation2 + $0x2d8] sm:$0xff]
        %v3450 = vld [vmem:[#allocation2 + $0x2e0] sm:$0xff]
        %v3451 = vld [vmem:[#allocation2 + $0x2e8] sm:$0xff]
        %v3452 = vld [vmem:[#allocation2 + $0x2f0] sm:$0xff]
        %v3453 = vld [vmem:[#allocation2 + $0x2f8] sm:$0xff]
        %v3454 = vld [vmem:[#allocation2 + $0x300] sm:$0xff]
        %v3455 = vld [vmem:[#allocation2 + $0x308] sm:$0xff]
        %v3456 = vld [vmem:[#allocation2 + $0x310] sm:$0xff]
        %v3457 = vld [vmem:[#allocation2 + $0x318] sm:$0xff]
        %v3458 = vld [vmem:[#allocation2 + $0x320] sm:$0xff]
        %v3459 = vld [vmem:[#allocation2 + $0x328] sm:$0xff]
        %v3460 = vld [vmem:[#allocation2 + $0x330] sm:$0xff]
        %v3461 = vld [vmem:[#allocation2 + $0x338] sm:$0xff]
        %v3462 = vld [vmem:[#allocation2 + $0x340] sm:$0xff]
        %v3463 = vld [vmem:[#allocation2 + $0x348] sm:$0xff]
        %v3464 = vld [vmem:[#allocation2 + $0x350] sm:$0xff]
        %v3465 = vld [vmem:[#allocation2 + $0x358] sm:$0xff]
        %v3466 = vld [vmem:[#allocation2 + $0x360] sm:$0xff]
        %v3467 = vld [vmem:[#allocation2 + $0x368] sm:$0xff]
        %v3468 = vld [vmem:[#allocation2 + $0x370] sm:$0xff]
        %v3469 = vld [vmem:[#allocation2 + $0x378] sm:$0xff]
        %v3470 = vld [vmem:[#allocation2 + $0x380] sm:$0xff]
        %v3471 = vld [vmem:[#allocation2 + $0x388] sm:$0xff]
        %v3472 = vld [vmem:[#allocation2 + $0x390] sm:$0xff]
        %v3473 = vld [vmem:[#allocation2 + $0x398] sm:$0xff]
        %v3474 = vld [vmem:[#allocation2 + $0x3a0] sm:$0xff]
        %v3475 = vld [vmem:[#allocation2 + $0x3a8] sm:$0xff]
        %v3476 = vld [vmem:[#allocation2 + $0x3b0] sm:$0xff]
        %v3477 = vld [vmem:[#allocation2 + $0x3b8] sm:$0xff]
        %v3478 = vld [vmem:[#allocation2 + $0x3c0] sm:$0xff]
        %v3479 = vld [vmem:[#allocation2 + $0x3c8] sm:$0xff]
        %v3480 = vld [vmem:[#allocation2 + $0x3d0] sm:$0xff]
        %v3481 = vld [vmem:[#allocation2 + $0x3d8] sm:$0xff]
        %v3482 = vld [vmem:[#allocation2 + $0x3e0] sm:$0xff]
        %v3483 = vld [vmem:[#allocation2 + $0x3e8] sm:$0xff]
        %v3484 = vld [vmem:[#allocation2 + $0x3f0] sm:$0xff]
        %v3485 = vld [vmem:[#allocation2 + $0x3f8] sm:$0xff]
        %v3486 = vld [vmem:[#allocation2 + $0x400] sm:$0xff]
        %v3487 = vld [vmem:[#allocation2 + $0x408] sm:$0xff]
        %v3488 = vld [vmem:[#allocation2 + $0x410] sm:$0xff]
        %v3489 = vld [vmem:[#allocation2 + $0x418] sm:$0xff]
        %v3490 = vld [vmem:[#allocation2 + $0x420] sm:$0xff]
        %v3491 = vld [vmem:[#allocation2 + $0x428] sm:$0xff]
        %v3492 = vld [vmem:[#allocation2 + $0x430] sm:$0xff]
        %v3493 = vld [vmem:[#allocation2 + $0x438] sm:$0xff]
        %v3494 = vld [vmem:[#allocation2 + $0x440] sm:$0xff]
        %v3495 = vld [vmem:[#allocation2 + $0x448] sm:$0xff]
        %v3496 = vld [vmem:[#allocation2 + $0x450] sm:$0xff]
        %v3497 = vld [vmem:[#allocation2 + $0x458] sm:$0xff]
        %v3498 = vld [vmem:[#allocation2 + $0x460] sm:$0xff]
        %v3499 = vld [vmem:[#allocation2 + $0x468] sm:$0xff]
        %v3500 = vld [vmem:[#allocation2 + $0x470] sm:$0xff]
        %v3501 = vld [vmem:[#allocation2 + $0x478] sm:$0xff]
        %v3502 = vld [vmem:[%s6] sm:$0xff]
        %v3503 = vld [vmem:[%s6 + $0x8] sm:$0xff]
        %v3504 = vld [vmem:[%s6 + $0x10] sm:$0xff]
        %v3505 = vld [vmem:[%s6 + $0x18] sm:$0xff]
        %3507 = vset.pattern.permute.xlu0 0
        %3508 = vperm.xlu0 %3507, %v3502
        %v3509 = vpop.permute.xlu0 %3508
        %3512 = vset.pattern.permute.xlu0 0
        %3513 = vperm.xlu0 %3512, %v3503
        %v3514 = vpop.permute.xlu0 %3513
        %3517 = vset.pattern.permute.xlu0 0
        %3518 = vperm.xlu0 %3517, %v3504
        %v3519 = vpop.permute.xlu0 %3518
        %3522 = vset.pattern.permute.xlu0 0
        %3523 = vperm.xlu0 %3522, %v3505
        %v3524 = vpop.permute.xlu0 %3523
        %vm3526 = vcmask 261120
        %v3528 = vsel %vm3526, %v3354, 0
        %v3531 = vsel %vm3526, %v3357, 0
        %3533 = vmatprep.subr.bf16.mxu0 %v3359
        %3534 = vmatpush1.bf16.msra.mxu0 %v3358
        %3535 = vmatprep.subr.bf16.mxu0 %v3367
        %3536 = vmatpush1.bf16.msra.mxu0 %v3366
        %3537 = vmatprep.subr.bf16.mxu0 %v3375
        %3538 = vmatpush1.bf16.msra.mxu0 %v3374
        %3539 = vmatprep.subr.bf16.mxu0 %v3383
        %3540 = vmatpush1.bf16.msra.mxu0 %v3382
        %3541 = vmatprep.subr.bf16.mxu0 %v3391
        %3542 = vmatpush1.bf16.msra.mxu0 %v3390
        %3543 = vmatprep.subr.bf16.mxu0 %v3399
        %3544 = vmatpush1.bf16.msra.mxu0 %v3398
        %3545 = vmatprep.subr.bf16.mxu0 %v3407
        %3546 = vmatpush1.bf16.msra.mxu0 %v3406
        %3547 = vmatprep.subr.bf16.mxu0 %v3415
        %3548 = vmatpush1.bf16.msra.mxu0 %v3414
        %3549 = vmatprep.subr.bf16.mxu0 %v3423
        %3550 = vmatpush1.bf16.msra.mxu0 %v3422
        %3551 = vmatprep.subr.bf16.mxu0 %v3431
        %3552 = vmatpush1.bf16.msra.mxu0 %v3430
        %3553 = vmatprep.subr.bf16.mxu0 %v3439
        %3554 = vmatpush1.bf16.msra.mxu0 %v3438
        %3555 = vmatprep.subr.bf16.mxu0 %v3447
        %3556 = vmatpush1.bf16.msra.mxu0 %v3446
        %3557 = vmatprep.subr.bf16.mxu0 %v3455
        %3558 = vmatpush1.bf16.msra.mxu0 %v3454
        %3559 = vmatprep.subr.bf16.mxu0 %v3463
        %3560 = vmatpush1.bf16.msra.mxu0 %v3462
        %3561 = vmatprep.subr.bf16.mxu0 %v3471
        %3562 = vmatpush1.bf16.msra.mxu0 %v3470
        %3563 = vmatprep.subr.bf16.mxu0 %v3479
        %3564 = vmatpush1.bf16.msra.mxu0 %v3478
        %3565 = vmatprep.mubr.bf16.mxu0 %v3353
        %3566 = vmatmul.mubr.bf16.gmra.mrb[0].mxu0 %v3352
        %v3567 = vpop.f32.mrb[0].mxu0
        %v3568 = vadd.f32 %v3509, %v3567
        %v3569 = vpop.f32.mrb[0].mxu0
        %v3570 = vadd.f32 %v3509, %v3569
        %v3571 = vpop.f32.mrb[0].mxu0
        %v3572 = vadd.f32 %v3514, %v3571
        %v3573 = vpop.f32.mrb[0].mxu0
        %v3574 = vadd.f32 %v3514, %v3573
        %3575 = vmatprep.mubr.bf16.mxu0 %v3356
        %3576 = vmatmul.mubr.bf16.gmra.mrb[0].mxu0 %v3355
        %v3577 = vpop.f32.mrb[0].mxu0
        %v3578 = vadd.f32 %v3519, %v3577
        %v3579 = vpop.f32.mrb[0].mxu0
        %v3580 = vadd.f32 %v3519, %v3579
        %v3581 = vpop.f32.mrb[0].mxu0
        %v3582 = vadd.f32 %v3524, %v3581
        %v3583 = vpop.f32.mrb[0].mxu0
        %v3584 = vadd.f32 %v3524, %v3583
        %3585 = vdwg.mxu0
        %3586 = vmatprep.subr.bf16.mxu0 %v3487
        %3587 = vmatpush1.bf16.msra.mxu0 %v3486
        %3588 = vmatprep.subr.bf16.mxu0 %v3495
        %3589 = vmatpush1.bf16.msra.mxu0 %v3494
        %3590 = vmatprep.subr.bf16.mxu0 0
        %3591 = vmatpush1.bf16.msra.mxu0 0
        %3592 = vmatprep.subr.bf16.mxu0 0
        %3593 = vmatpush1.bf16.msra.mxu0 0
        %3594 = vmatprep.subr.bf16.mxu0 0
        %3595 = vmatpush1.bf16.msra.mxu0 0
        %3596 = vmatprep.subr.bf16.mxu0 0
        %3597 = vmatpush1.bf16.msra.mxu0 0
        %3598 = vmatprep.subr.bf16.mxu0 0
        %3599 = vmatpush1.bf16.msra.mxu0 0
        %3600 = vmatprep.subr.bf16.mxu0 0
        %3601 = vmatpush1.bf16.msra.mxu0 0
        %3602 = vmatprep.subr.bf16.mxu0 0
        %3603 = vmatpush1.bf16.msra.mxu0 0
        %3604 = vmatprep.subr.bf16.mxu0 0
        %3605 = vmatpush1.bf16.msra.mxu0 0
        %3606 = vmatprep.subr.bf16.mxu0 0
        %3607 = vmatpush1.bf16.msra.mxu0 0
        %3608 = vmatprep.subr.bf16.mxu0 0
        %3609 = vmatpush1.bf16.msra.mxu0 0
        %3610 = vmatprep.subr.bf16.mxu0 0
        %3611 = vmatpush1.bf16.msra.mxu0 0
        %3612 = vmatprep.subr.bf16.mxu0 0
        %3613 = vmatpush1.bf16.msra.mxu0 0
        %3614 = vmatprep.subr.bf16.mxu0 0
        %3615 = vmatpush1.bf16.msra.mxu0 0
        %3616 = vmatprep.subr.bf16.mxu0 0
        %3617 = vmatpush1.bf16.msra.mxu0 0
        %3618 = vmatprep.mubr.bf16.mxu0 0
        %3619 = vmatmul.mubr.bf16.gmra.mrb[0].mxu0 %v3528
        %v3620 = vpop.f32.mrb[0].mxu0
        %v3621 = vadd.f32 %v3568, %v3620
        %v3622 = vpop.f32.mrb[0].mxu0
        %v3623 = vadd.f32 %v3570, %v3622
        %v3624 = vpop.f32.mrb[0].mxu0
        %v3625 = vadd.f32 %v3572, %v3624
        %v3626 = vpop.f32.mrb[0].mxu0
        %v3627 = vadd.f32 %v3574, %v3626
        %3628 = vmatprep.mubr.bf16.mxu0 0
        %3629 = vmatmul.mubr.bf16.gmra.mrb[0].mxu0 %v3531
        %v3630 = vpop.f32.mrb[0].mxu0
        %v3631 = vadd.f32 %v3578, %v3630
        %v3632 = vpop.f32.mrb[0].mxu0
        %v3633 = vadd.f32 %v3580, %v3632
        %v3634 = vpop.f32.mrb[0].mxu0
        %v3635 = vadd.f32 %v3582, %v3634
        %v3636 = vpop.f32.mrb[0].mxu0
        %v3637 = vadd.f32 %v3584, %v3636
        %3638 = vdwg.mxu0
        %3639 = vmatprep.subr.bf16.mxu0 %v3361
        %3640 = vmatpush1.bf16.msra.mxu0 %v3360
        %3641 = vmatprep.subr.bf16.mxu0 %v3369
        %3642 = vmatpush1.bf16.msra.mxu0 %v3368
        %3643 = vmatprep.subr.bf16.mxu0 %v3377
        %3644 = vmatpush1.bf16.msra.mxu0 %v3376
        %3645 = vmatprep.subr.bf16.mxu0 %v3385
        %3646 = vmatpush1.bf16.msra.mxu0 %v3384
        %3647 = vmatprep.subr.bf16.mxu0 %v3393
        %3648 = vmatpush1.bf16.msra.mxu0 %v3392
        %3649 = vmatprep.subr.bf16.mxu0 %v3401
        %3650 = vmatpush1.bf16.msra.mxu0 %v3400
        %3651 = vmatprep.subr.bf16.mxu0 %v3409
        %3652 = vmatpush1.bf16.msra.mxu0 %v3408
        %3653 = vmatprep.subr.bf16.mxu0 %v3417
        %3654 = vmatpush1.bf16.msra.mxu0 %v3416
        %3655 = vmatprep.subr.bf16.mxu0 %v3425
        %3656 = vmatpush1.bf16.msra.mxu0 %v3424
        %3657 = vmatprep.subr.bf16.mxu0 %v3433
        %3658 = vmatpush1.bf16.msra.mxu0 %v3432
        %3659 = vmatprep.subr.bf16.mxu0 %v3441
        %3660 = vmatpush1.bf16.msra.mxu0 %v3440
        %3661 = vmatprep.subr.bf16.mxu0 %v3449
        %3662 = vmatpush1.bf16.msra.mxu0 %v3448
        %3663 = vmatprep.subr.bf16.mxu0 %v3457
        %3664 = vmatpush1.bf16.msra.mxu0 %v3456
        %3665 = vmatprep.subr.bf16.mxu0 %v3465
        %3666 = vmatpush1.bf16.msra.mxu0 %v3464
        %3667 = vmatprep.subr.bf16.mxu0 %v3473
        %3668 = vmatpush1.bf16.msra.mxu0 %v3472
        %3669 = vmatprep.subr.bf16.mxu0 %v3481
        %3670 = vmatpush1.bf16.msra.mxu0 %v3480
        %3671 = vmatprep.mubr.bf16.mxu0 %v3353
        %3672 = vmatmul.mubr.bf16.gmra.mrb[0].mxu0 %v3352
        %v3673 = vpop.f32.mrb[0].mxu0
        %v3674 = vadd.f32 %v3509, %v3673
        %v3675 = vpop.f32.mrb[0].mxu0
        %v3676 = vadd.f32 %v3509, %v3675
        %v3677 = vpop.f32.mrb[0].mxu0
        %v3678 = vadd.f32 %v3514, %v3677
        %v3679 = vpop.f32.mrb[0].mxu0
        %v3680 = vadd.f32 %v3514, %v3679
        %3681 = vmatprep.mubr.bf16.mxu0 %v3356
        %3682 = vmatmul.mubr.bf16.gmra.mrb[0].mxu0 %v3355
        %v3683 = vpop.f32.mrb[0].mxu0
        %v3684 = vadd.f32 %v3519, %v3683
        %v3685 = vpop.f32.mrb[0].mxu0
        %v3686 = vadd.f32 %v3519, %v3685
        %v3687 = vpop.f32.mrb[0].mxu0
        %v3688 = vadd.f32 %v3524, %v3687
        %v3689 = vpop.f32.mrb[0].mxu0
        %v3690 = vadd.f32 %v3524, %v3689
        %3691 = vdwg.mxu0
        %3692 = vmatprep.subr.bf16.mxu0 %v3489
        %3693 = vmatpush1.bf16.msra.mxu0 %v3488
        %3694 = vmatprep.subr.bf16.mxu0 %v3497
        %3695 = vmatpush1.bf16.msra.mxu0 %v3496
        %3696 = vmatprep.subr.bf16.mxu0 0
        %3697 = vmatpush1.bf16.msra.mxu0 0
        %3698 = vmatprep.subr.bf16.mxu0 0
        %3699 = vmatpush1.bf16.msra.mxu0 0
        %3700 = vmatprep.subr.bf16.mxu0 0
        %3701 = vmatpush1.bf16.msra.mxu0 0
        %3702 = vmatprep.subr.bf16.mxu0 0
        %3703 = vmatpush1.bf16.msra.mxu0 0
        %3704 = vmatprep.subr.bf16.mxu0 0
        %3705 = vmatpush1.bf16.msra.mxu0 0
        %3706 = vmatprep.subr.bf16.mxu0 0
        %3707 = vmatpush1.bf16.msra.mxu0 0
        %3708 = vmatprep.subr.bf16.mxu0 0
        %3709 = vmatpush1.bf16.msra.mxu0 0
        %3710 = vmatprep.subr.bf16.mxu0 0
        %3711 = vmatpush1.bf16.msra.mxu0 0
        %3712 = vmatprep.subr.bf16.mxu0 0
        %3713 = vmatpush1.bf16.msra.mxu0 0
        %3714 = vmatprep.subr.bf16.mxu0 0
        %3715 = vmatpush1.bf16.msra.mxu0 0
        %3716 = vmatprep.subr.bf16.mxu0 0
        %3717 = vmatpush1.bf16.msra.mxu0 0
        %3718 = vmatprep.subr.bf16.mxu0 0
        %3719 = vmatpush1.bf16.msra.mxu0 0
        %3720 = vmatprep.subr.bf16.mxu0 0
        %3721 = vmatpush1.bf16.msra.mxu0 0
        %3722 = vmatprep.subr.bf16.mxu0 0
        %3723 = vmatpush1.bf16.msra.mxu0 0
        %3724 = vmatprep.mubr.bf16.mxu0 0
        %3725 = vmatmul.mubr.bf16.gmra.mrb[0].mxu0 %v3528
        %v3726 = vpop.f32.mrb[0].mxu0
        %v3727 = vadd.f32 %v3674, %v3726
        %v3728 = vpop.f32.mrb[0].mxu0
        %v3729 = vadd.f32 %v3676, %v3728
        %v3730 = vpop.f32.mrb[0].mxu0
        %v3731 = vadd.f32 %v3678, %v3730
        %v3732 = vpop.f32.mrb[0].mxu0
        %v3733 = vadd.f32 %v3680, %v3732
        %3734 = vmatprep.mubr.bf16.mxu0 0
        %3735 = vmatmul.mubr.bf16.gmra.mrb[0].mxu0 %v3531
        %v3736 = vpop.f32.mrb[0].mxu0
        %v3737 = vadd.f32 %v3684, %v3736
        %v3738 = vpop.f32.mrb[0].mxu0
        %v3739 = vadd.f32 %v3686, %v3738
        %v3740 = vpop.f32.mrb[0].mxu0
        %v3741 = vadd.f32 %v3688, %v3740
        %v3742 = vpop.f32.mrb[0].mxu0
        %v3743 = vadd.f32 %v3690, %v3742
        %3744 = vdwg.mxu0
        %3745 = vmatprep.subr.bf16.mxu0 %v3363
        %3746 = vmatpush1.bf16.msra.mxu0 %v3362
        %3747 = vmatprep.subr.bf16.mxu0 %v3371
        %3748 = vmatpush1.bf16.msra.mxu0 %v3370
        %3749 = vmatprep.subr.bf16.mxu0 %v3379
        %3750 = vmatpush1.bf16.msra.mxu0 %v3378
        %3751 = vmatprep.subr.bf16.mxu0 %v3387
        %3752 = vmatpush1.bf16.msra.mxu0 %v3386
        %3753 = vmatprep.subr.bf16.mxu0 %v3395
        %3754 = vmatpush1.bf16.msra.mxu0 %v3394
        %3755 = vmatprep.subr.bf16.mxu0 %v3403
        %3756 = vmatpush1.bf16.msra.mxu0 %v3402
        %3757 = vmatprep.subr.bf16.mxu0 %v3411
        %3758 = vmatpush1.bf16.msra.mxu0 %v3410
        %3759 = vmatprep.subr.bf16.mxu0 %v3419
        %3760 = vmatpush1.bf16.msra.mxu0 %v3418
        %3761 = vmatprep.subr.bf16.mxu0 %v3427
        %3762 = vmatpush1.bf16.msra.mxu0 %v3426
        %3763 = vmatprep.subr.bf16.mxu0 %v3435
        %3764 = vmatpush1.bf16.msra.mxu0 %v3434
        %3765 = vmatprep.subr.bf16.mxu0 %v3443
        %3766 = vmatpush1.bf16.msra.mxu0 %v3442
        %3767 = vmatprep.subr.bf16.mxu0 %v3451
        %3768 = vmatpush1.bf16.msra.mxu0 %v3450
        %3769 = vmatprep.subr.bf16.mxu0 %v3459
        %3770 = vmatpush1.bf16.msra.mxu0 %v3458
        %3771 = vmatprep.subr.bf16.mxu0 %v3467
        %3772 = vmatpush1.bf16.msra.mxu0 %v3466
        %3773 = vmatprep.subr.bf16.mxu0 %v3475
        %3774 = vmatpush1.bf16.msra.mxu0 %v3474
        %3775 = vmatprep.subr.bf16.mxu0 %v3483
        %3776 = vmatpush1.bf16.msra.mxu0 %v3482
        %3777 = vmatprep.mubr.bf16.mxu0 %v3353
        %3778 = vmatmul.mubr.bf16.gmra.mrb[0].mxu0 %v3352
        %v3779 = vpop.f32.mrb[0].mxu0
        %v3780 = vadd.f32 %v3509, %v3779
        %v3781 = vpop.f32.mrb[0].mxu0
        %v3782 = vadd.f32 %v3509, %v3781
        %v3783 = vpop.f32.mrb[0].mxu0
        %v3784 = vadd.f32 %v3514, %v3783
        %v3785 = vpop.f32.mrb[0].mxu0
        %v3786 = vadd.f32 %v3514, %v3785
        %3787 = vmatprep.mubr.bf16.mxu0 %v3356
        %3788 = vmatmul.mubr.bf16.gmra.mrb[0].mxu0 %v3355
        %v3789 = vpop.f32.mrb[0].mxu0
        %v3790 = vadd.f32 %v3519, %v3789
        %v3791 = vpop.f32.mrb[0].mxu0
        %v3792 = vadd.f32 %v3519, %v3791
        %v3793 = vpop.f32.mrb[0].mxu0
        %v3794 = vadd.f32 %v3524, %v3793
        %v3795 = vpop.f32.mrb[0].mxu0
        %v3796 = vadd.f32 %v3524, %v3795
        %3797 = vdwg.mxu0
        %3798 = vmatprep.subr.bf16.mxu0 %v3491
        %3799 = vmatpush1.bf16.msra.mxu0 %v3490
        %3800 = vmatprep.subr.bf16.mxu0 %v3499
        %3801 = vmatpush1.bf16.msra.mxu0 %v3498
        %3802 = vmatprep.subr.bf16.mxu0 0
        %3803 = vmatpush1.bf16.msra.mxu0 0
        %3804 = vmatprep.subr.bf16.mxu0 0
        %3805 = vmatpush1.bf16.msra.mxu0 0
        %3806 = vmatprep.subr.bf16.mxu0 0
        %3807 = vmatpush1.bf16.msra.mxu0 0
        %3808 = vmatprep.subr.bf16.mxu0 0
        %3809 = vmatpush1.bf16.msra.mxu0 0
        %3810 = vmatprep.subr.bf16.mxu0 0
        %3811 = vmatpush1.bf16.msra.mxu0 0
        %3812 = vmatprep.subr.bf16.mxu0 0
        %3813 = vmatpush1.bf16.msra.mxu0 0
        %3814 = vmatprep.subr.bf16.mxu0 0
        %3815 = vmatpush1.bf16.msra.mxu0 0
        %3816 = vmatprep.subr.bf16.mxu0 0
        %3817 = vmatpush1.bf16.msra.mxu0 0
        %3818 = vmatprep.subr.bf16.mxu0 0
        %3819 = vmatpush1.bf16.msra.mxu0 0
        %3820 = vmatprep.subr.bf16.mxu0 0
        %3821 = vmatpush1.bf16.msra.mxu0 0
        %3822 = vmatprep.subr.bf16.mxu0 0
        %3823 = vmatpush1.bf16.msra.mxu0 0
        %3824 = vmatprep.subr.bf16.mxu0 0
        %3825 = vmatpush1.bf16.msra.mxu0 0
        %3826 = vmatprep.subr.bf16.mxu0 0
        %3827 = vmatpush1.bf16.msra.mxu0 0
        %3828 = vmatprep.subr.bf16.mxu0 0
        %3829 = vmatpush1.bf16.msra.mxu0 0
        %3830 = vmatprep.mubr.bf16.mxu0 0
        %3831 = vmatmul.mubr.bf16.gmra.mrb[0].mxu0 %v3528
        %v3832 = vpop.f32.mrb[0].mxu0
        %v3833 = vadd.f32 %v3780, %v3832
        %v3834 = vpop.f32.mrb[0].mxu0
        %v3835 = vadd.f32 %v3782, %v3834
        %v3836 = vpop.f32.mrb[0].mxu0
        %v3837 = vadd.f32 %v3784, %v3836
        %v3838 = vpop.f32.mrb[0].mxu0
        %v3839 = vadd.f32 %v3786, %v3838
        %3840 = vmatprep.mubr.bf16.mxu0 0
        %3841 = vmatmul.mubr.bf16.gmra.mrb[0].mxu0 %v3531
        %v3842 = vpop.f32.mrb[0].mxu0
        %v3843 = vadd.f32 %v3790, %v3842
        %v3844 = vpop.f32.mrb[0].mxu0
        %v3845 = vadd.f32 %v3792, %v3844
        %v3846 = vpop.f32.mrb[0].mxu0
        %v3847 = vadd.f32 %v3794, %v3846
        %v3848 = vpop.f32.mrb[0].mxu0
        %v3849 = vadd.f32 %v3796, %v3848
        %3850 = vdwg.mxu0
        %3851 = vmatprep.subr.bf16.mxu0 %v3365
        %3852 = vmatpush1.bf16.msra.mxu0 %v3364
        %3853 = vmatprep.subr.bf16.mxu0 %v3373
        %3854 = vmatpush1.bf16.msra.mxu0 %v3372
        %3855 = vmatprep.subr.bf16.mxu0 %v3381
        %3856 = vmatpush1.bf16.msra.mxu0 %v3380
        %3857 = vmatprep.subr.bf16.mxu0 %v3389
        %3858 = vmatpush1.bf16.msra.mxu0 %v3388
        %3859 = vmatprep.subr.bf16.mxu0 %v3397
        %3860 = vmatpush1.bf16.msra.mxu0 %v3396
        %3861 = vmatprep.subr.bf16.mxu0 %v3405
        %3862 = vmatpush1.bf16.msra.mxu0 %v3404
        %3863 = vmatprep.subr.bf16.mxu0 %v3413
        %3864 = vmatpush1.bf16.msra.mxu0 %v3412
        %3865 = vmatprep.subr.bf16.mxu0 %v3421
        %3866 = vmatpush1.bf16.msra.mxu0 %v3420
        %3867 = vmatprep.subr.bf16.mxu0 %v3429
        %3868 = vmatpush1.bf16.msra.mxu0 %v3428
        %3869 = vmatprep.subr.bf16.mxu0 %v3437
        %3870 = vmatpush1.bf16.msra.mxu0 %v3436
        %3871 = vmatprep.subr.bf16.mxu0 %v3445
        %3872 = vmatpush1.bf16.msra.mxu0 %v3444
        %3873 = vmatprep.subr.bf16.mxu0 %v3453
        %3874 = vmatpush1.bf16.msra.mxu0 %v3452
        %3875 = vmatprep.subr.bf16.mxu0 %v3461
        %3876 = vmatpush1.bf16.msra.mxu0 %v3460
        %3877 = vmatprep.subr.bf16.mxu0 %v3469
        %3878 = vmatpush1.bf16.msra.mxu0 %v3468
        %3879 = vmatprep.subr.bf16.mxu0 %v3477
        %3880 = vmatpush1.bf16.msra.mxu0 %v3476
        %3881 = vmatprep.subr.bf16.mxu0 %v3485
        %3882 = vmatpush1.bf16.msra.mxu0 %v3484
        %3883 = vmatprep.mubr.bf16.mxu0 %v3353
        %3884 = vmatmul.mubr.bf16.gmra.mrb[0].mxu0 %v3352
        %v3885 = vpop.f32.mrb[0].mxu0
        %v3886 = vadd.f32 %v3509, %v3885
        %v3887 = vpop.f32.mrb[0].mxu0
        %v3888 = vadd.f32 %v3509, %v3887
        %v3889 = vpop.f32.mrb[0].mxu0
        %v3890 = vadd.f32 %v3514, %v3889
        %v3891 = vpop.f32.mrb[0].mxu0
        %v3892 = vadd.f32 %v3514, %v3891
        %3893 = vmatprep.mubr.bf16.mxu0 %v3356
        %3894 = vmatmul.mubr.bf16.gmra.mrb[0].mxu0 %v3355
        %v3895 = vpop.f32.mrb[0].mxu0
        %v3896 = vadd.f32 %v3519, %v3895
        %v3897 = vpop.f32.mrb[0].mxu0
        %v3898 = vadd.f32 %v3519, %v3897
        %v3899 = vpop.f32.mrb[0].mxu0
        %v3900 = vadd.f32 %v3524, %v3899
        %v3901 = vpop.f32.mrb[0].mxu0
        %v3902 = vadd.f32 %v3524, %v3901
        %3903 = vdwg.mxu0
        %3904 = vmatprep.subr.bf16.mxu0 %v3493
        %3905 = vmatpush1.bf16.msra.mxu0 %v3492
        %3906 = vmatprep.subr.bf16.mxu0 %v3501
        %3907 = vmatpush1.bf16.msra.mxu0 %v3500
        %3908 = vmatprep.subr.bf16.mxu0 0
        %3909 = vmatpush1.bf16.msra.mxu0 0
        %3910 = vmatprep.subr.bf16.mxu0 0
        %3911 = vmatpush1.bf16.msra.mxu0 0
        %3912 = vmatprep.subr.bf16.mxu0 0
        %3913 = vmatpush1.bf16.msra.mxu0 0
        %3914 = vmatprep.subr.bf16.mxu0 0
        %3915 = vmatpush1.bf16.msra.mxu0 0
        %3916 = vmatprep.subr.bf16.mxu0 0
        %3917 = vmatpush1.bf16.msra.mxu0 0
        %3918 = vmatprep.subr.bf16.mxu0 0
        %3919 = vmatpush1.bf16.msra.mxu0 0
        %3920 = vmatprep.subr.bf16.mxu0 0
        %3921 = vmatpush1.bf16.msra.mxu0 0
        %3922 = vmatprep.subr.bf16.mxu0 0
        %3923 = vmatpush1.bf16.msra.mxu0 0
        %3924 = vmatprep.subr.bf16.mxu0 0
        %3925 = vmatpush1.bf16.msra.mxu0 0
        %3926 = vmatprep.subr.bf16.mxu0 0
        %3927 = vmatpush1.bf16.msra.mxu0 0
        %3928 = vmatprep.subr.bf16.mxu0 0
        %3929 = vmatpush1.bf16.msra.mxu0 0
        %3930 = vmatprep.subr.bf16.mxu0 0
        %3931 = vmatpush1.bf16.msra.mxu0 0
        %3932 = vmatprep.subr.bf16.mxu0 0
        %3933 = vmatpush1.bf16.msra.mxu0 0
        %3934 = vmatprep.subr.bf16.mxu0 0
        %3935 = vmatpush1.bf16.msra.mxu0 0
        %3936 = vmatprep.mubr.bf16.mxu0 0
        %3937 = vmatmul.mubr.bf16.gmra.mrb[0].mxu0 %v3528
        %v3938 = vpop.f32.mrb[0].mxu0
        %v3939 = vadd.f32 %v3886, %v3938
        %v3940 = vpop.f32.mrb[0].mxu0
        %v3941 = vadd.f32 %v3888, %v3940
        %v3942 = vpop.f32.mrb[0].mxu0
        %v3943 = vadd.f32 %v3890, %v3942
        %v3944 = vpop.f32.mrb[0].mxu0
        %v3945 = vadd.f32 %v3892, %v3944
        %3946 = vmatprep.mubr.bf16.mxu0 0
        %3947 = vmatmul.mubr.bf16.gmra.mrb[0].mxu0 %v3531
        %v3948 = vpop.f32.mrb[0].mxu0
        %v3949 = vadd.f32 %v3896, %v3948
        %v3950 = vpop.f32.mrb[0].mxu0
        %v3951 = vadd.f32 %v3898, %v3950
        %v3952 = vpop.f32.mrb[0].mxu0
        %v3953 = vadd.f32 %v3900, %v3952
        %v3954 = vpop.f32.mrb[0].mxu0
        %v3955 = vadd.f32 %v3902, %v3954
        %3956 = vdwg.mxu0
        %3957 = vst [vmem:[%s336] sm:$0xff] %v3621
        %3958 = vst [vmem:[%s336 + $0x8] sm:$0xff] %v3623
        %3959 = vst [vmem:[%s336 + $0x10] sm:$0xff] %v3727
        %3960 = vst [vmem:[%s336 + $0x18] sm:$0xff] %v3729
        %3961 = vst [vmem:[%s336 + $0x20] sm:$0xff] %v3833
        %3962 = vst [vmem:[%s336 + $0x28] sm:$0xff] %v3835
        %3963 = vst [vmem:[%s336 + $0x30] sm:$0xff] %v3939
        %3964 = vst [vmem:[%s336 + $0x38] sm:$0xff] %v3941
        %3965 = vst [vmem:[%s336 + $0x40] sm:$0xff] %v3625
        %3966 = vst [vmem:[%s336 + $0x48] sm:$0xff] %v3627
        %3967 = vst [vmem:[%s336 + $0x50] sm:$0xff] %v3731
        %3968 = vst [vmem:[%s336 + $0x58] sm:$0xff] %v3733
        %3969 = vst [vmem:[%s336 + $0x60] sm:$0xff] %v3837
        %3970 = vst [vmem:[%s336 + $0x68] sm:$0xff] %v3839
        %3971 = vst [vmem:[%s336 + $0x70] sm:$0xff] %v3943
        %3972 = vst [vmem:[%s336 + $0x78] sm:$0xff] %v3945
        %3973 = vst [vmem:[%s336 + $0x80] sm:$0xff] %v3631
        %3974 = vst [vmem:[%s336 + $0x88] sm:$0xff] %v3633
        %3975 = vst [vmem:[%s336 + $0x90] sm:$0xff] %v3737
        %3976 = vst [vmem:[%s336 + $0x98] sm:$0xff] %v3739
        %3977 = vst [vmem:[%s336 + $0xa0] sm:$0xff] %v3843
        %3978 = vst [vmem:[%s336 + $0xa8] sm:$0xff] %v3845
        %3979 = vst [vmem:[%s336 + $0xb0] sm:$0xff] %v3949
        %3980 = vst [vmem:[%s336 + $0xb8] sm:$0xff] %v3951
        %3981 = vst [vmem:[%s336 + $0xc0] sm:$0xff] %v3635
        %3982 = vst [vmem:[%s336 + $0xc8] sm:$0xff] %v3637
        %3983 = vst [vmem:[%s336 + $0xd0] sm:$0xff] %v3741
        %3984 = vst [vmem:[%s336 + $0xd8] sm:$0xff] %v3743
        %3985 = vst [vmem:[%s336 + $0xe0] sm:$0xff] %v3847
        %3986 = vst [vmem:[%s336 + $0xe8] sm:$0xff] %v3849
        %3987 = vst [vmem:[%s336 + $0xf0] sm:$0xff] %v3953
        %3988 = vst [vmem:[%s336 + $0xf8] sm:$0xff] %v3955
        %s3989 = sand.u32 %s188, 1
        %s3990 = scalar_lea.sflag [#allocation4], %s3989
        %s3991 = sand.u32 %s188, 1
        %s3992 = smul.addr %s3991, 256
        %s3993 = scalar_lea.vmem [#allocation3], %s3992
        %p3994 = scmp.lt.s32.totalorder %s23, 1
        %s3995 = scalar_select %p3994, %s23, 1
        %s3996 = smul.addr %s3995, 32
        %s3997 = smul.addr %s3996, 8
        %s3998 = scalar_lea.vmem %s8, %s3997
        // Predicated region
        $region49: #{feature_shrinker_forward.9} parent=47 // pred_check
          %p3999 = pneg %p198
        $region50: #{feature_shrinker_forward.9} parent=47 // pred_check_branch
          %4001 = sbr.rel (%p3999) target = $region52
        $region51: #{feature_shrinker_forward.9} parent=47 // pred_region
          %s4003 = ssub.s32 4096, 4096
          %4004 = vsyncadd %s3990, %s4003
          %s4005 = smul.addr %s23, 32
          %s4006 = smul.addr %s4005, 128
          %s4007 = scalar_lea.hbm %s7, %s4006
          %s4008 = sshll.u32 %s3993, 4
          %s4009 = int_to_ptr.vmem [resolvable:$true] %s4008
          %4014 = dma.vmem_to_hbm [thread:$0]  %s4009, 4096, %s4007, %s3990, 1024, 1024, 64
        $region52: #{feature_shrinker_forward.9} parent=47 // pred_fallthru
          _
        // Predicated region
        $region53: #{feature_shrinker_forward.9} parent=47 // pred_check
          %p4015 = pneg %p224
        $region54: #{feature_shrinker_forward.9} parent=47 // pred_check_branch
          %4017 = sbr.rel (%p4015) target = $region56
        $region55: #{feature_shrinker_forward.9} parent=47 // pred_region
          _
        $region56: #{feature_shrinker_forward.9} parent=47 // pred_fallthru
          _
      $region48: #{feature_shrinker_forward.9} parent=5 // pred_fallthru
        _
      %p4018 = scmp.le.s32.totalorder 2, %s18
      // Predicated region
      $region57: #{feature_shrinker_forward.9} parent=5 // pred_check
        %p4019 = pneg %p4018
      $region58: #{feature_shrinker_forward.9} parent=5 // pred_check_branch
        %4021 = sbr.rel (%p4019) target = $region60
      $region59: #{feature_shrinker_forward.9} parent=5 // pred_region
        %s4022 = ssub.s32 %s18, 2
        // Predicated region
        $region61: #{feature_shrinker_forward.9} parent=59 // pred_check
          %p4023 = pneg %p204
        $region62: #{feature_shrinker_forward.9} parent=59 // pred_check_branch
          %4025 = sbr.rel (%p4023) target = $region64
        $region63: #{feature_shrinker_forward.9} parent=59 // pred_region
          %s4026 = sand.u32 %s189, 1
          %s4027 = scalar_lea.sflag [#allocation4], %s4026
          %s4028 = sand.u32 %s189, 1
          %s4029 = smul.addr %s4028, 256
          %s4030 = scalar_lea.vmem [#allocation3], %s4029
          %4031 = dma.done %s4027, 4096
        $region64: #{feature_shrinker_forward.9} parent=59 // pred_fallthru
          _
        // Predicated region
        $region65: #{feature_shrinker_forward.9} parent=59 // pred_check
          %p4032 = pneg %p230
        $region66: #{feature_shrinker_forward.9} parent=59 // pred_check_branch
          %4034 = sbr.rel (%p4032) target = $region68
        $region67: #{feature_shrinker_forward.9} parent=59 // pred_region
          %p4035 = scmp.lt.s32.totalorder %s24, 1
          %s4036 = scalar_select %p4035, %s24, 1
          %s4037 = smul.addr %s4036, 32
          %s4038 = smul.addr %s4037, 8
          %s4039 = scalar_lea.vmem %s8, %s4038
        $region68: #{feature_shrinker_forward.9} parent=59 // pred_fallthru
          _
      $region60: #{feature_shrinker_forward.9} parent=5 // pred_fallthru
        _
    $region6: #{feature_shrinker_forward.9} parent=1 // loop_footer
      %s22 = sadd.s32 1, %s18
    $region7: #{feature_shrinker_forward.9} parent=1 // loop_footer_branch
      %17 = sbr.rel target = $region3
    $region8: #{feature_shrinker_forward.9} parent=1 // loop_exit
      _
    %4040 = vsyncpa [#allocation4], 1
    %s4041 = scalar_lea.sflag [#allocation4], 1
    %4042 = vsyncpa %s4041, 1

</llo_original>
